<compile_context>
chip_gen: v5e
topology: v5e:2x2
jax: 0.10.0
libtpu: 0.0.40
codegen_flags: <defaults>
</compile_context>

<pallas_src>
import functools

import jax
import jax.numpy as jnp
from jax import lax
from jax.experimental import pallas as pl
from jax.experimental.pallas import tpu as pltpu


MXU_DTYPE = jnp.bfloat16   # operand dtype fed to the MXU (f32 accumulation)


# ------------------------------ fused kernel --------------------------------


def _module_a_kernel(
    x_ref,                        # (1, H, W, Cin)                f32
    w1_ref, b1_ref,               # (Cin, C123) bf16, (1, C123)   f32
    w22_ref, b22_ref,             # (3, 3, C123, C23) bf16 (channel-routed)
    w32_ref, b32_ref,             # (3, 3, C123, C33) bf16 (channel-routed)
    w33_ref, b33_ref,             # (3, 3, C33,  C33) bf16
    w41_ref, b41_ref,             # (3, 3, Cin,  C41) bf16
    o_ref,                        # (1, H, W, C11+C23+C33+C41)
    xpad, ypad, f3pad, ppad,      # f32 VMEM scratch with zero halo
    *, H, W, Cin, C11, C123, C23, C33, C41,
):
    HW = H * W

    def conv3x3_relu(pad_scr, w_ref, b_ref, cc, co):
        """3x3 / stride-1 conv (+bias+ReLU) on a zero-padded VMEM buffer."""
        acc = jnp.zeros((HW, co), jnp.float32)
        for kh in range(3):
            for kw in range(3):
                tap = pad_scr[kh:kh + H, kw:kw + W, :].reshape(HW, cc)
                acc = acc + jnp.dot(tap.astype(MXU_DTYPE), w_ref[kh, kw],
                                    preferred_element_type=jnp.float32)
        return jnp.maximum(acc + b_ref[...], 0.0)            # (HW, co) f32

    x = x_ref[0]                                             # (H, W, Cin) f32

    # ---- zero-padded copy of x (halo for the branch-4 average pool) --------
    xpad[...] = jnp.zeros_like(xpad)
    xpad[1:H + 1, 1:W + 1, :] = x

    # ---- branches 1/2/3 entry: three 1x1 convs merged into one matmul ------
    x2d = x.reshape(HW, Cin).astype(MXU_DTYPE)
    y = jnp.dot(x2d, w1_ref[...], preferred_element_type=jnp.float32)
    y = jnp.maximum(y + b1_ref[...], 0.0)                    # (HW, C123) f32

    f1 = y[:, :C11]                                          # branch-1 output

    # Shared zero-padded buffer holding all merged 1x1 channels; the 3x3
    # weights of branches 2/3 are zero-padded on their input-channel range,
    # so they pick out their own channels without slicing y.
    ypad[...] = jnp.zeros_like(ypad)
    ypad[1:H + 1, 1:W + 1, :] = y.reshape(H, W, C123)

    # ---- branch 2: 1x1 -> 3x3(pad 1) ----------------------------------------
    f2 = conv3x3_relu(ypad, w22_ref, b22_ref, C123, C23)

    # ---- branch 3: 1x1 -> 3x3(pad 1) -> 3x3(pad 1) ---------------------------
    f3a = conv3x3_relu(ypad, w32_ref, b32_ref, C123, C33)
    f3pad[...] = jnp.zeros_like(f3pad)
    f3pad[1:H + 1, 1:W + 1, :] = f3a.reshape(H, W, C33)
    f3 = conv3x3_relu(f3pad, w33_ref, b33_ref, C33, C33)

    # ---- branch 4: avgpool(3, s1, p1, /9) -> 3x3(pad 1) ----------------------
    pacc = jnp.zeros((H, W, Cin), jnp.float32)
    for kh in range(3):
        for kw in range(3):
            pacc = pacc + xpad[kh:kh + H, kw:kw + W, :]
    ppad[...] = jnp.zeros_like(ppad)
    ppad[1:H + 1, 1:W + 1, :] = pacc * (1.0 / 9.0)           # count_include_pad
    f4 = conv3x3_relu(ppad, w41_ref, b41_ref, Cin, C41)

    # ---- in-kernel concat -> single lane-dense output store ------------------
    out = jnp.concatenate([f1, f2, f3, f4], axis=-1)          # (HW, Ctot) f32
    Ctot = C11 + C23 + C33 + C41
    o_ref[...] = out.reshape(1, H, W, Ctot).astype(o_ref.dtype)


# ------------------------------ wrappers -------------------------------------


def _prep_params(params):
    """Merge / route / reshape / cast weights for the fused kernel."""
    w11, b11 = params["b1_c1"]
    w21, b21 = params["b2_c1"]
    w31, b31 = params["b3_c1"]
    cin = w11.shape[2]
    c11, c21, c31 = w11.shape[3], w21.shape[3], w31.shape[3]
    c123 = c11 + c21 + c31

    # Merged 1x1 (branch 1/2/3 entry): (Cin, C11+C21+C31).
    w1 = jnp.concatenate([w11.reshape(cin, c11), w21.reshape(cin, c21),
                          w31.reshape(cin, c31)], axis=-1)
    b1 = jnp.concatenate([b11, b21, b31])

    def route(w, lo, hi):
        """Embed a 3x3 weight on an input-channel sub-range into C123 channels."""
        kh, kw, _, co = w.shape
        full = jnp.zeros((kh, kw, c123, co), w.dtype)
        return full.at[:, :, lo:hi, :].set(w)

    w22, b22 = params["b2_c2"]
    w32, b32 = params["b3_c2"]
    w33, b33 = params["b3_c3"]
    w41, b41 = params["b4_c1"]

    w22r = route(w22, c11, c11 + c21)          # branch-2 3x3 input channels
    w32r = route(w32, c11 + c21, c123)         # branch-3 first 3x3 input channels

    fb = lambda b: b.reshape(1, -1).astype(jnp.float32)
    fw = lambda w: w.astype(MXU_DTYPE)
    return (fw(w1), fb(b1),
            fw(w22r), fb(b22),
            fw(w32r), fb(b32),
            fw(w33), fb(b33),
            fw(w41), fb(b41))


def module_a_forward_nhwc(params, x):
    """x: (N, H, W, Cin) -> (N, H, W, out1_1 + out2_3 + out3_3 + out4_1)."""
    N, H, W, Cin = x.shape
    C11 = params["b1_c1"][0].shape[-1]
    C21 = params["b2_c1"][0].shape[-1]
    C23 = params["b2_c2"][0].shape[-1]
    C31 = params["b3_c1"][0].shape[-1]
    C33 = params["b3_c3"][0].shape[-1]
    C41 = params["b4_c1"][0].shape[-1]
    C123 = C11 + C21 + C31
    Ctot = C11 + C23 + C33 + C41

    flat = _prep_params(params)

    kernel = functools.partial(
        _module_a_kernel, H=H, W=W, Cin=Cin,
        C11=C11, C123=C123, C23=C23, C33=C33, C41=C41)

    def const_spec(arr):
        nd = arr.ndim
        return pl.BlockSpec(arr.shape, lambda n, _nd=nd: (0,) * _nd)

    return pl.pallas_call(
        kernel,
        out_shape=jax.ShapeDtypeStruct((N, H, W, Ctot), x.dtype),
        grid=(N,),
        in_specs=[pl.BlockSpec((1, H, W, Cin), lambda n: (n, 0, 0, 0))]
                 + [const_spec(a) for a in flat],
        out_specs=pl.BlockSpec((1, H, W, Ctot), lambda n: (n, 0, 0, 0)),
        scratch_shapes=[
            pltpu.VMEM((H + 2, W + 2, Cin), jnp.float32),    # padded x (pool)
            pltpu.VMEM((H + 2, W + 2, C123), jnp.float32),   # padded merged 1x1
            pltpu.VMEM((H + 2, W + 2, C33), jnp.float32),    # padded b3 interm.
            pltpu.VMEM((H + 2, W + 2, Cin), jnp.float32),    # padded pooled x
        ],
        compiler_params=pltpu.CompilerParams(
            dimension_semantics=("parallel",)),
    )(x, *flat)


def module_a_forward(params, x_nchw):
    """PyTorch-layout entry point: (N, C, H, W) -> (N, Ctot, H, W)."""
    x = jnp.transpose(x_nchw, (0, 2, 3, 1))
    out = module_a_forward_nhwc(params, x)
    return jnp.transpose(out, (0, 3, 1, 2))


# ------------------------------ init -----------------------------------------


def _init_conv(key, kh, kw, cin, cout):
    kw_, kb_ = jax.random.split(key)
    fan_in = kh * kw * cin
    scale = 1.0 / jnp.sqrt(jnp.float32(fan_in))
    w = jax.random.uniform(kw_, (kh, kw, cin, cout), jnp.float32, -scale, scale)
    b = jax.random.uniform(kb_, (cout,), jnp.float32, -scale, scale)
    return w, b


def init_module_a(key, in_channel, out1_1, out2_1, out2_3, out3_1, out3_3,
                  out4_1):
    keys = jax.random.split(key, 7)
    return {
        "b1_c1": _init_conv(keys[0], 1, 1, in_channel, out1_1),
        "b2_c1": _init_conv(keys[1], 1, 1, in_channel, out2_1),
        "b2_c2": _init_conv(keys[2], 3, 3, out2_1, out2_3),
        "b3_c1": _init_conv(keys[3], 1, 1, in_channel, out3_1),
        "b3_c2": _init_conv(keys[4], 3, 3, out3_1, out3_3),
        "b3_c3": _init_conv(keys[5], 3, 3, out3_3, out3_3),
        "b4_c1": _init_conv(keys[6], 3, 3, in_channel, out4_1),
    }


# --------------------------- pure-JAX reference ------------------------------


def _q(v):
    """Round to bf16 and back (matches the kernel's MXU-operand rounding)."""
    return v.astype(MXU_DTYPE).astype(jnp.float32)


def _ref_conv_relu(x, w, b, padding):
    y = lax.conv_general_dilated(
        _q(x), _q(w), window_strides=(1, 1),
        padding=((padding, padding), (padding, padding)),
        dimension_numbers=("NHWC", "HWIO", "NHWC"),
        preferred_element_type=jnp.float32)
    return jnp.maximum(y + b, 0.0)


def _ref_avgpool3(x):
    N, H, W, C = x.shape
    xp = jnp.pad(x, ((0, 0), (1, 1), (1, 1), (0, 0)))
    s = jnp.zeros((N, H, W, C), jnp.float32)
    for kh in range(3):
        for kw in range(3):
            s = s + xp[:, kh:kh + H, kw:kw + W, :]
    return s * (1.0 / 9.0)


def module_a_reference(params, x_nchw):
    x = jnp.transpose(x_nchw, (0, 2, 3, 1))
    f1 = _ref_conv_relu(x, *params["b1_c1"], 0)
    f2 = _ref_conv_relu(x, *params["b2_c1"], 0)
    f2 = _ref_conv_relu(f2, *params["b2_c2"], 1)
    f3 = _ref_conv_relu(x, *params["b3_c1"], 0)
    f3 = _ref_conv_relu(f3, *params["b3_c2"], 1)
    f3 = _ref_conv_relu(f3, *params["b3_c3"], 1)
    f4 = _ref_conv_relu(_ref_avgpool3(x), *params["b4_c1"], 1)
    out = jnp.concatenate([f1, f2, f3, f4], axis=-1)
    return jnp.transpose(out, (0, 3, 1, 2))


# ------------------------------- main ----------------------------------------

if __name__ == "__main__":
    key = jax.random.PRNGKey(0)
    k_x, k_p = jax.random.split(key)

    # Small shapes consistent with the module.
    N, C, H, W = 2, 4, 16, 16
    out1_1, out2_1, out2_3, out3_1, out3_3, out4_1 = 8, 6, 8, 4, 8, 8

    x = jax.random.normal(k_x, (N, C, H, W), jnp.float32)
    params = init_module_a(k_p, C, out1_1, out2_1, out2_3, out3_1, out3_3,
                           out4_1)

    out = jax.block_until_ready(module_a_forward(params, x))
    expected_channels = out1_1 + out2_3 + out3_3 + out4_1
    assert out.shape == (N, expected_channels, H, W), out.shape

    ref = jax.block_until_ready(module_a_reference(params, x))
    # bf16 MXU operands with f32 accumulation: compare against a reference with
    # matched bf16 rounding.  Tolerance absorbs accumulation-order /
    # double-rounding noise while still catching real indexing/weight bugs.
    err = float(jnp.max(jnp.abs(out - ref)))
    assert jnp.allclose(out, ref, atol=3e-3, rtol=3e-3), err

    print("KERNEL_OK")
</pallas_src>

<mosaic_0001>
module attributes {stable_mosaic.version = 11 : i64} {
  func.func @_module_a_kernel(%arg0: i32, %arg1: memref<1x16x16x4xf32, #tpu.memory_space<vmem>>, %arg2: memref<4x18xbf16, #tpu.memory_space<vmem>>, %arg3: memref<1x18xf32, #tpu.memory_space<vmem>>, %arg4: memref<3x3x18x8xbf16, #tpu.memory_space<vmem>>, %arg5: memref<1x8xf32, #tpu.memory_space<vmem>>, %arg6: memref<3x3x18x8xbf16, #tpu.memory_space<vmem>>, %arg7: memref<1x8xf32, #tpu.memory_space<vmem>>, %arg8: memref<3x3x8x8xbf16, #tpu.memory_space<vmem>>, %arg9: memref<1x8xf32, #tpu.memory_space<vmem>>, %arg10: memref<3x3x4x8xbf16, #tpu.memory_space<vmem>>, %arg11: memref<1x8xf32, #tpu.memory_space<vmem>>, %arg12: memref<1x16x16x32xf32, #tpu.memory_space<vmem>>, %arg13: memref<18x18x4xf32, #tpu.memory_space<vmem>>, %arg14: memref<18x18x18xf32, #tpu.memory_space<vmem>>, %arg15: memref<18x18x8xf32, #tpu.memory_space<vmem>>, %arg16: memref<18x18x4xf32, #tpu.memory_space<vmem>>) attributes {dimension_semantics = [#tpu.dimension_semantics<parallel>], iteration_bounds = array<i64: 2>, scalar_prefetch = 0 : i64, scratch_operands = 4 : i64, tpu.core_type = #tpu.core_type<tc>, window_params = [{transform_indices = @transform_0, window_bounds = array<i64: 1, 16, 16, 4>}, {pipeline_mode = #tpu.pipeline_mode<synchronous>, transform_indices = @transform_1, window_bounds = array<i64: 4, 18>}, {pipeline_mode = #tpu.pipeline_mode<synchronous>, transform_indices = @transform_2, window_bounds = array<i64: 1, 18>}, {pipeline_mode = #tpu.pipeline_mode<synchronous>, transform_indices = @transform_3, window_bounds = array<i64: 3, 3, 18, 8>}, {pipeline_mode = #tpu.pipeline_mode<synchronous>, transform_indices = @transform_4, window_bounds = array<i64: 1, 8>}, {pipeline_mode = #tpu.pipeline_mode<synchronous>, transform_indices = @transform_5, window_bounds = array<i64: 3, 3, 18, 8>}, {pipeline_mode = #tpu.pipeline_mode<synchronous>, transform_indices = @transform_6, window_bounds = array<i64: 1, 8>}, {pipeline_mode = #tpu.pipeline_mode<synchronous>, transform_indices = @transform_7, window_bounds = array<i64: 3, 3, 8, 8>}, {pipeline_mode = #tpu.pipeline_mode<synchronous>, transform_indices = @transform_8, window_bounds = array<i64: 1, 8>}, {pipeline_mode = #tpu.pipeline_mode<synchronous>, transform_indices = @transform_9, window_bounds = array<i64: 3, 3, 4, 8>}, {pipeline_mode = #tpu.pipeline_mode<synchronous>, transform_indices = @transform_10, window_bounds = array<i64: 1, 8>}, {transform_indices = @transform_11, window_bounds = array<i64: 1, 16, 16, 32>}]} {
    %c0 = arith.constant 0 : index
    %c0_0 = arith.constant 0 : index
    %c0_1 = arith.constant 0 : index
    %c0_2 = arith.constant 0 : index
    %0 = vector.load %arg1[%c0, %c0_0, %c0_1, %c0_2] : memref<1x16x16x4xf32, #tpu.memory_space<vmem>>, vector<1x16x16x4xf32>
    %1 = vector.shape_cast %0 : vector<1x16x16x4xf32> to vector<16x16x4xf32>
    %cst = arith.constant 0.000000e+00 : f32
    %2 = vector.broadcast %cst : f32 to vector<18x18x4xf32>
    %c0_3 = arith.constant 0 : index
    %c0_4 = arith.constant 0 : index
    %c0_5 = arith.constant 0 : index
    %3 = vector.load %arg13[%c0_3, %c0_4, %c0_5] : memref<18x18x4xf32, #tpu.memory_space<vmem>>, vector<18x18x4xf32>
    tpu.vector_store %arg13[%c0_3, %c0_4, %c0_5], %2 {strides = array<i32>} : memref<18x18x4xf32, #tpu.memory_space<vmem>>, vector<18x18x4xf32>,
    %c1 = arith.constant 1 : index
    %c1_6 = arith.constant 1 : index
    %c0_7 = arith.constant 0 : index
    %4 = vector.load %arg13[%c1, %c1_6, %c0_7] : memref<18x18x4xf32, #tpu.memory_space<vmem>>, vector<16x16x4xf32>
    tpu.vector_store %arg13[%c1, %c1_6, %c0_7], %1 {strides = array<i32>} : memref<18x18x4xf32, #tpu.memory_space<vmem>>, vector<16x16x4xf32>,
    %5 = vector.shape_cast %1 : vector<16x16x4xf32> to vector<256x4xf32>
    %6 = arith.truncf %5 : vector<256x4xf32> to vector<256x4xbf16>
    %c0_8 = arith.constant 0 : index
    %c0_9 = arith.constant 0 : index
    %7 = vector.load %arg2[%c0_8, %c0_9] : memref<4x18xbf16, #tpu.memory_space<vmem>>, vector<4x18xbf16>
    %cst_10 = arith.constant dense<0.000000e+00> : vector<256x18xf32>
    %8 = tpu.matmul %6, %7, %cst_10 {dimension_numbers = #tpu.dot_dimension_numbers<[1], [0], [0], [1], [0, 0, 1, 1], [], []>} : vector<256x4xbf16>, vector<4x18xbf16>, vector<256x18xf32> -> vector<256x18xf32>
    %c0_11 = arith.constant 0 : index
    %c0_12 = arith.constant 0 : index
    %9 = vector.load %arg3[%c0_11, %c0_12] : memref<1x18xf32, #tpu.memory_space<vmem>>, vector<1x18xf32>
    %10 = vector.broadcast %9 : vector<1x18xf32> to vector<256x18xf32>
    %11 = arith.addf %8, %10 : vector<256x18xf32>
    %cst_13 = arith.constant 0.000000e+00 : f32
    %12 = vector.broadcast %cst_13 : f32 to vector<256x18xf32>
    %13 = arith.maximumf %11, %12 : vector<256x18xf32>
    %14 = vector.extract_strided_slice %13 {offsets = [0, 0], sizes = [256, 8], strides = [1, 1]} : vector<256x18xf32> to vector<256x8xf32>
    %cst_14 = arith.constant 0.000000e+00 : f32
    %15 = vector.broadcast %cst_14 : f32 to vector<18x18x18xf32>
    %c0_15 = arith.constant 0 : index
    %c0_16 = arith.constant 0 : index
    %c0_17 = arith.constant 0 : index
    %16 = vector.load %arg14[%c0_15, %c0_16, %c0_17] : memref<18x18x18xf32, #tpu.memory_space<vmem>>, vector<18x18x18xf32>
    tpu.vector_store %arg14[%c0_15, %c0_16, %c0_17], %15 {strides = array<i32>} : memref<18x18x18xf32, #tpu.memory_space<vmem>>, vector<18x18x18xf32>,
    %17 = vector.shape_cast %13 : vector<256x18xf32> to vector<16x16x18xf32>
    %c1_18 = arith.constant 1 : index
    %c1_19 = arith.constant 1 : index
    %c0_20 = arith.constant 0 : index
    %18 = vector.load %arg14[%c1_18, %c1_19, %c0_20] : memref<18x18x18xf32, #tpu.memory_space<vmem>>, vector<16x16x18xf32>
    tpu.vector_store %arg14[%c1_18, %c1_19, %c0_20], %17 {strides = array<i32>} : memref<18x18x18xf32, #tpu.memory_space<vmem>>, vector<16x16x18xf32>,
    %cst_21 = arith.constant 0.000000e+00 : f32
    %19 = vector.broadcast %cst_21 : f32 to vector<256x8xf32>
    %c0_22 = arith.constant 0 : index
    %c0_23 = arith.constant 0 : index
    %c0_24 = arith.constant 0 : index
    %20 = vector.load %arg14[%c0_22, %c0_23, %c0_24] : memref<18x18x18xf32, #tpu.memory_space<vmem>>, vector<16x16x18xf32>
    %21 = vector.shape_cast %20 : vector<16x16x18xf32> to vector<256x18xf32>
    %22 = arith.truncf %21 : vector<256x18xf32> to vector<256x18xbf16>
    %c0_25 = arith.constant 0 : index
    %c0_26 = arith.constant 0 : index
    %c0_27 = arith.constant 0 : index
    %c0_28 = arith.constant 0 : index
    %23 = vector.load %arg4[%c0_25, %c0_26, %c0_27, %c0_28] : memref<3x3x18x8xbf16, #tpu.memory_space<vmem>>, vector<1x1x18x8xbf16>
    %24 = vector.shape_cast %23 : vector<1x1x18x8xbf16> to vector<18x8xbf16>
    %cst_29 = arith.constant dense<0.000000e+00> : vector<256x8xf32>
    %25 = tpu.matmul %22, %24, %cst_29 {dimension_numbers = #tpu.dot_dimension_numbers<[1], [0], [0], [1], [0, 0, 1, 1], [], []>} : vector<256x18xbf16>, vector<18x8xbf16>, vector<256x8xf32> -> vector<256x8xf32>
    %26 = arith.addf %19, %25 : vector<256x8xf32>
    %c0_30 = arith.constant 0 : index
    %c1_31 = arith.constant 1 : index
    %c0_32 = arith.constant 0 : index
    %27 = vector.load %arg14[%c0_30, %c1_31, %c0_32] : memref<18x18x18xf32, #tpu.memory_space<vmem>>, vector<16x16x18xf32>
    %28 = vector.shape_cast %27 : vector<16x16x18xf32> to vector<256x18xf32>
    %29 = arith.truncf %28 : vector<256x18xf32> to vector<256x18xbf16>
    %c0_33 = arith.constant 0 : index
    %c1_34 = arith.constant 1 : index
    %c0_35 = arith.constant 0 : index
    %c0_36 = arith.constant 0 : index
    %30 = vector.load %arg4[%c0_33, %c1_34, %c0_35, %c0_36] : memref<3x3x18x8xbf16, #tpu.memory_space<vmem>>, vector<1x1x18x8xbf16>
    %31 = vector.shape_cast %30 : vector<1x1x18x8xbf16> to vector<18x8xbf16>
    %cst_37 = arith.constant dense<0.000000e+00> : vector<256x8xf32>
    %32 = tpu.matmul %29, %31, %cst_37 {dimension_numbers = #tpu.dot_dimension_numbers<[1], [0], [0], [1], [0, 0, 1, 1], [], []>} : vector<256x18xbf16>, vector<18x8xbf16>, vector<256x8xf32> -> vector<256x8xf32>
    %33 = arith.addf %26, %32 : vector<256x8xf32>
    %c0_38 = arith.constant 0 : index
    %c2 = arith.constant 2 : index
    %c0_39 = arith.constant 0 : index
    %34 = vector.load %arg14[%c0_38, %c2, %c0_39] : memref<18x18x18xf32, #tpu.memory_space<vmem>>, vector<16x16x18xf32>
    %35 = vector.shape_cast %34 : vector<16x16x18xf32> to vector<256x18xf32>
    %36 = arith.truncf %35 : vector<256x18xf32> to vector<256x18xbf16>
    %c0_40 = arith.constant 0 : index
    %c2_41 = arith.constant 2 : index
    %c0_42 = arith.constant 0 : index
    %c0_43 = arith.constant 0 : index
    %37 = vector.load %arg4[%c0_40, %c2_41, %c0_42, %c0_43] : memref<3x3x18x8xbf16, #tpu.memory_space<vmem>>, vector<1x1x18x8xbf16>
    %38 = vector.shape_cast %37 : vector<1x1x18x8xbf16> to vector<18x8xbf16>
    %cst_44 = arith.constant dense<0.000000e+00> : vector<256x8xf32>
    %39 = tpu.matmul %36, %38, %cst_44 {dimension_numbers = #tpu.dot_dimension_numbers<[1], [0], [0], [1], [0, 0, 1, 1], [], []>} : vector<256x18xbf16>, vector<18x8xbf16>, vector<256x8xf32> -> vector<256x8xf32>
    %40 = arith.addf %33, %39 : vector<256x8xf32>
    %c1_45 = arith.constant 1 : index
    %c0_46 = arith.constant 0 : index
    %c0_47 = arith.constant 0 : index
    %41 = vector.load %arg14[%c1_45, %c0_46, %c0_47] : memref<18x18x18xf32, #tpu.memory_space<vmem>>, vector<16x16x18xf32>
    %42 = vector.shape_cast %41 : vector<16x16x18xf32> to vector<256x18xf32>
    %43 = arith.truncf %42 : vector<256x18xf32> to vector<256x18xbf16>
    %c1_48 = arith.constant 1 : index
    %c0_49 = arith.constant 0 : index
    %c0_50 = arith.constant 0 : index
    %c0_51 = arith.constant 0 : index
    %44 = vector.load %arg4[%c1_48, %c0_49, %c0_50, %c0_51] : memref<3x3x18x8xbf16, #tpu.memory_space<vmem>>, vector<1x1x18x8xbf16>
    %45 = vector.shape_cast %44 : vector<1x1x18x8xbf16> to vector<18x8xbf16>
    %cst_52 = arith.constant dense<0.000000e+00> : vector<256x8xf32>
    %46 = tpu.matmul %43, %45, %cst_52 {dimension_numbers = #tpu.dot_dimension_numbers<[1], [0], [0], [1], [0, 0, 1, 1], [], []>} : vector<256x18xbf16>, vector<18x8xbf16>, vector<256x8xf32> -> vector<256x8xf32>
    %47 = arith.addf %40, %46 : vector<256x8xf32>
    %c1_53 = arith.constant 1 : index
    %c1_54 = arith.constant 1 : index
    %c0_55 = arith.constant 0 : index
    %48 = vector.load %arg14[%c1_53, %c1_54, %c0_55] : memref<18x18x18xf32, #tpu.memory_space<vmem>>, vector<16x16x18xf32>
    %49 = vector.shape_cast %48 : vector<16x16x18xf32> to vector<256x18xf32>
    %50 = arith.truncf %49 : vector<256x18xf32> to vector<256x18xbf16>
    %c1_56 = arith.constant 1 : index
    %c1_57 = arith.constant 1 : index
    %c0_58 = arith.constant 0 : index
    %c0_59 = arith.constant 0 : index
    %51 = vector.load %arg4[%c1_56, %c1_57, %c0_58, %c0_59] : memref<3x3x18x8xbf16, #tpu.memory_space<vmem>>, vector<1x1x18x8xbf16>
    %52 = vector.shape_cast %51 : vector<1x1x18x8xbf16> to vector<18x8xbf16>
    %cst_60 = arith.constant dense<0.000000e+00> : vector<256x8xf32>
    %53 = tpu.matmul %50, %52, %cst_60 {dimension_numbers = #tpu.dot_dimension_numbers<[1], [0], [0], [1], [0, 0, 1, 1], [], []>} : vector<256x18xbf16>, vector<18x8xbf16>, vector<256x8xf32> -> vector<256x8xf32>
    %54 = arith.addf %47, %53 : vector<256x8xf32>
    %c1_61 = arith.constant 1 : index
    %c2_62 = arith.constant 2 : index
    %c0_63 = arith.constant 0 : index
    %55 = vector.load %arg14[%c1_61, %c2_62, %c0_63] : memref<18x18x18xf32, #tpu.memory_space<vmem>>, vector<16x16x18xf32>
    %56 = vector.shape_cast %55 : vector<16x16x18xf32> to vector<256x18xf32>
    %57 = arith.truncf %56 : vector<256x18xf32> to vector<256x18xbf16>
    %c1_64 = arith.constant 1 : index
    %c2_65 = arith.constant 2 : index
    %c0_66 = arith.constant 0 : index
    %c0_67 = arith.constant 0 : index
    %58 = vector.load %arg4[%c1_64, %c2_65, %c0_66, %c0_67] : memref<3x3x18x8xbf16, #tpu.memory_space<vmem>>, vector<1x1x18x8xbf16>
    %59 = vector.shape_cast %58 : vector<1x1x18x8xbf16> to vector<18x8xbf16>
    %cst_68 = arith.constant dense<0.000000e+00> : vector<256x8xf32>
    %60 = tpu.matmul %57, %59, %cst_68 {dimension_numbers = #tpu.dot_dimension_numbers<[1], [0], [0], [1], [0, 0, 1, 1], [], []>} : vector<256x18xbf16>, vector<18x8xbf16>, vector<256x8xf32> -> vector<256x8xf32>
    %61 = arith.addf %54, %60 : vector<256x8xf32>
    %c2_69 = arith.constant 2 : index
    %c0_70 = arith.constant 0 : index
    %c0_71 = arith.constant 0 : index
    %62 = vector.load %arg14[%c2_69, %c0_70, %c0_71] : memref<18x18x18xf32, #tpu.memory_space<vmem>>, vector<16x16x18xf32>
    %63 = vector.shape_cast %62 : vector<16x16x18xf32> to vector<256x18xf32>
    %64 = arith.truncf %63 : vector<256x18xf32> to vector<256x18xbf16>
    %c2_72 = arith.constant 2 : index
    %c0_73 = arith.constant 0 : index
    %c0_74 = arith.constant 0 : index
    %c0_75 = arith.constant 0 : index
    %65 = vector.load %arg4[%c2_72, %c0_73, %c0_74, %c0_75] : memref<3x3x18x8xbf16, #tpu.memory_space<vmem>>, vector<1x1x18x8xbf16>
    %66 = vector.shape_cast %65 : vector<1x1x18x8xbf16> to vector<18x8xbf16>
    %cst_76 = arith.constant dense<0.000000e+00> : vector<256x8xf32>
    %67 = tpu.matmul %64, %66, %cst_76 {dimension_numbers = #tpu.dot_dimension_numbers<[1], [0], [0], [1], [0, 0, 1, 1], [], []>} : vector<256x18xbf16>, vector<18x8xbf16>, vector<256x8xf32> -> vector<256x8xf32>
    %68 = arith.addf %61, %67 : vector<256x8xf32>
    %c2_77 = arith.constant 2 : index
    %c1_78 = arith.constant 1 : index
    %c0_79 = arith.constant 0 : index
    %69 = vector.load %arg14[%c2_77, %c1_78, %c0_79] : memref<18x18x18xf32, #tpu.memory_space<vmem>>, vector<16x16x18xf32>
    %70 = vector.shape_cast %69 : vector<16x16x18xf32> to vector<256x18xf32>
    %71 = arith.truncf %70 : vector<256x18xf32> to vector<256x18xbf16>
    %c2_80 = arith.constant 2 : index
    %c1_81 = arith.constant 1 : index
    %c0_82 = arith.constant 0 : index
    %c0_83 = arith.constant 0 : index
    %72 = vector.load %arg4[%c2_80, %c1_81, %c0_82, %c0_83] : memref<3x3x18x8xbf16, #tpu.memory_space<vmem>>, vector<1x1x18x8xbf16>
    %73 = vector.shape_cast %72 : vector<1x1x18x8xbf16> to vector<18x8xbf16>
    %cst_84 = arith.constant dense<0.000000e+00> : vector<256x8xf32>
    %74 = tpu.matmul %71, %73, %cst_84 {dimension_numbers = #tpu.dot_dimension_numbers<[1], [0], [0], [1], [0, 0, 1, 1], [], []>} : vector<256x18xbf16>, vector<18x8xbf16>, vector<256x8xf32> -> vector<256x8xf32>
    %75 = arith.addf %68, %74 : vector<256x8xf32>
    %c2_85 = arith.constant 2 : index
    %c2_86 = arith.constant 2 : index
    %c0_87 = arith.constant 0 : index
    %76 = vector.load %arg14[%c2_85, %c2_86, %c0_87] : memref<18x18x18xf32, #tpu.memory_space<vmem>>, vector<16x16x18xf32>
    %77 = vector.shape_cast %76 : vector<16x16x18xf32> to vector<256x18xf32>
    %78 = arith.truncf %77 : vector<256x18xf32> to vector<256x18xbf16>
    %c2_88 = arith.constant 2 : index
    %c2_89 = arith.constant 2 : index
    %c0_90 = arith.constant 0 : index
    %c0_91 = arith.constant 0 : index
    %79 = vector.load %arg4[%c2_88, %c2_89, %c0_90, %c0_91] : memref<3x3x18x8xbf16, #tpu.memory_space<vmem>>, vector<1x1x18x8xbf16>
    %80 = vector.shape_cast %79 : vector<1x1x18x8xbf16> to vector<18x8xbf16>
    %cst_92 = arith.constant dense<0.000000e+00> : vector<256x8xf32>
    %81 = tpu.matmul %78, %80, %cst_92 {dimension_numbers = #tpu.dot_dimension_numbers<[1], [0], [0], [1], [0, 0, 1, 1], [], []>} : vector<256x18xbf16>, vector<18x8xbf16>, vector<256x8xf32> -> vector<256x8xf32>
    %82 = arith.addf %75, %81 : vector<256x8xf32>
    %c0_93 = arith.constant 0 : index
    %c0_94 = arith.constant 0 : index
    %83 = vector.load %arg5[%c0_93, %c0_94] : memref<1x8xf32, #tpu.memory_space<vmem>>, vector<1x8xf32>
    %84 = vector.broadcast %83 : vector<1x8xf32> to vector<256x8xf32>
    %85 = arith.addf %82, %84 : vector<256x8xf32>
    %cst_95 = arith.constant 0.000000e+00 : f32
    %86 = vector.broadcast %cst_95 : f32 to vector<256x8xf32>
    %87 = arith.maximumf %85, %86 : vector<256x8xf32>
    %cst_96 = arith.constant 0.000000e+00 : f32
    %88 = vector.broadcast %cst_96 : f32 to vector<256x8xf32>
    %c0_97 = arith.constant 0 : index
    %c0_98 = arith.constant 0 : index
    %c0_99 = arith.constant 0 : index
    %89 = vector.load %arg14[%c0_97, %c0_98, %c0_99] : memref<18x18x18xf32, #tpu.memory_space<vmem>>, vector<16x16x18xf32>
    %90 = vector.shape_cast %89 : vector<16x16x18xf32> to vector<256x18xf32>
    %91 = arith.truncf %90 : vector<256x18xf32> to vector<256x18xbf16>
    %c0_100 = arith.constant 0 : index
    %c0_101 = arith.constant 0 : index
    %c0_102 = arith.constant 0 : index
    %c0_103 = arith.constant 0 : index
    %92 = vector.load %arg6[%c0_100, %c0_101, %c0_102, %c0_103] : memref<3x3x18x8xbf16, #tpu.memory_space<vmem>>, vector<1x1x18x8xbf16>
    %93 = vector.shape_cast %92 : vector<1x1x18x8xbf16> to vector<18x8xbf16>
    %cst_104 = arith.constant dense<0.000000e+00> : vector<256x8xf32>
    %94 = tpu.matmul %91, %93, %cst_104 {dimension_numbers = #tpu.dot_dimension_numbers<[1], [0], [0], [1], [0, 0, 1, 1], [], []>} : vector<256x18xbf16>, vector<18x8xbf16>, vector<256x8xf32> -> vector<256x8xf32>
    %95 = arith.addf %88, %94 : vector<256x8xf32>
    %c0_105 = arith.constant 0 : index
    %c1_106 = arith.constant 1 : index
    %c0_107 = arith.constant 0 : index
    %96 = vector.load %arg14[%c0_105, %c1_106, %c0_107] : memref<18x18x18xf32, #tpu.memory_space<vmem>>, vector<16x16x18xf32>
    %97 = vector.shape_cast %96 : vector<16x16x18xf32> to vector<256x18xf32>
    %98 = arith.truncf %97 : vector<256x18xf32> to vector<256x18xbf16>
    %c0_108 = arith.constant 0 : index
    %c1_109 = arith.constant 1 : index
    %c0_110 = arith.constant 0 : index
    %c0_111 = arith.constant 0 : index
    %99 = vector.load %arg6[%c0_108, %c1_109, %c0_110, %c0_111] : memref<3x3x18x8xbf16, #tpu.memory_space<vmem>>, vector<1x1x18x8xbf16>
    %100 = vector.shape_cast %99 : vector<1x1x18x8xbf16> to vector<18x8xbf16>
    %cst_112 = arith.constant dense<0.000000e+00> : vector<256x8xf32>
    %101 = tpu.matmul %98, %100, %cst_112 {dimension_numbers = #tpu.dot_dimension_numbers<[1], [0], [0], [1], [0, 0, 1, 1], [], []>} : vector<256x18xbf16>, vector<18x8xbf16>, vector<256x8xf32> -> vector<256x8xf32>
    %102 = arith.addf %95, %101 : vector<256x8xf32>
    %c0_113 = arith.constant 0 : index
    %c2_114 = arith.constant 2 : index
    %c0_115 = arith.constant 0 : index
    %103 = vector.load %arg14[%c0_113, %c2_114, %c0_115] : memref<18x18x18xf32, #tpu.memory_space<vmem>>, vector<16x16x18xf32>
    %104 = vector.shape_cast %103 : vector<16x16x18xf32> to vector<256x18xf32>
    %105 = arith.truncf %104 : vector<256x18xf32> to vector<256x18xbf16>
    %c0_116 = arith.constant 0 : index
    %c2_117 = arith.constant 2 : index
    %c0_118 = arith.constant 0 : index
    %c0_119 = arith.constant 0 : index
    %106 = vector.load %arg6[%c0_116, %c2_117, %c0_118, %c0_119] : memref<3x3x18x8xbf16, #tpu.memory_space<vmem>>, vector<1x1x18x8xbf16>
    %107 = vector.shape_cast %106 : vector<1x1x18x8xbf16> to vector<18x8xbf16>
    %cst_120 = arith.constant dense<0.000000e+00> : vector<256x8xf32>
    %108 = tpu.matmul %105, %107, %cst_120 {dimension_numbers = #tpu.dot_dimension_numbers<[1], [0], [0], [1], [0, 0, 1, 1], [], []>} : vector<256x18xbf16>, vector<18x8xbf16>, vector<256x8xf32> -> vector<256x8xf32>
    %109 = arith.addf %102, %108 : vector<256x8xf32>
    %c1_121 = arith.constant 1 : index
    %c0_122 = arith.constant 0 : index
    %c0_123 = arith.constant 0 : index
    %110 = vector.load %arg14[%c1_121, %c0_122, %c0_123] : memref<18x18x18xf32, #tpu.memory_space<vmem>>, vector<16x16x18xf32>
    %111 = vector.shape_cast %110 : vector<16x16x18xf32> to vector<256x18xf32>
    %112 = arith.truncf %111 : vector<256x18xf32> to vector<256x18xbf16>
    %c1_124 = arith.constant 1 : index
    %c0_125 = arith.constant 0 : index
    %c0_126 = arith.constant 0 : index
    %c0_127 = arith.constant 0 : index
    %113 = vector.load %arg6[%c1_124, %c0_125, %c0_126, %c0_127] : memref<3x3x18x8xbf16, #tpu.memory_space<vmem>>, vector<1x1x18x8xbf16>
    %114 = vector.shape_cast %113 : vector<1x1x18x8xbf16> to vector<18x8xbf16>
    %cst_128 = arith.constant dense<0.000000e+00> : vector<256x8xf32>
    %115 = tpu.matmul %112, %114, %cst_128 {dimension_numbers = #tpu.dot_dimension_numbers<[1], [0], [0], [1], [0, 0, 1, 1], [], []>} : vector<256x18xbf16>, vector<18x8xbf16>, vector<256x8xf32> -> vector<256x8xf32>
    %116 = arith.addf %109, %115 : vector<256x8xf32>
    %c1_129 = arith.constant 1 : index
    %c1_130 = arith.constant 1 : index
    %c0_131 = arith.constant 0 : index
    %117 = vector.load %arg14[%c1_129, %c1_130, %c0_131] : memref<18x18x18xf32, #tpu.memory_space<vmem>>, vector<16x16x18xf32>
    %118 = vector.shape_cast %117 : vector<16x16x18xf32> to vector<256x18xf32>
    %119 = arith.truncf %118 : vector<256x18xf32> to vector<256x18xbf16>
    %c1_132 = arith.constant 1 : index
    %c1_133 = arith.constant 1 : index
    %c0_134 = arith.constant 0 : index
    %c0_135 = arith.constant 0 : index
    %120 = vector.load %arg6[%c1_132, %c1_133, %c0_134, %c0_135] : memref<3x3x18x8xbf16, #tpu.memory_space<vmem>>, vector<1x1x18x8xbf16>
    %121 = vector.shape_cast %120 : vector<1x1x18x8xbf16> to vector<18x8xbf16>
    %cst_136 = arith.constant dense<0.000000e+00> : vector<256x8xf32>
    %122 = tpu.matmul %119, %121, %cst_136 {dimension_numbers = #tpu.dot_dimension_numbers<[1], [0], [0], [1], [0, 0, 1, 1], [], []>} : vector<256x18xbf16>, vector<18x8xbf16>, vector<256x8xf32> -> vector<256x8xf32>
    %123 = arith.addf %116, %122 : vector<256x8xf32>
    %c1_137 = arith.constant 1 : index
    %c2_138 = arith.constant 2 : index
    %c0_139 = arith.constant 0 : index
    %124 = vector.load %arg14[%c1_137, %c2_138, %c0_139] : memref<18x18x18xf32, #tpu.memory_space<vmem>>, vector<16x16x18xf32>
    %125 = vector.shape_cast %124 : vector<16x16x18xf32> to vector<256x18xf32>
    %126 = arith.truncf %125 : vector<256x18xf32> to vector<256x18xbf16>
    %c1_140 = arith.constant 1 : index
    %c2_141 = arith.constant 2 : index
    %c0_142 = arith.constant 0 : index
    %c0_143 = arith.constant 0 : index
    %127 = vector.load %arg6[%c1_140, %c2_141, %c0_142, %c0_143] : memref<3x3x18x8xbf16, #tpu.memory_space<vmem>>, vector<1x1x18x8xbf16>
    %128 = vector.shape_cast %127 : vector<1x1x18x8xbf16> to vector<18x8xbf16>
    %cst_144 = arith.constant dense<0.000000e+00> : vector<256x8xf32>
    %129 = tpu.matmul %126, %128, %cst_144 {dimension_numbers = #tpu.dot_dimension_numbers<[1], [0], [0], [1], [0, 0, 1, 1], [], []>} : vector<256x18xbf16>, vector<18x8xbf16>, vector<256x8xf32> -> vector<256x8xf32>
    %130 = arith.addf %123, %129 : vector<256x8xf32>
    %c2_145 = arith.constant 2 : index
    %c0_146 = arith.constant 0 : index
    %c0_147 = arith.constant 0 : index
    %131 = vector.load %arg14[%c2_145, %c0_146, %c0_147] : memref<18x18x18xf32, #tpu.memory_space<vmem>>, vector<16x16x18xf32>
    %132 = vector.shape_cast %131 : vector<16x16x18xf32> to vector<256x18xf32>
    %133 = arith.truncf %132 : vector<256x18xf32> to vector<256x18xbf16>
    %c2_148 = arith.constant 2 : index
    %c0_149 = arith.constant 0 : index
    %c0_150 = arith.constant 0 : index
    %c0_151 = arith.constant 0 : index
    %134 = vector.load %arg6[%c2_148, %c0_149, %c0_150, %c0_151] : memref<3x3x18x8xbf16, #tpu.memory_space<vmem>>, vector<1x1x18x8xbf16>
    %135 = vector.shape_cast %134 : vector<1x1x18x8xbf16> to vector<18x8xbf16>
    %cst_152 = arith.constant dense<0.000000e+00> : vector<256x8xf32>
    %136 = tpu.matmul %133, %135, %cst_152 {dimension_numbers = #tpu.dot_dimension_numbers<[1], [0], [0], [1], [0, 0, 1, 1], [], []>} : vector<256x18xbf16>, vector<18x8xbf16>, vector<256x8xf32> -> vector<256x8xf32>
    %137 = arith.addf %130, %136 : vector<256x8xf32>
    %c2_153 = arith.constant 2 : index
    %c1_154 = arith.constant 1 : index
    %c0_155 = arith.constant 0 : index
    %138 = vector.load %arg14[%c2_153, %c1_154, %c0_155] : memref<18x18x18xf32, #tpu.memory_space<vmem>>, vector<16x16x18xf32>
    %139 = vector.shape_cast %138 : vector<16x16x18xf32> to vector<256x18xf32>
    %140 = arith.truncf %139 : vector<256x18xf32> to vector<256x18xbf16>
    %c2_156 = arith.constant 2 : index
    %c1_157 = arith.constant 1 : index
    %c0_158 = arith.constant 0 : index
    %c0_159 = arith.constant 0 : index
    %141 = vector.load %arg6[%c2_156, %c1_157, %c0_158, %c0_159] : memref<3x3x18x8xbf16, #tpu.memory_space<vmem>>, vector<1x1x18x8xbf16>
    %142 = vector.shape_cast %141 : vector<1x1x18x8xbf16> to vector<18x8xbf16>
    %cst_160 = arith.constant dense<0.000000e+00> : vector<256x8xf32>
    %143 = tpu.matmul %140, %142, %cst_160 {dimension_numbers = #tpu.dot_dimension_numbers<[1], [0], [0], [1], [0, 0, 1, 1], [], []>} : vector<256x18xbf16>, vector<18x8xbf16>, vector<256x8xf32> -> vector<256x8xf32>
    %144 = arith.addf %137, %143 : vector<256x8xf32>
    %c2_161 = arith.constant 2 : index
    %c2_162 = arith.constant 2 : index
    %c0_163 = arith.constant 0 : index
    %145 = vector.load %arg14[%c2_161, %c2_162, %c0_163] : memref<18x18x18xf32, #tpu.memory_space<vmem>>, vector<16x16x18xf32>
    %146 = vector.shape_cast %145 : vector<16x16x18xf32> to vector<256x18xf32>
    %147 = arith.truncf %146 : vector<256x18xf32> to vector<256x18xbf16>
    %c2_164 = arith.constant 2 : index
    %c2_165 = arith.constant 2 : index
    %c0_166 = arith.constant 0 : index
    %c0_167 = arith.constant 0 : index
    %148 = vector.load %arg6[%c2_164, %c2_165, %c0_166, %c0_167] : memref<3x3x18x8xbf16, #tpu.memory_space<vmem>>, vector<1x1x18x8xbf16>
    %149 = vector.shape_cast %148 : vector<1x1x18x8xbf16> to vector<18x8xbf16>
    %cst_168 = arith.constant dense<0.000000e+00> : vector<256x8xf32>
    %150 = tpu.matmul %147, %149, %cst_168 {dimension_numbers = #tpu.dot_dimension_numbers<[1], [0], [0], [1], [0, 0, 1, 1], [], []>} : vector<256x18xbf16>, vector<18x8xbf16>, vector<256x8xf32> -> vector<256x8xf32>
    %151 = arith.addf %144, %150 : vector<256x8xf32>
    %c0_169 = arith.constant 0 : index
    %c0_170 = arith.constant 0 : index
    %152 = vector.load %arg7[%c0_169, %c0_170] : memref<1x8xf32, #tpu.memory_space<vmem>>, vector<1x8xf32>
    %153 = vector.broadcast %152 : vector<1x8xf32> to vector<256x8xf32>
    %154 = arith.addf %151, %153 : vector<256x8xf32>
    %cst_171 = arith.constant 0.000000e+00 : f32
    %155 = vector.broadcast %cst_171 : f32 to vector<256x8xf32>
    %156 = arith.maximumf %154, %155 : vector<256x8xf32>
    %cst_172 = arith.constant 0.000000e+00 : f32
    %157 = vector.broadcast %cst_172 : f32 to vector<18x18x8xf32>
    %c0_173 = arith.constant 0 : index
    %c0_174 = arith.constant 0 : index
    %c0_175 = arith.constant 0 : index
    %158 = vector.load %arg15[%c0_173, %c0_174, %c0_175] : memref<18x18x8xf32, #tpu.memory_space<vmem>>, vector<18x18x8xf32>
    tpu.vector_store %arg15[%c0_173, %c0_174, %c0_175], %157 {strides = array<i32>} : memref<18x18x8xf32, #tpu.memory_space<vmem>>, vector<18x18x8xf32>,
    %159 = vector.shape_cast %156 : vector<256x8xf32> to vector<16x16x8xf32>
    %c1_176 = arith.constant 1 : index
    %c1_177 = arith.constant 1 : index
    %c0_178 = arith.constant 0 : index
    %160 = vector.load %arg15[%c1_176, %c1_177, %c0_178] : memref<18x18x8xf32, #tpu.memory_space<vmem>>, vector<16x16x8xf32>
    tpu.vector_store %arg15[%c1_176, %c1_177, %c0_178], %159 {strides = array<i32>} : memref<18x18x8xf32, #tpu.memory_space<vmem>>, vector<16x16x8xf32>,
    %cst_179 = arith.constant 0.000000e+00 : f32
    %161 = vector.broadcast %cst_179 : f32 to vector<256x8xf32>
    %c0_180 = arith.constant 0 : index
    %c0_181 = arith.constant 0 : index
    %c0_182 = arith.constant 0 : index
    %162 = vector.load %arg15[%c0_180, %c0_181, %c0_182] : memref<18x18x8xf32, #tpu.memory_space<vmem>>, vector<16x16x8xf32>
    %163 = vector.shape_cast %162 : vector<16x16x8xf32> to vector<256x8xf32>
    %164 = arith.truncf %163 : vector<256x8xf32> to vector<256x8xbf16>
    %c0_183 = arith.constant 0 : index
    %c0_184 = arith.constant 0 : index
    %c0_185 = arith.constant 0 : index
    %c0_186 = arith.constant 0 : index
    %165 = vector.load %arg8[%c0_183, %c0_184, %c0_185, %c0_186] : memref<3x3x8x8xbf16, #tpu.memory_space<vmem>>, vector<1x1x8x8xbf16>
    %166 = vector.shape_cast %165 : vector<1x1x8x8xbf16> to vector<8x8xbf16>
    %cst_187 = arith.constant dense<0.000000e+00> : vector<256x8xf32>
    %167 = tpu.matmul %164, %166, %cst_187 {dimension_numbers = #tpu.dot_dimension_numbers<[1], [0], [0], [1], [0, 0, 1, 1], [], []>} : vector<256x8xbf16>, vector<8x8xbf16>, vector<256x8xf32> -> vector<256x8xf32>
    %168 = arith.addf %161, %167 : vector<256x8xf32>
    %c0_188 = arith.constant 0 : index
    %c1_189 = arith.constant 1 : index
    %c0_190 = arith.constant 0 : index
    %169 = vector.load %arg15[%c0_188, %c1_189, %c0_190] : memref<18x18x8xf32, #tpu.memory_space<vmem>>, vector<16x16x8xf32>
    %170 = vector.shape_cast %169 : vector<16x16x8xf32> to vector<256x8xf32>
    %171 = arith.truncf %170 : vector<256x8xf32> to vector<256x8xbf16>
    %c0_191 = arith.constant 0 : index
    %c1_192 = arith.constant 1 : index
    %c0_193 = arith.constant 0 : index
    %c0_194 = arith.constant 0 : index
    %172 = vector.load %arg8[%c0_191, %c1_192, %c0_193, %c0_194] : memref<3x3x8x8xbf16, #tpu.memory_space<vmem>>, vector<1x1x8x8xbf16>
    %173 = vector.shape_cast %172 : vector<1x1x8x8xbf16> to vector<8x8xbf16>
    %cst_195 = arith.constant dense<0.000000e+00> : vector<256x8xf32>
    %174 = tpu.matmul %171, %173, %cst_195 {dimension_numbers = #tpu.dot_dimension_numbers<[1], [0], [0], [1], [0, 0, 1, 1], [], []>} : vector<256x8xbf16>, vector<8x8xbf16>, vector<256x8xf32> -> vector<256x8xf32>
    %175 = arith.addf %168, %174 : vector<256x8xf32>
    %c0_196 = arith.constant 0 : index
    %c2_197 = arith.constant 2 : index
    %c0_198 = arith.constant 0 : index
    %176 = vector.load %arg15[%c0_196, %c2_197, %c0_198] : memref<18x18x8xf32, #tpu.memory_space<vmem>>, vector<16x16x8xf32>
    %177 = vector.shape_cast %176 : vector<16x16x8xf32> to vector<256x8xf32>
    %178 = arith.truncf %177 : vector<256x8xf32> to vector<256x8xbf16>
    %c0_199 = arith.constant 0 : index
    %c2_200 = arith.constant 2 : index
    %c0_201 = arith.constant 0 : index
    %c0_202 = arith.constant 0 : index
    %179 = vector.load %arg8[%c0_199, %c2_200, %c0_201, %c0_202] : memref<3x3x8x8xbf16, #tpu.memory_space<vmem>>, vector<1x1x8x8xbf16>
    %180 = vector.shape_cast %179 : vector<1x1x8x8xbf16> to vector<8x8xbf16>
    %cst_203 = arith.constant dense<0.000000e+00> : vector<256x8xf32>
    %181 = tpu.matmul %178, %180, %cst_203 {dimension_numbers = #tpu.dot_dimension_numbers<[1], [0], [0], [1], [0, 0, 1, 1], [], []>} : vector<256x8xbf16>, vector<8x8xbf16>, vector<256x8xf32> -> vector<256x8xf32>
    %182 = arith.addf %175, %181 : vector<256x8xf32>
    %c1_204 = arith.constant 1 : index
    %c0_205 = arith.constant 0 : index
    %c0_206 = arith.constant 0 : index
    %183 = vector.load %arg15[%c1_204, %c0_205, %c0_206] : memref<18x18x8xf32, #tpu.memory_space<vmem>>, vector<16x16x8xf32>
    %184 = vector.shape_cast %183 : vector<16x16x8xf32> to vector<256x8xf32>
    %185 = arith.truncf %184 : vector<256x8xf32> to vector<256x8xbf16>
    %c1_207 = arith.constant 1 : index
    %c0_208 = arith.constant 0 : index
    %c0_209 = arith.constant 0 : index
    %c0_210 = arith.constant 0 : index
    %186 = vector.load %arg8[%c1_207, %c0_208, %c0_209, %c0_210] : memref<3x3x8x8xbf16, #tpu.memory_space<vmem>>, vector<1x1x8x8xbf16>
    %187 = vector.shape_cast %186 : vector<1x1x8x8xbf16> to vector<8x8xbf16>
    %cst_211 = arith.constant dense<0.000000e+00> : vector<256x8xf32>
    %188 = tpu.matmul %185, %187, %cst_211 {dimension_numbers = #tpu.dot_dimension_numbers<[1], [0], [0], [1], [0, 0, 1, 1], [], []>} : vector<256x8xbf16>, vector<8x8xbf16>, vector<256x8xf32> -> vector<256x8xf32>
    %189 = arith.addf %182, %188 : vector<256x8xf32>
    %c1_212 = arith.constant 1 : index
    %c1_213 = arith.constant 1 : index
    %c0_214 = arith.constant 0 : index
    %190 = vector.load %arg15[%c1_212, %c1_213, %c0_214] : memref<18x18x8xf32, #tpu.memory_space<vmem>>, vector<16x16x8xf32>
    %191 = vector.shape_cast %190 : vector<16x16x8xf32> to vector<256x8xf32>
    %192 = arith.truncf %191 : vector<256x8xf32> to vector<256x8xbf16>
    %c1_215 = arith.constant 1 : index
    %c1_216 = arith.constant 1 : index
    %c0_217 = arith.constant 0 : index
    %c0_218 = arith.constant 0 : index
    %193 = vector.load %arg8[%c1_215, %c1_216, %c0_217, %c0_218] : memref<3x3x8x8xbf16, #tpu.memory_space<vmem>>, vector<1x1x8x8xbf16>
    %194 = vector.shape_cast %193 : vector<1x1x8x8xbf16> to vector<8x8xbf16>
    %cst_219 = arith.constant dense<0.000000e+00> : vector<256x8xf32>
    %195 = tpu.matmul %192, %194, %cst_219 {dimension_numbers = #tpu.dot_dimension_numbers<[1], [0], [0], [1], [0, 0, 1, 1], [], []>} : vector<256x8xbf16>, vector<8x8xbf16>, vector<256x8xf32> -> vector<256x8xf32>
    %196 = arith.addf %189, %195 : vector<256x8xf32>
    %c1_220 = arith.constant 1 : index
    %c2_221 = arith.constant 2 : index
    %c0_222 = arith.constant 0 : index
    %197 = vector.load %arg15[%c1_220, %c2_221, %c0_222] : memref<18x18x8xf32, #tpu.memory_space<vmem>>, vector<16x16x8xf32>
    %198 = vector.shape_cast %197 : vector<16x16x8xf32> to vector<256x8xf32>
    %199 = arith.truncf %198 : vector<256x8xf32> to vector<256x8xbf16>
    %c1_223 = arith.constant 1 : index
    %c2_224 = arith.constant 2 : index
    %c0_225 = arith.constant 0 : index
    %c0_226 = arith.constant 0 : index
    %200 = vector.load %arg8[%c1_223, %c2_224, %c0_225, %c0_226] : memref<3x3x8x8xbf16, #tpu.memory_space<vmem>>, vector<1x1x8x8xbf16>
    %201 = vector.shape_cast %200 : vector<1x1x8x8xbf16> to vector<8x8xbf16>
    %cst_227 = arith.constant dense<0.000000e+00> : vector<256x8xf32>
    %202 = tpu.matmul %199, %201, %cst_227 {dimension_numbers = #tpu.dot_dimension_numbers<[1], [0], [0], [1], [0, 0, 1, 1], [], []>} : vector<256x8xbf16>, vector<8x8xbf16>, vector<256x8xf32> -> vector<256x8xf32>
    %203 = arith.addf %196, %202 : vector<256x8xf32>
    %c2_228 = arith.constant 2 : index
    %c0_229 = arith.constant 0 : index
    %c0_230 = arith.constant 0 : index
    %204 = vector.load %arg15[%c2_228, %c0_229, %c0_230] : memref<18x18x8xf32, #tpu.memory_space<vmem>>, vector<16x16x8xf32>
    %205 = vector.shape_cast %204 : vector<16x16x8xf32> to vector<256x8xf32>
    %206 = arith.truncf %205 : vector<256x8xf32> to vector<256x8xbf16>
    %c2_231 = arith.constant 2 : index
    %c0_232 = arith.constant 0 : index
    %c0_233 = arith.constant 0 : index
    %c0_234 = arith.constant 0 : index
    %207 = vector.load %arg8[%c2_231, %c0_232, %c0_233, %c0_234] : memref<3x3x8x8xbf16, #tpu.memory_space<vmem>>, vector<1x1x8x8xbf16>
    %208 = vector.shape_cast %207 : vector<1x1x8x8xbf16> to vector<8x8xbf16>
    %cst_235 = arith.constant dense<0.000000e+00> : vector<256x8xf32>
    %209 = tpu.matmul %206, %208, %cst_235 {dimension_numbers = #tpu.dot_dimension_numbers<[1], [0], [0], [1], [0, 0, 1, 1], [], []>} : vector<256x8xbf16>, vector<8x8xbf16>, vector<256x8xf32> -> vector<256x8xf32>
    %210 = arith.addf %203, %209 : vector<256x8xf32>
    %c2_236 = arith.constant 2 : index
    %c1_237 = arith.constant 1 : index
    %c0_238 = arith.constant 0 : index
    %211 = vector.load %arg15[%c2_236, %c1_237, %c0_238] : memref<18x18x8xf32, #tpu.memory_space<vmem>>, vector<16x16x8xf32>
    %212 = vector.shape_cast %211 : vector<16x16x8xf32> to vector<256x8xf32>
    %213 = arith.truncf %212 : vector<256x8xf32> to vector<256x8xbf16>
    %c2_239 = arith.constant 2 : index
    %c1_240 = arith.constant 1 : index
    %c0_241 = arith.constant 0 : index
    %c0_242 = arith.constant 0 : index
    %214 = vector.load %arg8[%c2_239, %c1_240, %c0_241, %c0_242] : memref<3x3x8x8xbf16, #tpu.memory_space<vmem>>, vector<1x1x8x8xbf16>
    %215 = vector.shape_cast %214 : vector<1x1x8x8xbf16> to vector<8x8xbf16>
    %cst_243 = arith.constant dense<0.000000e+00> : vector<256x8xf32>
    %216 = tpu.matmul %213, %215, %cst_243 {dimension_numbers = #tpu.dot_dimension_numbers<[1], [0], [0], [1], [0, 0, 1, 1], [], []>} : vector<256x8xbf16>, vector<8x8xbf16>, vector<256x8xf32> -> vector<256x8xf32>
    %217 = arith.addf %210, %216 : vector<256x8xf32>
    %c2_244 = arith.constant 2 : index
    %c2_245 = arith.constant 2 : index
    %c0_246 = arith.constant 0 : index
    %218 = vector.load %arg15[%c2_244, %c2_245, %c0_246] : memref<18x18x8xf32, #tpu.memory_space<vmem>>, vector<16x16x8xf32>
    %219 = vector.shape_cast %218 : vector<16x16x8xf32> to vector<256x8xf32>
    %220 = arith.truncf %219 : vector<256x8xf32> to vector<256x8xbf16>
    %c2_247 = arith.constant 2 : index
    %c2_248 = arith.constant 2 : index
    %c0_249 = arith.constant 0 : index
    %c0_250 = arith.constant 0 : index
    %221 = vector.load %arg8[%c2_247, %c2_248, %c0_249, %c0_250] : memref<3x3x8x8xbf16, #tpu.memory_space<vmem>>, vector<1x1x8x8xbf16>
    %222 = vector.shape_cast %221 : vector<1x1x8x8xbf16> to vector<8x8xbf16>
    %cst_251 = arith.constant dense<0.000000e+00> : vector<256x8xf32>
    %223 = tpu.matmul %220, %222, %cst_251 {dimension_numbers = #tpu.dot_dimension_numbers<[1], [0], [0], [1], [0, 0, 1, 1], [], []>} : vector<256x8xbf16>, vector<8x8xbf16>, vector<256x8xf32> -> vector<256x8xf32>
    %224 = arith.addf %217, %223 : vector<256x8xf32>
    %c0_252 = arith.constant 0 : index
    %c0_253 = arith.constant 0 : index
    %225 = vector.load %arg9[%c0_252, %c0_253] : memref<1x8xf32, #tpu.memory_space<vmem>>, vector<1x8xf32>
    %226 = vector.broadcast %225 : vector<1x8xf32> to vector<256x8xf32>
    %227 = arith.addf %224, %226 : vector<256x8xf32>
    %cst_254 = arith.constant 0.000000e+00 : f32
    %228 = vector.broadcast %cst_254 : f32 to vector<256x8xf32>
    %229 = arith.maximumf %227, %228 : vector<256x8xf32>
    %cst_255 = arith.constant 0.000000e+00 : f32
    %230 = vector.broadcast %cst_255 : f32 to vector<16x16x4xf32>
    %c0_256 = arith.constant 0 : index
    %c0_257 = arith.constant 0 : index
    %c0_258 = arith.constant 0 : index
    %231 = vector.load %arg13[%c0_256, %c0_257, %c0_258] : memref<18x18x4xf32, #tpu.memory_space<vmem>>, vector<16x16x4xf32>
    %232 = arith.addf %230, %231 : vector<16x16x4xf32>
    %c0_259 = arith.constant 0 : index
    %c1_260 = arith.constant 1 : index
    %c0_261 = arith.constant 0 : index
    %233 = vector.load %arg13[%c0_259, %c1_260, %c0_261] : memref<18x18x4xf32, #tpu.memory_space<vmem>>, vector<16x16x4xf32>
    %234 = arith.addf %232, %233 : vector<16x16x4xf32>
    %c0_262 = arith.constant 0 : index
    %c2_263 = arith.constant 2 : index
    %c0_264 = arith.constant 0 : index
    %235 = vector.load %arg13[%c0_262, %c2_263, %c0_264] : memref<18x18x4xf32, #tpu.memory_space<vmem>>, vector<16x16x4xf32>
    %236 = arith.addf %234, %235 : vector<16x16x4xf32>
    %c1_265 = arith.constant 1 : index
    %c0_266 = arith.constant 0 : index
    %c0_267 = arith.constant 0 : index
    %237 = vector.load %arg13[%c1_265, %c0_266, %c0_267] : memref<18x18x4xf32, #tpu.memory_space<vmem>>, vector<16x16x4xf32>
    %238 = arith.addf %236, %237 : vector<16x16x4xf32>
    %c1_268 = arith.constant 1 : index
    %c1_269 = arith.constant 1 : index
    %c0_270 = arith.constant 0 : index
    %239 = vector.load %arg13[%c1_268, %c1_269, %c0_270] : memref<18x18x4xf32, #tpu.memory_space<vmem>>, vector<16x16x4xf32>
    %240 = arith.addf %238, %239 : vector<16x16x4xf32>
    %c1_271 = arith.constant 1 : index
    %c2_272 = arith.constant 2 : index
    %c0_273 = arith.constant 0 : index
    %241 = vector.load %arg13[%c1_271, %c2_272, %c0_273] : memref<18x18x4xf32, #tpu.memory_space<vmem>>, vector<16x16x4xf32>
    %242 = arith.addf %240, %241 : vector<16x16x4xf32>
    %c2_274 = arith.constant 2 : index
    %c0_275 = arith.constant 0 : index
    %c0_276 = arith.constant 0 : index
    %243 = vector.load %arg13[%c2_274, %c0_275, %c0_276] : memref<18x18x4xf32, #tpu.memory_space<vmem>>, vector<16x16x4xf32>
    %244 = arith.addf %242, %243 : vector<16x16x4xf32>
    %c2_277 = arith.constant 2 : index
    %c1_278 = arith.constant 1 : index
    %c0_279 = arith.constant 0 : index
    %245 = vector.load %arg13[%c2_277, %c1_278, %c0_279] : memref<18x18x4xf32, #tpu.memory_space<vmem>>, vector<16x16x4xf32>
    %246 = arith.addf %244, %245 : vector<16x16x4xf32>
    %c2_280 = arith.constant 2 : index
    %c2_281 = arith.constant 2 : index
    %c0_282 = arith.constant 0 : index
    %247 = vector.load %arg13[%c2_280, %c2_281, %c0_282] : memref<18x18x4xf32, #tpu.memory_space<vmem>>, vector<16x16x4xf32>
    %248 = arith.addf %246, %247 : vector<16x16x4xf32>
    %cst_283 = arith.constant 0.000000e+00 : f32
    %249 = vector.broadcast %cst_283 : f32 to vector<18x18x4xf32>
    %c0_284 = arith.constant 0 : index
    %c0_285 = arith.constant 0 : index
    %c0_286 = arith.constant 0 : index
    %250 = vector.load %arg16[%c0_284, %c0_285, %c0_286] : memref<18x18x4xf32, #tpu.memory_space<vmem>>, vector<18x18x4xf32>
    tpu.vector_store %arg16[%c0_284, %c0_285, %c0_286], %249 {strides = array<i32>} : memref<18x18x4xf32, #tpu.memory_space<vmem>>, vector<18x18x4xf32>,
    %cst_287 = arith.constant 0.111111112 : f32
    %251 = vector.broadcast %cst_287 : f32 to vector<16x16x4xf32>
    %252 = arith.mulf %248, %251 : vector<16x16x4xf32>
    %c1_288 = arith.constant 1 : index
    %c1_289 = arith.constant 1 : index
    %c0_290 = arith.constant 0 : index
    %253 = vector.load %arg16[%c1_288, %c1_289, %c0_290] : memref<18x18x4xf32, #tpu.memory_space<vmem>>, vector<16x16x4xf32>
    tpu.vector_store %arg16[%c1_288, %c1_289, %c0_290], %252 {strides = array<i32>} : memref<18x18x4xf32, #tpu.memory_space<vmem>>, vector<16x16x4xf32>,
    %cst_291 = arith.constant 0.000000e+00 : f32
    %254 = vector.broadcast %cst_291 : f32 to vector<256x8xf32>
    %c0_292 = arith.constant 0 : index
    %c0_293 = arith.constant 0 : index
    %c0_294 = arith.constant 0 : index
    %255 = vector.load %arg16[%c0_292, %c0_293, %c0_294] : memref<18x18x4xf32, #tpu.memory_space<vmem>>, vector<16x16x4xf32>
    %256 = vector.shape_cast %255 : vector<16x16x4xf32> to vector<256x4xf32>
    %257 = arith.truncf %256 : vector<256x4xf32> to vector<256x4xbf16>
    %c0_295 = arith.constant 0 : index
    %c0_296 = arith.constant 0 : index
    %c0_297 = arith.constant 0 : index
    %c0_298 = arith.constant 0 : index
    %258 = vector.load %arg10[%c0_295, %c0_296, %c0_297, %c0_298] : memref<3x3x4x8xbf16, #tpu.memory_space<vmem>>, vector<1x1x4x8xbf16>
    %259 = vector.shape_cast %258 : vector<1x1x4x8xbf16> to vector<4x8xbf16>
    %cst_299 = arith.constant dense<0.000000e+00> : vector<256x8xf32>
    %260 = tpu.matmul %257, %259, %cst_299 {dimension_numbers = #tpu.dot_dimension_numbers<[1], [0], [0], [1], [0, 0, 1, 1], [], []>} : vector<256x4xbf16>, vector<4x8xbf16>, vector<256x8xf32> -> vector<256x8xf32>
    %261 = arith.addf %254, %260 : vector<256x8xf32>
    %c0_300 = arith.constant 0 : index
    %c1_301 = arith.constant 1 : index
    %c0_302 = arith.constant 0 : index
    %262 = vector.load %arg16[%c0_300, %c1_301, %c0_302] : memref<18x18x4xf32, #tpu.memory_space<vmem>>, vector<16x16x4xf32>
    %263 = vector.shape_cast %262 : vector<16x16x4xf32> to vector<256x4xf32>
    %264 = arith.truncf %263 : vector<256x4xf32> to vector<256x4xbf16>
    %c0_303 = arith.constant 0 : index
    %c1_304 = arith.constant 1 : index
    %c0_305 = arith.constant 0 : index
    %c0_306 = arith.constant 0 : index
    %265 = vector.load %arg10[%c0_303, %c1_304, %c0_305, %c0_306] : memref<3x3x4x8xbf16, #tpu.memory_space<vmem>>, vector<1x1x4x8xbf16>
    %266 = vector.shape_cast %265 : vector<1x1x4x8xbf16> to vector<4x8xbf16>
    %cst_307 = arith.constant dense<0.000000e+00> : vector<256x8xf32>
    %267 = tpu.matmul %264, %266, %cst_307 {dimension_numbers = #tpu.dot_dimension_numbers<[1], [0], [0], [1], [0, 0, 1, 1], [], []>} : vector<256x4xbf16>, vector<4x8xbf16>, vector<256x8xf32> -> vector<256x8xf32>
    %268 = arith.addf %261, %267 : vector<256x8xf32>
    %c0_308 = arith.constant 0 : index
    %c2_309 = arith.constant 2 : index
    %c0_310 = arith.constant 0 : index
    %269 = vector.load %arg16[%c0_308, %c2_309, %c0_310] : memref<18x18x4xf32, #tpu.memory_space<vmem>>, vector<16x16x4xf32>
    %270 = vector.shape_cast %269 : vector<16x16x4xf32> to vector<256x4xf32>
    %271 = arith.truncf %270 : vector<256x4xf32> to vector<256x4xbf16>
    %c0_311 = arith.constant 0 : index
    %c2_312 = arith.constant 2 : index
    %c0_313 = arith.constant 0 : index
    %c0_314 = arith.constant 0 : index
    %272 = vector.load %arg10[%c0_311, %c2_312, %c0_313, %c0_314] : memref<3x3x4x8xbf16, #tpu.memory_space<vmem>>, vector<1x1x4x8xbf16>
    %273 = vector.shape_cast %272 : vector<1x1x4x8xbf16> to vector<4x8xbf16>
    %cst_315 = arith.constant dense<0.000000e+00> : vector<256x8xf32>
    %274 = tpu.matmul %271, %273, %cst_315 {dimension_numbers = #tpu.dot_dimension_numbers<[1], [0], [0], [1], [0, 0, 1, 1], [], []>} : vector<256x4xbf16>, vector<4x8xbf16>, vector<256x8xf32> -> vector<256x8xf32>
    %275 = arith.addf %268, %274 : vector<256x8xf32>
    %c1_316 = arith.constant 1 : index
    %c0_317 = arith.constant 0 : index
    %c0_318 = arith.constant 0 : index
    %276 = vector.load %arg16[%c1_316, %c0_317, %c0_318] : memref<18x18x4xf32, #tpu.memory_space<vmem>>, vector<16x16x4xf32>
    %277 = vector.shape_cast %276 : vector<16x16x4xf32> to vector<256x4xf32>
    %278 = arith.truncf %277 : vector<256x4xf32> to vector<256x4xbf16>
    %c1_319 = arith.constant 1 : index
    %c0_320 = arith.constant 0 : index
    %c0_321 = arith.constant 0 : index
    %c0_322 = arith.constant 0 : index
    %279 = vector.load %arg10[%c1_319, %c0_320, %c0_321, %c0_322] : memref<3x3x4x8xbf16, #tpu.memory_space<vmem>>, vector<1x1x4x8xbf16>
    %280 = vector.shape_cast %279 : vector<1x1x4x8xbf16> to vector<4x8xbf16>
    %cst_323 = arith.constant dense<0.000000e+00> : vector<256x8xf32>
    %281 = tpu.matmul %278, %280, %cst_323 {dimension_numbers = #tpu.dot_dimension_numbers<[1], [0], [0], [1], [0, 0, 1, 1], [], []>} : vector<256x4xbf16>, vector<4x8xbf16>, vector<256x8xf32> -> vector<256x8xf32>
    %282 = arith.addf %275, %281 : vector<256x8xf32>
    %c1_324 = arith.constant 1 : index
    %c1_325 = arith.constant 1 : index
    %c0_326 = arith.constant 0 : index
    %283 = vector.load %arg16[%c1_324, %c1_325, %c0_326] : memref<18x18x4xf32, #tpu.memory_space<vmem>>, vector<16x16x4xf32>
    %284 = vector.shape_cast %283 : vector<16x16x4xf32> to vector<256x4xf32>
    %285 = arith.truncf %284 : vector<256x4xf32> to vector<256x4xbf16>
    %c1_327 = arith.constant 1 : index
    %c1_328 = arith.constant 1 : index
    %c0_329 = arith.constant 0 : index
    %c0_330 = arith.constant 0 : index
    %286 = vector.load %arg10[%c1_327, %c1_328, %c0_329, %c0_330] : memref<3x3x4x8xbf16, #tpu.memory_space<vmem>>, vector<1x1x4x8xbf16>
    %287 = vector.shape_cast %286 : vector<1x1x4x8xbf16> to vector<4x8xbf16>
    %cst_331 = arith.constant dense<0.000000e+00> : vector<256x8xf32>
    %288 = tpu.matmul %285, %287, %cst_331 {dimension_numbers = #tpu.dot_dimension_numbers<[1], [0], [0], [1], [0, 0, 1, 1], [], []>} : vector<256x4xbf16>, vector<4x8xbf16>, vector<256x8xf32> -> vector<256x8xf32>
    %289 = arith.addf %282, %288 : vector<256x8xf32>
    %c1_332 = arith.constant 1 : index
    %c2_333 = arith.constant 2 : index
    %c0_334 = arith.constant 0 : index
    %290 = vector.load %arg16[%c1_332, %c2_333, %c0_334] : memref<18x18x4xf32, #tpu.memory_space<vmem>>, vector<16x16x4xf32>
    %291 = vector.shape_cast %290 : vector<16x16x4xf32> to vector<256x4xf32>
    %292 = arith.truncf %291 : vector<256x4xf32> to vector<256x4xbf16>
    %c1_335 = arith.constant 1 : index
    %c2_336 = arith.constant 2 : index
    %c0_337 = arith.constant 0 : index
    %c0_338 = arith.constant 0 : index
    %293 = vector.load %arg10[%c1_335, %c2_336, %c0_337, %c0_338] : memref<3x3x4x8xbf16, #tpu.memory_space<vmem>>, vector<1x1x4x8xbf16>
    %294 = vector.shape_cast %293 : vector<1x1x4x8xbf16> to vector<4x8xbf16>
    %cst_339 = arith.constant dense<0.000000e+00> : vector<256x8xf32>
    %295 = tpu.matmul %292, %294, %cst_339 {dimension_numbers = #tpu.dot_dimension_numbers<[1], [0], [0], [1], [0, 0, 1, 1], [], []>} : vector<256x4xbf16>, vector<4x8xbf16>, vector<256x8xf32> -> vector<256x8xf32>
    %296 = arith.addf %289, %295 : vector<256x8xf32>
    %c2_340 = arith.constant 2 : index
    %c0_341 = arith.constant 0 : index
    %c0_342 = arith.constant 0 : index
    %297 = vector.load %arg16[%c2_340, %c0_341, %c0_342] : memref<18x18x4xf32, #tpu.memory_space<vmem>>, vector<16x16x4xf32>
    %298 = vector.shape_cast %297 : vector<16x16x4xf32> to vector<256x4xf32>
    %299 = arith.truncf %298 : vector<256x4xf32> to vector<256x4xbf16>
    %c2_343 = arith.constant 2 : index
    %c0_344 = arith.constant 0 : index
    %c0_345 = arith.constant 0 : index
    %c0_346 = arith.constant 0 : index
    %300 = vector.load %arg10[%c2_343, %c0_344, %c0_345, %c0_346] : memref<3x3x4x8xbf16, #tpu.memory_space<vmem>>, vector<1x1x4x8xbf16>
    %301 = vector.shape_cast %300 : vector<1x1x4x8xbf16> to vector<4x8xbf16>
    %cst_347 = arith.constant dense<0.000000e+00> : vector<256x8xf32>
    %302 = tpu.matmul %299, %301, %cst_347 {dimension_numbers = #tpu.dot_dimension_numbers<[1], [0], [0], [1], [0, 0, 1, 1], [], []>} : vector<256x4xbf16>, vector<4x8xbf16>, vector<256x8xf32> -> vector<256x8xf32>
    %303 = arith.addf %296, %302 : vector<256x8xf32>
    %c2_348 = arith.constant 2 : index
    %c1_349 = arith.constant 1 : index
    %c0_350 = arith.constant 0 : index
    %304 = vector.load %arg16[%c2_348, %c1_349, %c0_350] : memref<18x18x4xf32, #tpu.memory_space<vmem>>, vector<16x16x4xf32>
    %305 = vector.shape_cast %304 : vector<16x16x4xf32> to vector<256x4xf32>
    %306 = arith.truncf %305 : vector<256x4xf32> to vector<256x4xbf16>
    %c2_351 = arith.constant 2 : index
    %c1_352 = arith.constant 1 : index
    %c0_353 = arith.constant 0 : index
    %c0_354 = arith.constant 0 : index
    %307 = vector.load %arg10[%c2_351, %c1_352, %c0_353, %c0_354] : memref<3x3x4x8xbf16, #tpu.memory_space<vmem>>, vector<1x1x4x8xbf16>
    %308 = vector.shape_cast %307 : vector<1x1x4x8xbf16> to vector<4x8xbf16>
    %cst_355 = arith.constant dense<0.000000e+00> : vector<256x8xf32>
    %309 = tpu.matmul %306, %308, %cst_355 {dimension_numbers = #tpu.dot_dimension_numbers<[1], [0], [0], [1], [0, 0, 1, 1], [], []>} : vector<256x4xbf16>, vector<4x8xbf16>, vector<256x8xf32> -> vector<256x8xf32>
    %310 = arith.addf %303, %309 : vector<256x8xf32>
    %c2_356 = arith.constant 2 : index
    %c2_357 = arith.constant 2 : index
    %c0_358 = arith.constant 0 : index
    %311 = vector.load %arg16[%c2_356, %c2_357, %c0_358] : memref<18x18x4xf32, #tpu.memory_space<vmem>>, vector<16x16x4xf32>
    %312 = vector.shape_cast %311 : vector<16x16x4xf32> to vector<256x4xf32>
    %313 = arith.truncf %312 : vector<256x4xf32> to vector<256x4xbf16>
    %c2_359 = arith.constant 2 : index
    %c2_360 = arith.constant 2 : index
    %c0_361 = arith.constant 0 : index
    %c0_362 = arith.constant 0 : index
    %314 = vector.load %arg10[%c2_359, %c2_360, %c0_361, %c0_362] : memref<3x3x4x8xbf16, #tpu.memory_space<vmem>>, vector<1x1x4x8xbf16>
    %315 = vector.shape_cast %314 : vector<1x1x4x8xbf16> to vector<4x8xbf16>
    %cst_363 = arith.constant dense<0.000000e+00> : vector<256x8xf32>
    %316 = tpu.matmul %313, %315, %cst_363 {dimension_numbers = #tpu.dot_dimension_numbers<[1], [0], [0], [1], [0, 0, 1, 1], [], []>} : vector<256x4xbf16>, vector<4x8xbf16>, vector<256x8xf32> -> vector<256x8xf32>
    %317 = arith.addf %310, %316 : vector<256x8xf32>
    %c0_364 = arith.constant 0 : index
    %c0_365 = arith.constant 0 : index
    %318 = vector.load %arg11[%c0_364, %c0_365] : memref<1x8xf32, #tpu.memory_space<vmem>>, vector<1x8xf32>
    %319 = vector.broadcast %318 : vector<1x8xf32> to vector<256x8xf32>
    %320 = arith.addf %317, %319 : vector<256x8xf32>
    %cst_366 = arith.constant 0.000000e+00 : f32
    %321 = vector.broadcast %cst_366 : f32 to vector<256x8xf32>
    %322 = arith.maximumf %320, %321 : vector<256x8xf32>
    %323 = tpu.concatenate %14, %87, %229, %322 in 1 : vector<256x8xf32>, vector<256x8xf32>, vector<256x8xf32>, vector<256x8xf32> -> vector<256x32xf32>
    %324 = vector.shape_cast %323 : vector<256x32xf32> to vector<1x16x16x32xf32>
    %c0_367 = arith.constant 0 : index
    %c0_368 = arith.constant 0 : index
    %c0_369 = arith.constant 0 : index
    %c0_370 = arith.constant 0 : index
    %325 = vector.load %arg12[%c0_367, %c0_368, %c0_369, %c0_370] : memref<1x16x16x32xf32, #tpu.memory_space<vmem>>, vector<1x16x16x32xf32>
    tpu.vector_store %arg12[%c0_367, %c0_368, %c0_369, %c0_370], %324 {strides = array<i32>} : memref<1x16x16x32xf32, #tpu.memory_space<vmem>>, vector<1x16x16x32xf32>,
    return
  }
  func.func @transform_0(%arg0: i32) -> (i32, i32, i32, i32) {
    %c0_i32 = arith.constant 0 : i32
    %c0_i32_0 = arith.constant 0 : i32
    %c0_i32_1 = arith.constant 0 : i32
    %c0_i32_2 = arith.constant 0 : i32
    return %arg0, %c0_i32, %c0_i32_0, %c0_i32_1 : i32, i32, i32, i32
  }
  func.func @transform_1(%arg0: i32) -> (i32, i32) {
    %c0_i32 = arith.constant 0 : i32
    %c0_i32_0 = arith.constant 0 : i32
    %c0_i32_1 = arith.constant 0 : i32
    return %c0_i32, %c0_i32_0 : i32, i32
  }
  func.func @transform_2(%arg0: i32) -> (i32, i32) {
    %c0_i32 = arith.constant 0 : i32
    %c0_i32_0 = arith.constant 0 : i32
    %c0_i32_1 = arith.constant 0 : i32
    return %c0_i32, %c0_i32_0 : i32, i32
  }
  func.func @transform_3(%arg0: i32) -> (i32, i32, i32, i32) {
    %c0_i32 = arith.constant 0 : i32
    %c0_i32_0 = arith.constant 0 : i32
    %c0_i32_1 = arith.constant 0 : i32
    %c0_i32_2 = arith.constant 0 : i32
    %c0_i32_3 = arith.constant 0 : i32
    return %c0_i32, %c0_i32_0, %c0_i32_1, %c0_i32_2 : i32, i32, i32, i32
  }
  func.func @transform_4(%arg0: i32) -> (i32, i32) {
    %c0_i32 = arith.constant 0 : i32
    %c0_i32_0 = arith.constant 0 : i32
    %c0_i32_1 = arith.constant 0 : i32
    return %c0_i32, %c0_i32_0 : i32, i32
  }
  func.func @transform_5(%arg0: i32) -> (i32, i32, i32, i32) {
    %c0_i32 = arith.constant 0 : i32
    %c0_i32_0 = arith.constant 0 : i32
    %c0_i32_1 = arith.constant 0 : i32
    %c0_i32_2 = arith.constant 0 : i32
    %c0_i32_3 = arith.constant 0 : i32
    return %c0_i32, %c0_i32_0, %c0_i32_1, %c0_i32_2 : i32, i32, i32, i32
  }
  func.func @transform_6(%arg0: i32) -> (i32, i32) {
    %c0_i32 = arith.constant 0 : i32
    %c0_i32_0 = arith.constant 0 : i32
    %c0_i32_1 = arith.constant 0 : i32
    return %c0_i32, %c0_i32_0 : i32, i32
  }
  func.func @transform_7(%arg0: i32) -> (i32, i32, i32, i32) {
    %c0_i32 = arith.constant 0 : i32
    %c0_i32_0 = arith.constant 0 : i32
    %c0_i32_1 = arith.constant 0 : i32
    %c0_i32_2 = arith.constant 0 : i32
    %c0_i32_3 = arith.constant 0 : i32
    return %c0_i32, %c0_i32_0, %c0_i32_1, %c0_i32_2 : i32, i32, i32, i32
  }
  func.func @transform_8(%arg0: i32) -> (i32, i32) {
    %c0_i32 = arith.constant 0 : i32
    %c0_i32_0 = arith.constant 0 : i32
    %c0_i32_1 = arith.constant 0 : i32
    return %c0_i32, %c0_i32_0 : i32, i32
  }
  func.func @transform_9(%arg0: i32) -> (i32, i32, i32, i32) {
    %c0_i32 = arith.constant 0 : i32
    %c0_i32_0 = arith.constant 0 : i32
    %c0_i32_1 = arith.constant 0 : i32
    %c0_i32_2 = arith.constant 0 : i32
    %c0_i32_3 = arith.constant 0 : i32
    return %c0_i32, %c0_i32_0, %c0_i32_1, %c0_i32_2 : i32, i32, i32, i32
  }
  func.func @transform_10(%arg0: i32) -> (i32, i32) {
    %c0_i32 = arith.constant 0 : i32
    %c0_i32_0 = arith.constant 0 : i32
    %c0_i32_1 = arith.constant 0 : i32
    return %c0_i32, %c0_i32_0 : i32, i32
  }
  func.func @transform_11(%arg0: i32) -> (i32, i32, i32, i32) {
    %c0_i32 = arith.constant 0 : i32
    %c0_i32_0 = arith.constant 0 : i32
    %c0_i32_1 = arith.constant 0 : i32
    %c0_i32_2 = arith.constant 0 : i32
    return %arg0, %c0_i32, %c0_i32_0, %c0_i32_1 : i32, i32, i32, i32
  }
}

</mosaic_0001>

<llo_original>
// kernel: tpu_custom_call.1
$region0: #{tpu_custom_call.1}
  #allocation0 [shape = 'u32[]', space=smem, size = 0x4, offset = 0x4, fixed_abs, tag = 'smem constant byte address 0x4 - core index']
  #allocation1 [shape = 'u32[72,128]{1,0:T(1,128)}', space=vmem, size = 0x9000, scoped, tag = 'internal scratch']
  #allocation2 [shape = 'f32[18,18,4]{2,1,0:T(8,128)}', space=vmem, size = 0x36000, scoped, tag = 'scratch operand']
  #allocation3 [shape = 'f32[18,18,18]{2,1,0:T(8,128)}', space=vmem, size = 0x36000, scoped, tag = 'scratch operand']
  #allocation4 [shape = 'f32[18,18,8]{2,1,0:T(8,128)}', space=vmem, size = 0x36000, scoped, tag = 'scratch operand']
  #allocation5 [shape = 'f32[18,18,4]{2,1,0:T(8,128)}', space=vmem, size = 0x36000, scoped, tag = 'scratch operand']
  %s0 = inlined_call_operand.vmem [shape: f32[2,16,16,4], index: 0, kind: input, shape index: {}]
  %s1 = inlined_call_operand.vmem [shape: bf16[4,18], index: 1, kind: input, shape index: {}]
  %s2 = inlined_call_operand.vmem [shape: f32[1,18], index: 2, kind: input, shape index: {}]
  %s3 = inlined_call_operand.vmem [shape: bf16[3,3,18,8], index: 3, kind: input, shape index: {}]
  %s4 = inlined_call_operand.vmem [shape: f32[1,8], index: 4, kind: input, shape index: {}]
  %s5 = inlined_call_operand.vmem [shape: bf16[3,3,18,8], index: 5, kind: input, shape index: {}]
  %s6 = inlined_call_operand.vmem [shape: f32[1,8], index: 6, kind: input, shape index: {}]
  %s7 = inlined_call_operand.vmem [shape: bf16[3,3,8,8], index: 7, kind: input, shape index: {}]
  %s8 = inlined_call_operand.vmem [shape: f32[1,8], index: 8, kind: input, shape index: {}]
  %s9 = inlined_call_operand.vmem [shape: bf16[3,3,4,8], index: 9, kind: input, shape index: {}]
  %s10 = inlined_call_operand.vmem [shape: f32[1,8], index: 10, kind: input, shape index: {}]
  %s11 = inlined_call_operand.hbm [shape: f32[2,16,16,32], index: 11, kind: output, shape index: {}]
  %s12 = sld [smem:[#allocation0]]
  $region77: #{tpu_custom_call.1} parent=0
    _
  %s14 = ssub.s32 1, %s12
  %s15 = scalar_select 0, %s14, %s12
  $region1: #{tpu_custom_call.1} parent=0
    #allocation6 [shape = 'u8[262144]{0}', space=vmem, size = 0x40000, scoped, tag = 'output window, operand 0']
    #allocation7 [shape = 's32[2]{0}', space=sflag, size = 0x8, scoped, tag = 'scoped memory for tpu_custom_call.1']
    %16 = vsyncpa [#allocation7], 0
    %s17 = scalar_lea.sflag [#allocation7], 1
    %18 = vsyncpa %s17, 0
    loop: start=0, step=1, limit=4
    $region2: #{tpu_custom_call.1} parent=1 // loop_pre_header
      _
    $region3: #{tpu_custom_call.1} parent=1 // loop_header
      %s20 = sphi 0, %s24
      %p21 = scmp.ge.s32.totalorder %s20, 4
      %s30 = sphi 0, %s32
      %s33 = sphi 0, %s30
      %s34 = sphi 0, %s33
      %s50 = sphi 0, %s34
      %s54 = sphi 0, %s54
      %s56 = sphi 0, %s54
      %s57 = sphi 0, %s56
      %s71 = sphi 0, %s57
      %s75 = sphi 0, %s75
      %s77 = sphi 0, %s75
      %s78 = sphi 0, %s77
      %s92 = sphi 0, %s78
      %s96 = sphi 0, %s96
      %s98 = sphi 0, %s96
      %s99 = sphi 0, %s98
      %s113 = sphi 0, %s99
      %s117 = sphi 0, %s117
      %s119 = sphi 0, %s117
      %s120 = sphi 0, %s119
      %s134 = sphi 0, %s120
      %s138 = sphi 0, %s138
      %s140 = sphi 0, %s138
      %s141 = sphi 0, %s140
      %s155 = sphi 0, %s141
      %s159 = sphi 0, %s159
      %s161 = sphi 0, %s159
      %s162 = sphi 0, %s161
      %s176 = sphi 0, %s162
      %s180 = sphi 0, %s180
      %s182 = sphi 0, %s180
      %s183 = sphi 0, %s182
      %s197 = sphi 0, %s183
      %s201 = sphi 0, %s201
      %s203 = sphi 0, %s201
      %s204 = sphi 0, %s203
      %s218 = sphi 0, %s204
      %s222 = sphi 0, %s222
      %s224 = sphi 0, %s222
      %s225 = sphi 0, %s224
      %s239 = sphi 0, %s225
      %s243 = sphi 0, %s243
      %s245 = sphi 0, %s243
      %s246 = sphi 0, %s245
      %s260 = sphi 0, %s246
      %s266 = sphi 0, %s268
      %s269 = sphi 0, %s266
      %s270 = sphi 0, %s269
      %s286 = sphi 0, %s270
    $region4: #{tpu_custom_call.1} parent=1 // loop_header_branch
      %23 = sbr.rel (%p21) target = $region8
    $region5: #{tpu_custom_call.1} parent=1 // loop_body
      %s25 = ssub.s32 %s20, 1
      %s26 = ssub.s32 %s20, 2
      %s27 = sadd.s32 %s20, 1
      %s28 = ssub.s32 %s20, %s27
      %p29 = scmp.eq.s32.totalorder %s28, 0
      %s31 = sadd.s32 %s30, 1
      %s32 = scalar_select %p29, %s30, %s31
      %p35 = pneg %p29
      %p36 = scmp.eq.s32.totalorder %s20, 1
      %p37 = por %p35, %p36
      %p38 = scmp.ne.s32.totalorder %s30, %s33
      %p39 = scmp.eq.s32.totalorder %s20, 0
      %p40 = por %p38, %p39
      %p41 = scmp.ne.s32.totalorder %s30, %s33
      %p42 = scmp.eq.s32.totalorder %s25, 1
      %p43 = por %p41, %p42
      %p44 = scmp.ne.s32.totalorder %s33, %s34
      %p45 = scmp.eq.s32.totalorder %s25, 0
      %p46 = por %p44, %p45
      %p47 = scmp.ne.s32.totalorder %s33, %s34
      %p48 = scmp.eq.s32.totalorder %s26, 1
      %p49 = por %p47, %p48
      %p51 = scmp.ne.s32.totalorder %s34, %s50
      %p52 = scmp.eq.s32.totalorder %s26, 0
      %p53 = por %p51, %p52
      %s55 = sadd.s32 %s54, 1
      %p58 = scmp.eq.s32.totalorder %s20, 1
      %p59 = scmp.ne.s32.totalorder %s54, %s56
      %p60 = scmp.eq.s32.totalorder %s20, 0
      %p61 = por %p59, %p60
      %p62 = scmp.ne.s32.totalorder %s54, %s56
      %p63 = scmp.eq.s32.totalorder %s25, 1
      %p64 = por %p62, %p63
      %p65 = scmp.ne.s32.totalorder %s56, %s57
      %p66 = scmp.eq.s32.totalorder %s25, 0
      %p67 = por %p65, %p66
      %p68 = scmp.ne.s32.totalorder %s56, %s57
      %p69 = scmp.eq.s32.totalorder %s26, 1
      %p70 = por %p68, %p69
      %p72 = scmp.ne.s32.totalorder %s57, %s71
      %p73 = scmp.eq.s32.totalorder %s26, 0
      %p74 = por %p72, %p73
      %s76 = sadd.s32 %s75, 1
      %p79 = scmp.eq.s32.totalorder %s20, 1
      %p80 = scmp.ne.s32.totalorder %s75, %s77
      %p81 = scmp.eq.s32.totalorder %s20, 0
      %p82 = por %p80, %p81
      %p83 = scmp.ne.s32.totalorder %s75, %s77
      %p84 = scmp.eq.s32.totalorder %s25, 1
      %p85 = por %p83, %p84
      %p86 = scmp.ne.s32.totalorder %s77, %s78
      %p87 = scmp.eq.s32.totalorder %s25, 0
      %p88 = por %p86, %p87
      %p89 = scmp.ne.s32.totalorder %s77, %s78
      %p90 = scmp.eq.s32.totalorder %s26, 1
      %p91 = por %p89, %p90
      %p93 = scmp.ne.s32.totalorder %s78, %s92
      %p94 = scmp.eq.s32.totalorder %s26, 0
      %p95 = por %p93, %p94
      %s97 = sadd.s32 %s96, 1
      %p100 = scmp.eq.s32.totalorder %s20, 1
      %p101 = scmp.ne.s32.totalorder %s96, %s98
      %p102 = scmp.eq.s32.totalorder %s20, 0
      %p103 = por %p101, %p102
      %p104 = scmp.ne.s32.totalorder %s96, %s98
      %p105 = scmp.eq.s32.totalorder %s25, 1
      %p106 = por %p104, %p105
      %p107 = scmp.ne.s32.totalorder %s98, %s99
      %p108 = scmp.eq.s32.totalorder %s25, 0
      %p109 = por %p107, %p108
      %p110 = scmp.ne.s32.totalorder %s98, %s99
      %p111 = scmp.eq.s32.totalorder %s26, 1
      %p112 = por %p110, %p111
      %p114 = scmp.ne.s32.totalorder %s99, %s113
      %p115 = scmp.eq.s32.totalorder %s26, 0
      %p116 = por %p114, %p115
      %s118 = sadd.s32 %s117, 1
      %p121 = scmp.eq.s32.totalorder %s20, 1
      %p122 = scmp.ne.s32.totalorder %s117, %s119
      %p123 = scmp.eq.s32.totalorder %s20, 0
      %p124 = por %p122, %p123
      %p125 = scmp.ne.s32.totalorder %s117, %s119
      %p126 = scmp.eq.s32.totalorder %s25, 1
      %p127 = por %p125, %p126
      %p128 = scmp.ne.s32.totalorder %s119, %s120
      %p129 = scmp.eq.s32.totalorder %s25, 0
      %p130 = por %p128, %p129
      %p131 = scmp.ne.s32.totalorder %s119, %s120
      %p132 = scmp.eq.s32.totalorder %s26, 1
      %p133 = por %p131, %p132
      %p135 = scmp.ne.s32.totalorder %s120, %s134
      %p136 = scmp.eq.s32.totalorder %s26, 0
      %p137 = por %p135, %p136
      %s139 = sadd.s32 %s138, 1
      %p142 = scmp.eq.s32.totalorder %s20, 1
      %p143 = scmp.ne.s32.totalorder %s138, %s140
      %p144 = scmp.eq.s32.totalorder %s20, 0
      %p145 = por %p143, %p144
      %p146 = scmp.ne.s32.totalorder %s138, %s140
      %p147 = scmp.eq.s32.totalorder %s25, 1
      %p148 = por %p146, %p147
      %p149 = scmp.ne.s32.totalorder %s140, %s141
      %p150 = scmp.eq.s32.totalorder %s25, 0
      %p151 = por %p149, %p150
      %p152 = scmp.ne.s32.totalorder %s140, %s141
      %p153 = scmp.eq.s32.totalorder %s26, 1
      %p154 = por %p152, %p153
      %p156 = scmp.ne.s32.totalorder %s141, %s155
      %p157 = scmp.eq.s32.totalorder %s26, 0
      %p158 = por %p156, %p157
      %s160 = sadd.s32 %s159, 1
      %p163 = scmp.eq.s32.totalorder %s20, 1
      %p164 = scmp.ne.s32.totalorder %s159, %s161
      %p165 = scmp.eq.s32.totalorder %s20, 0
      %p166 = por %p164, %p165
      %p167 = scmp.ne.s32.totalorder %s159, %s161
      %p168 = scmp.eq.s32.totalorder %s25, 1
      %p169 = por %p167, %p168
      %p170 = scmp.ne.s32.totalorder %s161, %s162
      %p171 = scmp.eq.s32.totalorder %s25, 0
      %p172 = por %p170, %p171
      %p173 = scmp.ne.s32.totalorder %s161, %s162
      %p174 = scmp.eq.s32.totalorder %s26, 1
      %p175 = por %p173, %p174
      %p177 = scmp.ne.s32.totalorder %s162, %s176
      %p178 = scmp.eq.s32.totalorder %s26, 0
      %p179 = por %p177, %p178
      %s181 = sadd.s32 %s180, 1
      %p184 = scmp.eq.s32.totalorder %s20, 1
      %p185 = scmp.ne.s32.totalorder %s180, %s182
      %p186 = scmp.eq.s32.totalorder %s20, 0
      %p187 = por %p185, %p186
      %p188 = scmp.ne.s32.totalorder %s180, %s182
      %p189 = scmp.eq.s32.totalorder %s25, 1
      %p190 = por %p188, %p189
      %p191 = scmp.ne.s32.totalorder %s182, %s183
      %p192 = scmp.eq.s32.totalorder %s25, 0
      %p193 = por %p191, %p192
      %p194 = scmp.ne.s32.totalorder %s182, %s183
      %p195 = scmp.eq.s32.totalorder %s26, 1
      %p196 = por %p194, %p195
      %p198 = scmp.ne.s32.totalorder %s183, %s197
      %p199 = scmp.eq.s32.totalorder %s26, 0
      %p200 = por %p198, %p199
      %s202 = sadd.s32 %s201, 1
      %p205 = scmp.eq.s32.totalorder %s20, 1
      %p206 = scmp.ne.s32.totalorder %s201, %s203
      %p207 = scmp.eq.s32.totalorder %s20, 0
      %p208 = por %p206, %p207
      %p209 = scmp.ne.s32.totalorder %s201, %s203
      %p210 = scmp.eq.s32.totalorder %s25, 1
      %p211 = por %p209, %p210
      %p212 = scmp.ne.s32.totalorder %s203, %s204
      %p213 = scmp.eq.s32.totalorder %s25, 0
      %p214 = por %p212, %p213
      %p215 = scmp.ne.s32.totalorder %s203, %s204
      %p216 = scmp.eq.s32.totalorder %s26, 1
      %p217 = por %p215, %p216
      %p219 = scmp.ne.s32.totalorder %s204, %s218
      %p220 = scmp.eq.s32.totalorder %s26, 0
      %p221 = por %p219, %p220
      %s223 = sadd.s32 %s222, 1
      %p226 = scmp.eq.s32.totalorder %s20, 1
      %p227 = scmp.ne.s32.totalorder %s222, %s224
      %p228 = scmp.eq.s32.totalorder %s20, 0
      %p229 = por %p227, %p228
      %p230 = scmp.ne.s32.totalorder %s222, %s224
      %p231 = scmp.eq.s32.totalorder %s25, 1
      %p232 = por %p230, %p231
      %p233 = scmp.ne.s32.totalorder %s224, %s225
      %p234 = scmp.eq.s32.totalorder %s25, 0
      %p235 = por %p233, %p234
      %p236 = scmp.ne.s32.totalorder %s224, %s225
      %p237 = scmp.eq.s32.totalorder %s26, 1
      %p238 = por %p236, %p237
      %p240 = scmp.ne.s32.totalorder %s225, %s239
      %p241 = scmp.eq.s32.totalorder %s26, 0
      %p242 = por %p240, %p241
      %s244 = sadd.s32 %s243, 1
      %p247 = scmp.eq.s32.totalorder %s20, 1
      %p248 = scmp.ne.s32.totalorder %s243, %s245
      %p249 = scmp.eq.s32.totalorder %s20, 0
      %p250 = por %p248, %p249
      %p251 = scmp.ne.s32.totalorder %s243, %s245
      %p252 = scmp.eq.s32.totalorder %s25, 1
      %p253 = por %p251, %p252
      %p254 = scmp.ne.s32.totalorder %s245, %s246
      %p255 = scmp.eq.s32.totalorder %s25, 0
      %p256 = por %p254, %p255
      %p257 = scmp.ne.s32.totalorder %s245, %s246
      %p258 = scmp.eq.s32.totalorder %s26, 1
      %p259 = por %p257, %p258
      %p261 = scmp.ne.s32.totalorder %s246, %s260
      %p262 = scmp.eq.s32.totalorder %s26, 0
      %p263 = por %p261, %p262
      %s264 = ssub.s32 %s20, %s27
      %p265 = scmp.eq.s32.totalorder %s264, 0
      %s267 = sadd.s32 %s266, 1
      %s268 = scalar_select %p265, %s266, %s267
      %p271 = pneg %p265
      %p272 = scmp.eq.s32.totalorder %s20, 1
      %p273 = por %p271, %p272
      %p274 = scmp.ne.s32.totalorder %s266, %s269
      %p275 = scmp.eq.s32.totalorder %s20, 0
      %p276 = por %p274, %p275
      %p277 = scmp.ne.s32.totalorder %s266, %s269
      %p278 = scmp.eq.s32.totalorder %s25, 1
      %p279 = por %p277, %p278
      %p280 = scmp.ne.s32.totalorder %s269, %s270
      %p281 = scmp.eq.s32.totalorder %s25, 0
      %p282 = por %p280, %p281
      %p283 = scmp.ne.s32.totalorder %s269, %s270
      %p284 = scmp.eq.s32.totalorder %s26, 1
      %p285 = por %p283, %p284
      %p287 = scmp.ne.s32.totalorder %s270, %s286
      %p288 = scmp.eq.s32.totalorder %s26, 0
      %p289 = por %p287, %p288
      %p290 = scmp.le.s32.totalorder 1, %s20
      %p291 = scmp.lt.s32.totalorder %s20, 3
      %p292 = pnand %p290, %p291
      %p293 = pneg %p292
      // Predicated region
      $region9: #{tpu_custom_call.1} parent=5 // pred_check
        _
      $region10: #{tpu_custom_call.1} parent=5 // pred_check_branch
        %295 = sbr.rel (%p292) target = $region12
      $region11: #{tpu_custom_call.1} parent=5 // pred_region
        %s296 = ssub.s32 %s20, 1
        // Predicated region
        $region13: #{tpu_custom_call.1} parent=11 // pred_check
          %p297 = pneg %p67
        $region14: #{tpu_custom_call.1} parent=11 // pred_check_branch
          %299 = sbr.rel (%p297) target = $region16
        $region15: #{tpu_custom_call.1} parent=11 // pred_region
          _
        $region16: #{tpu_custom_call.1} parent=11 // pred_fallthru
          _
        // Predicated region
        $region17: #{tpu_custom_call.1} parent=11 // pred_check
          %p300 = pneg %p88
        $region18: #{tpu_custom_call.1} parent=11 // pred_check_branch
          %302 = sbr.rel (%p300) target = $region20
        $region19: #{tpu_custom_call.1} parent=11 // pred_region
          _
        $region20: #{tpu_custom_call.1} parent=11 // pred_fallthru
          _
        // Predicated region
        $region21: #{tpu_custom_call.1} parent=11 // pred_check
          %p303 = pneg %p109
        $region22: #{tpu_custom_call.1} parent=11 // pred_check_branch
          %305 = sbr.rel (%p303) target = $region24
        $region23: #{tpu_custom_call.1} parent=11 // pred_region
          _
        $region24: #{tpu_custom_call.1} parent=11 // pred_fallthru
          _
        // Predicated region
        $region25: #{tpu_custom_call.1} parent=11 // pred_check
          %p306 = pneg %p130
        $region26: #{tpu_custom_call.1} parent=11 // pred_check_branch
          %308 = sbr.rel (%p306) target = $region28
        $region27: #{tpu_custom_call.1} parent=11 // pred_region
          _
        $region28: #{tpu_custom_call.1} parent=11 // pred_fallthru
          _
        // Predicated region
        $region29: #{tpu_custom_call.1} parent=11 // pred_check
          %p309 = pneg %p151
        $region30: #{tpu_custom_call.1} parent=11 // pred_check_branch
          %311 = sbr.rel (%p309) target = $region32
        $region31: #{tpu_custom_call.1} parent=11 // pred_region
          _
        $region32: #{tpu_custom_call.1} parent=11 // pred_fallthru
          _
        // Predicated region
        $region33: #{tpu_custom_call.1} parent=11 // pred_check
          %p312 = pneg %p172
        $region34: #{tpu_custom_call.1} parent=11 // pred_check_branch
          %314 = sbr.rel (%p312) target = $region36
        $region35: #{tpu_custom_call.1} parent=11 // pred_region
          _
        $region36: #{tpu_custom_call.1} parent=11 // pred_fallthru
          _
        // Predicated region
        $region37: #{tpu_custom_call.1} parent=11 // pred_check
          %p315 = pneg %p193
        $region38: #{tpu_custom_call.1} parent=11 // pred_check_branch
          %317 = sbr.rel (%p315) target = $region40
        $region39: #{tpu_custom_call.1} parent=11 // pred_region
          _
        $region40: #{tpu_custom_call.1} parent=11 // pred_fallthru
          _
        // Predicated region
        $region41: #{tpu_custom_call.1} parent=11 // pred_check
          %p318 = pneg %p214
        $region42: #{tpu_custom_call.1} parent=11 // pred_check_branch
          %320 = sbr.rel (%p318) target = $region44
        $region43: #{tpu_custom_call.1} parent=11 // pred_region
          _
        $region44: #{tpu_custom_call.1} parent=11 // pred_fallthru
          _
        // Predicated region
        $region45: #{tpu_custom_call.1} parent=11 // pred_check
          %p321 = pneg %p235
        $region46: #{tpu_custom_call.1} parent=11 // pred_check_branch
          %323 = sbr.rel (%p321) target = $region48
        $region47: #{tpu_custom_call.1} parent=11 // pred_region
          _
        $region48: #{tpu_custom_call.1} parent=11 // pred_fallthru
          _
        // Predicated region
        $region49: #{tpu_custom_call.1} parent=11 // pred_check
          %p324 = pneg %p256
        $region50: #{tpu_custom_call.1} parent=11 // pred_check_branch
          %326 = sbr.rel (%p324) target = $region52
        $region51: #{tpu_custom_call.1} parent=11 // pred_region
          _
        $region52: #{tpu_custom_call.1} parent=11 // pred_fallthru
          _
      $region12: #{tpu_custom_call.1} parent=5 // pred_fallthru
        _
      %p327 = scmp.lt.s32.totalorder %s20, 2
      // Predicated region
      $region53: #{tpu_custom_call.1} parent=5 // pred_check
        %p328 = pneg %p327
      $region54: #{tpu_custom_call.1} parent=5 // pred_check_branch
        %330 = sbr.rel (%p328) target = $region56
      $region55: #{tpu_custom_call.1} parent=5 // pred_region
        // Predicated region
        $region57: #{tpu_custom_call.1} parent=55 // pred_check
          %p331 = pneg %p40
        $region58: #{tpu_custom_call.1} parent=55 // pred_check_branch
          %333 = sbr.rel (%p331) target = $region60
        $region59: #{tpu_custom_call.1} parent=55 // pred_region
          %p334 = scmp.lt.s32.totalorder %s20, 1
          %s335 = scalar_select %p334, %s20, 1
          %s336 = smul.addr %s335, 32
          %s337 = smul.addr %s336, 8
          %s338 = scalar_lea.vmem %s0, %s337
        $region60: #{tpu_custom_call.1} parent=55 // pred_fallthru
          _
      $region56: #{tpu_custom_call.1} parent=5 // pred_fallthru
        _
      %p339 = scmp.le.s32.totalorder 1, %s20
      %p340 = scmp.lt.s32.totalorder %s20, 3
      %p341 = pnand %p339, %p340
      %p342 = pneg %p341
      // Predicated region
      $region61: #{tpu_custom_call.1} parent=5 // pred_check
        _
      $region62: #{tpu_custom_call.1} parent=5 // pred_check_branch
        %344 = sbr.rel (%p341) target = $region64
      $region63: #{tpu_custom_call.1} parent=5 // pred_region
        %s345 = ssub.s32 %s20, 1
        %p346 = scmp.lt.s32.totalorder %s25, 1
        %s347 = scalar_select %p346, %s25, 1
        %s348 = smul.addr %s347, 32
        %s349 = smul.addr %s348, 8
        %s350 = scalar_lea.vmem %s0, %s349
        %p351 = pneg %p46
        %p352 = pneg %p43
        %p353 = pneg %p67
        %p354 = pneg %p64
        %p355 = pneg %p88
        %p356 = pneg %p85
        %p357 = pneg %p109
        %p358 = pneg %p106
        %p359 = pneg %p130
        %p360 = pneg %p127
        %p361 = pneg %p151
        %p362 = pneg %p148
        %p363 = pneg %p172
        %p364 = pneg %p169
        %p365 = pneg %p193
        %p366 = pneg %p190
        %p367 = pneg %p214
        %p368 = pneg %p211
        %p369 = pneg %p235
        %p370 = pneg %p232
        %p371 = pneg %p256
        %p372 = pneg %p253
        %p373 = pneg %p282
        %p374 = pneg %p279
        %s375 = sand.u32 %s269, 1
        %s376 = scalar_lea.sflag [#allocation7], %s375
        %s377 = sand.u32 %s269, 1
        %s378 = smul.addr %s377, 256
        %s379 = scalar_lea.vmem [#allocation6], %s378
        %p380 = scmp.lt.s32.totalorder %s25, 1
        %s381 = scalar_select %p380, %s25, 1
        %s382 = smul.addr %s381, 32
        %s383 = smul.addr %s382, 8
        %s384 = scalar_lea.vmem %s0, %s383
        %v386 = vld [vmem:[%s384] sm:$0xff]
        %v387 = vld [vmem:[%s384 + $0x8] sm:$0xff]
        %v388 = vld [vmem:[%s384 + $0x10] sm:$0xff]
        %v389 = vld [vmem:[%s384 + $0x18] sm:$0xff]
        %v390 = vld [vmem:[%s384 + $0x20] sm:$0xff]
        %v391 = vld [vmem:[%s384 + $0x28] sm:$0xff]
        %v392 = vld [vmem:[%s384 + $0x30] sm:$0xff]
        %v393 = vld [vmem:[%s384 + $0x38] sm:$0xff]
        %v394 = vld [vmem:[%s384 + $0x40] sm:$0xff]
        %v395 = vld [vmem:[%s384 + $0x48] sm:$0xff]
        %v396 = vld [vmem:[%s384 + $0x50] sm:$0xff]
        %v397 = vld [vmem:[%s384 + $0x58] sm:$0xff]
        %v398 = vld [vmem:[%s384 + $0x60] sm:$0xff]
        %v399 = vld [vmem:[%s384 + $0x68] sm:$0xff]
        %v400 = vld [vmem:[%s384 + $0x70] sm:$0xff]
        %v401 = vld [vmem:[%s384 + $0x78] sm:$0xff]
        %v402 = vld [vmem:[%s384 + $0x80] sm:$0xff]
        %v403 = vld [vmem:[%s384 + $0x88] sm:$0xff]
        %v404 = vld [vmem:[%s384 + $0x90] sm:$0xff]
        %v405 = vld [vmem:[%s384 + $0x98] sm:$0xff]
        %v406 = vld [vmem:[%s384 + $0xa0] sm:$0xff]
        %v407 = vld [vmem:[%s384 + $0xa8] sm:$0xff]
        %v408 = vld [vmem:[%s384 + $0xb0] sm:$0xff]
        %v409 = vld [vmem:[%s384 + $0xb8] sm:$0xff]
        %v410 = vld [vmem:[%s384 + $0xc0] sm:$0xff]
        %v411 = vld [vmem:[%s384 + $0xc8] sm:$0xff]
        %v412 = vld [vmem:[%s384 + $0xd0] sm:$0xff]
        %v413 = vld [vmem:[%s384 + $0xd8] sm:$0xff]
        %v414 = vld [vmem:[%s384 + $0xe0] sm:$0xff]
        %v415 = vld [vmem:[%s384 + $0xe8] sm:$0xff]
        %v416 = vld [vmem:[%s384 + $0xf0] sm:$0xff]
        %v417 = vld [vmem:[%s384 + $0xf8] sm:$0xff]
        %vm418 = vcmask 31744
        %419 = vst.msk [vmem:[#allocation2] sm:$0xff] %vm418, 0.0
        %420 = vst.msk [vmem:[#allocation2 + $0x8] sm:$0xff] %vm418, 0.0
        %vm421 = vcmask 25600
        %422 = vst.msk [vmem:[#allocation2 + $0x10] sm:$0x3] %vm421, 0.0
        %423 = vst.msk [vmem:[#allocation2 + $0x18] sm:$0xff] %vm418, 0.0
        %424 = vst.msk [vmem:[#allocation2 + $0x20] sm:$0xff] %vm418, 0.0
        %425 = vst.msk [vmem:[#allocation2 + $0x28] sm:$0x3] %vm421, 0.0
        %426 = vst.msk [vmem:[#allocation2 + $0x30] sm:$0xff] %vm418, 0.0
        %427 = vst.msk [vmem:[#allocation2 + $0x38] sm:$0xff] %vm418, 0.0
        %428 = vst.msk [vmem:[#allocation2 + $0x40] sm:$0x3] %vm421, 0.0
        %429 = vst.msk [vmem:[#allocation2 + $0x48] sm:$0xff] %vm418, 0.0
        %430 = vst.msk [vmem:[#allocation2 + $0x50] sm:$0xff] %vm418, 0.0
        %431 = vst.msk [vmem:[#allocation2 + $0x58] sm:$0x3] %vm421, 0.0
        %432 = vst.msk [vmem:[#allocation2 + $0x60] sm:$0xff] %vm418, 0.0
        %433 = vst.msk [vmem:[#allocation2 + $0x68] sm:$0xff] %vm418, 0.0
        %434 = vst.msk [vmem:[#allocation2 + $0x70] sm:$0x3] %vm421, 0.0
        %435 = vst.msk [vmem:[#allocation2 + $0x78] sm:$0xff] %vm418, 0.0
        %436 = vst.msk [vmem:[#allocation2 + $0x80] sm:$0xff] %vm418, 0.0
        %437 = vst.msk [vmem:[#allocation2 + $0x88] sm:$0x3] %vm421, 0.0
        %438 = vst.msk [vmem:[#allocation2 + $0x90] sm:$0xff] %vm418, 0.0
        %439 = vst.msk [vmem:[#allocation2 + $0x98] sm:$0xff] %vm418, 0.0
        %440 = vst.msk [vmem:[#allocation2 + $0xa0] sm:$0x3] %vm421, 0.0
        %441 = vst.msk [vmem:[#allocation2 + $0xa8] sm:$0xff] %vm418, 0.0
        %442 = vst.msk [vmem:[#allocation2 + $0xb0] sm:$0xff] %vm418, 0.0
        %443 = vst.msk [vmem:[#allocation2 + $0xb8] sm:$0x3] %vm421, 0.0
        %444 = vst.msk [vmem:[#allocation2 + $0xc0] sm:$0xff] %vm418, 0.0
        %445 = vst.msk [vmem:[#allocation2 + $0xc8] sm:$0xff] %vm418, 0.0
        %446 = vst.msk [vmem:[#allocation2 + $0xd0] sm:$0x3] %vm421, 0.0
        %447 = vst.msk [vmem:[#allocation2 + $0xd8] sm:$0xff] %vm418, 0.0
        %448 = vst.msk [vmem:[#allocation2 + $0xe0] sm:$0xff] %vm418, 0.0
        %449 = vst.msk [vmem:[#allocation2 + $0xe8] sm:$0x3] %vm421, 0.0
        %450 = vst.msk [vmem:[#allocation2 + $0xf0] sm:$0xff] %vm418, 0.0
        %451 = vst.msk [vmem:[#allocation2 + $0xf8] sm:$0xff] %vm418, 0.0
        %452 = vst.msk [vmem:[#allocation2 + $0x100] sm:$0x3] %vm421, 0.0
        %453 = vst.msk [vmem:[#allocation2 + $0x108] sm:$0xff] %vm418, 0.0
        %454 = vst.msk [vmem:[#allocation2 + $0x110] sm:$0xff] %vm418, 0.0
        %455 = vst.msk [vmem:[#allocation2 + $0x118] sm:$0x3] %vm421, 0.0
        %456 = vst.msk [vmem:[#allocation2 + $0x120] sm:$0xff] %vm418, 0.0
        %457 = vst.msk [vmem:[#allocation2 + $0x128] sm:$0xff] %vm418, 0.0
        %458 = vst.msk [vmem:[#allocation2 + $0x130] sm:$0x3] %vm421, 0.0
        %459 = vst.msk [vmem:[#allocation2 + $0x138] sm:$0xff] %vm418, 0.0
        %460 = vst.msk [vmem:[#allocation2 + $0x140] sm:$0xff] %vm418, 0.0
        %461 = vst.msk [vmem:[#allocation2 + $0x148] sm:$0x3] %vm421, 0.0
        %462 = vst.msk [vmem:[#allocation2 + $0x150] sm:$0xff] %vm418, 0.0
        %463 = vst.msk [vmem:[#allocation2 + $0x158] sm:$0xff] %vm418, 0.0
        %464 = vst.msk [vmem:[#allocation2 + $0x160] sm:$0x3] %vm421, 0.0
        %465 = vst.msk [vmem:[#allocation2 + $0x168] sm:$0xff] %vm418, 0.0
        %466 = vst.msk [vmem:[#allocation2 + $0x170] sm:$0xff] %vm418, 0.0
        %467 = vst.msk [vmem:[#allocation2 + $0x178] sm:$0x3] %vm421, 0.0
        %468 = vst.msk [vmem:[#allocation2 + $0x180] sm:$0xff] %vm418, 0.0
        %469 = vst.msk [vmem:[#allocation2 + $0x188] sm:$0xff] %vm418, 0.0
        %470 = vst.msk [vmem:[#allocation2 + $0x190] sm:$0x3] %vm421, 0.0
        %471 = vst.msk [vmem:[#allocation2 + $0x198] sm:$0xff] %vm418, 0.0
        %472 = vst.msk [vmem:[#allocation2 + $0x1a0] sm:$0xff] %vm418, 0.0
        %473 = vst.msk [vmem:[#allocation2 + $0x1a8] sm:$0x3] %vm421, 0.0
        %s474 = scalar_lea.vmem [#allocation2], 24
        %475 = vst.msk [vmem:[%s474 + $0x1] sm:$0xff] %vm418, %v386
        %476 = vst.msk [vmem:[%s474 + $0x9] sm:$0xff] %vm418, %v387
        %477 = vst.msk [vmem:[%s474 + $0x19] sm:$0xff] %vm418, %v388
        %478 = vst.msk [vmem:[%s474 + $0x21] sm:$0xff] %vm418, %v389
        %479 = vst.msk [vmem:[%s474 + $0x31] sm:$0xff] %vm418, %v390
        %480 = vst.msk [vmem:[%s474 + $0x39] sm:$0xff] %vm418, %v391
        %481 = vst.msk [vmem:[%s474 + $0x49] sm:$0xff] %vm418, %v392
        %482 = vst.msk [vmem:[%s474 + $0x51] sm:$0xff] %vm418, %v393
        %483 = vst.msk [vmem:[%s474 + $0x61] sm:$0xff] %vm418, %v394
        %484 = vst.msk [vmem:[%s474 + $0x69] sm:$0xff] %vm418, %v395
        %485 = vst.msk [vmem:[%s474 + $0x79] sm:$0xff] %vm418, %v396
        %486 = vst.msk [vmem:[%s474 + $0x81] sm:$0xff] %vm418, %v397
        %487 = vst.msk [vmem:[%s474 + $0x91] sm:$0xff] %vm418, %v398
        %488 = vst.msk [vmem:[%s474 + $0x99] sm:$0xff] %vm418, %v399
        %489 = vst.msk [vmem:[%s474 + $0xa9] sm:$0xff] %vm418, %v400
        %490 = vst.msk [vmem:[%s474 + $0xb1] sm:$0xff] %vm418, %v401
        %491 = vst.msk [vmem:[%s474 + $0xc1] sm:$0xff] %vm418, %v402
        %492 = vst.msk [vmem:[%s474 + $0xc9] sm:$0xff] %vm418, %v403
        %493 = vst.msk [vmem:[%s474 + $0xd9] sm:$0xff] %vm418, %v404
        %494 = vst.msk [vmem:[%s474 + $0xe1] sm:$0xff] %vm418, %v405
        %495 = vst.msk [vmem:[%s474 + $0xf1] sm:$0xff] %vm418, %v406
        %496 = vst.msk [vmem:[%s474 + $0xf9] sm:$0xff] %vm418, %v407
        %497 = vst.msk [vmem:[%s474 + $0x109] sm:$0xff] %vm418, %v408
        %498 = vst.msk [vmem:[%s474 + $0x111] sm:$0xff] %vm418, %v409
        %499 = vst.msk [vmem:[%s474 + $0x121] sm:$0xff] %vm418, %v410
        %500 = vst.msk [vmem:[%s474 + $0x129] sm:$0xff] %vm418, %v411
        %501 = vst.msk [vmem:[%s474 + $0x139] sm:$0xff] %vm418, %v412
        %502 = vst.msk [vmem:[%s474 + $0x141] sm:$0xff] %vm418, %v413
        %503 = vst.msk [vmem:[%s474 + $0x151] sm:$0xff] %vm418, %v414
        %504 = vst.msk [vmem:[%s474 + $0x159] sm:$0xff] %vm418, %v415
        %505 = vst.msk [vmem:[%s474 + $0x169] sm:$0xff] %vm418, %v416
        %506 = vst.msk [vmem:[%s474 + $0x171] sm:$0xff] %vm418, %v417
        %v507 = vpack.c.bf16 %v387, %v386
        %v508 = vpack.c.bf16 %v389, %v388
        %v509 = vpack.c.bf16 %v391, %v390
        %v510 = vpack.c.bf16 %v393, %v392
        %v511 = vpack.c.bf16 %v395, %v394
        %v512 = vpack.c.bf16 %v397, %v396
        %v513 = vpack.c.bf16 %v399, %v398
        %v514 = vpack.c.bf16 %v401, %v400
        %v515 = vpack.c.bf16 %v403, %v402
        %v516 = vpack.c.bf16 %v405, %v404
        %v517 = vpack.c.bf16 %v407, %v406
        %v518 = vpack.c.bf16 %v409, %v408
        %v519 = vpack.c.bf16 %v411, %v410
        %v520 = vpack.c.bf16 %v413, %v412
        %v521 = vpack.c.bf16 %v415, %v414
        %v522 = vpack.c.bf16 %v417, %v416
        %v523 = vld [vmem:[%s1] sm:$0x3]
        %v524 = vld [vmem:[%s2] sm:$0x1]
        %v526 = vperm.slane %v524, 0
        %v529 = vsel %vm418, %v507, 0
        %v532 = vsel %vm418, %v508, 0
        %v535 = vsel %vm418, %v509, 0
        %v538 = vsel %vm418, %v510, 0
        %v541 = vsel %vm418, %v511, 0
        %v544 = vsel %vm418, %v512, 0
        %v547 = vsel %vm418, %v513, 0
        %v550 = vsel %vm418, %v514, 0
        %v553 = vsel %vm418, %v515, 0
        %v556 = vsel %vm418, %v516, 0
        %v559 = vsel %vm418, %v517, 0
        %v562 = vsel %vm418, %v518, 0
        %v565 = vsel %vm418, %v519, 0
        %v568 = vsel %vm418, %v520, 0
        %v571 = vsel %vm418, %v521, 0
        %v574 = vsel %vm418, %v522, 0
        %vm576 = vcmask 1041408
        %v578 = vsel %vm576, %v523, 0
        %580 = vmatpush.bf16.msra.mxu0 0
        %581 = vmatpush.bf16.msra.mxu0 0
        %582 = vmatpush.bf16.msra.mxu0 0
        %583 = vmatpush.bf16.msra.mxu0 0
        %584 = vmatpush.bf16.msra.mxu0 0
        %585 = vmatpush.bf16.msra.mxu0 0
        %586 = vmatpush.bf16.msra.mxu0 0
        %587 = vmatpush.bf16.msra.mxu0 %v578
        %588 = vmatmul.bf16.gmra.mxu0 %v529
        %v589 = vpop.f32.mrf.mxu0
        %v590 = vadd.f32 %v526, %v589
        %v591 = vpop.f32.mrf.mxu0
        %v592 = vadd.f32 %v526, %v591
        %593 = vmatmul.bf16.gmra.mxu0 %v532
        %v594 = vpop.f32.mrf.mxu0
        %v595 = vadd.f32 %v526, %v594
        %v596 = vpop.f32.mrf.mxu0
        %v597 = vadd.f32 %v526, %v596
        %598 = vmatmul.bf16.gmra.mxu0 %v535
        %v599 = vpop.f32.mrf.mxu0
        %v600 = vadd.f32 %v526, %v599
        %v601 = vpop.f32.mrf.mxu0
        %v602 = vadd.f32 %v526, %v601
        %603 = vmatmul.bf16.gmra.mxu0 %v538
        %v604 = vpop.f32.mrf.mxu0
        %v605 = vadd.f32 %v526, %v604
        %v606 = vpop.f32.mrf.mxu0
        %v607 = vadd.f32 %v526, %v606
        %608 = vmatmul.bf16.gmra.mxu0 %v541
        %v609 = vpop.f32.mrf.mxu0
        %v610 = vadd.f32 %v526, %v609
        %v611 = vpop.f32.mrf.mxu0
        %v612 = vadd.f32 %v526, %v611
        %613 = vmatmul.bf16.gmra.mxu0 %v544
        %v614 = vpop.f32.mrf.mxu0
        %v615 = vadd.f32 %v526, %v614
        %v616 = vpop.f32.mrf.mxu0
        %v617 = vadd.f32 %v526, %v616
        %618 = vmatmul.bf16.gmra.mxu0 %v547
        %v619 = vpop.f32.mrf.mxu0
        %v620 = vadd.f32 %v526, %v619
        %v621 = vpop.f32.mrf.mxu0
        %v622 = vadd.f32 %v526, %v621
        %623 = vmatmul.bf16.gmra.mxu0 %v550
        %v624 = vpop.f32.mrf.mxu0
        %v625 = vadd.f32 %v526, %v624
        %v626 = vpop.f32.mrf.mxu0
        %v627 = vadd.f32 %v526, %v626
        %628 = vmatmul.bf16.gmra.mxu0 %v553
        %v629 = vpop.f32.mrf.mxu0
        %v630 = vadd.f32 %v526, %v629
        %v631 = vpop.f32.mrf.mxu0
        %v632 = vadd.f32 %v526, %v631
        %633 = vmatmul.bf16.gmra.mxu0 %v556
        %v634 = vpop.f32.mrf.mxu0
        %v635 = vadd.f32 %v526, %v634
        %v636 = vpop.f32.mrf.mxu0
        %v637 = vadd.f32 %v526, %v636
        %638 = vmatmul.bf16.gmra.mxu0 %v559
        %v639 = vpop.f32.mrf.mxu0
        %v640 = vadd.f32 %v526, %v639
        %v641 = vpop.f32.mrf.mxu0
        %v642 = vadd.f32 %v526, %v641
        %643 = vmatmul.bf16.gmra.mxu0 %v562
        %v644 = vpop.f32.mrf.mxu0
        %v645 = vadd.f32 %v526, %v644
        %v646 = vpop.f32.mrf.mxu0
        %v647 = vadd.f32 %v526, %v646
        %648 = vmatmul.bf16.gmra.mxu0 %v565
        %v649 = vpop.f32.mrf.mxu0
        %v650 = vadd.f32 %v526, %v649
        %v651 = vpop.f32.mrf.mxu0
        %v652 = vadd.f32 %v526, %v651
        %653 = vmatmul.bf16.gmra.mxu0 %v568
        %v654 = vpop.f32.mrf.mxu0
        %v655 = vadd.f32 %v526, %v654
        %v656 = vpop.f32.mrf.mxu0
        %v657 = vadd.f32 %v526, %v656
        %658 = vmatmul.bf16.gmra.mxu0 %v571
        %v659 = vpop.f32.mrf.mxu0
        %v660 = vadd.f32 %v526, %v659
        %v661 = vpop.f32.mrf.mxu0
        %v662 = vadd.f32 %v526, %v661
        %663 = vmatmul.bf16.gmra.mxu0 %v574
        %v664 = vpop.f32.mrf.mxu0
        %v665 = vadd.f32 %v526, %v664
        %v666 = vpop.f32.mrf.mxu0
        %v667 = vadd.f32 %v526, %v666
        %668 = vdwg.mxu0
        %v669 = vmax.f32 %v590, 0.0
        %v670 = vmax.f32 %v592, 0.0
        %v671 = vmax.f32 %v595, 0.0
        %v672 = vmax.f32 %v597, 0.0
        %v673 = vmax.f32 %v600, 0.0
        %v674 = vmax.f32 %v602, 0.0
        %v675 = vmax.f32 %v605, 0.0
        %v676 = vmax.f32 %v607, 0.0
        %v677 = vmax.f32 %v610, 0.0
        %v678 = vmax.f32 %v612, 0.0
        %v679 = vmax.f32 %v615, 0.0
        %v680 = vmax.f32 %v617, 0.0
        %v681 = vmax.f32 %v620, 0.0
        %v682 = vmax.f32 %v622, 0.0
        %v683 = vmax.f32 %v625, 0.0
        %v684 = vmax.f32 %v627, 0.0
        %v685 = vmax.f32 %v630, 0.0
        %v686 = vmax.f32 %v632, 0.0
        %v687 = vmax.f32 %v635, 0.0
        %v688 = vmax.f32 %v637, 0.0
        %v689 = vmax.f32 %v640, 0.0
        %v690 = vmax.f32 %v642, 0.0
        %v691 = vmax.f32 %v645, 0.0
        %v692 = vmax.f32 %v647, 0.0
        %v693 = vmax.f32 %v650, 0.0
        %v694 = vmax.f32 %v652, 0.0
        %v695 = vmax.f32 %v655, 0.0
        %v696 = vmax.f32 %v657, 0.0
        %v697 = vmax.f32 %v660, 0.0
        %v698 = vmax.f32 %v662, 0.0
        %v699 = vmax.f32 %v665, 0.0
        %v700 = vmax.f32 %v667, 0.0
        %vm701 = vcmask 146432
        %702 = vst.msk [vmem:[#allocation3] sm:$0xff] %vm701, 0.0
        %703 = vst.msk [vmem:[#allocation3 + $0x8] sm:$0xff] %vm701, 0.0
        %vm704 = vcmask 140288
        %705 = vst.msk [vmem:[#allocation3 + $0x10] sm:$0x3] %vm704, 0.0
        %706 = vst.msk [vmem:[#allocation3 + $0x18] sm:$0xff] %vm701, 0.0
        %707 = vst.msk [vmem:[#allocation3 + $0x20] sm:$0xff] %vm701, 0.0
        %708 = vst.msk [vmem:[#allocation3 + $0x28] sm:$0x3] %vm704, 0.0
        %709 = vst.msk [vmem:[#allocation3 + $0x30] sm:$0xff] %vm701, 0.0
        %710 = vst.msk [vmem:[#allocation3 + $0x38] sm:$0xff] %vm701, 0.0
        %711 = vst.msk [vmem:[#allocation3 + $0x40] sm:$0x3] %vm704, 0.0
        %712 = vst.msk [vmem:[#allocation3 + $0x48] sm:$0xff] %vm701, 0.0
        %713 = vst.msk [vmem:[#allocation3 + $0x50] sm:$0xff] %vm701, 0.0
        %714 = vst.msk [vmem:[#allocation3 + $0x58] sm:$0x3] %vm704, 0.0
        %715 = vst.msk [vmem:[#allocation3 + $0x60] sm:$0xff] %vm701, 0.0
        %716 = vst.msk [vmem:[#allocation3 + $0x68] sm:$0xff] %vm701, 0.0
        %717 = vst.msk [vmem:[#allocation3 + $0x70] sm:$0x3] %vm704, 0.0
        %718 = vst.msk [vmem:[#allocation3 + $0x78] sm:$0xff] %vm701, 0.0
        %719 = vst.msk [vmem:[#allocation3 + $0x80] sm:$0xff] %vm701, 0.0
        %720 = vst.msk [vmem:[#allocation3 + $0x88] sm:$0x3] %vm704, 0.0
        %721 = vst.msk [vmem:[#allocation3 + $0x90] sm:$0xff] %vm701, 0.0
        %722 = vst.msk [vmem:[#allocation3 + $0x98] sm:$0xff] %vm701, 0.0
        %723 = vst.msk [vmem:[#allocation3 + $0xa0] sm:$0x3] %vm704, 0.0
        %724 = vst.msk [vmem:[#allocation3 + $0xa8] sm:$0xff] %vm701, 0.0
        %725 = vst.msk [vmem:[#allocation3 + $0xb0] sm:$0xff] %vm701, 0.0
        %726 = vst.msk [vmem:[#allocation3 + $0xb8] sm:$0x3] %vm704, 0.0
        %727 = vst.msk [vmem:[#allocation3 + $0xc0] sm:$0xff] %vm701, 0.0
        %728 = vst.msk [vmem:[#allocation3 + $0xc8] sm:$0xff] %vm701, 0.0
        %729 = vst.msk [vmem:[#allocation3 + $0xd0] sm:$0x3] %vm704, 0.0
        %730 = vst.msk [vmem:[#allocation3 + $0xd8] sm:$0xff] %vm701, 0.0
        %731 = vst.msk [vmem:[#allocation3 + $0xe0] sm:$0xff] %vm701, 0.0
        %732 = vst.msk [vmem:[#allocation3 + $0xe8] sm:$0x3] %vm704, 0.0
        %733 = vst.msk [vmem:[#allocation3 + $0xf0] sm:$0xff] %vm701, 0.0
        %734 = vst.msk [vmem:[#allocation3 + $0xf8] sm:$0xff] %vm701, 0.0
        %735 = vst.msk [vmem:[#allocation3 + $0x100] sm:$0x3] %vm704, 0.0
        %736 = vst.msk [vmem:[#allocation3 + $0x108] sm:$0xff] %vm701, 0.0
        %737 = vst.msk [vmem:[#allocation3 + $0x110] sm:$0xff] %vm701, 0.0
        %738 = vst.msk [vmem:[#allocation3 + $0x118] sm:$0x3] %vm704, 0.0
        %739 = vst.msk [vmem:[#allocation3 + $0x120] sm:$0xff] %vm701, 0.0
        %740 = vst.msk [vmem:[#allocation3 + $0x128] sm:$0xff] %vm701, 0.0
        %741 = vst.msk [vmem:[#allocation3 + $0x130] sm:$0x3] %vm704, 0.0
        %742 = vst.msk [vmem:[#allocation3 + $0x138] sm:$0xff] %vm701, 0.0
        %743 = vst.msk [vmem:[#allocation3 + $0x140] sm:$0xff] %vm701, 0.0
        %744 = vst.msk [vmem:[#allocation3 + $0x148] sm:$0x3] %vm704, 0.0
        %745 = vst.msk [vmem:[#allocation3 + $0x150] sm:$0xff] %vm701, 0.0
        %746 = vst.msk [vmem:[#allocation3 + $0x158] sm:$0xff] %vm701, 0.0
        %747 = vst.msk [vmem:[#allocation3 + $0x160] sm:$0x3] %vm704, 0.0
        %748 = vst.msk [vmem:[#allocation3 + $0x168] sm:$0xff] %vm701, 0.0
        %749 = vst.msk [vmem:[#allocation3 + $0x170] sm:$0xff] %vm701, 0.0
        %750 = vst.msk [vmem:[#allocation3 + $0x178] sm:$0x3] %vm704, 0.0
        %751 = vst.msk [vmem:[#allocation3 + $0x180] sm:$0xff] %vm701, 0.0
        %752 = vst.msk [vmem:[#allocation3 + $0x188] sm:$0xff] %vm701, 0.0
        %753 = vst.msk [vmem:[#allocation3 + $0x190] sm:$0x3] %vm704, 0.0
        %754 = vst.msk [vmem:[#allocation3 + $0x198] sm:$0xff] %vm701, 0.0
        %755 = vst.msk [vmem:[#allocation3 + $0x1a0] sm:$0xff] %vm701, 0.0
        %756 = vst.msk [vmem:[#allocation3 + $0x1a8] sm:$0x3] %vm704, 0.0
        %s757 = scalar_lea.vmem [#allocation3], 24
        %758 = vst.msk [vmem:[%s757 + $0x1] sm:$0xff] %vm701, %v669
        %759 = vst.msk [vmem:[%s757 + $0x9] sm:$0xff] %vm701, %v670
        %760 = vst.msk [vmem:[%s757 + $0x19] sm:$0xff] %vm701, %v671
        %761 = vst.msk [vmem:[%s757 + $0x21] sm:$0xff] %vm701, %v672
        %762 = vst.msk [vmem:[%s757 + $0x31] sm:$0xff] %vm701, %v673
        %763 = vst.msk [vmem:[%s757 + $0x39] sm:$0xff] %vm701, %v674
        %764 = vst.msk [vmem:[%s757 + $0x49] sm:$0xff] %vm701, %v675
        %765 = vst.msk [vmem:[%s757 + $0x51] sm:$0xff] %vm701, %v676
        %766 = vst.msk [vmem:[%s757 + $0x61] sm:$0xff] %vm701, %v677
        %767 = vst.msk [vmem:[%s757 + $0x69] sm:$0xff] %vm701, %v678
        %768 = vst.msk [vmem:[%s757 + $0x79] sm:$0xff] %vm701, %v679
        %769 = vst.msk [vmem:[%s757 + $0x81] sm:$0xff] %vm701, %v680
        %770 = vst.msk [vmem:[%s757 + $0x91] sm:$0xff] %vm701, %v681
        %771 = vst.msk [vmem:[%s757 + $0x99] sm:$0xff] %vm701, %v682
        %772 = vst.msk [vmem:[%s757 + $0xa9] sm:$0xff] %vm701, %v683
        %773 = vst.msk [vmem:[%s757 + $0xb1] sm:$0xff] %vm701, %v684
        %774 = vst.msk [vmem:[%s757 + $0xc1] sm:$0xff] %vm701, %v685
        %775 = vst.msk [vmem:[%s757 + $0xc9] sm:$0xff] %vm701, %v686
        %776 = vst.msk [vmem:[%s757 + $0xd9] sm:$0xff] %vm701, %v687
        %777 = vst.msk [vmem:[%s757 + $0xe1] sm:$0xff] %vm701, %v688
        %778 = vst.msk [vmem:[%s757 + $0xf1] sm:$0xff] %vm701, %v689
        %779 = vst.msk [vmem:[%s757 + $0xf9] sm:$0xff] %vm701, %v690
        %780 = vst.msk [vmem:[%s757 + $0x109] sm:$0xff] %vm701, %v691
        %781 = vst.msk [vmem:[%s757 + $0x111] sm:$0xff] %vm701, %v692
        %782 = vst.msk [vmem:[%s757 + $0x121] sm:$0xff] %vm701, %v693
        %783 = vst.msk [vmem:[%s757 + $0x129] sm:$0xff] %vm701, %v694
        %784 = vst.msk [vmem:[%s757 + $0x139] sm:$0xff] %vm701, %v695
        %785 = vst.msk [vmem:[%s757 + $0x141] sm:$0xff] %vm701, %v696
        %786 = vst.msk [vmem:[%s757 + $0x151] sm:$0xff] %vm701, %v697
        %787 = vst.msk [vmem:[%s757 + $0x159] sm:$0xff] %vm701, %v698
        %788 = vst.msk [vmem:[%s757 + $0x169] sm:$0xff] %vm701, %v699
        %789 = vst.msk [vmem:[%s757 + $0x171] sm:$0xff] %vm701, %v700
        %v790 = vld [vmem:[#allocation3] sm:$0xff]
        %v791 = vld [vmem:[#allocation3 + $0x8] sm:$0xff]
        %v792 = vld [vmem:[#allocation3 + $0x18] sm:$0xff]
        %v793 = vld [vmem:[#allocation3 + $0x20] sm:$0xff]
        %v794 = vld [vmem:[#allocation3 + $0x30] sm:$0xff]
        %v795 = vld [vmem:[#allocation3 + $0x38] sm:$0xff]
        %v796 = vld [vmem:[#allocation3 + $0x48] sm:$0xff]
        %v797 = vld [vmem:[#allocation3 + $0x50] sm:$0xff]
        %v798 = vld [vmem:[#allocation3 + $0x60] sm:$0xff]
        %v799 = vld [vmem:[#allocation3 + $0x68] sm:$0xff]
        %v800 = vld [vmem:[#allocation3 + $0x78] sm:$0xff]
        %v801 = vld [vmem:[#allocation3 + $0x80] sm:$0xff]
        %v802 = vld [vmem:[#allocation3 + $0x90] sm:$0xff]
        %v803 = vld [vmem:[#allocation3 + $0x98] sm:$0xff]
        %v804 = vld [vmem:[#allocation3 + $0xa8] sm:$0xff]
        %v805 = vld [vmem:[#allocation3 + $0xb0] sm:$0xff]
        %v806 = vld [vmem:[#allocation3 + $0xc0] sm:$0xff]
        %v807 = vld [vmem:[#allocation3 + $0xc8] sm:$0xff]
        %v808 = vld [vmem:[#allocation3 + $0xd8] sm:$0xff]
        %v809 = vld [vmem:[#allocation3 + $0xe0] sm:$0xff]
        %v810 = vld [vmem:[#allocation3 + $0xf0] sm:$0xff]
        %v811 = vld [vmem:[#allocation3 + $0xf8] sm:$0xff]
        %v812 = vld [vmem:[#allocation3 + $0x108] sm:$0xff]
        %v813 = vld [vmem:[#allocation3 + $0x110] sm:$0xff]
        %v814 = vld [vmem:[#allocation3 + $0x120] sm:$0xff]
        %v815 = vld [vmem:[#allocation3 + $0x128] sm:$0xff]
        %v816 = vld [vmem:[#allocation3 + $0x138] sm:$0xff]
        %v817 = vld [vmem:[#allocation3 + $0x140] sm:$0xff]
        %v818 = vld [vmem:[#allocation3 + $0x150] sm:$0xff]
        %v819 = vld [vmem:[#allocation3 + $0x158] sm:$0xff]
        %v820 = vld [vmem:[#allocation3 + $0x168] sm:$0xff]
        %v821 = vld [vmem:[#allocation3 + $0x170] sm:$0xff]
        %v822 = vpack.c.bf16 %v791, %v790
        %v823 = vpack.c.bf16 %v793, %v792
        %v824 = vpack.c.bf16 %v795, %v794
        %v825 = vpack.c.bf16 %v797, %v796
        %v826 = vpack.c.bf16 %v799, %v798
        %v827 = vpack.c.bf16 %v801, %v800
        %v828 = vpack.c.bf16 %v803, %v802
        %v829 = vpack.c.bf16 %v805, %v804
        %v830 = vpack.c.bf16 %v807, %v806
        %v831 = vpack.c.bf16 %v809, %v808
        %v832 = vpack.c.bf16 %v811, %v810
        %v833 = vpack.c.bf16 %v813, %v812
        %v834 = vpack.c.bf16 %v815, %v814
        %v835 = vpack.c.bf16 %v817, %v816
        %v836 = vpack.c.bf16 %v819, %v818
        %v837 = vpack.c.bf16 %v821, %v820
        %v838 = vld [vmem:[%s3] sm:$0xf]
        %v839 = vld [vmem:[%s3 + $0x4] sm:$0xf]
        %v840 = vld [vmem:[%s3 + $0x8] sm:$0x1]
        %v841 = vld [vmem:[#allocation3 + $0x1] sm:$0xff]
        %v842 = vld [vmem:[#allocation3 + $0x9] sm:$0xff]
        %v843 = vld [vmem:[#allocation3 + $0x19] sm:$0xff]
        %v844 = vld [vmem:[#allocation3 + $0x21] sm:$0xff]
        %v845 = vld [vmem:[#allocation3 + $0x31] sm:$0xff]
        %v846 = vld [vmem:[#allocation3 + $0x39] sm:$0xff]
        %v847 = vld [vmem:[#allocation3 + $0x49] sm:$0xff]
        %v848 = vld [vmem:[#allocation3 + $0x51] sm:$0xff]
        %v849 = vld [vmem:[#allocation3 + $0x61] sm:$0xff]
        %v850 = vld [vmem:[#allocation3 + $0x69] sm:$0xff]
        %v851 = vld [vmem:[#allocation3 + $0x79] sm:$0xff]
        %v852 = vld [vmem:[#allocation3 + $0x81] sm:$0xff]
        %v853 = vld [vmem:[#allocation3 + $0x91] sm:$0xff]
        %v854 = vld [vmem:[#allocation3 + $0x99] sm:$0xff]
        %v855 = vld [vmem:[#allocation3 + $0xa9] sm:$0xff]
        %v856 = vld [vmem:[#allocation3 + $0xb1] sm:$0xff]
        %v857 = vld [vmem:[#allocation3 + $0xc1] sm:$0xff]
        %v858 = vld [vmem:[#allocation3 + $0xc9] sm:$0xff]
        %v859 = vld [vmem:[#allocation3 + $0xd9] sm:$0xff]
        %v860 = vld [vmem:[#allocation3 + $0xe1] sm:$0xff]
        %v861 = vld [vmem:[#allocation3 + $0xf1] sm:$0xff]
        %v862 = vld [vmem:[#allocation3 + $0xf9] sm:$0xff]
        %v863 = vld [vmem:[#allocation3 + $0x109] sm:$0xff]
        %v864 = vld [vmem:[#allocation3 + $0x111] sm:$0xff]
        %v865 = vld [vmem:[#allocation3 + $0x121] sm:$0xff]
        %v866 = vld [vmem:[#allocation3 + $0x129] sm:$0xff]
        %v867 = vld [vmem:[#allocation3 + $0x139] sm:$0xff]
        %v868 = vld [vmem:[#allocation3 + $0x141] sm:$0xff]
        %v869 = vld [vmem:[#allocation3 + $0x151] sm:$0xff]
        %v870 = vld [vmem:[#allocation3 + $0x159] sm:$0xff]
        %v871 = vld [vmem:[#allocation3 + $0x169] sm:$0xff]
        %v872 = vld [vmem:[#allocation3 + $0x171] sm:$0xff]
        %v873 = vpack.c.bf16 %v842, %v841
        %v874 = vpack.c.bf16 %v844, %v843
        %v875 = vpack.c.bf16 %v846, %v845
        %v876 = vpack.c.bf16 %v848, %v847
        %v877 = vpack.c.bf16 %v850, %v849
        %v878 = vpack.c.bf16 %v852, %v851
        %v879 = vpack.c.bf16 %v854, %v853
        %v880 = vpack.c.bf16 %v856, %v855
        %v881 = vpack.c.bf16 %v858, %v857
        %v882 = vpack.c.bf16 %v860, %v859
        %v883 = vpack.c.bf16 %v862, %v861
        %v884 = vpack.c.bf16 %v864, %v863
        %v885 = vpack.c.bf16 %v866, %v865
        %v886 = vpack.c.bf16 %v868, %v867
        %v887 = vpack.c.bf16 %v870, %v869
        %v888 = vpack.c.bf16 %v872, %v871
        %s889 = scalar_lea.vmem %s3, 12
        %v890 = vld [vmem:[%s889] sm:$0xf]
        %v891 = vld [vmem:[%s889 + $0x4] sm:$0xf]
        %v892 = vld [vmem:[%s889 + $0x8] sm:$0x1]
        %v896 = vunpack.c.l.b16 %v890
        %v897 = vunpack.c.l.b16 %v891
        %v898 = vunpack.c.l.b16 %v892
        %v899 = vpack.c.b16 %v897, %v896
        %v900 = vpack.c.b16 %v898, %v898
        %v903 = vsel %vm701, %v873, 0
        %v906 = vsel %vm701, %v874, 0
        %v909 = vsel %vm701, %v875, 0
        %v912 = vsel %vm701, %v876, 0
        %v915 = vsel %vm701, %v877, 0
        %v918 = vsel %vm701, %v878, 0
        %v921 = vsel %vm701, %v879, 0
        %v924 = vsel %vm701, %v880, 0
        %v927 = vsel %vm701, %v881, 0
        %v930 = vsel %vm701, %v882, 0
        %v933 = vsel %vm701, %v883, 0
        %v936 = vsel %vm701, %v884, 0
        %v939 = vsel %vm701, %v885, 0
        %v942 = vsel %vm701, %v886, 0
        %v945 = vsel %vm701, %v887, 0
        %v948 = vsel %vm701, %v888, 0
        %vm950 = vcmask 1040384
        %v952 = vsel %vm950, %v900, 0
        %954 = vmatpush.bf16.msra.mxu0 0
        %955 = vmatpush.bf16.msra.mxu0 0
        %956 = vmatpush.bf16.msra.mxu0 0
        %957 = vmatpush.bf16.msra.mxu0 0
        %958 = vmatpush.bf16.msra.mxu0 0
        %959 = vmatpush.bf16.msra.mxu0 0
        %960 = vmatpush.bf16.msra.mxu0 %v952
        %961 = vmatpush.bf16.msra.mxu0 %v899
        %962 = vmatmul.bf16.gmra.mxu0 %v903
        %v963 = vpop.f32.mrf.mxu0
        %v964 = vadd.f32 0.0, %v963
        %v965 = vpop.f32.mrf.mxu0
        %v966 = vadd.f32 0.0, %v965
        %967 = vmatmul.bf16.gmra.mxu0 %v906
        %v968 = vpop.f32.mrf.mxu0
        %v969 = vadd.f32 0.0, %v968
        %v970 = vpop.f32.mrf.mxu0
        %v971 = vadd.f32 0.0, %v970
        %972 = vmatmul.bf16.gmra.mxu0 %v909
        %v973 = vpop.f32.mrf.mxu0
        %v974 = vadd.f32 0.0, %v973
        %v975 = vpop.f32.mrf.mxu0
        %v976 = vadd.f32 0.0, %v975
        %977 = vmatmul.bf16.gmra.mxu0 %v912
        %v978 = vpop.f32.mrf.mxu0
        %v979 = vadd.f32 0.0, %v978
        %v980 = vpop.f32.mrf.mxu0
        %v981 = vadd.f32 0.0, %v980
        %982 = vmatmul.bf16.gmra.mxu0 %v915
        %v983 = vpop.f32.mrf.mxu0
        %v984 = vadd.f32 0.0, %v983
        %v985 = vpop.f32.mrf.mxu0
        %v986 = vadd.f32 0.0, %v985
        %987 = vmatmul.bf16.gmra.mxu0 %v918
        %v988 = vpop.f32.mrf.mxu0
        %v989 = vadd.f32 0.0, %v988
        %v990 = vpop.f32.mrf.mxu0
        %v991 = vadd.f32 0.0, %v990
        %992 = vmatmul.bf16.gmra.mxu0 %v921
        %v993 = vpop.f32.mrf.mxu0
        %v994 = vadd.f32 0.0, %v993
        %v995 = vpop.f32.mrf.mxu0
        %v996 = vadd.f32 0.0, %v995
        %997 = vmatmul.bf16.gmra.mxu0 %v924
        %v998 = vpop.f32.mrf.mxu0
        %v999 = vadd.f32 0.0, %v998
        %v1000 = vpop.f32.mrf.mxu0
        %v1001 = vadd.f32 0.0, %v1000
        %1002 = vmatmul.bf16.gmra.mxu0 %v927
        %v1003 = vpop.f32.mrf.mxu0
        %v1004 = vadd.f32 0.0, %v1003
        %v1005 = vpop.f32.mrf.mxu0
        %v1006 = vadd.f32 0.0, %v1005
        %1007 = vmatmul.bf16.gmra.mxu0 %v930
        %v1008 = vpop.f32.mrf.mxu0
        %v1009 = vadd.f32 0.0, %v1008
        %v1010 = vpop.f32.mrf.mxu0
        %v1011 = vadd.f32 0.0, %v1010
        %1012 = vmatmul.bf16.gmra.mxu0 %v933
        %v1013 = vpop.f32.mrf.mxu0
        %v1014 = vadd.f32 0.0, %v1013
        %v1015 = vpop.f32.mrf.mxu0
        %v1016 = vadd.f32 0.0, %v1015
        %1017 = vmatmul.bf16.gmra.mxu0 %v936
        %v1018 = vpop.f32.mrf.mxu0
        %v1019 = vadd.f32 0.0, %v1018
        %v1020 = vpop.f32.mrf.mxu0
        %v1021 = vadd.f32 0.0, %v1020
        %1022 = vmatmul.bf16.gmra.mxu0 %v939
        %v1023 = vpop.f32.mrf.mxu0
        %v1024 = vadd.f32 0.0, %v1023
        %v1025 = vpop.f32.mrf.mxu0
        %v1026 = vadd.f32 0.0, %v1025
        %1027 = vmatmul.bf16.gmra.mxu0 %v942
        %v1028 = vpop.f32.mrf.mxu0
        %v1029 = vadd.f32 0.0, %v1028
        %v1030 = vpop.f32.mrf.mxu0
        %v1031 = vadd.f32 0.0, %v1030
        %1032 = vmatmul.bf16.gmra.mxu0 %v945
        %v1033 = vpop.f32.mrf.mxu0
        %v1034 = vadd.f32 0.0, %v1033
        %v1035 = vpop.f32.mrf.mxu0
        %v1036 = vadd.f32 0.0, %v1035
        %1037 = vmatmul.bf16.gmra.mxu0 %v948
        %v1038 = vpop.f32.mrf.mxu0
        %v1039 = vadd.f32 0.0, %v1038
        %v1040 = vpop.f32.mrf.mxu0
        %v1041 = vadd.f32 0.0, %v1040
        %1042 = vdwg.mxu0
        %v1046 = vunpack.c.l.b16 %v838
        %v1047 = vunpack.c.l.b16 %v839
        %v1048 = vunpack.c.l.b16 %v840
        %v1049 = vpack.c.b16 %v1047, %v1046
        %v1050 = vpack.c.b16 %v1048, %v1048
        %v1053 = vsel %vm701, %v822, 0
        %v1056 = vsel %vm701, %v823, 0
        %v1059 = vsel %vm701, %v824, 0
        %v1062 = vsel %vm701, %v825, 0
        %v1065 = vsel %vm701, %v826, 0
        %v1068 = vsel %vm701, %v827, 0
        %v1071 = vsel %vm701, %v828, 0
        %v1074 = vsel %vm701, %v829, 0
        %v1077 = vsel %vm701, %v830, 0
        %v1080 = vsel %vm701, %v831, 0
        %v1083 = vsel %vm701, %v832, 0
        %v1086 = vsel %vm701, %v833, 0
        %v1089 = vsel %vm701, %v834, 0
        %v1092 = vsel %vm701, %v835, 0
        %v1095 = vsel %vm701, %v836, 0
        %v1098 = vsel %vm701, %v837, 0
        %v1101 = vsel %vm950, %v1050, 0
        %1103 = vmatpush.bf16.msra.mxu0 0
        %1104 = vmatpush.bf16.msra.mxu0 0
        %1105 = vmatpush.bf16.msra.mxu0 0
        %1106 = vmatpush.bf16.msra.mxu0 0
        %1107 = vmatpush.bf16.msra.mxu0 0
        %1108 = vmatpush.bf16.msra.mxu0 0
        %1109 = vmatpush.bf16.msra.mxu0 %v1101
        %1110 = vmatpush.bf16.msra.mxu0 %v1049
        %1111 = vmatmul.bf16.gmra.mxu0 %v1053
        %v1112 = vpop.f32.mrf.mxu0
        %v1113 = vadd.f32 %v964, %v1112
        %v1114 = vpop.f32.mrf.mxu0
        %v1115 = vadd.f32 %v966, %v1114
        %1116 = vmatmul.bf16.gmra.mxu0 %v1056
        %v1117 = vpop.f32.mrf.mxu0
        %v1118 = vadd.f32 %v969, %v1117
        %v1119 = vpop.f32.mrf.mxu0
        %v1120 = vadd.f32 %v971, %v1119
        %1121 = vmatmul.bf16.gmra.mxu0 %v1059
        %v1122 = vpop.f32.mrf.mxu0
        %v1123 = vadd.f32 %v974, %v1122
        %v1124 = vpop.f32.mrf.mxu0
        %v1125 = vadd.f32 %v976, %v1124
        %1126 = vmatmul.bf16.gmra.mxu0 %v1062
        %v1127 = vpop.f32.mrf.mxu0
        %v1128 = vadd.f32 %v979, %v1127
        %v1129 = vpop.f32.mrf.mxu0
        %v1130 = vadd.f32 %v981, %v1129
        %1131 = vmatmul.bf16.gmra.mxu0 %v1065
        %v1132 = vpop.f32.mrf.mxu0
        %v1133 = vadd.f32 %v984, %v1132
        %v1134 = vpop.f32.mrf.mxu0
        %v1135 = vadd.f32 %v986, %v1134
        %1136 = vmatmul.bf16.gmra.mxu0 %v1068
        %v1137 = vpop.f32.mrf.mxu0
        %v1138 = vadd.f32 %v989, %v1137
        %v1139 = vpop.f32.mrf.mxu0
        %v1140 = vadd.f32 %v991, %v1139
        %1141 = vmatmul.bf16.gmra.mxu0 %v1071
        %v1142 = vpop.f32.mrf.mxu0
        %v1143 = vadd.f32 %v994, %v1142
        %v1144 = vpop.f32.mrf.mxu0
        %v1145 = vadd.f32 %v996, %v1144
        %1146 = vmatmul.bf16.gmra.mxu0 %v1074
        %v1147 = vpop.f32.mrf.mxu0
        %v1148 = vadd.f32 %v999, %v1147
        %v1149 = vpop.f32.mrf.mxu0
        %v1150 = vadd.f32 %v1001, %v1149
        %1151 = vmatmul.bf16.gmra.mxu0 %v1077
        %v1152 = vpop.f32.mrf.mxu0
        %v1153 = vadd.f32 %v1004, %v1152
        %v1154 = vpop.f32.mrf.mxu0
        %v1155 = vadd.f32 %v1006, %v1154
        %1156 = vmatmul.bf16.gmra.mxu0 %v1080
        %v1157 = vpop.f32.mrf.mxu0
        %v1158 = vadd.f32 %v1009, %v1157
        %v1159 = vpop.f32.mrf.mxu0
        %v1160 = vadd.f32 %v1011, %v1159
        %1161 = vmatmul.bf16.gmra.mxu0 %v1083
        %v1162 = vpop.f32.mrf.mxu0
        %v1163 = vadd.f32 %v1014, %v1162
        %v1164 = vpop.f32.mrf.mxu0
        %v1165 = vadd.f32 %v1016, %v1164
        %1166 = vmatmul.bf16.gmra.mxu0 %v1086
        %v1167 = vpop.f32.mrf.mxu0
        %v1168 = vadd.f32 %v1019, %v1167
        %v1169 = vpop.f32.mrf.mxu0
        %v1170 = vadd.f32 %v1021, %v1169
        %1171 = vmatmul.bf16.gmra.mxu0 %v1089
        %v1172 = vpop.f32.mrf.mxu0
        %v1173 = vadd.f32 %v1024, %v1172
        %v1174 = vpop.f32.mrf.mxu0
        %v1175 = vadd.f32 %v1026, %v1174
        %1176 = vmatmul.bf16.gmra.mxu0 %v1092
        %v1177 = vpop.f32.mrf.mxu0
        %v1178 = vadd.f32 %v1029, %v1177
        %v1179 = vpop.f32.mrf.mxu0
        %v1180 = vadd.f32 %v1031, %v1179
        %1181 = vmatmul.bf16.gmra.mxu0 %v1095
        %v1182 = vpop.f32.mrf.mxu0
        %v1183 = vadd.f32 %v1034, %v1182
        %v1184 = vpop.f32.mrf.mxu0
        %v1185 = vadd.f32 %v1036, %v1184
        %1186 = vmatmul.bf16.gmra.mxu0 %v1098
        %v1187 = vpop.f32.mrf.mxu0
        %v1188 = vadd.f32 %v1039, %v1187
        %v1189 = vpop.f32.mrf.mxu0
        %v1190 = vadd.f32 %v1041, %v1189
        %1191 = vdwg.mxu0
        %v1192 = vld [vmem:[#allocation3 + $0x2] sm:$0xff]
        %v1193 = vld [vmem:[#allocation3 + $0xa] sm:$0xff]
        %v1194 = vld [vmem:[#allocation3 + $0x1a] sm:$0xff]
        %v1195 = vld [vmem:[#allocation3 + $0x22] sm:$0xff]
        %v1196 = vld [vmem:[#allocation3 + $0x32] sm:$0xff]
        %v1197 = vld [vmem:[#allocation3 + $0x3a] sm:$0xff]
        %v1198 = vld [vmem:[#allocation3 + $0x4a] sm:$0xff]
        %v1199 = vld [vmem:[#allocation3 + $0x52] sm:$0xff]
        %v1200 = vld [vmem:[#allocation3 + $0x62] sm:$0xff]
        %v1201 = vld [vmem:[#allocation3 + $0x6a] sm:$0xff]
        %v1202 = vld [vmem:[#allocation3 + $0x7a] sm:$0xff]
        %v1203 = vld [vmem:[#allocation3 + $0x82] sm:$0xff]
        %v1204 = vld [vmem:[#allocation3 + $0x92] sm:$0xff]
        %v1205 = vld [vmem:[#allocation3 + $0x9a] sm:$0xff]
        %v1206 = vld [vmem:[#allocation3 + $0xaa] sm:$0xff]
        %v1207 = vld [vmem:[#allocation3 + $0xb2] sm:$0xff]
        %v1208 = vld [vmem:[#allocation3 + $0xc2] sm:$0xff]
        %v1209 = vld [vmem:[#allocation3 + $0xca] sm:$0xff]
        %v1210 = vld [vmem:[#allocation3 + $0xda] sm:$0xff]
        %v1211 = vld [vmem:[#allocation3 + $0xe2] sm:$0xff]
        %v1212 = vld [vmem:[#allocation3 + $0xf2] sm:$0xff]
        %v1213 = vld [vmem:[#allocation3 + $0xfa] sm:$0xff]
        %v1214 = vld [vmem:[#allocation3 + $0x10a] sm:$0xff]
        %v1215 = vld [vmem:[#allocation3 + $0x112] sm:$0xff]
        %v1216 = vld [vmem:[#allocation3 + $0x122] sm:$0xff]
        %v1217 = vld [vmem:[#allocation3 + $0x12a] sm:$0xff]
        %v1218 = vld [vmem:[#allocation3 + $0x13a] sm:$0xff]
        %v1219 = vld [vmem:[#allocation3 + $0x142] sm:$0xff]
        %v1220 = vld [vmem:[#allocation3 + $0x152] sm:$0xff]
        %v1221 = vld [vmem:[#allocation3 + $0x15a] sm:$0xff]
        %v1222 = vld [vmem:[#allocation3 + $0x16a] sm:$0xff]
        %v1223 = vld [vmem:[#allocation3 + $0x172] sm:$0xff]
        %v1224 = vpack.c.bf16 %v1193, %v1192
        %v1225 = vpack.c.bf16 %v1195, %v1194
        %v1226 = vpack.c.bf16 %v1197, %v1196
        %v1227 = vpack.c.bf16 %v1199, %v1198
        %v1228 = vpack.c.bf16 %v1201, %v1200
        %v1229 = vpack.c.bf16 %v1203, %v1202
        %v1230 = vpack.c.bf16 %v1205, %v1204
        %v1231 = vpack.c.bf16 %v1207, %v1206
        %v1232 = vpack.c.bf16 %v1209, %v1208
        %v1233 = vpack.c.bf16 %v1211, %v1210
        %v1234 = vpack.c.bf16 %v1213, %v1212
        %v1235 = vpack.c.bf16 %v1215, %v1214
        %v1236 = vpack.c.bf16 %v1217, %v1216
        %v1237 = vpack.c.bf16 %v1219, %v1218
        %v1238 = vpack.c.bf16 %v1221, %v1220
        %v1239 = vpack.c.bf16 %v1223, %v1222
        %s1240 = scalar_lea.vmem %s3, 24
        %v1241 = vld [vmem:[%s1240] sm:$0xf]
        %v1242 = vld [vmem:[%s1240 + $0x4] sm:$0xf]
        %v1243 = vld [vmem:[%s1240 + $0x8] sm:$0x1]
        %v1247 = vunpack.c.l.b16 %v1241
        %v1248 = vunpack.c.l.b16 %v1242
        %v1249 = vunpack.c.l.b16 %v1243
        %v1250 = vpack.c.b16 %v1248, %v1247
        %v1251 = vpack.c.b16 %v1249, %v1249
        %v1254 = vsel %vm701, %v1224, 0
        %v1257 = vsel %vm701, %v1225, 0
        %v1260 = vsel %vm701, %v1226, 0
        %v1263 = vsel %vm701, %v1227, 0
        %v1266 = vsel %vm701, %v1228, 0
        %v1269 = vsel %vm701, %v1229, 0
        %v1272 = vsel %vm701, %v1230, 0
        %v1275 = vsel %vm701, %v1231, 0
        %v1278 = vsel %vm701, %v1232, 0
        %v1281 = vsel %vm701, %v1233, 0
        %v1284 = vsel %vm701, %v1234, 0
        %v1287 = vsel %vm701, %v1235, 0
        %v1290 = vsel %vm701, %v1236, 0
        %v1293 = vsel %vm701, %v1237, 0
        %v1296 = vsel %vm701, %v1238, 0
        %v1299 = vsel %vm701, %v1239, 0
        %v1302 = vsel %vm950, %v1251, 0
        %1304 = vmatpush.bf16.msra.mxu0 0
        %1305 = vmatpush.bf16.msra.mxu0 0
        %1306 = vmatpush.bf16.msra.mxu0 0
        %1307 = vmatpush.bf16.msra.mxu0 0
        %1308 = vmatpush.bf16.msra.mxu0 0
        %1309 = vmatpush.bf16.msra.mxu0 0
        %1310 = vmatpush.bf16.msra.mxu0 %v1302
        %1311 = vmatpush.bf16.msra.mxu0 %v1250
        %1312 = vmatmul.bf16.gmra.mxu0 %v1254
        %v1313 = vpop.f32.mrf.mxu0
        %v1314 = vadd.f32 0.0, %v1313
        %v1315 = vpop.f32.mrf.mxu0
        %v1316 = vadd.f32 0.0, %v1315
        %1317 = vmatmul.bf16.gmra.mxu0 %v1257
        %v1318 = vpop.f32.mrf.mxu0
        %v1319 = vadd.f32 0.0, %v1318
        %v1320 = vpop.f32.mrf.mxu0
        %v1321 = vadd.f32 0.0, %v1320
        %1322 = vmatmul.bf16.gmra.mxu0 %v1260
        %v1323 = vpop.f32.mrf.mxu0
        %v1324 = vadd.f32 0.0, %v1323
        %v1325 = vpop.f32.mrf.mxu0
        %v1326 = vadd.f32 0.0, %v1325
        %1327 = vmatmul.bf16.gmra.mxu0 %v1263
        %v1328 = vpop.f32.mrf.mxu0
        %v1329 = vadd.f32 0.0, %v1328
        %v1330 = vpop.f32.mrf.mxu0
        %v1331 = vadd.f32 0.0, %v1330
        %1332 = vmatmul.bf16.gmra.mxu0 %v1266
        %v1333 = vpop.f32.mrf.mxu0
        %v1334 = vadd.f32 0.0, %v1333
        %v1335 = vpop.f32.mrf.mxu0
        %v1336 = vadd.f32 0.0, %v1335
        %1337 = vmatmul.bf16.gmra.mxu0 %v1269
        %v1338 = vpop.f32.mrf.mxu0
        %v1339 = vadd.f32 0.0, %v1338
        %v1340 = vpop.f32.mrf.mxu0
        %v1341 = vadd.f32 0.0, %v1340
        %1342 = vmatmul.bf16.gmra.mxu0 %v1272
        %v1343 = vpop.f32.mrf.mxu0
        %v1344 = vadd.f32 0.0, %v1343
        %v1345 = vpop.f32.mrf.mxu0
        %v1346 = vadd.f32 0.0, %v1345
        %1347 = vmatmul.bf16.gmra.mxu0 %v1275
        %v1348 = vpop.f32.mrf.mxu0
        %v1349 = vadd.f32 0.0, %v1348
        %v1350 = vpop.f32.mrf.mxu0
        %v1351 = vadd.f32 0.0, %v1350
        %1352 = vmatmul.bf16.gmra.mxu0 %v1278
        %v1353 = vpop.f32.mrf.mxu0
        %v1354 = vadd.f32 0.0, %v1353
        %v1355 = vpop.f32.mrf.mxu0
        %v1356 = vadd.f32 0.0, %v1355
        %1357 = vmatmul.bf16.gmra.mxu0 %v1281
        %v1358 = vpop.f32.mrf.mxu0
        %v1359 = vadd.f32 0.0, %v1358
        %v1360 = vpop.f32.mrf.mxu0
        %v1361 = vadd.f32 0.0, %v1360
        %1362 = vmatmul.bf16.gmra.mxu0 %v1284
        %v1363 = vpop.f32.mrf.mxu0
        %v1364 = vadd.f32 0.0, %v1363
        %v1365 = vpop.f32.mrf.mxu0
        %v1366 = vadd.f32 0.0, %v1365
        %1367 = vmatmul.bf16.gmra.mxu0 %v1287
        %v1368 = vpop.f32.mrf.mxu0
        %v1369 = vadd.f32 0.0, %v1368
        %v1370 = vpop.f32.mrf.mxu0
        %v1371 = vadd.f32 0.0, %v1370
        %1372 = vmatmul.bf16.gmra.mxu0 %v1290
        %v1373 = vpop.f32.mrf.mxu0
        %v1374 = vadd.f32 0.0, %v1373
        %v1375 = vpop.f32.mrf.mxu0
        %v1376 = vadd.f32 0.0, %v1375
        %1377 = vmatmul.bf16.gmra.mxu0 %v1293
        %v1378 = vpop.f32.mrf.mxu0
        %v1379 = vadd.f32 0.0, %v1378
        %v1380 = vpop.f32.mrf.mxu0
        %v1381 = vadd.f32 0.0, %v1380
        %1382 = vmatmul.bf16.gmra.mxu0 %v1296
        %v1383 = vpop.f32.mrf.mxu0
        %v1384 = vadd.f32 0.0, %v1383
        %v1385 = vpop.f32.mrf.mxu0
        %v1386 = vadd.f32 0.0, %v1385
        %1387 = vmatmul.bf16.gmra.mxu0 %v1299
        %v1388 = vpop.f32.mrf.mxu0
        %v1389 = vadd.f32 0.0, %v1388
        %v1390 = vpop.f32.mrf.mxu0
        %v1391 = vadd.f32 0.0, %v1390
        %1392 = vdwg.mxu0
        %v1393 = vadd.f32 %v1113, %v1314
        %v1394 = vadd.f32 %v1115, %v1316
        %v1395 = vadd.f32 %v1118, %v1319
        %v1396 = vadd.f32 %v1120, %v1321
        %v1397 = vadd.f32 %v1123, %v1324
        %v1398 = vadd.f32 %v1125, %v1326
        %v1399 = vadd.f32 %v1128, %v1329
        %v1400 = vadd.f32 %v1130, %v1331
        %v1401 = vadd.f32 %v1133, %v1334
        %v1402 = vadd.f32 %v1135, %v1336
        %v1403 = vadd.f32 %v1138, %v1339
        %v1404 = vadd.f32 %v1140, %v1341
        %v1405 = vadd.f32 %v1143, %v1344
        %v1406 = vadd.f32 %v1145, %v1346
        %v1407 = vadd.f32 %v1148, %v1349
        %v1408 = vadd.f32 %v1150, %v1351
        %v1409 = vadd.f32 %v1153, %v1354
        %v1410 = vadd.f32 %v1155, %v1356
        %v1411 = vadd.f32 %v1158, %v1359
        %v1412 = vadd.f32 %v1160, %v1361
        %v1413 = vadd.f32 %v1163, %v1364
        %v1414 = vadd.f32 %v1165, %v1366
        %v1415 = vadd.f32 %v1168, %v1369
        %v1416 = vadd.f32 %v1170, %v1371
        %v1417 = vadd.f32 %v1173, %v1374
        %v1418 = vadd.f32 %v1175, %v1376
        %v1419 = vadd.f32 %v1178, %v1379
        %v1420 = vadd.f32 %v1180, %v1381
        %v1421 = vadd.f32 %v1183, %v1384
        %v1422 = vadd.f32 %v1185, %v1386
        %v1423 = vadd.f32 %v1188, %v1389
        %v1424 = vadd.f32 %v1190, %v1391
        %v1425 = vld [vmem:[%s757] sm:$0xff]
        %v1426 = vld [vmem:[%s757 + $0x8] sm:$0xff]
        %v1427 = vld [vmem:[%s757 + $0x18] sm:$0xff]
        %v1428 = vld [vmem:[%s757 + $0x20] sm:$0xff]
        %v1429 = vld [vmem:[%s757 + $0x30] sm:$0xff]
        %v1430 = vld [vmem:[%s757 + $0x38] sm:$0xff]
        %v1431 = vld [vmem:[%s757 + $0x48] sm:$0xff]
        %v1432 = vld [vmem:[%s757 + $0x50] sm:$0xff]
        %v1433 = vld [vmem:[%s757 + $0x60] sm:$0xff]
        %v1434 = vld [vmem:[%s757 + $0x68] sm:$0xff]
        %v1435 = vld [vmem:[%s757 + $0x78] sm:$0xff]
        %v1436 = vld [vmem:[%s757 + $0x80] sm:$0xff]
        %v1437 = vld [vmem:[%s757 + $0x90] sm:$0xff]
        %v1438 = vld [vmem:[%s757 + $0x98] sm:$0xff]
        %v1439 = vld [vmem:[%s757 + $0xa8] sm:$0xff]
        %v1440 = vld [vmem:[%s757 + $0xb0] sm:$0xff]
        %v1441 = vld [vmem:[%s757 + $0xc0] sm:$0xff]
        %v1442 = vld [vmem:[%s757 + $0xc8] sm:$0xff]
        %v1443 = vld [vmem:[%s757 + $0xd8] sm:$0xff]
        %v1444 = vld [vmem:[%s757 + $0xe0] sm:$0xff]
        %v1445 = vld [vmem:[%s757 + $0xf0] sm:$0xff]
        %v1446 = vld [vmem:[%s757 + $0xf8] sm:$0xff]
        %v1447 = vld [vmem:[%s757 + $0x108] sm:$0xff]
        %v1448 = vld [vmem:[%s757 + $0x110] sm:$0xff]
        %v1449 = vld [vmem:[%s757 + $0x120] sm:$0xff]
        %v1450 = vld [vmem:[%s757 + $0x128] sm:$0xff]
        %v1451 = vld [vmem:[%s757 + $0x138] sm:$0xff]
        %v1452 = vld [vmem:[%s757 + $0x140] sm:$0xff]
        %v1453 = vld [vmem:[%s757 + $0x150] sm:$0xff]
        %v1454 = vld [vmem:[%s757 + $0x158] sm:$0xff]
        %v1455 = vld [vmem:[%s757 + $0x168] sm:$0xff]
        %v1456 = vld [vmem:[%s757 + $0x170] sm:$0xff]
        %v1457 = vpack.c.bf16 %v1426, %v1425
        %v1458 = vpack.c.bf16 %v1428, %v1427
        %v1459 = vpack.c.bf16 %v1430, %v1429
        %v1460 = vpack.c.bf16 %v1432, %v1431
        %v1461 = vpack.c.bf16 %v1434, %v1433
        %v1462 = vpack.c.bf16 %v1436, %v1435
        %v1463 = vpack.c.bf16 %v1438, %v1437
        %v1464 = vpack.c.bf16 %v1440, %v1439
        %v1465 = vpack.c.bf16 %v1442, %v1441
        %v1466 = vpack.c.bf16 %v1444, %v1443
        %v1467 = vpack.c.bf16 %v1446, %v1445
        %v1468 = vpack.c.bf16 %v1448, %v1447
        %v1469 = vpack.c.bf16 %v1450, %v1449
        %v1470 = vpack.c.bf16 %v1452, %v1451
        %v1471 = vpack.c.bf16 %v1454, %v1453
        %v1472 = vpack.c.bf16 %v1456, %v1455
        %s1473 = scalar_lea.vmem %s3, 36
        %v1474 = vld [vmem:[%s1473] sm:$0xf]
        %v1475 = vld [vmem:[%s1473 + $0x4] sm:$0xf]
        %v1476 = vld [vmem:[%s1473 + $0x8] sm:$0x1]
        %v1480 = vunpack.c.l.b16 %v1474
        %v1481 = vunpack.c.l.b16 %v1475
        %v1482 = vunpack.c.l.b16 %v1476
        %v1483 = vpack.c.b16 %v1481, %v1480
        %v1484 = vpack.c.b16 %v1482, %v1482
        %v1487 = vsel %vm701, %v1457, 0
        %v1490 = vsel %vm701, %v1458, 0
        %v1493 = vsel %vm701, %v1459, 0
        %v1496 = vsel %vm701, %v1460, 0
        %v1499 = vsel %vm701, %v1461, 0
        %v1502 = vsel %vm701, %v1462, 0
        %v1505 = vsel %vm701, %v1463, 0
        %v1508 = vsel %vm701, %v1464, 0
        %v1511 = vsel %vm701, %v1465, 0
        %v1514 = vsel %vm701, %v1466, 0
        %v1517 = vsel %vm701, %v1467, 0
        %v1520 = vsel %vm701, %v1468, 0
        %v1523 = vsel %vm701, %v1469, 0
        %v1526 = vsel %vm701, %v1470, 0
        %v1529 = vsel %vm701, %v1471, 0
        %v1532 = vsel %vm701, %v1472, 0
        %v1535 = vsel %vm950, %v1484, 0
        %1537 = vmatpush.bf16.msra.mxu0 0
        %1538 = vmatpush.bf16.msra.mxu0 0
        %1539 = vmatpush.bf16.msra.mxu0 0
        %1540 = vmatpush.bf16.msra.mxu0 0
        %1541 = vmatpush.bf16.msra.mxu0 0
        %1542 = vmatpush.bf16.msra.mxu0 0
        %1543 = vmatpush.bf16.msra.mxu0 %v1535
        %1544 = vmatpush.bf16.msra.mxu0 %v1483
        %1545 = vmatmul.bf16.gmra.mxu0 %v1487
        %v1546 = vpop.f32.mrf.mxu0
        %v1547 = vadd.f32 0.0, %v1546
        %v1548 = vpop.f32.mrf.mxu0
        %v1549 = vadd.f32 0.0, %v1548
        %1550 = vmatmul.bf16.gmra.mxu0 %v1490
        %v1551 = vpop.f32.mrf.mxu0
        %v1552 = vadd.f32 0.0, %v1551
        %v1553 = vpop.f32.mrf.mxu0
        %v1554 = vadd.f32 0.0, %v1553
        %1555 = vmatmul.bf16.gmra.mxu0 %v1493
        %v1556 = vpop.f32.mrf.mxu0
        %v1557 = vadd.f32 0.0, %v1556
        %v1558 = vpop.f32.mrf.mxu0
        %v1559 = vadd.f32 0.0, %v1558
        %1560 = vmatmul.bf16.gmra.mxu0 %v1496
        %v1561 = vpop.f32.mrf.mxu0
        %v1562 = vadd.f32 0.0, %v1561
        %v1563 = vpop.f32.mrf.mxu0
        %v1564 = vadd.f32 0.0, %v1563
        %1565 = vmatmul.bf16.gmra.mxu0 %v1499
        %v1566 = vpop.f32.mrf.mxu0
        %v1567 = vadd.f32 0.0, %v1566
        %v1568 = vpop.f32.mrf.mxu0
        %v1569 = vadd.f32 0.0, %v1568
        %1570 = vmatmul.bf16.gmra.mxu0 %v1502
        %v1571 = vpop.f32.mrf.mxu0
        %v1572 = vadd.f32 0.0, %v1571
        %v1573 = vpop.f32.mrf.mxu0
        %v1574 = vadd.f32 0.0, %v1573
        %1575 = vmatmul.bf16.gmra.mxu0 %v1505
        %v1576 = vpop.f32.mrf.mxu0
        %v1577 = vadd.f32 0.0, %v1576
        %v1578 = vpop.f32.mrf.mxu0
        %v1579 = vadd.f32 0.0, %v1578
        %1580 = vmatmul.bf16.gmra.mxu0 %v1508
        %v1581 = vpop.f32.mrf.mxu0
        %v1582 = vadd.f32 0.0, %v1581
        %v1583 = vpop.f32.mrf.mxu0
        %v1584 = vadd.f32 0.0, %v1583
        %1585 = vmatmul.bf16.gmra.mxu0 %v1511
        %v1586 = vpop.f32.mrf.mxu0
        %v1587 = vadd.f32 0.0, %v1586
        %v1588 = vpop.f32.mrf.mxu0
        %v1589 = vadd.f32 0.0, %v1588
        %1590 = vmatmul.bf16.gmra.mxu0 %v1514
        %v1591 = vpop.f32.mrf.mxu0
        %v1592 = vadd.f32 0.0, %v1591
        %v1593 = vpop.f32.mrf.mxu0
        %v1594 = vadd.f32 0.0, %v1593
        %1595 = vmatmul.bf16.gmra.mxu0 %v1517
        %v1596 = vpop.f32.mrf.mxu0
        %v1597 = vadd.f32 0.0, %v1596
        %v1598 = vpop.f32.mrf.mxu0
        %v1599 = vadd.f32 0.0, %v1598
        %1600 = vmatmul.bf16.gmra.mxu0 %v1520
        %v1601 = vpop.f32.mrf.mxu0
        %v1602 = vadd.f32 0.0, %v1601
        %v1603 = vpop.f32.mrf.mxu0
        %v1604 = vadd.f32 0.0, %v1603
        %1605 = vmatmul.bf16.gmra.mxu0 %v1523
        %v1606 = vpop.f32.mrf.mxu0
        %v1607 = vadd.f32 0.0, %v1606
        %v1608 = vpop.f32.mrf.mxu0
        %v1609 = vadd.f32 0.0, %v1608
        %1610 = vmatmul.bf16.gmra.mxu0 %v1526
        %v1611 = vpop.f32.mrf.mxu0
        %v1612 = vadd.f32 0.0, %v1611
        %v1613 = vpop.f32.mrf.mxu0
        %v1614 = vadd.f32 0.0, %v1613
        %1615 = vmatmul.bf16.gmra.mxu0 %v1529
        %v1616 = vpop.f32.mrf.mxu0
        %v1617 = vadd.f32 0.0, %v1616
        %v1618 = vpop.f32.mrf.mxu0
        %v1619 = vadd.f32 0.0, %v1618
        %1620 = vmatmul.bf16.gmra.mxu0 %v1532
        %v1621 = vpop.f32.mrf.mxu0
        %v1622 = vadd.f32 0.0, %v1621
        %v1623 = vpop.f32.mrf.mxu0
        %v1624 = vadd.f32 0.0, %v1623
        %1625 = vdwg.mxu0
        %v1626 = vadd.f32 %v1393, %v1547
        %v1627 = vadd.f32 %v1394, %v1549
        %v1628 = vadd.f32 %v1395, %v1552
        %v1629 = vadd.f32 %v1396, %v1554
        %v1630 = vadd.f32 %v1397, %v1557
        %v1631 = vadd.f32 %v1398, %v1559
        %v1632 = vadd.f32 %v1399, %v1562
        %v1633 = vadd.f32 %v1400, %v1564
        %v1634 = vadd.f32 %v1401, %v1567
        %v1635 = vadd.f32 %v1402, %v1569
        %v1636 = vadd.f32 %v1403, %v1572
        %v1637 = vadd.f32 %v1404, %v1574
        %v1638 = vadd.f32 %v1405, %v1577
        %v1639 = vadd.f32 %v1406, %v1579
        %v1640 = vadd.f32 %v1407, %v1582
        %v1641 = vadd.f32 %v1408, %v1584
        %v1642 = vadd.f32 %v1409, %v1587
        %v1643 = vadd.f32 %v1410, %v1589
        %v1644 = vadd.f32 %v1411, %v1592
        %v1645 = vadd.f32 %v1412, %v1594
        %v1646 = vadd.f32 %v1413, %v1597
        %v1647 = vadd.f32 %v1414, %v1599
        %v1648 = vadd.f32 %v1415, %v1602
        %v1649 = vadd.f32 %v1416, %v1604
        %v1650 = vadd.f32 %v1417, %v1607
        %v1651 = vadd.f32 %v1418, %v1609
        %v1652 = vadd.f32 %v1419, %v1612
        %v1653 = vadd.f32 %v1420, %v1614
        %v1654 = vadd.f32 %v1421, %v1617
        %v1655 = vadd.f32 %v1422, %v1619
        %v1656 = vadd.f32 %v1423, %v1622
        %v1657 = vadd.f32 %v1424, %v1624
        %v1658 = vld [vmem:[%s757 + $0x1] sm:$0xff]
        %v1659 = vld [vmem:[%s757 + $0x9] sm:$0xff]
        %v1660 = vld [vmem:[%s757 + $0x19] sm:$0xff]
        %v1661 = vld [vmem:[%s757 + $0x21] sm:$0xff]
        %v1662 = vld [vmem:[%s757 + $0x31] sm:$0xff]
        %v1663 = vld [vmem:[%s757 + $0x39] sm:$0xff]
        %v1664 = vld [vmem:[%s757 + $0x49] sm:$0xff]
        %v1665 = vld [vmem:[%s757 + $0x51] sm:$0xff]
        %v1666 = vld [vmem:[%s757 + $0x61] sm:$0xff]
        %v1667 = vld [vmem:[%s757 + $0x69] sm:$0xff]
        %v1668 = vld [vmem:[%s757 + $0x79] sm:$0xff]
        %v1669 = vld [vmem:[%s757 + $0x81] sm:$0xff]
        %v1670 = vld [vmem:[%s757 + $0x91] sm:$0xff]
        %v1671 = vld [vmem:[%s757 + $0x99] sm:$0xff]
        %v1672 = vld [vmem:[%s757 + $0xa9] sm:$0xff]
        %v1673 = vld [vmem:[%s757 + $0xb1] sm:$0xff]
        %v1674 = vld [vmem:[%s757 + $0xc1] sm:$0xff]
        %v1675 = vld [vmem:[%s757 + $0xc9] sm:$0xff]
        %v1676 = vld [vmem:[%s757 + $0xd9] sm:$0xff]
        %v1677 = vld [vmem:[%s757 + $0xe1] sm:$0xff]
        %v1678 = vld [vmem:[%s757 + $0xf1] sm:$0xff]
        %v1679 = vld [vmem:[%s757 + $0xf9] sm:$0xff]
        %v1680 = vld [vmem:[%s757 + $0x109] sm:$0xff]
        %v1681 = vld [vmem:[%s757 + $0x111] sm:$0xff]
        %v1682 = vld [vmem:[%s757 + $0x121] sm:$0xff]
        %v1683 = vld [vmem:[%s757 + $0x129] sm:$0xff]
        %v1684 = vld [vmem:[%s757 + $0x139] sm:$0xff]
        %v1685 = vld [vmem:[%s757 + $0x141] sm:$0xff]
        %v1686 = vld [vmem:[%s757 + $0x151] sm:$0xff]
        %v1687 = vld [vmem:[%s757 + $0x159] sm:$0xff]
        %v1688 = vld [vmem:[%s757 + $0x169] sm:$0xff]
        %v1689 = vld [vmem:[%s757 + $0x171] sm:$0xff]
        %v1690 = vpack.c.bf16 %v1659, %v1658
        %v1691 = vpack.c.bf16 %v1661, %v1660
        %v1692 = vpack.c.bf16 %v1663, %v1662
        %v1693 = vpack.c.bf16 %v1665, %v1664
        %v1694 = vpack.c.bf16 %v1667, %v1666
        %v1695 = vpack.c.bf16 %v1669, %v1668
        %v1696 = vpack.c.bf16 %v1671, %v1670
        %v1697 = vpack.c.bf16 %v1673, %v1672
        %v1698 = vpack.c.bf16 %v1675, %v1674
        %v1699 = vpack.c.bf16 %v1677, %v1676
        %v1700 = vpack.c.bf16 %v1679, %v1678
        %v1701 = vpack.c.bf16 %v1681, %v1680
        %v1702 = vpack.c.bf16 %v1683, %v1682
        %v1703 = vpack.c.bf16 %v1685, %v1684
        %v1704 = vpack.c.bf16 %v1687, %v1686
        %v1705 = vpack.c.bf16 %v1689, %v1688
        %s1706 = scalar_lea.vmem %s3, 48
        %v1707 = vld [vmem:[%s1706] sm:$0xf]
        %v1708 = vld [vmem:[%s1706 + $0x4] sm:$0xf]
        %v1709 = vld [vmem:[%s1706 + $0x8] sm:$0x1]
        %v1713 = vunpack.c.l.b16 %v1707
        %v1714 = vunpack.c.l.b16 %v1708
        %v1715 = vunpack.c.l.b16 %v1709
        %v1716 = vpack.c.b16 %v1714, %v1713
        %v1717 = vpack.c.b16 %v1715, %v1715
        %v1720 = vsel %vm701, %v1690, 0
        %v1723 = vsel %vm701, %v1691, 0
        %v1726 = vsel %vm701, %v1692, 0
        %v1729 = vsel %vm701, %v1693, 0
        %v1732 = vsel %vm701, %v1694, 0
        %v1735 = vsel %vm701, %v1695, 0
        %v1738 = vsel %vm701, %v1696, 0
        %v1741 = vsel %vm701, %v1697, 0
        %v1744 = vsel %vm701, %v1698, 0
        %v1747 = vsel %vm701, %v1699, 0
        %v1750 = vsel %vm701, %v1700, 0
        %v1753 = vsel %vm701, %v1701, 0
        %v1756 = vsel %vm701, %v1702, 0
        %v1759 = vsel %vm701, %v1703, 0
        %v1762 = vsel %vm701, %v1704, 0
        %v1765 = vsel %vm701, %v1705, 0
        %v1768 = vsel %vm950, %v1717, 0
        %1770 = vmatpush.bf16.msra.mxu0 0
        %1771 = vmatpush.bf16.msra.mxu0 0
        %1772 = vmatpush.bf16.msra.mxu0 0
        %1773 = vmatpush.bf16.msra.mxu0 0
        %1774 = vmatpush.bf16.msra.mxu0 0
        %1775 = vmatpush.bf16.msra.mxu0 0
        %1776 = vmatpush.bf16.msra.mxu0 %v1768
        %1777 = vmatpush.bf16.msra.mxu0 %v1716
        %1778 = vmatmul.bf16.gmra.mxu0 %v1720
        %v1779 = vpop.f32.mrf.mxu0
        %v1780 = vadd.f32 0.0, %v1779
        %v1781 = vpop.f32.mrf.mxu0
        %v1782 = vadd.f32 0.0, %v1781
        %1783 = vmatmul.bf16.gmra.mxu0 %v1723
        %v1784 = vpop.f32.mrf.mxu0
        %v1785 = vadd.f32 0.0, %v1784
        %v1786 = vpop.f32.mrf.mxu0
        %v1787 = vadd.f32 0.0, %v1786
        %1788 = vmatmul.bf16.gmra.mxu0 %v1726
        %v1789 = vpop.f32.mrf.mxu0
        %v1790 = vadd.f32 0.0, %v1789
        %v1791 = vpop.f32.mrf.mxu0
        %v1792 = vadd.f32 0.0, %v1791
        %1793 = vmatmul.bf16.gmra.mxu0 %v1729
        %v1794 = vpop.f32.mrf.mxu0
        %v1795 = vadd.f32 0.0, %v1794
        %v1796 = vpop.f32.mrf.mxu0
        %v1797 = vadd.f32 0.0, %v1796
        %1798 = vmatmul.bf16.gmra.mxu0 %v1732
        %v1799 = vpop.f32.mrf.mxu0
        %v1800 = vadd.f32 0.0, %v1799
        %v1801 = vpop.f32.mrf.mxu0
        %v1802 = vadd.f32 0.0, %v1801
        %1803 = vmatmul.bf16.gmra.mxu0 %v1735
        %v1804 = vpop.f32.mrf.mxu0
        %v1805 = vadd.f32 0.0, %v1804
        %v1806 = vpop.f32.mrf.mxu0
        %v1807 = vadd.f32 0.0, %v1806
        %1808 = vmatmul.bf16.gmra.mxu0 %v1738
        %v1809 = vpop.f32.mrf.mxu0
        %v1810 = vadd.f32 0.0, %v1809
        %v1811 = vpop.f32.mrf.mxu0
        %v1812 = vadd.f32 0.0, %v1811
        %1813 = vmatmul.bf16.gmra.mxu0 %v1741
        %v1814 = vpop.f32.mrf.mxu0
        %v1815 = vadd.f32 0.0, %v1814
        %v1816 = vpop.f32.mrf.mxu0
        %v1817 = vadd.f32 0.0, %v1816
        %1818 = vmatmul.bf16.gmra.mxu0 %v1744
        %v1819 = vpop.f32.mrf.mxu0
        %v1820 = vadd.f32 0.0, %v1819
        %v1821 = vpop.f32.mrf.mxu0
        %v1822 = vadd.f32 0.0, %v1821
        %1823 = vmatmul.bf16.gmra.mxu0 %v1747
        %v1824 = vpop.f32.mrf.mxu0
        %v1825 = vadd.f32 0.0, %v1824
        %v1826 = vpop.f32.mrf.mxu0
        %v1827 = vadd.f32 0.0, %v1826
        %1828 = vmatmul.bf16.gmra.mxu0 %v1750
        %v1829 = vpop.f32.mrf.mxu0
        %v1830 = vadd.f32 0.0, %v1829
        %v1831 = vpop.f32.mrf.mxu0
        %v1832 = vadd.f32 0.0, %v1831
        %1833 = vmatmul.bf16.gmra.mxu0 %v1753
        %v1834 = vpop.f32.mrf.mxu0
        %v1835 = vadd.f32 0.0, %v1834
        %v1836 = vpop.f32.mrf.mxu0
        %v1837 = vadd.f32 0.0, %v1836
        %1838 = vmatmul.bf16.gmra.mxu0 %v1756
        %v1839 = vpop.f32.mrf.mxu0
        %v1840 = vadd.f32 0.0, %v1839
        %v1841 = vpop.f32.mrf.mxu0
        %v1842 = vadd.f32 0.0, %v1841
        %1843 = vmatmul.bf16.gmra.mxu0 %v1759
        %v1844 = vpop.f32.mrf.mxu0
        %v1845 = vadd.f32 0.0, %v1844
        %v1846 = vpop.f32.mrf.mxu0
        %v1847 = vadd.f32 0.0, %v1846
        %1848 = vmatmul.bf16.gmra.mxu0 %v1762
        %v1849 = vpop.f32.mrf.mxu0
        %v1850 = vadd.f32 0.0, %v1849
        %v1851 = vpop.f32.mrf.mxu0
        %v1852 = vadd.f32 0.0, %v1851
        %1853 = vmatmul.bf16.gmra.mxu0 %v1765
        %v1854 = vpop.f32.mrf.mxu0
        %v1855 = vadd.f32 0.0, %v1854
        %v1856 = vpop.f32.mrf.mxu0
        %v1857 = vadd.f32 0.0, %v1856
        %1858 = vdwg.mxu0
        %v1859 = vadd.f32 %v1626, %v1780
        %v1860 = vadd.f32 %v1627, %v1782
        %v1861 = vadd.f32 %v1628, %v1785
        %v1862 = vadd.f32 %v1629, %v1787
        %v1863 = vadd.f32 %v1630, %v1790
        %v1864 = vadd.f32 %v1631, %v1792
        %v1865 = vadd.f32 %v1632, %v1795
        %v1866 = vadd.f32 %v1633, %v1797
        %v1867 = vadd.f32 %v1634, %v1800
        %v1868 = vadd.f32 %v1635, %v1802
        %v1869 = vadd.f32 %v1636, %v1805
        %v1870 = vadd.f32 %v1637, %v1807
        %v1871 = vadd.f32 %v1638, %v1810
        %v1872 = vadd.f32 %v1639, %v1812
        %v1873 = vadd.f32 %v1640, %v1815
        %v1874 = vadd.f32 %v1641, %v1817
        %v1875 = vadd.f32 %v1642, %v1820
        %v1876 = vadd.f32 %v1643, %v1822
        %v1877 = vadd.f32 %v1644, %v1825
        %v1878 = vadd.f32 %v1645, %v1827
        %v1879 = vadd.f32 %v1646, %v1830
        %v1880 = vadd.f32 %v1647, %v1832
        %v1881 = vadd.f32 %v1648, %v1835
        %v1882 = vadd.f32 %v1649, %v1837
        %v1883 = vadd.f32 %v1650, %v1840
        %v1884 = vadd.f32 %v1651, %v1842
        %v1885 = vadd.f32 %v1652, %v1845
        %v1886 = vadd.f32 %v1653, %v1847
        %v1887 = vadd.f32 %v1654, %v1850
        %v1888 = vadd.f32 %v1655, %v1852
        %v1889 = vadd.f32 %v1656, %v1855
        %v1890 = vadd.f32 %v1657, %v1857
        %v1891 = vld [vmem:[%s757 + $0x2] sm:$0xff]
        %v1892 = vld [vmem:[%s757 + $0xa] sm:$0xff]
        %v1893 = vld [vmem:[%s757 + $0x1a] sm:$0xff]
        %v1894 = vld [vmem:[%s757 + $0x22] sm:$0xff]
        %v1895 = vld [vmem:[%s757 + $0x32] sm:$0xff]
        %v1896 = vld [vmem:[%s757 + $0x3a] sm:$0xff]
        %v1897 = vld [vmem:[%s757 + $0x4a] sm:$0xff]
        %v1898 = vld [vmem:[%s757 + $0x52] sm:$0xff]
        %v1899 = vld [vmem:[%s757 + $0x62] sm:$0xff]
        %v1900 = vld [vmem:[%s757 + $0x6a] sm:$0xff]
        %v1901 = vld [vmem:[%s757 + $0x7a] sm:$0xff]
        %v1902 = vld [vmem:[%s757 + $0x82] sm:$0xff]
        %v1903 = vld [vmem:[%s757 + $0x92] sm:$0xff]
        %v1904 = vld [vmem:[%s757 + $0x9a] sm:$0xff]
        %v1905 = vld [vmem:[%s757 + $0xaa] sm:$0xff]
        %v1906 = vld [vmem:[%s757 + $0xb2] sm:$0xff]
        %v1907 = vld [vmem:[%s757 + $0xc2] sm:$0xff]
        %v1908 = vld [vmem:[%s757 + $0xca] sm:$0xff]
        %v1909 = vld [vmem:[%s757 + $0xda] sm:$0xff]
        %v1910 = vld [vmem:[%s757 + $0xe2] sm:$0xff]
        %v1911 = vld [vmem:[%s757 + $0xf2] sm:$0xff]
        %v1912 = vld [vmem:[%s757 + $0xfa] sm:$0xff]
        %v1913 = vld [vmem:[%s757 + $0x10a] sm:$0xff]
        %v1914 = vld [vmem:[%s757 + $0x112] sm:$0xff]
        %v1915 = vld [vmem:[%s757 + $0x122] sm:$0xff]
        %v1916 = vld [vmem:[%s757 + $0x12a] sm:$0xff]
        %v1917 = vld [vmem:[%s757 + $0x13a] sm:$0xff]
        %v1918 = vld [vmem:[%s757 + $0x142] sm:$0xff]
        %v1919 = vld [vmem:[%s757 + $0x152] sm:$0xff]
        %v1920 = vld [vmem:[%s757 + $0x15a] sm:$0xff]
        %v1921 = vld [vmem:[%s757 + $0x16a] sm:$0xff]
        %v1922 = vld [vmem:[%s757 + $0x172] sm:$0xff]
        %v1923 = vpack.c.bf16 %v1892, %v1891
        %v1924 = vpack.c.bf16 %v1894, %v1893
        %v1925 = vpack.c.bf16 %v1896, %v1895
        %v1926 = vpack.c.bf16 %v1898, %v1897
        %v1927 = vpack.c.bf16 %v1900, %v1899
        %v1928 = vpack.c.bf16 %v1902, %v1901
        %v1929 = vpack.c.bf16 %v1904, %v1903
        %v1930 = vpack.c.bf16 %v1906, %v1905
        %v1931 = vpack.c.bf16 %v1908, %v1907
        %v1932 = vpack.c.bf16 %v1910, %v1909
        %v1933 = vpack.c.bf16 %v1912, %v1911
        %v1934 = vpack.c.bf16 %v1914, %v1913
        %v1935 = vpack.c.bf16 %v1916, %v1915
        %v1936 = vpack.c.bf16 %v1918, %v1917
        %v1937 = vpack.c.bf16 %v1920, %v1919
        %v1938 = vpack.c.bf16 %v1922, %v1921
        %s1939 = scalar_lea.vmem %s3, 60
        %v1940 = vld [vmem:[%s1939] sm:$0xf]
        %v1941 = vld [vmem:[%s1939 + $0x4] sm:$0xf]
        %v1942 = vld [vmem:[%s1939 + $0x8] sm:$0x1]
        %v1946 = vunpack.c.l.b16 %v1940
        %v1947 = vunpack.c.l.b16 %v1941
        %v1948 = vunpack.c.l.b16 %v1942
        %v1949 = vpack.c.b16 %v1947, %v1946
        %v1950 = vpack.c.b16 %v1948, %v1948
        %v1953 = vsel %vm701, %v1923, 0
        %v1956 = vsel %vm701, %v1924, 0
        %v1959 = vsel %vm701, %v1925, 0
        %v1962 = vsel %vm701, %v1926, 0
        %v1965 = vsel %vm701, %v1927, 0
        %v1968 = vsel %vm701, %v1928, 0
        %v1971 = vsel %vm701, %v1929, 0
        %v1974 = vsel %vm701, %v1930, 0
        %v1977 = vsel %vm701, %v1931, 0
        %v1980 = vsel %vm701, %v1932, 0
        %v1983 = vsel %vm701, %v1933, 0
        %v1986 = vsel %vm701, %v1934, 0
        %v1989 = vsel %vm701, %v1935, 0
        %v1992 = vsel %vm701, %v1936, 0
        %v1995 = vsel %vm701, %v1937, 0
        %v1998 = vsel %vm701, %v1938, 0
        %v2001 = vsel %vm950, %v1950, 0
        %2003 = vmatpush.bf16.msra.mxu0 0
        %2004 = vmatpush.bf16.msra.mxu0 0
        %2005 = vmatpush.bf16.msra.mxu0 0
        %2006 = vmatpush.bf16.msra.mxu0 0
        %2007 = vmatpush.bf16.msra.mxu0 0
        %2008 = vmatpush.bf16.msra.mxu0 0
        %2009 = vmatpush.bf16.msra.mxu0 %v2001
        %2010 = vmatpush.bf16.msra.mxu0 %v1949
        %2011 = vmatmul.bf16.gmra.mxu0 %v1953
        %v2012 = vpop.f32.mrf.mxu0
        %v2013 = vadd.f32 0.0, %v2012
        %v2014 = vpop.f32.mrf.mxu0
        %v2015 = vadd.f32 0.0, %v2014
        %2016 = vmatmul.bf16.gmra.mxu0 %v1956
        %v2017 = vpop.f32.mrf.mxu0
        %v2018 = vadd.f32 0.0, %v2017
        %v2019 = vpop.f32.mrf.mxu0
        %v2020 = vadd.f32 0.0, %v2019
        %2021 = vmatmul.bf16.gmra.mxu0 %v1959
        %v2022 = vpop.f32.mrf.mxu0
        %v2023 = vadd.f32 0.0, %v2022
        %v2024 = vpop.f32.mrf.mxu0
        %v2025 = vadd.f32 0.0, %v2024
        %2026 = vmatmul.bf16.gmra.mxu0 %v1962
        %v2027 = vpop.f32.mrf.mxu0
        %v2028 = vadd.f32 0.0, %v2027
        %v2029 = vpop.f32.mrf.mxu0
        %v2030 = vadd.f32 0.0, %v2029
        %2031 = vmatmul.bf16.gmra.mxu0 %v1965
        %v2032 = vpop.f32.mrf.mxu0
        %v2033 = vadd.f32 0.0, %v2032
        %v2034 = vpop.f32.mrf.mxu0
        %v2035 = vadd.f32 0.0, %v2034
        %2036 = vmatmul.bf16.gmra.mxu0 %v1968
        %v2037 = vpop.f32.mrf.mxu0
        %v2038 = vadd.f32 0.0, %v2037
        %v2039 = vpop.f32.mrf.mxu0
        %v2040 = vadd.f32 0.0, %v2039
        %2041 = vmatmul.bf16.gmra.mxu0 %v1971
        %v2042 = vpop.f32.mrf.mxu0
        %v2043 = vadd.f32 0.0, %v2042
        %v2044 = vpop.f32.mrf.mxu0
        %v2045 = vadd.f32 0.0, %v2044
        %2046 = vmatmul.bf16.gmra.mxu0 %v1974
        %v2047 = vpop.f32.mrf.mxu0
        %v2048 = vadd.f32 0.0, %v2047
        %v2049 = vpop.f32.mrf.mxu0
        %v2050 = vadd.f32 0.0, %v2049
        %2051 = vmatmul.bf16.gmra.mxu0 %v1977
        %v2052 = vpop.f32.mrf.mxu0
        %v2053 = vadd.f32 0.0, %v2052
        %v2054 = vpop.f32.mrf.mxu0
        %v2055 = vadd.f32 0.0, %v2054
        %2056 = vmatmul.bf16.gmra.mxu0 %v1980
        %v2057 = vpop.f32.mrf.mxu0
        %v2058 = vadd.f32 0.0, %v2057
        %v2059 = vpop.f32.mrf.mxu0
        %v2060 = vadd.f32 0.0, %v2059
        %2061 = vmatmul.bf16.gmra.mxu0 %v1983
        %v2062 = vpop.f32.mrf.mxu0
        %v2063 = vadd.f32 0.0, %v2062
        %v2064 = vpop.f32.mrf.mxu0
        %v2065 = vadd.f32 0.0, %v2064
        %2066 = vmatmul.bf16.gmra.mxu0 %v1986
        %v2067 = vpop.f32.mrf.mxu0
        %v2068 = vadd.f32 0.0, %v2067
        %v2069 = vpop.f32.mrf.mxu0
        %v2070 = vadd.f32 0.0, %v2069
        %2071 = vmatmul.bf16.gmra.mxu0 %v1989
        %v2072 = vpop.f32.mrf.mxu0
        %v2073 = vadd.f32 0.0, %v2072
        %v2074 = vpop.f32.mrf.mxu0
        %v2075 = vadd.f32 0.0, %v2074
        %2076 = vmatmul.bf16.gmra.mxu0 %v1992
        %v2077 = vpop.f32.mrf.mxu0
        %v2078 = vadd.f32 0.0, %v2077
        %v2079 = vpop.f32.mrf.mxu0
        %v2080 = vadd.f32 0.0, %v2079
        %2081 = vmatmul.bf16.gmra.mxu0 %v1995
        %v2082 = vpop.f32.mrf.mxu0
        %v2083 = vadd.f32 0.0, %v2082
        %v2084 = vpop.f32.mrf.mxu0
        %v2085 = vadd.f32 0.0, %v2084
        %2086 = vmatmul.bf16.gmra.mxu0 %v1998
        %v2087 = vpop.f32.mrf.mxu0
        %v2088 = vadd.f32 0.0, %v2087
        %v2089 = vpop.f32.mrf.mxu0
        %v2090 = vadd.f32 0.0, %v2089
        %2091 = vdwg.mxu0
        %v2092 = vadd.f32 %v1859, %v2013
        %v2093 = vadd.f32 %v1860, %v2015
        %v2094 = vadd.f32 %v1861, %v2018
        %v2095 = vadd.f32 %v1862, %v2020
        %v2096 = vadd.f32 %v1863, %v2023
        %v2097 = vadd.f32 %v1864, %v2025
        %v2098 = vadd.f32 %v1865, %v2028
        %v2099 = vadd.f32 %v1866, %v2030
        %v2100 = vadd.f32 %v1867, %v2033
        %v2101 = vadd.f32 %v1868, %v2035
        %v2102 = vadd.f32 %v1869, %v2038
        %v2103 = vadd.f32 %v1870, %v2040
        %v2104 = vadd.f32 %v1871, %v2043
        %v2105 = vadd.f32 %v1872, %v2045
        %v2106 = vadd.f32 %v1873, %v2048
        %v2107 = vadd.f32 %v1874, %v2050
        %v2108 = vadd.f32 %v1875, %v2053
        %v2109 = vadd.f32 %v1876, %v2055
        %v2110 = vadd.f32 %v1877, %v2058
        %v2111 = vadd.f32 %v1878, %v2060
        %v2112 = vadd.f32 %v1879, %v2063
        %v2113 = vadd.f32 %v1880, %v2065
        %v2114 = vadd.f32 %v1881, %v2068
        %v2115 = vadd.f32 %v1882, %v2070
        %v2116 = vadd.f32 %v1883, %v2073
        %v2117 = vadd.f32 %v1884, %v2075
        %v2118 = vadd.f32 %v1885, %v2078
        %v2119 = vadd.f32 %v1886, %v2080
        %v2120 = vadd.f32 %v1887, %v2083
        %v2121 = vadd.f32 %v1888, %v2085
        %v2122 = vadd.f32 %v1889, %v2088
        %v2123 = vadd.f32 %v1890, %v2090
        %s2124 = scalar_lea.vmem [#allocation3], 48
        %v2125 = vld [vmem:[%s2124] sm:$0xff]
        %v2126 = vld [vmem:[%s2124 + $0x8] sm:$0xff]
        %v2127 = vld [vmem:[%s2124 + $0x18] sm:$0xff]
        %v2128 = vld [vmem:[%s2124 + $0x20] sm:$0xff]
        %v2129 = vld [vmem:[%s2124 + $0x30] sm:$0xff]
        %v2130 = vld [vmem:[%s2124 + $0x38] sm:$0xff]
        %v2131 = vld [vmem:[%s2124 + $0x48] sm:$0xff]
        %v2132 = vld [vmem:[%s2124 + $0x50] sm:$0xff]
        %v2133 = vld [vmem:[%s2124 + $0x60] sm:$0xff]
        %v2134 = vld [vmem:[%s2124 + $0x68] sm:$0xff]
        %v2135 = vld [vmem:[%s2124 + $0x78] sm:$0xff]
        %v2136 = vld [vmem:[%s2124 + $0x80] sm:$0xff]
        %v2137 = vld [vmem:[%s2124 + $0x90] sm:$0xff]
        %v2138 = vld [vmem:[%s2124 + $0x98] sm:$0xff]
        %v2139 = vld [vmem:[%s2124 + $0xa8] sm:$0xff]
        %v2140 = vld [vmem:[%s2124 + $0xb0] sm:$0xff]
        %v2141 = vld [vmem:[%s2124 + $0xc0] sm:$0xff]
        %v2142 = vld [vmem:[%s2124 + $0xc8] sm:$0xff]
        %v2143 = vld [vmem:[%s2124 + $0xd8] sm:$0xff]
        %v2144 = vld [vmem:[%s2124 + $0xe0] sm:$0xff]
        %v2145 = vld [vmem:[%s2124 + $0xf0] sm:$0xff]
        %v2146 = vld [vmem:[%s2124 + $0xf8] sm:$0xff]
        %v2147 = vld [vmem:[%s2124 + $0x108] sm:$0xff]
        %v2148 = vld [vmem:[%s2124 + $0x110] sm:$0xff]
        %v2149 = vld [vmem:[%s2124 + $0x120] sm:$0xff]
        %v2150 = vld [vmem:[%s2124 + $0x128] sm:$0xff]
        %v2151 = vld [vmem:[%s2124 + $0x138] sm:$0xff]
        %v2152 = vld [vmem:[%s2124 + $0x140] sm:$0xff]
        %v2153 = vld [vmem:[%s2124 + $0x150] sm:$0xff]
        %v2154 = vld [vmem:[%s2124 + $0x158] sm:$0xff]
        %v2155 = vld [vmem:[%s2124 + $0x168] sm:$0xff]
        %v2156 = vld [vmem:[%s2124 + $0x170] sm:$0xff]
        %v2157 = vpack.c.bf16 %v2126, %v2125
        %v2158 = vpack.c.bf16 %v2128, %v2127
        %v2159 = vpack.c.bf16 %v2130, %v2129
        %v2160 = vpack.c.bf16 %v2132, %v2131
        %v2161 = vpack.c.bf16 %v2134, %v2133
        %v2162 = vpack.c.bf16 %v2136, %v2135
        %v2163 = vpack.c.bf16 %v2138, %v2137
        %v2164 = vpack.c.bf16 %v2140, %v2139
        %v2165 = vpack.c.bf16 %v2142, %v2141
        %v2166 = vpack.c.bf16 %v2144, %v2143
        %v2167 = vpack.c.bf16 %v2146, %v2145
        %v2168 = vpack.c.bf16 %v2148, %v2147
        %v2169 = vpack.c.bf16 %v2150, %v2149
        %v2170 = vpack.c.bf16 %v2152, %v2151
        %v2171 = vpack.c.bf16 %v2154, %v2153
        %v2172 = vpack.c.bf16 %v2156, %v2155
        %s2173 = scalar_lea.vmem %s3, 72
        %v2174 = vld [vmem:[%s2173] sm:$0xf]
        %v2175 = vld [vmem:[%s2173 + $0x4] sm:$0xf]
        %v2176 = vld [vmem:[%s2173 + $0x8] sm:$0x1]
        %v2180 = vunpack.c.l.b16 %v2174
        %v2181 = vunpack.c.l.b16 %v2175
        %v2182 = vunpack.c.l.b16 %v2176
        %v2183 = vpack.c.b16 %v2181, %v2180
        %v2184 = vpack.c.b16 %v2182, %v2182
        %v2187 = vsel %vm701, %v2157, 0
        %v2190 = vsel %vm701, %v2158, 0
        %v2193 = vsel %vm701, %v2159, 0
        %v2196 = vsel %vm701, %v2160, 0
        %v2199 = vsel %vm701, %v2161, 0
        %v2202 = vsel %vm701, %v2162, 0
        %v2205 = vsel %vm701, %v2163, 0
        %v2208 = vsel %vm701, %v2164, 0
        %v2211 = vsel %vm701, %v2165, 0
        %v2214 = vsel %vm701, %v2166, 0
        %v2217 = vsel %vm701, %v2167, 0
        %v2220 = vsel %vm701, %v2168, 0
        %v2223 = vsel %vm701, %v2169, 0
        %v2226 = vsel %vm701, %v2170, 0
        %v2229 = vsel %vm701, %v2171, 0
        %v2232 = vsel %vm701, %v2172, 0
        %v2235 = vsel %vm950, %v2184, 0
        %2237 = vmatpush.bf16.msra.mxu0 0
        %2238 = vmatpush.bf16.msra.mxu0 0
        %2239 = vmatpush.bf16.msra.mxu0 0
        %2240 = vmatpush.bf16.msra.mxu0 0
        %2241 = vmatpush.bf16.msra.mxu0 0
        %2242 = vmatpush.bf16.msra.mxu0 0
        %2243 = vmatpush.bf16.msra.mxu0 %v2235
        %2244 = vmatpush.bf16.msra.mxu0 %v2183
        %2245 = vmatmul.bf16.gmra.mxu0 %v2187
        %v2246 = vpop.f32.mrf.mxu0
        %v2247 = vadd.f32 0.0, %v2246
        %v2248 = vpop.f32.mrf.mxu0
        %v2249 = vadd.f32 0.0, %v2248
        %2250 = vmatmul.bf16.gmra.mxu0 %v2190
        %v2251 = vpop.f32.mrf.mxu0
        %v2252 = vadd.f32 0.0, %v2251
        %v2253 = vpop.f32.mrf.mxu0
        %v2254 = vadd.f32 0.0, %v2253
        %2255 = vmatmul.bf16.gmra.mxu0 %v2193
        %v2256 = vpop.f32.mrf.mxu0
        %v2257 = vadd.f32 0.0, %v2256
        %v2258 = vpop.f32.mrf.mxu0
        %v2259 = vadd.f32 0.0, %v2258
        %2260 = vmatmul.bf16.gmra.mxu0 %v2196
        %v2261 = vpop.f32.mrf.mxu0
        %v2262 = vadd.f32 0.0, %v2261
        %v2263 = vpop.f32.mrf.mxu0
        %v2264 = vadd.f32 0.0, %v2263
        %2265 = vmatmul.bf16.gmra.mxu0 %v2199
        %v2266 = vpop.f32.mrf.mxu0
        %v2267 = vadd.f32 0.0, %v2266
        %v2268 = vpop.f32.mrf.mxu0
        %v2269 = vadd.f32 0.0, %v2268
        %2270 = vmatmul.bf16.gmra.mxu0 %v2202
        %v2271 = vpop.f32.mrf.mxu0
        %v2272 = vadd.f32 0.0, %v2271
        %v2273 = vpop.f32.mrf.mxu0
        %v2274 = vadd.f32 0.0, %v2273
        %2275 = vmatmul.bf16.gmra.mxu0 %v2205
        %v2276 = vpop.f32.mrf.mxu0
        %v2277 = vadd.f32 0.0, %v2276
        %v2278 = vpop.f32.mrf.mxu0
        %v2279 = vadd.f32 0.0, %v2278
        %2280 = vmatmul.bf16.gmra.mxu0 %v2208
        %v2281 = vpop.f32.mrf.mxu0
        %v2282 = vadd.f32 0.0, %v2281
        %v2283 = vpop.f32.mrf.mxu0
        %v2284 = vadd.f32 0.0, %v2283
        %2285 = vmatmul.bf16.gmra.mxu0 %v2211
        %v2286 = vpop.f32.mrf.mxu0
        %v2287 = vadd.f32 0.0, %v2286
        %v2288 = vpop.f32.mrf.mxu0
        %v2289 = vadd.f32 0.0, %v2288
        %2290 = vmatmul.bf16.gmra.mxu0 %v2214
        %v2291 = vpop.f32.mrf.mxu0
        %v2292 = vadd.f32 0.0, %v2291
        %v2293 = vpop.f32.mrf.mxu0
        %v2294 = vadd.f32 0.0, %v2293
        %2295 = vmatmul.bf16.gmra.mxu0 %v2217
        %v2296 = vpop.f32.mrf.mxu0
        %v2297 = vadd.f32 0.0, %v2296
        %v2298 = vpop.f32.mrf.mxu0
        %v2299 = vadd.f32 0.0, %v2298
        %2300 = vmatmul.bf16.gmra.mxu0 %v2220
        %v2301 = vpop.f32.mrf.mxu0
        %v2302 = vadd.f32 0.0, %v2301
        %v2303 = vpop.f32.mrf.mxu0
        %v2304 = vadd.f32 0.0, %v2303
        %2305 = vmatmul.bf16.gmra.mxu0 %v2223
        %v2306 = vpop.f32.mrf.mxu0
        %v2307 = vadd.f32 0.0, %v2306
        %v2308 = vpop.f32.mrf.mxu0
        %v2309 = vadd.f32 0.0, %v2308
        %2310 = vmatmul.bf16.gmra.mxu0 %v2226
        %v2311 = vpop.f32.mrf.mxu0
        %v2312 = vadd.f32 0.0, %v2311
        %v2313 = vpop.f32.mrf.mxu0
        %v2314 = vadd.f32 0.0, %v2313
        %2315 = vmatmul.bf16.gmra.mxu0 %v2229
        %v2316 = vpop.f32.mrf.mxu0
        %v2317 = vadd.f32 0.0, %v2316
        %v2318 = vpop.f32.mrf.mxu0
        %v2319 = vadd.f32 0.0, %v2318
        %2320 = vmatmul.bf16.gmra.mxu0 %v2232
        %v2321 = vpop.f32.mrf.mxu0
        %v2322 = vadd.f32 0.0, %v2321
        %v2323 = vpop.f32.mrf.mxu0
        %v2324 = vadd.f32 0.0, %v2323
        %2325 = vdwg.mxu0
        %v2326 = vadd.f32 %v2092, %v2247
        %v2327 = vadd.f32 %v2093, %v2249
        %v2328 = vadd.f32 %v2094, %v2252
        %v2329 = vadd.f32 %v2095, %v2254
        %v2330 = vadd.f32 %v2096, %v2257
        %v2331 = vadd.f32 %v2097, %v2259
        %v2332 = vadd.f32 %v2098, %v2262
        %v2333 = vadd.f32 %v2099, %v2264
        %v2334 = vadd.f32 %v2100, %v2267
        %v2335 = vadd.f32 %v2101, %v2269
        %v2336 = vadd.f32 %v2102, %v2272
        %v2337 = vadd.f32 %v2103, %v2274
        %v2338 = vadd.f32 %v2104, %v2277
        %v2339 = vadd.f32 %v2105, %v2279
        %v2340 = vadd.f32 %v2106, %v2282
        %v2341 = vadd.f32 %v2107, %v2284
        %v2342 = vadd.f32 %v2108, %v2287
        %v2343 = vadd.f32 %v2109, %v2289
        %v2344 = vadd.f32 %v2110, %v2292
        %v2345 = vadd.f32 %v2111, %v2294
        %v2346 = vadd.f32 %v2112, %v2297
        %v2347 = vadd.f32 %v2113, %v2299
        %v2348 = vadd.f32 %v2114, %v2302
        %v2349 = vadd.f32 %v2115, %v2304
        %v2350 = vadd.f32 %v2116, %v2307
        %v2351 = vadd.f32 %v2117, %v2309
        %v2352 = vadd.f32 %v2118, %v2312
        %v2353 = vadd.f32 %v2119, %v2314
        %v2354 = vadd.f32 %v2120, %v2317
        %v2355 = vadd.f32 %v2121, %v2319
        %v2356 = vadd.f32 %v2122, %v2322
        %v2357 = vadd.f32 %v2123, %v2324
        %v2358 = vld [vmem:[%s2124 + $0x1] sm:$0xff]
        %v2359 = vld [vmem:[%s2124 + $0x9] sm:$0xff]
        %v2360 = vld [vmem:[%s2124 + $0x19] sm:$0xff]
        %v2361 = vld [vmem:[%s2124 + $0x21] sm:$0xff]
        %v2362 = vld [vmem:[%s2124 + $0x31] sm:$0xff]
        %v2363 = vld [vmem:[%s2124 + $0x39] sm:$0xff]
        %v2364 = vld [vmem:[%s2124 + $0x49] sm:$0xff]
        %v2365 = vld [vmem:[%s2124 + $0x51] sm:$0xff]
        %v2366 = vld [vmem:[%s2124 + $0x61] sm:$0xff]
        %v2367 = vld [vmem:[%s2124 + $0x69] sm:$0xff]
        %v2368 = vld [vmem:[%s2124 + $0x79] sm:$0xff]
        %v2369 = vld [vmem:[%s2124 + $0x81] sm:$0xff]
        %v2370 = vld [vmem:[%s2124 + $0x91] sm:$0xff]
        %v2371 = vld [vmem:[%s2124 + $0x99] sm:$0xff]
        %v2372 = vld [vmem:[%s2124 + $0xa9] sm:$0xff]
        %v2373 = vld [vmem:[%s2124 + $0xb1] sm:$0xff]
        %v2374 = vld [vmem:[%s2124 + $0xc1] sm:$0xff]
        %v2375 = vld [vmem:[%s2124 + $0xc9] sm:$0xff]
        %v2376 = vld [vmem:[%s2124 + $0xd9] sm:$0xff]
        %v2377 = vld [vmem:[%s2124 + $0xe1] sm:$0xff]
        %v2378 = vld [vmem:[%s2124 + $0xf1] sm:$0xff]
        %v2379 = vld [vmem:[%s2124 + $0xf9] sm:$0xff]
        %v2380 = vld [vmem:[%s2124 + $0x109] sm:$0xff]
        %v2381 = vld [vmem:[%s2124 + $0x111] sm:$0xff]
        %v2382 = vld [vmem:[%s2124 + $0x121] sm:$0xff]
        %v2383 = vld [vmem:[%s2124 + $0x129] sm:$0xff]
        %v2384 = vld [vmem:[%s2124 + $0x139] sm:$0xff]
        %v2385 = vld [vmem:[%s2124 + $0x141] sm:$0xff]
        %v2386 = vld [vmem:[%s2124 + $0x151] sm:$0xff]
        %v2387 = vld [vmem:[%s2124 + $0x159] sm:$0xff]
        %v2388 = vld [vmem:[%s2124 + $0x169] sm:$0xff]
        %v2389 = vld [vmem:[%s2124 + $0x171] sm:$0xff]
        %v2390 = vpack.c.bf16 %v2359, %v2358
        %v2391 = vpack.c.bf16 %v2361, %v2360
        %v2392 = vpack.c.bf16 %v2363, %v2362
        %v2393 = vpack.c.bf16 %v2365, %v2364
        %v2394 = vpack.c.bf16 %v2367, %v2366
        %v2395 = vpack.c.bf16 %v2369, %v2368
        %v2396 = vpack.c.bf16 %v2371, %v2370
        %v2397 = vpack.c.bf16 %v2373, %v2372
        %v2398 = vpack.c.bf16 %v2375, %v2374
        %v2399 = vpack.c.bf16 %v2377, %v2376
        %v2400 = vpack.c.bf16 %v2379, %v2378
        %v2401 = vpack.c.bf16 %v2381, %v2380
        %v2402 = vpack.c.bf16 %v2383, %v2382
        %v2403 = vpack.c.bf16 %v2385, %v2384
        %v2404 = vpack.c.bf16 %v2387, %v2386
        %v2405 = vpack.c.bf16 %v2389, %v2388
        %s2406 = scalar_lea.vmem %s3, 84
        %v2407 = vld [vmem:[%s2406] sm:$0xf]
        %v2408 = vld [vmem:[%s2406 + $0x4] sm:$0xf]
        %v2409 = vld [vmem:[%s2406 + $0x8] sm:$0x1]
        %v2413 = vunpack.c.l.b16 %v2407
        %v2414 = vunpack.c.l.b16 %v2408
        %v2415 = vunpack.c.l.b16 %v2409
        %v2416 = vpack.c.b16 %v2414, %v2413
        %v2417 = vpack.c.b16 %v2415, %v2415
        %v2420 = vsel %vm701, %v2390, 0
        %v2423 = vsel %vm701, %v2391, 0
        %v2426 = vsel %vm701, %v2392, 0
        %v2429 = vsel %vm701, %v2393, 0
        %v2432 = vsel %vm701, %v2394, 0
        %v2435 = vsel %vm701, %v2395, 0
        %v2438 = vsel %vm701, %v2396, 0
        %v2441 = vsel %vm701, %v2397, 0
        %v2444 = vsel %vm701, %v2398, 0
        %v2447 = vsel %vm701, %v2399, 0
        %v2450 = vsel %vm701, %v2400, 0
        %v2453 = vsel %vm701, %v2401, 0
        %v2456 = vsel %vm701, %v2402, 0
        %v2459 = vsel %vm701, %v2403, 0
        %v2462 = vsel %vm701, %v2404, 0
        %v2465 = vsel %vm701, %v2405, 0
        %v2468 = vsel %vm950, %v2417, 0
        %2470 = vmatpush.bf16.msra.mxu0 0
        %2471 = vmatpush.bf16.msra.mxu0 0
        %2472 = vmatpush.bf16.msra.mxu0 0
        %2473 = vmatpush.bf16.msra.mxu0 0
        %2474 = vmatpush.bf16.msra.mxu0 0
        %2475 = vmatpush.bf16.msra.mxu0 0
        %2476 = vmatpush.bf16.msra.mxu0 %v2468
        %2477 = vmatpush.bf16.msra.mxu0 %v2416
        %2478 = vmatmul.bf16.gmra.mxu0 %v2420
        %v2479 = vpop.f32.mrf.mxu0
        %v2480 = vadd.f32 0.0, %v2479
        %v2481 = vpop.f32.mrf.mxu0
        %v2482 = vadd.f32 0.0, %v2481
        %2483 = vmatmul.bf16.gmra.mxu0 %v2423
        %v2484 = vpop.f32.mrf.mxu0
        %v2485 = vadd.f32 0.0, %v2484
        %v2486 = vpop.f32.mrf.mxu0
        %v2487 = vadd.f32 0.0, %v2486
        %2488 = vmatmul.bf16.gmra.mxu0 %v2426
        %v2489 = vpop.f32.mrf.mxu0
        %v2490 = vadd.f32 0.0, %v2489
        %v2491 = vpop.f32.mrf.mxu0
        %v2492 = vadd.f32 0.0, %v2491
        %2493 = vmatmul.bf16.gmra.mxu0 %v2429
        %v2494 = vpop.f32.mrf.mxu0
        %v2495 = vadd.f32 0.0, %v2494
        %v2496 = vpop.f32.mrf.mxu0
        %v2497 = vadd.f32 0.0, %v2496
        %2498 = vmatmul.bf16.gmra.mxu0 %v2432
        %v2499 = vpop.f32.mrf.mxu0
        %v2500 = vadd.f32 0.0, %v2499
        %v2501 = vpop.f32.mrf.mxu0
        %v2502 = vadd.f32 0.0, %v2501
        %2503 = vmatmul.bf16.gmra.mxu0 %v2435
        %v2504 = vpop.f32.mrf.mxu0
        %v2505 = vadd.f32 0.0, %v2504
        %v2506 = vpop.f32.mrf.mxu0
        %v2507 = vadd.f32 0.0, %v2506
        %2508 = vmatmul.bf16.gmra.mxu0 %v2438
        %v2509 = vpop.f32.mrf.mxu0
        %v2510 = vadd.f32 0.0, %v2509
        %v2511 = vpop.f32.mrf.mxu0
        %v2512 = vadd.f32 0.0, %v2511
        %2513 = vmatmul.bf16.gmra.mxu0 %v2441
        %v2514 = vpop.f32.mrf.mxu0
        %v2515 = vadd.f32 0.0, %v2514
        %v2516 = vpop.f32.mrf.mxu0
        %v2517 = vadd.f32 0.0, %v2516
        %2518 = vmatmul.bf16.gmra.mxu0 %v2444
        %v2519 = vpop.f32.mrf.mxu0
        %v2520 = vadd.f32 0.0, %v2519
        %v2521 = vpop.f32.mrf.mxu0
        %v2522 = vadd.f32 0.0, %v2521
        %2523 = vmatmul.bf16.gmra.mxu0 %v2447
        %v2524 = vpop.f32.mrf.mxu0
        %v2525 = vadd.f32 0.0, %v2524
        %v2526 = vpop.f32.mrf.mxu0
        %v2527 = vadd.f32 0.0, %v2526
        %2528 = vmatmul.bf16.gmra.mxu0 %v2450
        %v2529 = vpop.f32.mrf.mxu0
        %v2530 = vadd.f32 0.0, %v2529
        %v2531 = vpop.f32.mrf.mxu0
        %v2532 = vadd.f32 0.0, %v2531
        %2533 = vmatmul.bf16.gmra.mxu0 %v2453
        %v2534 = vpop.f32.mrf.mxu0
        %v2535 = vadd.f32 0.0, %v2534
        %v2536 = vpop.f32.mrf.mxu0
        %v2537 = vadd.f32 0.0, %v2536
        %2538 = vmatmul.bf16.gmra.mxu0 %v2456
        %v2539 = vpop.f32.mrf.mxu0
        %v2540 = vadd.f32 0.0, %v2539
        %v2541 = vpop.f32.mrf.mxu0
        %v2542 = vadd.f32 0.0, %v2541
        %2543 = vmatmul.bf16.gmra.mxu0 %v2459
        %v2544 = vpop.f32.mrf.mxu0
        %v2545 = vadd.f32 0.0, %v2544
        %v2546 = vpop.f32.mrf.mxu0
        %v2547 = vadd.f32 0.0, %v2546
        %2548 = vmatmul.bf16.gmra.mxu0 %v2462
        %v2549 = vpop.f32.mrf.mxu0
        %v2550 = vadd.f32 0.0, %v2549
        %v2551 = vpop.f32.mrf.mxu0
        %v2552 = vadd.f32 0.0, %v2551
        %2553 = vmatmul.bf16.gmra.mxu0 %v2465
        %v2554 = vpop.f32.mrf.mxu0
        %v2555 = vadd.f32 0.0, %v2554
        %v2556 = vpop.f32.mrf.mxu0
        %v2557 = vadd.f32 0.0, %v2556
        %2558 = vdwg.mxu0
        %v2559 = vadd.f32 %v2326, %v2480
        %v2560 = vadd.f32 %v2327, %v2482
        %v2561 = vadd.f32 %v2328, %v2485
        %v2562 = vadd.f32 %v2329, %v2487
        %v2563 = vadd.f32 %v2330, %v2490
        %v2564 = vadd.f32 %v2331, %v2492
        %v2565 = vadd.f32 %v2332, %v2495
        %v2566 = vadd.f32 %v2333, %v2497
        %v2567 = vadd.f32 %v2334, %v2500
        %v2568 = vadd.f32 %v2335, %v2502
        %v2569 = vadd.f32 %v2336, %v2505
        %v2570 = vadd.f32 %v2337, %v2507
        %v2571 = vadd.f32 %v2338, %v2510
        %v2572 = vadd.f32 %v2339, %v2512
        %v2573 = vadd.f32 %v2340, %v2515
        %v2574 = vadd.f32 %v2341, %v2517
        %v2575 = vadd.f32 %v2342, %v2520
        %v2576 = vadd.f32 %v2343, %v2522
        %v2577 = vadd.f32 %v2344, %v2525
        %v2578 = vadd.f32 %v2345, %v2527
        %v2579 = vadd.f32 %v2346, %v2530
        %v2580 = vadd.f32 %v2347, %v2532
        %v2581 = vadd.f32 %v2348, %v2535
        %v2582 = vadd.f32 %v2349, %v2537
        %v2583 = vadd.f32 %v2350, %v2540
        %v2584 = vadd.f32 %v2351, %v2542
        %v2585 = vadd.f32 %v2352, %v2545
        %v2586 = vadd.f32 %v2353, %v2547
        %v2587 = vadd.f32 %v2354, %v2550
        %v2588 = vadd.f32 %v2355, %v2552
        %v2589 = vadd.f32 %v2356, %v2555
        %v2590 = vadd.f32 %v2357, %v2557
        %v2591 = vld [vmem:[%s2124 + $0x2] sm:$0xff]
        %v2592 = vld [vmem:[%s2124 + $0xa] sm:$0xff]
        %v2593 = vld [vmem:[%s2124 + $0x1a] sm:$0xff]
        %v2594 = vld [vmem:[%s2124 + $0x22] sm:$0xff]
        %v2595 = vld [vmem:[%s2124 + $0x32] sm:$0xff]
        %v2596 = vld [vmem:[%s2124 + $0x3a] sm:$0xff]
        %v2597 = vld [vmem:[%s2124 + $0x4a] sm:$0xff]
        %v2598 = vld [vmem:[%s2124 + $0x52] sm:$0xff]
        %v2599 = vld [vmem:[%s2124 + $0x62] sm:$0xff]
        %v2600 = vld [vmem:[%s2124 + $0x6a] sm:$0xff]
        %v2601 = vld [vmem:[%s2124 + $0x7a] sm:$0xff]
        %v2602 = vld [vmem:[%s2124 + $0x82] sm:$0xff]
        %v2603 = vld [vmem:[%s2124 + $0x92] sm:$0xff]
        %v2604 = vld [vmem:[%s2124 + $0x9a] sm:$0xff]
        %v2605 = vld [vmem:[%s2124 + $0xaa] sm:$0xff]
        %v2606 = vld [vmem:[%s2124 + $0xb2] sm:$0xff]
        %v2607 = vld [vmem:[%s2124 + $0xc2] sm:$0xff]
        %v2608 = vld [vmem:[%s2124 + $0xca] sm:$0xff]
        %v2609 = vld [vmem:[%s2124 + $0xda] sm:$0xff]
        %v2610 = vld [vmem:[%s2124 + $0xe2] sm:$0xff]
        %v2611 = vld [vmem:[%s2124 + $0xf2] sm:$0xff]
        %v2612 = vld [vmem:[%s2124 + $0xfa] sm:$0xff]
        %v2613 = vld [vmem:[%s2124 + $0x10a] sm:$0xff]
        %v2614 = vld [vmem:[%s2124 + $0x112] sm:$0xff]
        %v2615 = vld [vmem:[%s2124 + $0x122] sm:$0xff]
        %v2616 = vld [vmem:[%s2124 + $0x12a] sm:$0xff]
        %v2617 = vld [vmem:[%s2124 + $0x13a] sm:$0xff]
        %v2618 = vld [vmem:[%s2124 + $0x142] sm:$0xff]
        %v2619 = vld [vmem:[%s2124 + $0x152] sm:$0xff]
        %v2620 = vld [vmem:[%s2124 + $0x15a] sm:$0xff]
        %v2621 = vld [vmem:[%s2124 + $0x16a] sm:$0xff]
        %v2622 = vld [vmem:[%s2124 + $0x172] sm:$0xff]
        %v2623 = vpack.c.bf16 %v2592, %v2591
        %v2624 = vpack.c.bf16 %v2594, %v2593
        %v2625 = vpack.c.bf16 %v2596, %v2595
        %v2626 = vpack.c.bf16 %v2598, %v2597
        %v2627 = vpack.c.bf16 %v2600, %v2599
        %v2628 = vpack.c.bf16 %v2602, %v2601
        %v2629 = vpack.c.bf16 %v2604, %v2603
        %v2630 = vpack.c.bf16 %v2606, %v2605
        %v2631 = vpack.c.bf16 %v2608, %v2607
        %v2632 = vpack.c.bf16 %v2610, %v2609
        %v2633 = vpack.c.bf16 %v2612, %v2611
        %v2634 = vpack.c.bf16 %v2614, %v2613
        %v2635 = vpack.c.bf16 %v2616, %v2615
        %v2636 = vpack.c.bf16 %v2618, %v2617
        %v2637 = vpack.c.bf16 %v2620, %v2619
        %v2638 = vpack.c.bf16 %v2622, %v2621
        %s2639 = scalar_lea.vmem %s3, 96
        %v2640 = vld [vmem:[%s2639] sm:$0xf]
        %v2641 = vld [vmem:[%s2639 + $0x4] sm:$0xf]
        %v2642 = vld [vmem:[%s2639 + $0x8] sm:$0x1]
        %v2646 = vunpack.c.l.b16 %v2640
        %v2647 = vunpack.c.l.b16 %v2641
        %v2648 = vunpack.c.l.b16 %v2642
        %v2649 = vpack.c.b16 %v2647, %v2646
        %v2650 = vpack.c.b16 %v2648, %v2648
        %v2653 = vsel %vm701, %v2623, 0
        %v2656 = vsel %vm701, %v2624, 0
        %v2659 = vsel %vm701, %v2625, 0
        %v2662 = vsel %vm701, %v2626, 0
        %v2665 = vsel %vm701, %v2627, 0
        %v2668 = vsel %vm701, %v2628, 0
        %v2671 = vsel %vm701, %v2629, 0
        %v2674 = vsel %vm701, %v2630, 0
        %v2677 = vsel %vm701, %v2631, 0
        %v2680 = vsel %vm701, %v2632, 0
        %v2683 = vsel %vm701, %v2633, 0
        %v2686 = vsel %vm701, %v2634, 0
        %v2689 = vsel %vm701, %v2635, 0
        %v2692 = vsel %vm701, %v2636, 0
        %v2695 = vsel %vm701, %v2637, 0
        %v2698 = vsel %vm701, %v2638, 0
        %v2701 = vsel %vm950, %v2650, 0
        %2703 = vmatpush.bf16.msra.mxu0 0
        %2704 = vmatpush.bf16.msra.mxu0 0
        %2705 = vmatpush.bf16.msra.mxu0 0
        %2706 = vmatpush.bf16.msra.mxu0 0
        %2707 = vmatpush.bf16.msra.mxu0 0
        %2708 = vmatpush.bf16.msra.mxu0 0
        %2709 = vmatpush.bf16.msra.mxu0 %v2701
        %2710 = vmatpush.bf16.msra.mxu0 %v2649
        %2711 = vmatmul.bf16.gmra.mxu0 %v2653
        %v2712 = vpop.f32.mrf.mxu0
        %v2713 = vadd.f32 0.0, %v2712
        %v2714 = vpop.f32.mrf.mxu0
        %v2715 = vadd.f32 0.0, %v2714
        %2716 = vmatmul.bf16.gmra.mxu0 %v2656
        %v2717 = vpop.f32.mrf.mxu0
        %v2718 = vadd.f32 0.0, %v2717
        %v2719 = vpop.f32.mrf.mxu0
        %v2720 = vadd.f32 0.0, %v2719
        %2721 = vmatmul.bf16.gmra.mxu0 %v2659
        %v2722 = vpop.f32.mrf.mxu0
        %v2723 = vadd.f32 0.0, %v2722
        %v2724 = vpop.f32.mrf.mxu0
        %v2725 = vadd.f32 0.0, %v2724
        %2726 = vmatmul.bf16.gmra.mxu0 %v2662
        %v2727 = vpop.f32.mrf.mxu0
        %v2728 = vadd.f32 0.0, %v2727
        %v2729 = vpop.f32.mrf.mxu0
        %v2730 = vadd.f32 0.0, %v2729
        %2731 = vmatmul.bf16.gmra.mxu0 %v2665
        %v2732 = vpop.f32.mrf.mxu0
        %v2733 = vadd.f32 0.0, %v2732
        %v2734 = vpop.f32.mrf.mxu0
        %v2735 = vadd.f32 0.0, %v2734
        %2736 = vmatmul.bf16.gmra.mxu0 %v2668
        %v2737 = vpop.f32.mrf.mxu0
        %v2738 = vadd.f32 0.0, %v2737
        %v2739 = vpop.f32.mrf.mxu0
        %v2740 = vadd.f32 0.0, %v2739
        %2741 = vmatmul.bf16.gmra.mxu0 %v2671
        %v2742 = vpop.f32.mrf.mxu0
        %v2743 = vadd.f32 0.0, %v2742
        %v2744 = vpop.f32.mrf.mxu0
        %v2745 = vadd.f32 0.0, %v2744
        %2746 = vmatmul.bf16.gmra.mxu0 %v2674
        %v2747 = vpop.f32.mrf.mxu0
        %v2748 = vadd.f32 0.0, %v2747
        %v2749 = vpop.f32.mrf.mxu0
        %v2750 = vadd.f32 0.0, %v2749
        %2751 = vmatmul.bf16.gmra.mxu0 %v2677
        %v2752 = vpop.f32.mrf.mxu0
        %v2753 = vadd.f32 0.0, %v2752
        %v2754 = vpop.f32.mrf.mxu0
        %v2755 = vadd.f32 0.0, %v2754
        %2756 = vmatmul.bf16.gmra.mxu0 %v2680
        %v2757 = vpop.f32.mrf.mxu0
        %v2758 = vadd.f32 0.0, %v2757
        %v2759 = vpop.f32.mrf.mxu0
        %v2760 = vadd.f32 0.0, %v2759
        %2761 = vmatmul.bf16.gmra.mxu0 %v2683
        %v2762 = vpop.f32.mrf.mxu0
        %v2763 = vadd.f32 0.0, %v2762
        %v2764 = vpop.f32.mrf.mxu0
        %v2765 = vadd.f32 0.0, %v2764
        %2766 = vmatmul.bf16.gmra.mxu0 %v2686
        %v2767 = vpop.f32.mrf.mxu0
        %v2768 = vadd.f32 0.0, %v2767
        %v2769 = vpop.f32.mrf.mxu0
        %v2770 = vadd.f32 0.0, %v2769
        %2771 = vmatmul.bf16.gmra.mxu0 %v2689
        %v2772 = vpop.f32.mrf.mxu0
        %v2773 = vadd.f32 0.0, %v2772
        %v2774 = vpop.f32.mrf.mxu0
        %v2775 = vadd.f32 0.0, %v2774
        %2776 = vmatmul.bf16.gmra.mxu0 %v2692
        %v2777 = vpop.f32.mrf.mxu0
        %v2778 = vadd.f32 0.0, %v2777
        %v2779 = vpop.f32.mrf.mxu0
        %v2780 = vadd.f32 0.0, %v2779
        %2781 = vmatmul.bf16.gmra.mxu0 %v2695
        %v2782 = vpop.f32.mrf.mxu0
        %v2783 = vadd.f32 0.0, %v2782
        %v2784 = vpop.f32.mrf.mxu0
        %v2785 = vadd.f32 0.0, %v2784
        %2786 = vmatmul.bf16.gmra.mxu0 %v2698
        %v2787 = vpop.f32.mrf.mxu0
        %v2788 = vadd.f32 0.0, %v2787
        %v2789 = vpop.f32.mrf.mxu0
        %v2790 = vadd.f32 0.0, %v2789
        %2791 = vdwg.mxu0
        %v2792 = vadd.f32 %v2559, %v2713
        %v2793 = vadd.f32 %v2560, %v2715
        %v2794 = vadd.f32 %v2561, %v2718
        %v2795 = vadd.f32 %v2562, %v2720
        %v2796 = vadd.f32 %v2563, %v2723
        %v2797 = vadd.f32 %v2564, %v2725
        %v2798 = vadd.f32 %v2565, %v2728
        %v2799 = vadd.f32 %v2566, %v2730
        %v2800 = vadd.f32 %v2567, %v2733
        %v2801 = vadd.f32 %v2568, %v2735
        %v2802 = vadd.f32 %v2569, %v2738
        %v2803 = vadd.f32 %v2570, %v2740
        %v2804 = vadd.f32 %v2571, %v2743
        %v2805 = vadd.f32 %v2572, %v2745
        %v2806 = vadd.f32 %v2573, %v2748
        %v2807 = vadd.f32 %v2574, %v2750
        %v2808 = vadd.f32 %v2575, %v2753
        %v2809 = vadd.f32 %v2576, %v2755
        %v2810 = vadd.f32 %v2577, %v2758
        %v2811 = vadd.f32 %v2578, %v2760
        %v2812 = vadd.f32 %v2579, %v2763
        %v2813 = vadd.f32 %v2580, %v2765
        %v2814 = vadd.f32 %v2581, %v2768
        %v2815 = vadd.f32 %v2582, %v2770
        %v2816 = vadd.f32 %v2583, %v2773
        %v2817 = vadd.f32 %v2584, %v2775
        %v2818 = vadd.f32 %v2585, %v2778
        %v2819 = vadd.f32 %v2586, %v2780
        %v2820 = vadd.f32 %v2587, %v2783
        %v2821 = vadd.f32 %v2588, %v2785
        %v2822 = vadd.f32 %v2589, %v2788
        %v2823 = vadd.f32 %v2590, %v2790
        %v2824 = vld [vmem:[%s4] sm:$0x1]
        %v2826 = vperm.slane %v2824, 0
        %v2828 = vadd.f32 %v2792, %v2826
        %v2829 = vadd.f32 %v2793, %v2826
        %v2830 = vadd.f32 %v2794, %v2826
        %v2831 = vadd.f32 %v2795, %v2826
        %v2832 = vadd.f32 %v2796, %v2826
        %v2833 = vadd.f32 %v2797, %v2826
        %v2834 = vadd.f32 %v2798, %v2826
        %v2835 = vadd.f32 %v2799, %v2826
        %v2836 = vadd.f32 %v2800, %v2826
        %v2837 = vadd.f32 %v2801, %v2826
        %v2838 = vadd.f32 %v2802, %v2826
        %v2839 = vadd.f32 %v2803, %v2826
        %v2840 = vadd.f32 %v2804, %v2826
        %v2841 = vadd.f32 %v2805, %v2826
        %v2842 = vadd.f32 %v2806, %v2826
        %v2843 = vadd.f32 %v2807, %v2826
        %v2844 = vadd.f32 %v2808, %v2826
        %v2845 = vadd.f32 %v2809, %v2826
        %v2846 = vadd.f32 %v2810, %v2826
        %v2847 = vadd.f32 %v2811, %v2826
        %v2848 = vadd.f32 %v2812, %v2826
        %v2849 = vadd.f32 %v2813, %v2826
        %v2850 = vadd.f32 %v2814, %v2826
        %v2851 = vadd.f32 %v2815, %v2826
        %v2852 = vadd.f32 %v2816, %v2826
        %v2853 = vadd.f32 %v2817, %v2826
        %v2854 = vadd.f32 %v2818, %v2826
        %v2855 = vadd.f32 %v2819, %v2826
        %v2856 = vadd.f32 %v2820, %v2826
        %v2857 = vadd.f32 %v2821, %v2826
        %v2858 = vadd.f32 %v2822, %v2826
        %v2859 = vadd.f32 %v2823, %v2826
        %v2860 = vmax.f32 %v2828, 0.0
        %v2861 = vmax.f32 %v2829, 0.0
        %v2862 = vmax.f32 %v2830, 0.0
        %v2863 = vmax.f32 %v2831, 0.0
        %v2864 = vmax.f32 %v2832, 0.0
        %v2865 = vmax.f32 %v2833, 0.0
        %v2866 = vmax.f32 %v2834, 0.0
        %v2867 = vmax.f32 %v2835, 0.0
        %v2868 = vmax.f32 %v2836, 0.0
        %v2869 = vmax.f32 %v2837, 0.0
        %v2870 = vmax.f32 %v2838, 0.0
        %v2871 = vmax.f32 %v2839, 0.0
        %v2872 = vmax.f32 %v2840, 0.0
        %v2873 = vmax.f32 %v2841, 0.0
        %v2874 = vmax.f32 %v2842, 0.0
        %v2875 = vmax.f32 %v2843, 0.0
        %v2876 = vmax.f32 %v2844, 0.0
        %v2877 = vmax.f32 %v2845, 0.0
        %v2878 = vmax.f32 %v2846, 0.0
        %v2879 = vmax.f32 %v2847, 0.0
        %v2880 = vmax.f32 %v2848, 0.0
        %v2881 = vmax.f32 %v2849, 0.0
        %v2882 = vmax.f32 %v2850, 0.0
        %v2883 = vmax.f32 %v2851, 0.0
        %v2884 = vmax.f32 %v2852, 0.0
        %v2885 = vmax.f32 %v2853, 0.0
        %v2886 = vmax.f32 %v2854, 0.0
        %v2887 = vmax.f32 %v2855, 0.0
        %v2888 = vmax.f32 %v2856, 0.0
        %v2889 = vmax.f32 %v2857, 0.0
        %v2890 = vmax.f32 %v2858, 0.0
        %v2891 = vmax.f32 %v2859, 0.0
        %v2892 = vld [vmem:[%s5] sm:$0xf]
        %v2893 = vld [vmem:[%s5 + $0x4] sm:$0xf]
        %v2894 = vld [vmem:[%s5 + $0x8] sm:$0x1]
        %s2895 = scalar_lea.vmem %s5, 12
        %v2896 = vld [vmem:[%s2895] sm:$0xf]
        %v2897 = vld [vmem:[%s2895 + $0x4] sm:$0xf]
        %v2898 = vld [vmem:[%s2895 + $0x8] sm:$0x1]
        %v2902 = vunpack.c.l.b16 %v2896
        %v2903 = vunpack.c.l.b16 %v2897
        %v2904 = vunpack.c.l.b16 %v2898
        %v2905 = vpack.c.b16 %v2903, %v2902
        %v2906 = vpack.c.b16 %v2904, %v2904
        %v2909 = vsel %vm950, %v2906, 0
        %2911 = vmatpush.bf16.msra.mxu0 0
        %2912 = vmatpush.bf16.msra.mxu0 0
        %2913 = vmatpush.bf16.msra.mxu0 0
        %2914 = vmatpush.bf16.msra.mxu0 0
        %2915 = vmatpush.bf16.msra.mxu0 0
        %2916 = vmatpush.bf16.msra.mxu0 0
        %2917 = vmatpush.bf16.msra.mxu0 %v2909
        %2918 = vmatpush.bf16.msra.mxu0 %v2905
        %2919 = vmatmul.bf16.gmra.mxu0 %v903
        %v2920 = vpop.f32.mrf.mxu0
        %v2921 = vadd.f32 0.0, %v2920
        %v2922 = vpop.f32.mrf.mxu0
        %v2923 = vadd.f32 0.0, %v2922
        %2924 = vmatmul.bf16.gmra.mxu0 %v906
        %v2925 = vpop.f32.mrf.mxu0
        %v2926 = vadd.f32 0.0, %v2925
        %v2927 = vpop.f32.mrf.mxu0
        %v2928 = vadd.f32 0.0, %v2927
        %2929 = vmatmul.bf16.gmra.mxu0 %v909
        %v2930 = vpop.f32.mrf.mxu0
        %v2931 = vadd.f32 0.0, %v2930
        %v2932 = vpop.f32.mrf.mxu0
        %v2933 = vadd.f32 0.0, %v2932
        %2934 = vmatmul.bf16.gmra.mxu0 %v912
        %v2935 = vpop.f32.mrf.mxu0
        %v2936 = vadd.f32 0.0, %v2935
        %v2937 = vpop.f32.mrf.mxu0
        %v2938 = vadd.f32 0.0, %v2937
        %2939 = vmatmul.bf16.gmra.mxu0 %v915
        %v2940 = vpop.f32.mrf.mxu0
        %v2941 = vadd.f32 0.0, %v2940
        %v2942 = vpop.f32.mrf.mxu0
        %v2943 = vadd.f32 0.0, %v2942
        %2944 = vmatmul.bf16.gmra.mxu0 %v918
        %v2945 = vpop.f32.mrf.mxu0
        %v2946 = vadd.f32 0.0, %v2945
        %v2947 = vpop.f32.mrf.mxu0
        %v2948 = vadd.f32 0.0, %v2947
        %2949 = vmatmul.bf16.gmra.mxu0 %v921
        %v2950 = vpop.f32.mrf.mxu0
        %v2951 = vadd.f32 0.0, %v2950
        %v2952 = vpop.f32.mrf.mxu0
        %v2953 = vadd.f32 0.0, %v2952
        %2954 = vmatmul.bf16.gmra.mxu0 %v924
        %v2955 = vpop.f32.mrf.mxu0
        %v2956 = vadd.f32 0.0, %v2955
        %v2957 = vpop.f32.mrf.mxu0
        %v2958 = vadd.f32 0.0, %v2957
        %2959 = vmatmul.bf16.gmra.mxu0 %v927
        %v2960 = vpop.f32.mrf.mxu0
        %v2961 = vadd.f32 0.0, %v2960
        %v2962 = vpop.f32.mrf.mxu0
        %v2963 = vadd.f32 0.0, %v2962
        %2964 = vmatmul.bf16.gmra.mxu0 %v930
        %v2965 = vpop.f32.mrf.mxu0
        %v2966 = vadd.f32 0.0, %v2965
        %v2967 = vpop.f32.mrf.mxu0
        %v2968 = vadd.f32 0.0, %v2967
        %2969 = vmatmul.bf16.gmra.mxu0 %v933
        %v2970 = vpop.f32.mrf.mxu0
        %v2971 = vadd.f32 0.0, %v2970
        %v2972 = vpop.f32.mrf.mxu0
        %v2973 = vadd.f32 0.0, %v2972
        %2974 = vmatmul.bf16.gmra.mxu0 %v936
        %v2975 = vpop.f32.mrf.mxu0
        %v2976 = vadd.f32 0.0, %v2975
        %v2977 = vpop.f32.mrf.mxu0
        %v2978 = vadd.f32 0.0, %v2977
        %2979 = vmatmul.bf16.gmra.mxu0 %v939
        %v2980 = vpop.f32.mrf.mxu0
        %v2981 = vadd.f32 0.0, %v2980
        %v2982 = vpop.f32.mrf.mxu0
        %v2983 = vadd.f32 0.0, %v2982
        %2984 = vmatmul.bf16.gmra.mxu0 %v942
        %v2985 = vpop.f32.mrf.mxu0
        %v2986 = vadd.f32 0.0, %v2985
        %v2987 = vpop.f32.mrf.mxu0
        %v2988 = vadd.f32 0.0, %v2987
        %2989 = vmatmul.bf16.gmra.mxu0 %v945
        %v2990 = vpop.f32.mrf.mxu0
        %v2991 = vadd.f32 0.0, %v2990
        %v2992 = vpop.f32.mrf.mxu0
        %v2993 = vadd.f32 0.0, %v2992
        %2994 = vmatmul.bf16.gmra.mxu0 %v948
        %v2995 = vpop.f32.mrf.mxu0
        %v2996 = vadd.f32 0.0, %v2995
        %v2997 = vpop.f32.mrf.mxu0
        %v2998 = vadd.f32 0.0, %v2997
        %2999 = vdwg.mxu0
        %v3003 = vunpack.c.l.b16 %v2892
        %v3004 = vunpack.c.l.b16 %v2893
        %v3005 = vunpack.c.l.b16 %v2894
        %v3006 = vpack.c.b16 %v3004, %v3003
        %v3007 = vpack.c.b16 %v3005, %v3005
        %v3010 = vsel %vm950, %v3007, 0
        %3012 = vmatpush.bf16.msra.mxu0 0
        %3013 = vmatpush.bf16.msra.mxu0 0
        %3014 = vmatpush.bf16.msra.mxu0 0
        %3015 = vmatpush.bf16.msra.mxu0 0
        %3016 = vmatpush.bf16.msra.mxu0 0
        %3017 = vmatpush.bf16.msra.mxu0 0
        %3018 = vmatpush.bf16.msra.mxu0 %v3010
        %3019 = vmatpush.bf16.msra.mxu0 %v3006
        %3020 = vmatmul.bf16.gmra.mxu0 %v1053
        %v3021 = vpop.f32.mrf.mxu0
        %v3022 = vadd.f32 %v2921, %v3021
        %v3023 = vpop.f32.mrf.mxu0
        %v3024 = vadd.f32 %v2923, %v3023
        %3025 = vmatmul.bf16.gmra.mxu0 %v1056
        %v3026 = vpop.f32.mrf.mxu0
        %v3027 = vadd.f32 %v2926, %v3026
        %v3028 = vpop.f32.mrf.mxu0
        %v3029 = vadd.f32 %v2928, %v3028
        %3030 = vmatmul.bf16.gmra.mxu0 %v1059
        %v3031 = vpop.f32.mrf.mxu0
        %v3032 = vadd.f32 %v2931, %v3031
        %v3033 = vpop.f32.mrf.mxu0
        %v3034 = vadd.f32 %v2933, %v3033
        %3035 = vmatmul.bf16.gmra.mxu0 %v1062
        %v3036 = vpop.f32.mrf.mxu0
        %v3037 = vadd.f32 %v2936, %v3036
        %v3038 = vpop.f32.mrf.mxu0
        %v3039 = vadd.f32 %v2938, %v3038
        %3040 = vmatmul.bf16.gmra.mxu0 %v1065
        %v3041 = vpop.f32.mrf.mxu0
        %v3042 = vadd.f32 %v2941, %v3041
        %v3043 = vpop.f32.mrf.mxu0
        %v3044 = vadd.f32 %v2943, %v3043
        %3045 = vmatmul.bf16.gmra.mxu0 %v1068
        %v3046 = vpop.f32.mrf.mxu0
        %v3047 = vadd.f32 %v2946, %v3046
        %v3048 = vpop.f32.mrf.mxu0
        %v3049 = vadd.f32 %v2948, %v3048
        %3050 = vmatmul.bf16.gmra.mxu0 %v1071
        %v3051 = vpop.f32.mrf.mxu0
        %v3052 = vadd.f32 %v2951, %v3051
        %v3053 = vpop.f32.mrf.mxu0
        %v3054 = vadd.f32 %v2953, %v3053
        %3055 = vmatmul.bf16.gmra.mxu0 %v1074
        %v3056 = vpop.f32.mrf.mxu0
        %v3057 = vadd.f32 %v2956, %v3056
        %v3058 = vpop.f32.mrf.mxu0
        %v3059 = vadd.f32 %v2958, %v3058
        %3060 = vmatmul.bf16.gmra.mxu0 %v1077
        %v3061 = vpop.f32.mrf.mxu0
        %v3062 = vadd.f32 %v2961, %v3061
        %v3063 = vpop.f32.mrf.mxu0
        %v3064 = vadd.f32 %v2963, %v3063
        %3065 = vmatmul.bf16.gmra.mxu0 %v1080
        %v3066 = vpop.f32.mrf.mxu0
        %v3067 = vadd.f32 %v2966, %v3066
        %v3068 = vpop.f32.mrf.mxu0
        %v3069 = vadd.f32 %v2968, %v3068
        %3070 = vmatmul.bf16.gmra.mxu0 %v1083
        %v3071 = vpop.f32.mrf.mxu0
        %v3072 = vadd.f32 %v2971, %v3071
        %v3073 = vpop.f32.mrf.mxu0
        %v3074 = vadd.f32 %v2973, %v3073
        %3075 = vmatmul.bf16.gmra.mxu0 %v1086
        %v3076 = vpop.f32.mrf.mxu0
        %v3077 = vadd.f32 %v2976, %v3076
        %v3078 = vpop.f32.mrf.mxu0
        %v3079 = vadd.f32 %v2978, %v3078
        %3080 = vmatmul.bf16.gmra.mxu0 %v1089
        %v3081 = vpop.f32.mrf.mxu0
        %v3082 = vadd.f32 %v2981, %v3081
        %v3083 = vpop.f32.mrf.mxu0
        %v3084 = vadd.f32 %v2983, %v3083
        %3085 = vmatmul.bf16.gmra.mxu0 %v1092
        %v3086 = vpop.f32.mrf.mxu0
        %v3087 = vadd.f32 %v2986, %v3086
        %v3088 = vpop.f32.mrf.mxu0
        %v3089 = vadd.f32 %v2988, %v3088
        %3090 = vmatmul.bf16.gmra.mxu0 %v1095
        %v3091 = vpop.f32.mrf.mxu0
        %v3092 = vadd.f32 %v2991, %v3091
        %v3093 = vpop.f32.mrf.mxu0
        %v3094 = vadd.f32 %v2993, %v3093
        %3095 = vmatmul.bf16.gmra.mxu0 %v1098
        %v3096 = vpop.f32.mrf.mxu0
        %v3097 = vadd.f32 %v2996, %v3096
        %v3098 = vpop.f32.mrf.mxu0
        %v3099 = vadd.f32 %v2998, %v3098
        %3100 = vdwg.mxu0
        %s3101 = scalar_lea.vmem %s5, 24
        %v3102 = vld [vmem:[%s3101] sm:$0xf]
        %v3103 = vld [vmem:[%s3101 + $0x4] sm:$0xf]
        %v3104 = vld [vmem:[%s3101 + $0x8] sm:$0x1]
        %v3108 = vunpack.c.l.b16 %v3102
        %v3109 = vunpack.c.l.b16 %v3103
        %v3110 = vunpack.c.l.b16 %v3104
        %v3111 = vpack.c.b16 %v3109, %v3108
        %v3112 = vpack.c.b16 %v3110, %v3110
        %v3115 = vsel %vm950, %v3112, 0
        %3117 = vmatpush.bf16.msra.mxu0 0
        %3118 = vmatpush.bf16.msra.mxu0 0
        %3119 = vmatpush.bf16.msra.mxu0 0
        %3120 = vmatpush.bf16.msra.mxu0 0
        %3121 = vmatpush.bf16.msra.mxu0 0
        %3122 = vmatpush.bf16.msra.mxu0 0
        %3123 = vmatpush.bf16.msra.mxu0 %v3115
        %3124 = vmatpush.bf16.msra.mxu0 %v3111
        %3125 = vmatmul.bf16.gmra.mxu0 %v1254
        %v3126 = vpop.f32.mrf.mxu0
        %v3127 = vadd.f32 0.0, %v3126
        %v3128 = vpop.f32.mrf.mxu0
        %v3129 = vadd.f32 0.0, %v3128
        %3130 = vmatmul.bf16.gmra.mxu0 %v1257
        %v3131 = vpop.f32.mrf.mxu0
        %v3132 = vadd.f32 0.0, %v3131
        %v3133 = vpop.f32.mrf.mxu0
        %v3134 = vadd.f32 0.0, %v3133
        %3135 = vmatmul.bf16.gmra.mxu0 %v1260
        %v3136 = vpop.f32.mrf.mxu0
        %v3137 = vadd.f32 0.0, %v3136
        %v3138 = vpop.f32.mrf.mxu0
        %v3139 = vadd.f32 0.0, %v3138
        %3140 = vmatmul.bf16.gmra.mxu0 %v1263
        %v3141 = vpop.f32.mrf.mxu0
        %v3142 = vadd.f32 0.0, %v3141
        %v3143 = vpop.f32.mrf.mxu0
        %v3144 = vadd.f32 0.0, %v3143
        %3145 = vmatmul.bf16.gmra.mxu0 %v1266
        %v3146 = vpop.f32.mrf.mxu0
        %v3147 = vadd.f32 0.0, %v3146
        %v3148 = vpop.f32.mrf.mxu0
        %v3149 = vadd.f32 0.0, %v3148
        %3150 = vmatmul.bf16.gmra.mxu0 %v1269
        %v3151 = vpop.f32.mrf.mxu0
        %v3152 = vadd.f32 0.0, %v3151
        %v3153 = vpop.f32.mrf.mxu0
        %v3154 = vadd.f32 0.0, %v3153
        %3155 = vmatmul.bf16.gmra.mxu0 %v1272
        %v3156 = vpop.f32.mrf.mxu0
        %v3157 = vadd.f32 0.0, %v3156
        %v3158 = vpop.f32.mrf.mxu0
        %v3159 = vadd.f32 0.0, %v3158
        %3160 = vmatmul.bf16.gmra.mxu0 %v1275
        %v3161 = vpop.f32.mrf.mxu0
        %v3162 = vadd.f32 0.0, %v3161
        %v3163 = vpop.f32.mrf.mxu0
        %v3164 = vadd.f32 0.0, %v3163
        %3165 = vmatmul.bf16.gmra.mxu0 %v1278
        %v3166 = vpop.f32.mrf.mxu0
        %v3167 = vadd.f32 0.0, %v3166
        %v3168 = vpop.f32.mrf.mxu0
        %v3169 = vadd.f32 0.0, %v3168
        %3170 = vmatmul.bf16.gmra.mxu0 %v1281
        %v3171 = vpop.f32.mrf.mxu0
        %v3172 = vadd.f32 0.0, %v3171
        %v3173 = vpop.f32.mrf.mxu0
        %v3174 = vadd.f32 0.0, %v3173
        %3175 = vmatmul.bf16.gmra.mxu0 %v1284
        %v3176 = vpop.f32.mrf.mxu0
        %v3177 = vadd.f32 0.0, %v3176
        %v3178 = vpop.f32.mrf.mxu0
        %v3179 = vadd.f32 0.0, %v3178
        %3180 = vmatmul.bf16.gmra.mxu0 %v1287
        %v3181 = vpop.f32.mrf.mxu0
        %v3182 = vadd.f32 0.0, %v3181
        %v3183 = vpop.f32.mrf.mxu0
        %v3184 = vadd.f32 0.0, %v3183
        %3185 = vmatmul.bf16.gmra.mxu0 %v1290
        %v3186 = vpop.f32.mrf.mxu0
        %v3187 = vadd.f32 0.0, %v3186
        %v3188 = vpop.f32.mrf.mxu0
        %v3189 = vadd.f32 0.0, %v3188
        %3190 = vmatmul.bf16.gmra.mxu0 %v1293
        %v3191 = vpop.f32.mrf.mxu0
        %v3192 = vadd.f32 0.0, %v3191
        %v3193 = vpop.f32.mrf.mxu0
        %v3194 = vadd.f32 0.0, %v3193
        %3195 = vmatmul.bf16.gmra.mxu0 %v1296
        %v3196 = vpop.f32.mrf.mxu0
        %v3197 = vadd.f32 0.0, %v3196
        %v3198 = vpop.f32.mrf.mxu0
        %v3199 = vadd.f32 0.0, %v3198
        %3200 = vmatmul.bf16.gmra.mxu0 %v1299
        %v3201 = vpop.f32.mrf.mxu0
        %v3202 = vadd.f32 0.0, %v3201
        %v3203 = vpop.f32.mrf.mxu0
        %v3204 = vadd.f32 0.0, %v3203
        %3205 = vdwg.mxu0
        %v3206 = vadd.f32 %v3022, %v3127
        %v3207 = vadd.f32 %v3024, %v3129
        %v3208 = vadd.f32 %v3027, %v3132
        %v3209 = vadd.f32 %v3029, %v3134
        %v3210 = vadd.f32 %v3032, %v3137
        %v3211 = vadd.f32 %v3034, %v3139
        %v3212 = vadd.f32 %v3037, %v3142
        %v3213 = vadd.f32 %v3039, %v3144
        %v3214 = vadd.f32 %v3042, %v3147
        %v3215 = vadd.f32 %v3044, %v3149
        %v3216 = vadd.f32 %v3047, %v3152
        %v3217 = vadd.f32 %v3049, %v3154
        %v3218 = vadd.f32 %v3052, %v3157
        %v3219 = vadd.f32 %v3054, %v3159
        %v3220 = vadd.f32 %v3057, %v3162
        %v3221 = vadd.f32 %v3059, %v3164
        %v3222 = vadd.f32 %v3062, %v3167
        %v3223 = vadd.f32 %v3064, %v3169
        %v3224 = vadd.f32 %v3067, %v3172
        %v3225 = vadd.f32 %v3069, %v3174
        %v3226 = vadd.f32 %v3072, %v3177
        %v3227 = vadd.f32 %v3074, %v3179
        %v3228 = vadd.f32 %v3077, %v3182
        %v3229 = vadd.f32 %v3079, %v3184
        %v3230 = vadd.f32 %v3082, %v3187
        %v3231 = vadd.f32 %v3084, %v3189
        %v3232 = vadd.f32 %v3087, %v3192
        %v3233 = vadd.f32 %v3089, %v3194
        %v3234 = vadd.f32 %v3092, %v3197
        %v3235 = vadd.f32 %v3094, %v3199
        %v3236 = vadd.f32 %v3097, %v3202
        %v3237 = vadd.f32 %v3099, %v3204
        %s3238 = scalar_lea.vmem %s5, 36
        %v3239 = vld [vmem:[%s3238] sm:$0xf]
        %v3240 = vld [vmem:[%s3238 + $0x4] sm:$0xf]
        %v3241 = vld [vmem:[%s3238 + $0x8] sm:$0x1]
        %v3245 = vunpack.c.l.b16 %v3239
        %v3246 = vunpack.c.l.b16 %v3240
        %v3247 = vunpack.c.l.b16 %v3241
        %v3248 = vpack.c.b16 %v3246, %v3245
        %v3249 = vpack.c.b16 %v3247, %v3247
        %v3252 = vsel %vm950, %v3249, 0
        %3254 = vmatpush.bf16.msra.mxu0 0
        %3255 = vmatpush.bf16.msra.mxu0 0
        %3256 = vmatpush.bf16.msra.mxu0 0
        %3257 = vmatpush.bf16.msra.mxu0 0
        %3258 = vmatpush.bf16.msra.mxu0 0
        %3259 = vmatpush.bf16.msra.mxu0 0
        %3260 = vmatpush.bf16.msra.mxu0 %v3252
        %3261 = vmatpush.bf16.msra.mxu0 %v3248
        %3262 = vmatmul.bf16.gmra.mxu0 %v1487
        %v3263 = vpop.f32.mrf.mxu0
        %v3264 = vadd.f32 0.0, %v3263
        %v3265 = vpop.f32.mrf.mxu0
        %v3266 = vadd.f32 0.0, %v3265
        %3267 = vmatmul.bf16.gmra.mxu0 %v1490
        %v3268 = vpop.f32.mrf.mxu0
        %v3269 = vadd.f32 0.0, %v3268
        %v3270 = vpop.f32.mrf.mxu0
        %v3271 = vadd.f32 0.0, %v3270
        %3272 = vmatmul.bf16.gmra.mxu0 %v1493
        %v3273 = vpop.f32.mrf.mxu0
        %v3274 = vadd.f32 0.0, %v3273
        %v3275 = vpop.f32.mrf.mxu0
        %v3276 = vadd.f32 0.0, %v3275
        %3277 = vmatmul.bf16.gmra.mxu0 %v1496
        %v3278 = vpop.f32.mrf.mxu0
        %v3279 = vadd.f32 0.0, %v3278
        %v3280 = vpop.f32.mrf.mxu0
        %v3281 = vadd.f32 0.0, %v3280
        %3282 = vmatmul.bf16.gmra.mxu0 %v1499
        %v3283 = vpop.f32.mrf.mxu0
        %v3284 = vadd.f32 0.0, %v3283
        %v3285 = vpop.f32.mrf.mxu0
        %v3286 = vadd.f32 0.0, %v3285
        %3287 = vmatmul.bf16.gmra.mxu0 %v1502
        %v3288 = vpop.f32.mrf.mxu0
        %v3289 = vadd.f32 0.0, %v3288
        %v3290 = vpop.f32.mrf.mxu0
        %v3291 = vadd.f32 0.0, %v3290
        %3292 = vmatmul.bf16.gmra.mxu0 %v1505
        %v3293 = vpop.f32.mrf.mxu0
        %v3294 = vadd.f32 0.0, %v3293
        %v3295 = vpop.f32.mrf.mxu0
        %v3296 = vadd.f32 0.0, %v3295
        %3297 = vmatmul.bf16.gmra.mxu0 %v1508
        %v3298 = vpop.f32.mrf.mxu0
        %v3299 = vadd.f32 0.0, %v3298
        %v3300 = vpop.f32.mrf.mxu0
        %v3301 = vadd.f32 0.0, %v3300
        %3302 = vmatmul.bf16.gmra.mxu0 %v1511
        %v3303 = vpop.f32.mrf.mxu0
        %v3304 = vadd.f32 0.0, %v3303
        %v3305 = vpop.f32.mrf.mxu0
        %v3306 = vadd.f32 0.0, %v3305
        %3307 = vmatmul.bf16.gmra.mxu0 %v1514
        %v3308 = vpop.f32.mrf.mxu0
        %v3309 = vadd.f32 0.0, %v3308
        %v3310 = vpop.f32.mrf.mxu0
        %v3311 = vadd.f32 0.0, %v3310
        %3312 = vmatmul.bf16.gmra.mxu0 %v1517
        %v3313 = vpop.f32.mrf.mxu0
        %v3314 = vadd.f32 0.0, %v3313
        %v3315 = vpop.f32.mrf.mxu0
        %v3316 = vadd.f32 0.0, %v3315
        %3317 = vmatmul.bf16.gmra.mxu0 %v1520
        %v3318 = vpop.f32.mrf.mxu0
        %v3319 = vadd.f32 0.0, %v3318
        %v3320 = vpop.f32.mrf.mxu0
        %v3321 = vadd.f32 0.0, %v3320
        %3322 = vmatmul.bf16.gmra.mxu0 %v1523
        %v3323 = vpop.f32.mrf.mxu0
        %v3324 = vadd.f32 0.0, %v3323
        %v3325 = vpop.f32.mrf.mxu0
        %v3326 = vadd.f32 0.0, %v3325
        %3327 = vmatmul.bf16.gmra.mxu0 %v1526
        %v3328 = vpop.f32.mrf.mxu0
        %v3329 = vadd.f32 0.0, %v3328
        %v3330 = vpop.f32.mrf.mxu0
        %v3331 = vadd.f32 0.0, %v3330
        %3332 = vmatmul.bf16.gmra.mxu0 %v1529
        %v3333 = vpop.f32.mrf.mxu0
        %v3334 = vadd.f32 0.0, %v3333
        %v3335 = vpop.f32.mrf.mxu0
        %v3336 = vadd.f32 0.0, %v3335
        %3337 = vmatmul.bf16.gmra.mxu0 %v1532
        %v3338 = vpop.f32.mrf.mxu0
        %v3339 = vadd.f32 0.0, %v3338
        %v3340 = vpop.f32.mrf.mxu0
        %v3341 = vadd.f32 0.0, %v3340
        %3342 = vdwg.mxu0
        %v3343 = vadd.f32 %v3206, %v3264
        %v3344 = vadd.f32 %v3207, %v3266
        %v3345 = vadd.f32 %v3208, %v3269
        %v3346 = vadd.f32 %v3209, %v3271
        %v3347 = vadd.f32 %v3210, %v3274
        %v3348 = vadd.f32 %v3211, %v3276
        %v3349 = vadd.f32 %v3212, %v3279
        %v3350 = vadd.f32 %v3213, %v3281
        %v3351 = vadd.f32 %v3214, %v3284
        %v3352 = vadd.f32 %v3215, %v3286
        %v3353 = vadd.f32 %v3216, %v3289
        %v3354 = vadd.f32 %v3217, %v3291
        %v3355 = vadd.f32 %v3218, %v3294
        %v3356 = vadd.f32 %v3219, %v3296
        %v3357 = vadd.f32 %v3220, %v3299
        %v3358 = vadd.f32 %v3221, %v3301
        %v3359 = vadd.f32 %v3222, %v3304
        %v3360 = vadd.f32 %v3223, %v3306
        %v3361 = vadd.f32 %v3224, %v3309
        %v3362 = vadd.f32 %v3225, %v3311
        %v3363 = vadd.f32 %v3226, %v3314
        %v3364 = vadd.f32 %v3227, %v3316
        %v3365 = vadd.f32 %v3228, %v3319
        %v3366 = vadd.f32 %v3229, %v3321
        %v3367 = vadd.f32 %v3230, %v3324
        %v3368 = vadd.f32 %v3231, %v3326
        %v3369 = vadd.f32 %v3232, %v3329
        %v3370 = vadd.f32 %v3233, %v3331
        %v3371 = vadd.f32 %v3234, %v3334
        %v3372 = vadd.f32 %v3235, %v3336
        %v3373 = vadd.f32 %v3236, %v3339
        %v3374 = vadd.f32 %v3237, %v3341
        %s3375 = scalar_lea.vmem %s5, 48
        %v3376 = vld [vmem:[%s3375] sm:$0xf]
        %v3377 = vld [vmem:[%s3375 + $0x4] sm:$0xf]
        %v3378 = vld [vmem:[%s3375 + $0x8] sm:$0x1]
        %v3382 = vunpack.c.l.b16 %v3376
        %v3383 = vunpack.c.l.b16 %v3377
        %v3384 = vunpack.c.l.b16 %v3378
        %v3385 = vpack.c.b16 %v3383, %v3382
        %v3386 = vpack.c.b16 %v3384, %v3384
        %v3389 = vsel %vm950, %v3386, 0
        %3391 = vmatpush.bf16.msra.mxu0 0
        %3392 = vmatpush.bf16.msra.mxu0 0
        %3393 = vmatpush.bf16.msra.mxu0 0
        %3394 = vmatpush.bf16.msra.mxu0 0
        %3395 = vmatpush.bf16.msra.mxu0 0
        %3396 = vmatpush.bf16.msra.mxu0 0
        %3397 = vmatpush.bf16.msra.mxu0 %v3389
        %3398 = vmatpush.bf16.msra.mxu0 %v3385
        %3399 = vmatmul.bf16.gmra.mxu0 %v1720
        %v3400 = vpop.f32.mrf.mxu0
        %v3401 = vadd.f32 0.0, %v3400
        %v3402 = vpop.f32.mrf.mxu0
        %v3403 = vadd.f32 0.0, %v3402
        %3404 = vmatmul.bf16.gmra.mxu0 %v1723
        %v3405 = vpop.f32.mrf.mxu0
        %v3406 = vadd.f32 0.0, %v3405
        %v3407 = vpop.f32.mrf.mxu0
        %v3408 = vadd.f32 0.0, %v3407
        %3409 = vmatmul.bf16.gmra.mxu0 %v1726
        %v3410 = vpop.f32.mrf.mxu0
        %v3411 = vadd.f32 0.0, %v3410
        %v3412 = vpop.f32.mrf.mxu0
        %v3413 = vadd.f32 0.0, %v3412
        %3414 = vmatmul.bf16.gmra.mxu0 %v1729
        %v3415 = vpop.f32.mrf.mxu0
        %v3416 = vadd.f32 0.0, %v3415
        %v3417 = vpop.f32.mrf.mxu0
        %v3418 = vadd.f32 0.0, %v3417
        %3419 = vmatmul.bf16.gmra.mxu0 %v1732
        %v3420 = vpop.f32.mrf.mxu0
        %v3421 = vadd.f32 0.0, %v3420
        %v3422 = vpop.f32.mrf.mxu0
        %v3423 = vadd.f32 0.0, %v3422
        %3424 = vmatmul.bf16.gmra.mxu0 %v1735
        %v3425 = vpop.f32.mrf.mxu0
        %v3426 = vadd.f32 0.0, %v3425
        %v3427 = vpop.f32.mrf.mxu0
        %v3428 = vadd.f32 0.0, %v3427
        %3429 = vmatmul.bf16.gmra.mxu0 %v1738
        %v3430 = vpop.f32.mrf.mxu0
        %v3431 = vadd.f32 0.0, %v3430
        %v3432 = vpop.f32.mrf.mxu0
        %v3433 = vadd.f32 0.0, %v3432
        %3434 = vmatmul.bf16.gmra.mxu0 %v1741
        %v3435 = vpop.f32.mrf.mxu0
        %v3436 = vadd.f32 0.0, %v3435
        %v3437 = vpop.f32.mrf.mxu0
        %v3438 = vadd.f32 0.0, %v3437
        %3439 = vmatmul.bf16.gmra.mxu0 %v1744
        %v3440 = vpop.f32.mrf.mxu0
        %v3441 = vadd.f32 0.0, %v3440
        %v3442 = vpop.f32.mrf.mxu0
        %v3443 = vadd.f32 0.0, %v3442
        %3444 = vmatmul.bf16.gmra.mxu0 %v1747
        %v3445 = vpop.f32.mrf.mxu0
        %v3446 = vadd.f32 0.0, %v3445
        %v3447 = vpop.f32.mrf.mxu0
        %v3448 = vadd.f32 0.0, %v3447
        %3449 = vmatmul.bf16.gmra.mxu0 %v1750
        %v3450 = vpop.f32.mrf.mxu0
        %v3451 = vadd.f32 0.0, %v3450
        %v3452 = vpop.f32.mrf.mxu0
        %v3453 = vadd.f32 0.0, %v3452
        %3454 = vmatmul.bf16.gmra.mxu0 %v1753
        %v3455 = vpop.f32.mrf.mxu0
        %v3456 = vadd.f32 0.0, %v3455
        %v3457 = vpop.f32.mrf.mxu0
        %v3458 = vadd.f32 0.0, %v3457
        %3459 = vmatmul.bf16.gmra.mxu0 %v1756
        %v3460 = vpop.f32.mrf.mxu0
        %v3461 = vadd.f32 0.0, %v3460
        %v3462 = vpop.f32.mrf.mxu0
        %v3463 = vadd.f32 0.0, %v3462
        %3464 = vmatmul.bf16.gmra.mxu0 %v1759
        %v3465 = vpop.f32.mrf.mxu0
        %v3466 = vadd.f32 0.0, %v3465
        %v3467 = vpop.f32.mrf.mxu0
        %v3468 = vadd.f32 0.0, %v3467
        %3469 = vmatmul.bf16.gmra.mxu0 %v1762
        %v3470 = vpop.f32.mrf.mxu0
        %v3471 = vadd.f32 0.0, %v3470
        %v3472 = vpop.f32.mrf.mxu0
        %v3473 = vadd.f32 0.0, %v3472
        %3474 = vmatmul.bf16.gmra.mxu0 %v1765
        %v3475 = vpop.f32.mrf.mxu0
        %v3476 = vadd.f32 0.0, %v3475
        %v3477 = vpop.f32.mrf.mxu0
        %v3478 = vadd.f32 0.0, %v3477
        %3479 = vdwg.mxu0
        %v3480 = vadd.f32 %v3343, %v3401
        %v3481 = vadd.f32 %v3344, %v3403
        %v3482 = vadd.f32 %v3345, %v3406
        %v3483 = vadd.f32 %v3346, %v3408
        %v3484 = vadd.f32 %v3347, %v3411
        %v3485 = vadd.f32 %v3348, %v3413
        %v3486 = vadd.f32 %v3349, %v3416
        %v3487 = vadd.f32 %v3350, %v3418
        %v3488 = vadd.f32 %v3351, %v3421
        %v3489 = vadd.f32 %v3352, %v3423
        %v3490 = vadd.f32 %v3353, %v3426
        %v3491 = vadd.f32 %v3354, %v3428
        %v3492 = vadd.f32 %v3355, %v3431
        %v3493 = vadd.f32 %v3356, %v3433
        %v3494 = vadd.f32 %v3357, %v3436
        %v3495 = vadd.f32 %v3358, %v3438
        %v3496 = vadd.f32 %v3359, %v3441
        %v3497 = vadd.f32 %v3360, %v3443
        %v3498 = vadd.f32 %v3361, %v3446
        %v3499 = vadd.f32 %v3362, %v3448
        %v3500 = vadd.f32 %v3363, %v3451
        %v3501 = vadd.f32 %v3364, %v3453
        %v3502 = vadd.f32 %v3365, %v3456
        %v3503 = vadd.f32 %v3366, %v3458
        %v3504 = vadd.f32 %v3367, %v3461
        %v3505 = vadd.f32 %v3368, %v3463
        %v3506 = vadd.f32 %v3369, %v3466
        %v3507 = vadd.f32 %v3370, %v3468
        %v3508 = vadd.f32 %v3371, %v3471
        %v3509 = vadd.f32 %v3372, %v3473
        %v3510 = vadd.f32 %v3373, %v3476
        %v3511 = vadd.f32 %v3374, %v3478
        %s3512 = scalar_lea.vmem %s5, 60
        %v3513 = vld [vmem:[%s3512] sm:$0xf]
        %v3514 = vld [vmem:[%s3512 + $0x4] sm:$0xf]
        %v3515 = vld [vmem:[%s3512 + $0x8] sm:$0x1]
        %v3519 = vunpack.c.l.b16 %v3513
        %v3520 = vunpack.c.l.b16 %v3514
        %v3521 = vunpack.c.l.b16 %v3515
        %v3522 = vpack.c.b16 %v3520, %v3519
        %v3523 = vpack.c.b16 %v3521, %v3521
        %v3526 = vsel %vm950, %v3523, 0
        %3528 = vmatpush.bf16.msra.mxu0 0
        %3529 = vmatpush.bf16.msra.mxu0 0
        %3530 = vmatpush.bf16.msra.mxu0 0
        %3531 = vmatpush.bf16.msra.mxu0 0
        %3532 = vmatpush.bf16.msra.mxu0 0
        %3533 = vmatpush.bf16.msra.mxu0 0
        %3534 = vmatpush.bf16.msra.mxu0 %v3526
        %3535 = vmatpush.bf16.msra.mxu0 %v3522
        %3536 = vmatmul.bf16.gmra.mxu0 %v1953
        %v3537 = vpop.f32.mrf.mxu0
        %v3538 = vadd.f32 0.0, %v3537
        %v3539 = vpop.f32.mrf.mxu0
        %v3540 = vadd.f32 0.0, %v3539
        %3541 = vmatmul.bf16.gmra.mxu0 %v1956
        %v3542 = vpop.f32.mrf.mxu0
        %v3543 = vadd.f32 0.0, %v3542
        %v3544 = vpop.f32.mrf.mxu0
        %v3545 = vadd.f32 0.0, %v3544
        %3546 = vmatmul.bf16.gmra.mxu0 %v1959
        %v3547 = vpop.f32.mrf.mxu0
        %v3548 = vadd.f32 0.0, %v3547
        %v3549 = vpop.f32.mrf.mxu0
        %v3550 = vadd.f32 0.0, %v3549
        %3551 = vmatmul.bf16.gmra.mxu0 %v1962
        %v3552 = vpop.f32.mrf.mxu0
        %v3553 = vadd.f32 0.0, %v3552
        %v3554 = vpop.f32.mrf.mxu0
        %v3555 = vadd.f32 0.0, %v3554
        %3556 = vmatmul.bf16.gmra.mxu0 %v1965
        %v3557 = vpop.f32.mrf.mxu0
        %v3558 = vadd.f32 0.0, %v3557
        %v3559 = vpop.f32.mrf.mxu0
        %v3560 = vadd.f32 0.0, %v3559
        %3561 = vmatmul.bf16.gmra.mxu0 %v1968
        %v3562 = vpop.f32.mrf.mxu0
        %v3563 = vadd.f32 0.0, %v3562
        %v3564 = vpop.f32.mrf.mxu0
        %v3565 = vadd.f32 0.0, %v3564
        %3566 = vmatmul.bf16.gmra.mxu0 %v1971
        %v3567 = vpop.f32.mrf.mxu0
        %v3568 = vadd.f32 0.0, %v3567
        %v3569 = vpop.f32.mrf.mxu0
        %v3570 = vadd.f32 0.0, %v3569
        %3571 = vmatmul.bf16.gmra.mxu0 %v1974
        %v3572 = vpop.f32.mrf.mxu0
        %v3573 = vadd.f32 0.0, %v3572
        %v3574 = vpop.f32.mrf.mxu0
        %v3575 = vadd.f32 0.0, %v3574
        %3576 = vmatmul.bf16.gmra.mxu0 %v1977
        %v3577 = vpop.f32.mrf.mxu0
        %v3578 = vadd.f32 0.0, %v3577
        %v3579 = vpop.f32.mrf.mxu0
        %v3580 = vadd.f32 0.0, %v3579
        %3581 = vmatmul.bf16.gmra.mxu0 %v1980
        %v3582 = vpop.f32.mrf.mxu0
        %v3583 = vadd.f32 0.0, %v3582
        %v3584 = vpop.f32.mrf.mxu0
        %v3585 = vadd.f32 0.0, %v3584
        %3586 = vmatmul.bf16.gmra.mxu0 %v1983
        %v3587 = vpop.f32.mrf.mxu0
        %v3588 = vadd.f32 0.0, %v3587
        %v3589 = vpop.f32.mrf.mxu0
        %v3590 = vadd.f32 0.0, %v3589
        %3591 = vmatmul.bf16.gmra.mxu0 %v1986
        %v3592 = vpop.f32.mrf.mxu0
        %v3593 = vadd.f32 0.0, %v3592
        %v3594 = vpop.f32.mrf.mxu0
        %v3595 = vadd.f32 0.0, %v3594
        %3596 = vmatmul.bf16.gmra.mxu0 %v1989
        %v3597 = vpop.f32.mrf.mxu0
        %v3598 = vadd.f32 0.0, %v3597
        %v3599 = vpop.f32.mrf.mxu0
        %v3600 = vadd.f32 0.0, %v3599
        %3601 = vmatmul.bf16.gmra.mxu0 %v1992
        %v3602 = vpop.f32.mrf.mxu0
        %v3603 = vadd.f32 0.0, %v3602
        %v3604 = vpop.f32.mrf.mxu0
        %v3605 = vadd.f32 0.0, %v3604
        %3606 = vmatmul.bf16.gmra.mxu0 %v1995
        %v3607 = vpop.f32.mrf.mxu0
        %v3608 = vadd.f32 0.0, %v3607
        %v3609 = vpop.f32.mrf.mxu0
        %v3610 = vadd.f32 0.0, %v3609
        %3611 = vmatmul.bf16.gmra.mxu0 %v1998
        %v3612 = vpop.f32.mrf.mxu0
        %v3613 = vadd.f32 0.0, %v3612
        %v3614 = vpop.f32.mrf.mxu0
        %v3615 = vadd.f32 0.0, %v3614
        %3616 = vdwg.mxu0
        %v3617 = vadd.f32 %v3480, %v3538
        %v3618 = vadd.f32 %v3481, %v3540
        %v3619 = vadd.f32 %v3482, %v3543
        %v3620 = vadd.f32 %v3483, %v3545
        %v3621 = vadd.f32 %v3484, %v3548
        %v3622 = vadd.f32 %v3485, %v3550
        %v3623 = vadd.f32 %v3486, %v3553
        %v3624 = vadd.f32 %v3487, %v3555
        %v3625 = vadd.f32 %v3488, %v3558
        %v3626 = vadd.f32 %v3489, %v3560
        %v3627 = vadd.f32 %v3490, %v3563
        %v3628 = vadd.f32 %v3491, %v3565
        %v3629 = vadd.f32 %v3492, %v3568
        %v3630 = vadd.f32 %v3493, %v3570
        %v3631 = vadd.f32 %v3494, %v3573
        %v3632 = vadd.f32 %v3495, %v3575
        %v3633 = vadd.f32 %v3496, %v3578
        %v3634 = vadd.f32 %v3497, %v3580
        %v3635 = vadd.f32 %v3498, %v3583
        %v3636 = vadd.f32 %v3499, %v3585
        %v3637 = vadd.f32 %v3500, %v3588
        %v3638 = vadd.f32 %v3501, %v3590
        %v3639 = vadd.f32 %v3502, %v3593
        %v3640 = vadd.f32 %v3503, %v3595
        %v3641 = vadd.f32 %v3504, %v3598
        %v3642 = vadd.f32 %v3505, %v3600
        %v3643 = vadd.f32 %v3506, %v3603
        %v3644 = vadd.f32 %v3507, %v3605
        %v3645 = vadd.f32 %v3508, %v3608
        %v3646 = vadd.f32 %v3509, %v3610
        %v3647 = vadd.f32 %v3510, %v3613
        %v3648 = vadd.f32 %v3511, %v3615
        %s3649 = scalar_lea.vmem %s5, 72
        %v3650 = vld [vmem:[%s3649] sm:$0xf]
        %v3651 = vld [vmem:[%s3649 + $0x4] sm:$0xf]
        %v3652 = vld [vmem:[%s3649 + $0x8] sm:$0x1]
        %v3656 = vunpack.c.l.b16 %v3650
        %v3657 = vunpack.c.l.b16 %v3651
        %v3658 = vunpack.c.l.b16 %v3652
        %v3659 = vpack.c.b16 %v3657, %v3656
        %v3660 = vpack.c.b16 %v3658, %v3658
        %v3663 = vsel %vm950, %v3660, 0
        %3665 = vmatpush.bf16.msra.mxu0 0
        %3666 = vmatpush.bf16.msra.mxu0 0
        %3667 = vmatpush.bf16.msra.mxu0 0
        %3668 = vmatpush.bf16.msra.mxu0 0
        %3669 = vmatpush.bf16.msra.mxu0 0
        %3670 = vmatpush.bf16.msra.mxu0 0
        %3671 = vmatpush.bf16.msra.mxu0 %v3663
        %3672 = vmatpush.bf16.msra.mxu0 %v3659
        %3673 = vmatmul.bf16.gmra.mxu0 %v2187
        %v3674 = vpop.f32.mrf.mxu0
        %v3675 = vadd.f32 0.0, %v3674
        %v3676 = vpop.f32.mrf.mxu0
        %v3677 = vadd.f32 0.0, %v3676
        %3678 = vmatmul.bf16.gmra.mxu0 %v2190
        %v3679 = vpop.f32.mrf.mxu0
        %v3680 = vadd.f32 0.0, %v3679
        %v3681 = vpop.f32.mrf.mxu0
        %v3682 = vadd.f32 0.0, %v3681
        %3683 = vmatmul.bf16.gmra.mxu0 %v2193
        %v3684 = vpop.f32.mrf.mxu0
        %v3685 = vadd.f32 0.0, %v3684
        %v3686 = vpop.f32.mrf.mxu0
        %v3687 = vadd.f32 0.0, %v3686
        %3688 = vmatmul.bf16.gmra.mxu0 %v2196
        %v3689 = vpop.f32.mrf.mxu0
        %v3690 = vadd.f32 0.0, %v3689
        %v3691 = vpop.f32.mrf.mxu0
        %v3692 = vadd.f32 0.0, %v3691
        %3693 = vmatmul.bf16.gmra.mxu0 %v2199
        %v3694 = vpop.f32.mrf.mxu0
        %v3695 = vadd.f32 0.0, %v3694
        %v3696 = vpop.f32.mrf.mxu0
        %v3697 = vadd.f32 0.0, %v3696
        %3698 = vmatmul.bf16.gmra.mxu0 %v2202
        %v3699 = vpop.f32.mrf.mxu0
        %v3700 = vadd.f32 0.0, %v3699
        %v3701 = vpop.f32.mrf.mxu0
        %v3702 = vadd.f32 0.0, %v3701
        %3703 = vmatmul.bf16.gmra.mxu0 %v2205
        %v3704 = vpop.f32.mrf.mxu0
        %v3705 = vadd.f32 0.0, %v3704
        %v3706 = vpop.f32.mrf.mxu0
        %v3707 = vadd.f32 0.0, %v3706
        %3708 = vmatmul.bf16.gmra.mxu0 %v2208
        %v3709 = vpop.f32.mrf.mxu0
        %v3710 = vadd.f32 0.0, %v3709
        %v3711 = vpop.f32.mrf.mxu0
        %v3712 = vadd.f32 0.0, %v3711
        %3713 = vmatmul.bf16.gmra.mxu0 %v2211
        %v3714 = vpop.f32.mrf.mxu0
        %v3715 = vadd.f32 0.0, %v3714
        %v3716 = vpop.f32.mrf.mxu0
        %v3717 = vadd.f32 0.0, %v3716
        %3718 = vmatmul.bf16.gmra.mxu0 %v2214
        %v3719 = vpop.f32.mrf.mxu0
        %v3720 = vadd.f32 0.0, %v3719
        %v3721 = vpop.f32.mrf.mxu0
        %v3722 = vadd.f32 0.0, %v3721
        %3723 = vmatmul.bf16.gmra.mxu0 %v2217
        %v3724 = vpop.f32.mrf.mxu0
        %v3725 = vadd.f32 0.0, %v3724
        %v3726 = vpop.f32.mrf.mxu0
        %v3727 = vadd.f32 0.0, %v3726
        %3728 = vmatmul.bf16.gmra.mxu0 %v2220
        %v3729 = vpop.f32.mrf.mxu0
        %v3730 = vadd.f32 0.0, %v3729
        %v3731 = vpop.f32.mrf.mxu0
        %v3732 = vadd.f32 0.0, %v3731
        %3733 = vmatmul.bf16.gmra.mxu0 %v2223
        %v3734 = vpop.f32.mrf.mxu0
        %v3735 = vadd.f32 0.0, %v3734
        %v3736 = vpop.f32.mrf.mxu0
        %v3737 = vadd.f32 0.0, %v3736
        %3738 = vmatmul.bf16.gmra.mxu0 %v2226
        %v3739 = vpop.f32.mrf.mxu0
        %v3740 = vadd.f32 0.0, %v3739
        %v3741 = vpop.f32.mrf.mxu0
        %v3742 = vadd.f32 0.0, %v3741
        %3743 = vmatmul.bf16.gmra.mxu0 %v2229
        %v3744 = vpop.f32.mrf.mxu0
        %v3745 = vadd.f32 0.0, %v3744
        %v3746 = vpop.f32.mrf.mxu0
        %v3747 = vadd.f32 0.0, %v3746
        %3748 = vmatmul.bf16.gmra.mxu0 %v2232
        %v3749 = vpop.f32.mrf.mxu0
        %v3750 = vadd.f32 0.0, %v3749
        %v3751 = vpop.f32.mrf.mxu0
        %v3752 = vadd.f32 0.0, %v3751
        %3753 = vdwg.mxu0
        %v3754 = vadd.f32 %v3617, %v3675
        %v3755 = vadd.f32 %v3618, %v3677
        %v3756 = vadd.f32 %v3619, %v3680
        %v3757 = vadd.f32 %v3620, %v3682
        %v3758 = vadd.f32 %v3621, %v3685
        %v3759 = vadd.f32 %v3622, %v3687
        %v3760 = vadd.f32 %v3623, %v3690
        %v3761 = vadd.f32 %v3624, %v3692
        %v3762 = vadd.f32 %v3625, %v3695
        %v3763 = vadd.f32 %v3626, %v3697
        %v3764 = vadd.f32 %v3627, %v3700
        %v3765 = vadd.f32 %v3628, %v3702
        %v3766 = vadd.f32 %v3629, %v3705
        %v3767 = vadd.f32 %v3630, %v3707
        %v3768 = vadd.f32 %v3631, %v3710
        %v3769 = vadd.f32 %v3632, %v3712
        %v3770 = vadd.f32 %v3633, %v3715
        %v3771 = vadd.f32 %v3634, %v3717
        %v3772 = vadd.f32 %v3635, %v3720
        %v3773 = vadd.f32 %v3636, %v3722
        %v3774 = vadd.f32 %v3637, %v3725
        %v3775 = vadd.f32 %v3638, %v3727
        %v3776 = vadd.f32 %v3639, %v3730
        %v3777 = vadd.f32 %v3640, %v3732
        %v3778 = vadd.f32 %v3641, %v3735
        %v3779 = vadd.f32 %v3642, %v3737
        %v3780 = vadd.f32 %v3643, %v3740
        %v3781 = vadd.f32 %v3644, %v3742
        %v3782 = vadd.f32 %v3645, %v3745
        %v3783 = vadd.f32 %v3646, %v3747
        %v3784 = vadd.f32 %v3647, %v3750
        %v3785 = vadd.f32 %v3648, %v3752
        %s3786 = scalar_lea.vmem %s5, 84
        %v3787 = vld [vmem:[%s3786] sm:$0xf]
        %v3788 = vld [vmem:[%s3786 + $0x4] sm:$0xf]
        %v3789 = vld [vmem:[%s3786 + $0x8] sm:$0x1]
        %v3793 = vunpack.c.l.b16 %v3787
        %v3794 = vunpack.c.l.b16 %v3788
        %v3795 = vunpack.c.l.b16 %v3789
        %v3796 = vpack.c.b16 %v3794, %v3793
        %v3797 = vpack.c.b16 %v3795, %v3795
        %v3800 = vsel %vm950, %v3797, 0
        %3802 = vmatpush.bf16.msra.mxu0 0
        %3803 = vmatpush.bf16.msra.mxu0 0
        %3804 = vmatpush.bf16.msra.mxu0 0
        %3805 = vmatpush.bf16.msra.mxu0 0
        %3806 = vmatpush.bf16.msra.mxu0 0
        %3807 = vmatpush.bf16.msra.mxu0 0
        %3808 = vmatpush.bf16.msra.mxu0 %v3800
        %3809 = vmatpush.bf16.msra.mxu0 %v3796
        %3810 = vmatmul.bf16.gmra.mxu0 %v2420
        %v3811 = vpop.f32.mrf.mxu0
        %v3812 = vadd.f32 0.0, %v3811
        %v3813 = vpop.f32.mrf.mxu0
        %v3814 = vadd.f32 0.0, %v3813
        %3815 = vmatmul.bf16.gmra.mxu0 %v2423
        %v3816 = vpop.f32.mrf.mxu0
        %v3817 = vadd.f32 0.0, %v3816
        %v3818 = vpop.f32.mrf.mxu0
        %v3819 = vadd.f32 0.0, %v3818
        %3820 = vmatmul.bf16.gmra.mxu0 %v2426
        %v3821 = vpop.f32.mrf.mxu0
        %v3822 = vadd.f32 0.0, %v3821
        %v3823 = vpop.f32.mrf.mxu0
        %v3824 = vadd.f32 0.0, %v3823
        %3825 = vmatmul.bf16.gmra.mxu0 %v2429
        %v3826 = vpop.f32.mrf.mxu0
        %v3827 = vadd.f32 0.0, %v3826
        %v3828 = vpop.f32.mrf.mxu0
        %v3829 = vadd.f32 0.0, %v3828
        %3830 = vmatmul.bf16.gmra.mxu0 %v2432
        %v3831 = vpop.f32.mrf.mxu0
        %v3832 = vadd.f32 0.0, %v3831
        %v3833 = vpop.f32.mrf.mxu0
        %v3834 = vadd.f32 0.0, %v3833
        %3835 = vmatmul.bf16.gmra.mxu0 %v2435
        %v3836 = vpop.f32.mrf.mxu0
        %v3837 = vadd.f32 0.0, %v3836
        %v3838 = vpop.f32.mrf.mxu0
        %v3839 = vadd.f32 0.0, %v3838
        %3840 = vmatmul.bf16.gmra.mxu0 %v2438
        %v3841 = vpop.f32.mrf.mxu0
        %v3842 = vadd.f32 0.0, %v3841
        %v3843 = vpop.f32.mrf.mxu0
        %v3844 = vadd.f32 0.0, %v3843
        %3845 = vmatmul.bf16.gmra.mxu0 %v2441
        %v3846 = vpop.f32.mrf.mxu0
        %v3847 = vadd.f32 0.0, %v3846
        %v3848 = vpop.f32.mrf.mxu0
        %v3849 = vadd.f32 0.0, %v3848
        %3850 = vmatmul.bf16.gmra.mxu0 %v2444
        %v3851 = vpop.f32.mrf.mxu0
        %v3852 = vadd.f32 0.0, %v3851
        %v3853 = vpop.f32.mrf.mxu0
        %v3854 = vadd.f32 0.0, %v3853
        %3855 = vmatmul.bf16.gmra.mxu0 %v2447
        %v3856 = vpop.f32.mrf.mxu0
        %v3857 = vadd.f32 0.0, %v3856
        %v3858 = vpop.f32.mrf.mxu0
        %v3859 = vadd.f32 0.0, %v3858
        %3860 = vmatmul.bf16.gmra.mxu0 %v2450
        %v3861 = vpop.f32.mrf.mxu0
        %v3862 = vadd.f32 0.0, %v3861
        %v3863 = vpop.f32.mrf.mxu0
        %v3864 = vadd.f32 0.0, %v3863
        %3865 = vmatmul.bf16.gmra.mxu0 %v2453
        %v3866 = vpop.f32.mrf.mxu0
        %v3867 = vadd.f32 0.0, %v3866
        %v3868 = vpop.f32.mrf.mxu0
        %v3869 = vadd.f32 0.0, %v3868
        %3870 = vmatmul.bf16.gmra.mxu0 %v2456
        %v3871 = vpop.f32.mrf.mxu0
        %v3872 = vadd.f32 0.0, %v3871
        %v3873 = vpop.f32.mrf.mxu0
        %v3874 = vadd.f32 0.0, %v3873
        %3875 = vmatmul.bf16.gmra.mxu0 %v2459
        %v3876 = vpop.f32.mrf.mxu0
        %v3877 = vadd.f32 0.0, %v3876
        %v3878 = vpop.f32.mrf.mxu0
        %v3879 = vadd.f32 0.0, %v3878
        %3880 = vmatmul.bf16.gmra.mxu0 %v2462
        %v3881 = vpop.f32.mrf.mxu0
        %v3882 = vadd.f32 0.0, %v3881
        %v3883 = vpop.f32.mrf.mxu0
        %v3884 = vadd.f32 0.0, %v3883
        %3885 = vmatmul.bf16.gmra.mxu0 %v2465
        %v3886 = vpop.f32.mrf.mxu0
        %v3887 = vadd.f32 0.0, %v3886
        %v3888 = vpop.f32.mrf.mxu0
        %v3889 = vadd.f32 0.0, %v3888
        %3890 = vdwg.mxu0
        %v3891 = vadd.f32 %v3754, %v3812
        %v3892 = vadd.f32 %v3755, %v3814
        %v3893 = vadd.f32 %v3756, %v3817
        %v3894 = vadd.f32 %v3757, %v3819
        %v3895 = vadd.f32 %v3758, %v3822
        %v3896 = vadd.f32 %v3759, %v3824
        %v3897 = vadd.f32 %v3760, %v3827
        %v3898 = vadd.f32 %v3761, %v3829
        %v3899 = vadd.f32 %v3762, %v3832
        %v3900 = vadd.f32 %v3763, %v3834
        %v3901 = vadd.f32 %v3764, %v3837
        %v3902 = vadd.f32 %v3765, %v3839
        %v3903 = vadd.f32 %v3766, %v3842
        %v3904 = vadd.f32 %v3767, %v3844
        %v3905 = vadd.f32 %v3768, %v3847
        %v3906 = vadd.f32 %v3769, %v3849
        %v3907 = vadd.f32 %v3770, %v3852
        %v3908 = vadd.f32 %v3771, %v3854
        %v3909 = vadd.f32 %v3772, %v3857
        %v3910 = vadd.f32 %v3773, %v3859
        %v3911 = vadd.f32 %v3774, %v3862
        %v3912 = vadd.f32 %v3775, %v3864
        %v3913 = vadd.f32 %v3776, %v3867
        %v3914 = vadd.f32 %v3777, %v3869
        %v3915 = vadd.f32 %v3778, %v3872
        %v3916 = vadd.f32 %v3779, %v3874
        %v3917 = vadd.f32 %v3780, %v3877
        %v3918 = vadd.f32 %v3781, %v3879
        %v3919 = vadd.f32 %v3782, %v3882
        %v3920 = vadd.f32 %v3783, %v3884
        %v3921 = vadd.f32 %v3784, %v3887
        %v3922 = vadd.f32 %v3785, %v3889
        %s3923 = scalar_lea.vmem %s5, 96
        %v3924 = vld [vmem:[%s3923] sm:$0xf]
        %v3925 = vld [vmem:[%s3923 + $0x4] sm:$0xf]
        %v3926 = vld [vmem:[%s3923 + $0x8] sm:$0x1]
        %v3930 = vunpack.c.l.b16 %v3924
        %v3931 = vunpack.c.l.b16 %v3925
        %v3932 = vunpack.c.l.b16 %v3926
        %v3933 = vpack.c.b16 %v3931, %v3930
        %v3934 = vpack.c.b16 %v3932, %v3932
        %v3937 = vsel %vm950, %v3934, 0
        %3939 = vmatpush.bf16.msra.mxu0 0
        %3940 = vmatpush.bf16.msra.mxu0 0
        %3941 = vmatpush.bf16.msra.mxu0 0
        %3942 = vmatpush.bf16.msra.mxu0 0
        %3943 = vmatpush.bf16.msra.mxu0 0
        %3944 = vmatpush.bf16.msra.mxu0 0
        %3945 = vmatpush.bf16.msra.mxu0 %v3937
        %3946 = vmatpush.bf16.msra.mxu0 %v3933
        %3947 = vmatmul.bf16.gmra.mxu0 %v2653
        %v3948 = vpop.f32.mrf.mxu0
        %v3949 = vadd.f32 0.0, %v3948
        %v3950 = vpop.f32.mrf.mxu0
        %v3951 = vadd.f32 0.0, %v3950
        %3952 = vmatmul.bf16.gmra.mxu0 %v2656
        %v3953 = vpop.f32.mrf.mxu0
        %v3954 = vadd.f32 0.0, %v3953
        %v3955 = vpop.f32.mrf.mxu0
        %v3956 = vadd.f32 0.0, %v3955
        %3957 = vmatmul.bf16.gmra.mxu0 %v2659
        %v3958 = vpop.f32.mrf.mxu0
        %v3959 = vadd.f32 0.0, %v3958
        %v3960 = vpop.f32.mrf.mxu0
        %v3961 = vadd.f32 0.0, %v3960
        %3962 = vmatmul.bf16.gmra.mxu0 %v2662
        %v3963 = vpop.f32.mrf.mxu0
        %v3964 = vadd.f32 0.0, %v3963
        %v3965 = vpop.f32.mrf.mxu0
        %v3966 = vadd.f32 0.0, %v3965
        %3967 = vmatmul.bf16.gmra.mxu0 %v2665
        %v3968 = vpop.f32.mrf.mxu0
        %v3969 = vadd.f32 0.0, %v3968
        %v3970 = vpop.f32.mrf.mxu0
        %v3971 = vadd.f32 0.0, %v3970
        %3972 = vmatmul.bf16.gmra.mxu0 %v2668
        %v3973 = vpop.f32.mrf.mxu0
        %v3974 = vadd.f32 0.0, %v3973
        %v3975 = vpop.f32.mrf.mxu0
        %v3976 = vadd.f32 0.0, %v3975
        %3977 = vmatmul.bf16.gmra.mxu0 %v2671
        %v3978 = vpop.f32.mrf.mxu0
        %v3979 = vadd.f32 0.0, %v3978
        %v3980 = vpop.f32.mrf.mxu0
        %v3981 = vadd.f32 0.0, %v3980
        %3982 = vmatmul.bf16.gmra.mxu0 %v2674
        %v3983 = vpop.f32.mrf.mxu0
        %v3984 = vadd.f32 0.0, %v3983
        %v3985 = vpop.f32.mrf.mxu0
        %v3986 = vadd.f32 0.0, %v3985
        %3987 = vmatmul.bf16.gmra.mxu0 %v2677
        %v3988 = vpop.f32.mrf.mxu0
        %v3989 = vadd.f32 0.0, %v3988
        %v3990 = vpop.f32.mrf.mxu0
        %v3991 = vadd.f32 0.0, %v3990
        %3992 = vmatmul.bf16.gmra.mxu0 %v2680
        %v3993 = vpop.f32.mrf.mxu0
        %v3994 = vadd.f32 0.0, %v3993
        %v3995 = vpop.f32.mrf.mxu0
        %v3996 = vadd.f32 0.0, %v3995
        %3997 = vmatmul.bf16.gmra.mxu0 %v2683
        %v3998 = vpop.f32.mrf.mxu0
        %v3999 = vadd.f32 0.0, %v3998
        %v4000 = vpop.f32.mrf.mxu0
        %v4001 = vadd.f32 0.0, %v4000
        %4002 = vmatmul.bf16.gmra.mxu0 %v2686
        %v4003 = vpop.f32.mrf.mxu0
        %v4004 = vadd.f32 0.0, %v4003
        %v4005 = vpop.f32.mrf.mxu0
        %v4006 = vadd.f32 0.0, %v4005
        %4007 = vmatmul.bf16.gmra.mxu0 %v2689
        %v4008 = vpop.f32.mrf.mxu0
        %v4009 = vadd.f32 0.0, %v4008
        %v4010 = vpop.f32.mrf.mxu0
        %v4011 = vadd.f32 0.0, %v4010
        %4012 = vmatmul.bf16.gmra.mxu0 %v2692
        %v4013 = vpop.f32.mrf.mxu0
        %v4014 = vadd.f32 0.0, %v4013
        %v4015 = vpop.f32.mrf.mxu0
        %v4016 = vadd.f32 0.0, %v4015
        %4017 = vmatmul.bf16.gmra.mxu0 %v2695
        %v4018 = vpop.f32.mrf.mxu0
        %v4019 = vadd.f32 0.0, %v4018
        %v4020 = vpop.f32.mrf.mxu0
        %v4021 = vadd.f32 0.0, %v4020
        %4022 = vmatmul.bf16.gmra.mxu0 %v2698
        %v4023 = vpop.f32.mrf.mxu0
        %v4024 = vadd.f32 0.0, %v4023
        %v4025 = vpop.f32.mrf.mxu0
        %v4026 = vadd.f32 0.0, %v4025
        %4027 = vdwg.mxu0
        %v4028 = vadd.f32 %v3891, %v3949
        %v4029 = vadd.f32 %v3892, %v3951
        %v4030 = vadd.f32 %v3893, %v3954
        %v4031 = vadd.f32 %v3894, %v3956
        %v4032 = vadd.f32 %v3895, %v3959
        %v4033 = vadd.f32 %v3896, %v3961
        %v4034 = vadd.f32 %v3897, %v3964
        %v4035 = vadd.f32 %v3898, %v3966
        %v4036 = vadd.f32 %v3899, %v3969
        %v4037 = vadd.f32 %v3900, %v3971
        %v4038 = vadd.f32 %v3901, %v3974
        %v4039 = vadd.f32 %v3902, %v3976
        %v4040 = vadd.f32 %v3903, %v3979
        %v4041 = vadd.f32 %v3904, %v3981
        %v4042 = vadd.f32 %v3905, %v3984
        %v4043 = vadd.f32 %v3906, %v3986
        %v4044 = vadd.f32 %v3907, %v3989
        %v4045 = vadd.f32 %v3908, %v3991
        %v4046 = vadd.f32 %v3909, %v3994
        %v4047 = vadd.f32 %v3910, %v3996
        %v4048 = vadd.f32 %v3911, %v3999
        %v4049 = vadd.f32 %v3912, %v4001
        %v4050 = vadd.f32 %v3913, %v4004
        %v4051 = vadd.f32 %v3914, %v4006
        %v4052 = vadd.f32 %v3915, %v4009
        %v4053 = vadd.f32 %v3916, %v4011
        %v4054 = vadd.f32 %v3917, %v4014
        %v4055 = vadd.f32 %v3918, %v4016
        %v4056 = vadd.f32 %v3919, %v4019
        %v4057 = vadd.f32 %v3920, %v4021
        %v4058 = vadd.f32 %v3921, %v4024
        %v4059 = vadd.f32 %v3922, %v4026
        %v4060 = vld [vmem:[%s6] sm:$0x1]
        %v4062 = vperm.slane %v4060, 0
        %v4064 = vadd.f32 %v4028, %v4062
        %v4065 = vadd.f32 %v4029, %v4062
        %v4066 = vadd.f32 %v4030, %v4062
        %v4067 = vadd.f32 %v4031, %v4062
        %v4068 = vadd.f32 %v4032, %v4062
        %v4069 = vadd.f32 %v4033, %v4062
        %v4070 = vadd.f32 %v4034, %v4062
        %v4071 = vadd.f32 %v4035, %v4062
        %v4072 = vadd.f32 %v4036, %v4062
        %v4073 = vadd.f32 %v4037, %v4062
        %v4074 = vadd.f32 %v4038, %v4062
        %v4075 = vadd.f32 %v4039, %v4062
        %v4076 = vadd.f32 %v4040, %v4062
        %v4077 = vadd.f32 %v4041, %v4062
        %v4078 = vadd.f32 %v4042, %v4062
        %v4079 = vadd.f32 %v4043, %v4062
        %v4080 = vadd.f32 %v4044, %v4062
        %v4081 = vadd.f32 %v4045, %v4062
        %v4082 = vadd.f32 %v4046, %v4062
        %v4083 = vadd.f32 %v4047, %v4062
        %v4084 = vadd.f32 %v4048, %v4062
        %v4085 = vadd.f32 %v4049, %v4062
        %v4086 = vadd.f32 %v4050, %v4062
        %v4087 = vadd.f32 %v4051, %v4062
        %v4088 = vadd.f32 %v4052, %v4062
        %v4089 = vadd.f32 %v4053, %v4062
        %v4090 = vadd.f32 %v4054, %v4062
        %v4091 = vadd.f32 %v4055, %v4062
        %v4092 = vadd.f32 %v4056, %v4062
        %v4093 = vadd.f32 %v4057, %v4062
        %v4094 = vadd.f32 %v4058, %v4062
        %v4095 = vadd.f32 %v4059, %v4062
        %v4096 = vmax.f32 %v4064, 0.0
        %v4097 = vmax.f32 %v4065, 0.0
        %v4098 = vmax.f32 %v4066, 0.0
        %v4099 = vmax.f32 %v4067, 0.0
        %v4100 = vmax.f32 %v4068, 0.0
        %v4101 = vmax.f32 %v4069, 0.0
        %v4102 = vmax.f32 %v4070, 0.0
        %v4103 = vmax.f32 %v4071, 0.0
        %v4104 = vmax.f32 %v4072, 0.0
        %v4105 = vmax.f32 %v4073, 0.0
        %v4106 = vmax.f32 %v4074, 0.0
        %v4107 = vmax.f32 %v4075, 0.0
        %v4108 = vmax.f32 %v4076, 0.0
        %v4109 = vmax.f32 %v4077, 0.0
        %v4110 = vmax.f32 %v4078, 0.0
        %v4111 = vmax.f32 %v4079, 0.0
        %v4112 = vmax.f32 %v4080, 0.0
        %v4113 = vmax.f32 %v4081, 0.0
        %v4114 = vmax.f32 %v4082, 0.0
        %v4115 = vmax.f32 %v4083, 0.0
        %v4116 = vmax.f32 %v4084, 0.0
        %v4117 = vmax.f32 %v4085, 0.0
        %v4118 = vmax.f32 %v4086, 0.0
        %v4119 = vmax.f32 %v4087, 0.0
        %v4120 = vmax.f32 %v4088, 0.0
        %v4121 = vmax.f32 %v4089, 0.0
        %v4122 = vmax.f32 %v4090, 0.0
        %v4123 = vmax.f32 %v4091, 0.0
        %v4124 = vmax.f32 %v4092, 0.0
        %v4125 = vmax.f32 %v4093, 0.0
        %v4126 = vmax.f32 %v4094, 0.0
        %v4127 = vmax.f32 %v4095, 0.0
        %vm4128 = vcmask 64512
        %4129 = vst.msk [vmem:[#allocation4] sm:$0xff] %vm4128, 0.0
        %4130 = vst.msk [vmem:[#allocation4 + $0x8] sm:$0xff] %vm4128, 0.0
        %vm4131 = vcmask 58368
        %4132 = vst.msk [vmem:[#allocation4 + $0x10] sm:$0x3] %vm4131, 0.0
        %4133 = vst.msk [vmem:[#allocation4 + $0x18] sm:$0xff] %vm4128, 0.0
        %4134 = vst.msk [vmem:[#allocation4 + $0x20] sm:$0xff] %vm4128, 0.0
        %4135 = vst.msk [vmem:[#allocation4 + $0x28] sm:$0x3] %vm4131, 0.0
        %4136 = vst.msk [vmem:[#allocation4 + $0x30] sm:$0xff] %vm4128, 0.0
        %4137 = vst.msk [vmem:[#allocation4 + $0x38] sm:$0xff] %vm4128, 0.0
        %4138 = vst.msk [vmem:[#allocation4 + $0x40] sm:$0x3] %vm4131, 0.0
        %4139 = vst.msk [vmem:[#allocation4 + $0x48] sm:$0xff] %vm4128, 0.0
        %4140 = vst.msk [vmem:[#allocation4 + $0x50] sm:$0xff] %vm4128, 0.0
        %4141 = vst.msk [vmem:[#allocation4 + $0x58] sm:$0x3] %vm4131, 0.0
        %4142 = vst.msk [vmem:[#allocation4 + $0x60] sm:$0xff] %vm4128, 0.0
        %4143 = vst.msk [vmem:[#allocation4 + $0x68] sm:$0xff] %vm4128, 0.0
        %4144 = vst.msk [vmem:[#allocation4 + $0x70] sm:$0x3] %vm4131, 0.0
        %4145 = vst.msk [vmem:[#allocation4 + $0x78] sm:$0xff] %vm4128, 0.0
        %4146 = vst.msk [vmem:[#allocation4 + $0x80] sm:$0xff] %vm4128, 0.0
        %4147 = vst.msk [vmem:[#allocation4 + $0x88] sm:$0x3] %vm4131, 0.0
        %4148 = vst.msk [vmem:[#allocation4 + $0x90] sm:$0xff] %vm4128, 0.0
        %4149 = vst.msk [vmem:[#allocation4 + $0x98] sm:$0xff] %vm4128, 0.0
        %4150 = vst.msk [vmem:[#allocation4 + $0xa0] sm:$0x3] %vm4131, 0.0
        %4151 = vst.msk [vmem:[#allocation4 + $0xa8] sm:$0xff] %vm4128, 0.0
        %4152 = vst.msk [vmem:[#allocation4 + $0xb0] sm:$0xff] %vm4128, 0.0
        %4153 = vst.msk [vmem:[#allocation4 + $0xb8] sm:$0x3] %vm4131, 0.0
        %4154 = vst.msk [vmem:[#allocation4 + $0xc0] sm:$0xff] %vm4128, 0.0
        %4155 = vst.msk [vmem:[#allocation4 + $0xc8] sm:$0xff] %vm4128, 0.0
        %4156 = vst.msk [vmem:[#allocation4 + $0xd0] sm:$0x3] %vm4131, 0.0
        %4157 = vst.msk [vmem:[#allocation4 + $0xd8] sm:$0xff] %vm4128, 0.0
        %4158 = vst.msk [vmem:[#allocation4 + $0xe0] sm:$0xff] %vm4128, 0.0
        %4159 = vst.msk [vmem:[#allocation4 + $0xe8] sm:$0x3] %vm4131, 0.0
        %4160 = vst.msk [vmem:[#allocation4 + $0xf0] sm:$0xff] %vm4128, 0.0
        %4161 = vst.msk [vmem:[#allocation4 + $0xf8] sm:$0xff] %vm4128, 0.0
        %4162 = vst.msk [vmem:[#allocation4 + $0x100] sm:$0x3] %vm4131, 0.0
        %4163 = vst.msk [vmem:[#allocation4 + $0x108] sm:$0xff] %vm4128, 0.0
        %4164 = vst.msk [vmem:[#allocation4 + $0x110] sm:$0xff] %vm4128, 0.0
        %4165 = vst.msk [vmem:[#allocation4 + $0x118] sm:$0x3] %vm4131, 0.0
        %4166 = vst.msk [vmem:[#allocation4 + $0x120] sm:$0xff] %vm4128, 0.0
        %4167 = vst.msk [vmem:[#allocation4 + $0x128] sm:$0xff] %vm4128, 0.0
        %4168 = vst.msk [vmem:[#allocation4 + $0x130] sm:$0x3] %vm4131, 0.0
        %4169 = vst.msk [vmem:[#allocation4 + $0x138] sm:$0xff] %vm4128, 0.0
        %4170 = vst.msk [vmem:[#allocation4 + $0x140] sm:$0xff] %vm4128, 0.0
        %4171 = vst.msk [vmem:[#allocation4 + $0x148] sm:$0x3] %vm4131, 0.0
        %4172 = vst.msk [vmem:[#allocation4 + $0x150] sm:$0xff] %vm4128, 0.0
        %4173 = vst.msk [vmem:[#allocation4 + $0x158] sm:$0xff] %vm4128, 0.0
        %4174 = vst.msk [vmem:[#allocation4 + $0x160] sm:$0x3] %vm4131, 0.0
        %4175 = vst.msk [vmem:[#allocation4 + $0x168] sm:$0xff] %vm4128, 0.0
        %4176 = vst.msk [vmem:[#allocation4 + $0x170] sm:$0xff] %vm4128, 0.0
        %4177 = vst.msk [vmem:[#allocation4 + $0x178] sm:$0x3] %vm4131, 0.0
        %4178 = vst.msk [vmem:[#allocation4 + $0x180] sm:$0xff] %vm4128, 0.0
        %4179 = vst.msk [vmem:[#allocation4 + $0x188] sm:$0xff] %vm4128, 0.0
        %4180 = vst.msk [vmem:[#allocation4 + $0x190] sm:$0x3] %vm4131, 0.0
        %4181 = vst.msk [vmem:[#allocation4 + $0x198] sm:$0xff] %vm4128, 0.0
        %4182 = vst.msk [vmem:[#allocation4 + $0x1a0] sm:$0xff] %vm4128, 0.0
        %4183 = vst.msk [vmem:[#allocation4 + $0x1a8] sm:$0x3] %vm4131, 0.0
        %s4184 = scalar_lea.vmem [#allocation4], 24
        %4185 = vst.msk [vmem:[%s4184 + $0x1] sm:$0xff] %vm4128, %v4096
        %4186 = vst.msk [vmem:[%s4184 + $0x9] sm:$0xff] %vm4128, %v4097
        %4187 = vst.msk [vmem:[%s4184 + $0x19] sm:$0xff] %vm4128, %v4098
        %4188 = vst.msk [vmem:[%s4184 + $0x21] sm:$0xff] %vm4128, %v4099
        %4189 = vst.msk [vmem:[%s4184 + $0x31] sm:$0xff] %vm4128, %v4100
        %4190 = vst.msk [vmem:[%s4184 + $0x39] sm:$0xff] %vm4128, %v4101
        %4191 = vst.msk [vmem:[%s4184 + $0x49] sm:$0xff] %vm4128, %v4102
        %4192 = vst.msk [vmem:[%s4184 + $0x51] sm:$0xff] %vm4128, %v4103
        %4193 = vst.msk [vmem:[%s4184 + $0x61] sm:$0xff] %vm4128, %v4104
        %4194 = vst.msk [vmem:[%s4184 + $0x69] sm:$0xff] %vm4128, %v4105
        %4195 = vst.msk [vmem:[%s4184 + $0x79] sm:$0xff] %vm4128, %v4106
        %4196 = vst.msk [vmem:[%s4184 + $0x81] sm:$0xff] %vm4128, %v4107
        %4197 = vst.msk [vmem:[%s4184 + $0x91] sm:$0xff] %vm4128, %v4108
        %4198 = vst.msk [vmem:[%s4184 + $0x99] sm:$0xff] %vm4128, %v4109
        %4199 = vst.msk [vmem:[%s4184 + $0xa9] sm:$0xff] %vm4128, %v4110
        %4200 = vst.msk [vmem:[%s4184 + $0xb1] sm:$0xff] %vm4128, %v4111
        %4201 = vst.msk [vmem:[%s4184 + $0xc1] sm:$0xff] %vm4128, %v4112
        %4202 = vst.msk [vmem:[%s4184 + $0xc9] sm:$0xff] %vm4128, %v4113
        %4203 = vst.msk [vmem:[%s4184 + $0xd9] sm:$0xff] %vm4128, %v4114
        %4204 = vst.msk [vmem:[%s4184 + $0xe1] sm:$0xff] %vm4128, %v4115
        %4205 = vst.msk [vmem:[%s4184 + $0xf1] sm:$0xff] %vm4128, %v4116
        %4206 = vst.msk [vmem:[%s4184 + $0xf9] sm:$0xff] %vm4128, %v4117
        %4207 = vst.msk [vmem:[%s4184 + $0x109] sm:$0xff] %vm4128, %v4118
        %4208 = vst.msk [vmem:[%s4184 + $0x111] sm:$0xff] %vm4128, %v4119
        %4209 = vst.msk [vmem:[%s4184 + $0x121] sm:$0xff] %vm4128, %v4120
        %4210 = vst.msk [vmem:[%s4184 + $0x129] sm:$0xff] %vm4128, %v4121
        %4211 = vst.msk [vmem:[%s4184 + $0x139] sm:$0xff] %vm4128, %v4122
        %4212 = vst.msk [vmem:[%s4184 + $0x141] sm:$0xff] %vm4128, %v4123
        %4213 = vst.msk [vmem:[%s4184 + $0x151] sm:$0xff] %vm4128, %v4124
        %4214 = vst.msk [vmem:[%s4184 + $0x159] sm:$0xff] %vm4128, %v4125
        %4215 = vst.msk [vmem:[%s4184 + $0x169] sm:$0xff] %vm4128, %v4126
        %4216 = vst.msk [vmem:[%s4184 + $0x171] sm:$0xff] %vm4128, %v4127
        %v4217 = vld [vmem:[#allocation4] sm:$0xff]
        %v4218 = vld [vmem:[#allocation4 + $0x8] sm:$0xff]
        %v4219 = vld [vmem:[#allocation4 + $0x18] sm:$0xff]
        %v4220 = vld [vmem:[#allocation4 + $0x20] sm:$0xff]
        %v4221 = vld [vmem:[#allocation4 + $0x30] sm:$0xff]
        %v4222 = vld [vmem:[#allocation4 + $0x38] sm:$0xff]
        %v4223 = vld [vmem:[#allocation4 + $0x48] sm:$0xff]
        %v4224 = vld [vmem:[#allocation4 + $0x50] sm:$0xff]
        %v4225 = vld [vmem:[#allocation4 + $0x60] sm:$0xff]
        %v4226 = vld [vmem:[#allocation4 + $0x68] sm:$0xff]
        %v4227 = vld [vmem:[#allocation4 + $0x78] sm:$0xff]
        %v4228 = vld [vmem:[#allocation4 + $0x80] sm:$0xff]
        %v4229 = vld [vmem:[#allocation4 + $0x90] sm:$0xff]
        %v4230 = vld [vmem:[#allocation4 + $0x98] sm:$0xff]
        %v4231 = vld [vmem:[#allocation4 + $0xa8] sm:$0xff]
        %v4232 = vld [vmem:[#allocation4 + $0xb0] sm:$0xff]
        %v4233 = vld [vmem:[#allocation4 + $0xc0] sm:$0xff]
        %v4234 = vld [vmem:[#allocation4 + $0xc8] sm:$0xff]
        %v4235 = vld [vmem:[#allocation4 + $0xd8] sm:$0xff]
        %v4236 = vld [vmem:[#allocation4 + $0xe0] sm:$0xff]
        %v4237 = vld [vmem:[#allocation4 + $0xf0] sm:$0xff]
        %v4238 = vld [vmem:[#allocation4 + $0xf8] sm:$0xff]
        %v4239 = vld [vmem:[#allocation4 + $0x108] sm:$0xff]
        %v4240 = vld [vmem:[#allocation4 + $0x110] sm:$0xff]
        %v4241 = vld [vmem:[#allocation4 + $0x120] sm:$0xff]
        %v4242 = vld [vmem:[#allocation4 + $0x128] sm:$0xff]
        %v4243 = vld [vmem:[#allocation4 + $0x138] sm:$0xff]
        %v4244 = vld [vmem:[#allocation4 + $0x140] sm:$0xff]
        %v4245 = vld [vmem:[#allocation4 + $0x150] sm:$0xff]
        %v4246 = vld [vmem:[#allocation4 + $0x158] sm:$0xff]
        %v4247 = vld [vmem:[#allocation4 + $0x168] sm:$0xff]
        %v4248 = vld [vmem:[#allocation4 + $0x170] sm:$0xff]
        %v4249 = vpack.c.bf16 %v4218, %v4217
        %v4250 = vpack.c.bf16 %v4220, %v4219
        %v4251 = vpack.c.bf16 %v4222, %v4221
        %v4252 = vpack.c.bf16 %v4224, %v4223
        %v4253 = vpack.c.bf16 %v4226, %v4225
        %v4254 = vpack.c.bf16 %v4228, %v4227
        %v4255 = vpack.c.bf16 %v4230, %v4229
        %v4256 = vpack.c.bf16 %v4232, %v4231
        %v4257 = vpack.c.bf16 %v4234, %v4233
        %v4258 = vpack.c.bf16 %v4236, %v4235
        %v4259 = vpack.c.bf16 %v4238, %v4237
        %v4260 = vpack.c.bf16 %v4240, %v4239
        %v4261 = vpack.c.bf16 %v4242, %v4241
        %v4262 = vpack.c.bf16 %v4244, %v4243
        %v4263 = vpack.c.bf16 %v4246, %v4245
        %v4264 = vpack.c.bf16 %v4248, %v4247
        %v4265 = vld [vmem:[%s7] sm:$0xf]
        %v4266 = vld [vmem:[#allocation4 + $0x1] sm:$0xff]
        %v4267 = vld [vmem:[#allocation4 + $0x9] sm:$0xff]
        %v4268 = vld [vmem:[#allocation4 + $0x19] sm:$0xff]
        %v4269 = vld [vmem:[#allocation4 + $0x21] sm:$0xff]
        %v4270 = vld [vmem:[#allocation4 + $0x31] sm:$0xff]
        %v4271 = vld [vmem:[#allocation4 + $0x39] sm:$0xff]
        %v4272 = vld [vmem:[#allocation4 + $0x49] sm:$0xff]
        %v4273 = vld [vmem:[#allocation4 + $0x51] sm:$0xff]
        %v4274 = vld [vmem:[#allocation4 + $0x61] sm:$0xff]
        %v4275 = vld [vmem:[#allocation4 + $0x69] sm:$0xff]
        %v4276 = vld [vmem:[#allocation4 + $0x79] sm:$0xff]
        %v4277 = vld [vmem:[#allocation4 + $0x81] sm:$0xff]
        %v4278 = vld [vmem:[#allocation4 + $0x91] sm:$0xff]
        %v4279 = vld [vmem:[#allocation4 + $0x99] sm:$0xff]
        %v4280 = vld [vmem:[#allocation4 + $0xa9] sm:$0xff]
        %v4281 = vld [vmem:[#allocation4 + $0xb1] sm:$0xff]
        %v4282 = vld [vmem:[#allocation4 + $0xc1] sm:$0xff]
        %v4283 = vld [vmem:[#allocation4 + $0xc9] sm:$0xff]
        %v4284 = vld [vmem:[#allocation4 + $0xd9] sm:$0xff]
        %v4285 = vld [vmem:[#allocation4 + $0xe1] sm:$0xff]
        %v4286 = vld [vmem:[#allocation4 + $0xf1] sm:$0xff]
        %v4287 = vld [vmem:[#allocation4 + $0xf9] sm:$0xff]
        %v4288 = vld [vmem:[#allocation4 + $0x109] sm:$0xff]
        %v4289 = vld [vmem:[#allocation4 + $0x111] sm:$0xff]
        %v4290 = vld [vmem:[#allocation4 + $0x121] sm:$0xff]
        %v4291 = vld [vmem:[#allocation4 + $0x129] sm:$0xff]
        %v4292 = vld [vmem:[#allocation4 + $0x139] sm:$0xff]
        %v4293 = vld [vmem:[#allocation4 + $0x141] sm:$0xff]
        %v4294 = vld [vmem:[#allocation4 + $0x151] sm:$0xff]
        %v4295 = vld [vmem:[#allocation4 + $0x159] sm:$0xff]
        %v4296 = vld [vmem:[#allocation4 + $0x169] sm:$0xff]
        %v4297 = vld [vmem:[#allocation4 + $0x171] sm:$0xff]
        %v4298 = vpack.c.bf16 %v4267, %v4266
        %v4299 = vpack.c.bf16 %v4269, %v4268
        %v4300 = vpack.c.bf16 %v4271, %v4270
        %v4301 = vpack.c.bf16 %v4273, %v4272
        %v4302 = vpack.c.bf16 %v4275, %v4274
        %v4303 = vpack.c.bf16 %v4277, %v4276
        %v4304 = vpack.c.bf16 %v4279, %v4278
        %v4305 = vpack.c.bf16 %v4281, %v4280
        %v4306 = vpack.c.bf16 %v4283, %v4282
        %v4307 = vpack.c.bf16 %v4285, %v4284
        %v4308 = vpack.c.bf16 %v4287, %v4286
        %v4309 = vpack.c.bf16 %v4289, %v4288
        %v4310 = vpack.c.bf16 %v4291, %v4290
        %v4311 = vpack.c.bf16 %v4293, %v4292
        %v4312 = vpack.c.bf16 %v4295, %v4294
        %v4313 = vpack.c.bf16 %v4297, %v4296
        %s4314 = scalar_lea.vmem %s7, 4
        %v4315 = vld [vmem:[%s4314] sm:$0xf]
        %v4317 = vsel %vm4128, %v4298, 0
        %v4320 = vsel %vm4128, %v4299, 0
        %v4323 = vsel %vm4128, %v4300, 0
        %v4326 = vsel %vm4128, %v4301, 0
        %v4329 = vsel %vm4128, %v4302, 0
        %v4332 = vsel %vm4128, %v4303, 0
        %v4335 = vsel %vm4128, %v4304, 0
        %v4338 = vsel %vm4128, %v4305, 0
        %v4341 = vsel %vm4128, %v4306, 0
        %v4344 = vsel %vm4128, %v4307, 0
        %v4347 = vsel %vm4128, %v4308, 0
        %v4350 = vsel %vm4128, %v4309, 0
        %v4353 = vsel %vm4128, %v4310, 0
        %v4356 = vsel %vm4128, %v4311, 0
        %v4359 = vsel %vm4128, %v4312, 0
        %v4362 = vsel %vm4128, %v4313, 0
        %vm4364 = vcmask 1043456
        %v4366 = vsel %vm4364, %v4315, 0
        %4368 = vmatpush.bf16.msra.mxu0 0
        %4369 = vmatpush.bf16.msra.mxu0 0
        %4370 = vmatpush.bf16.msra.mxu0 0
        %4371 = vmatpush.bf16.msra.mxu0 0
        %4372 = vmatpush.bf16.msra.mxu0 0
        %4373 = vmatpush.bf16.msra.mxu0 0
        %4374 = vmatpush.bf16.msra.mxu0 0
        %4375 = vmatpush.bf16.msra.mxu0 %v4366
        %4376 = vmatmul.bf16.gmra.mxu0 %v4317
        %v4377 = vpop.f32.mrf.mxu0
        %v4378 = vadd.f32 0.0, %v4377
        %v4379 = vpop.f32.mrf.mxu0
        %v4380 = vadd.f32 0.0, %v4379
        %4381 = vmatmul.bf16.gmra.mxu0 %v4320
        %v4382 = vpop.f32.mrf.mxu0
        %v4383 = vadd.f32 0.0, %v4382
        %v4384 = vpop.f32.mrf.mxu0
        %v4385 = vadd.f32 0.0, %v4384
        %4386 = vmatmul.bf16.gmra.mxu0 %v4323
        %v4387 = vpop.f32.mrf.mxu0
        %v4388 = vadd.f32 0.0, %v4387
        %v4389 = vpop.f32.mrf.mxu0
        %v4390 = vadd.f32 0.0, %v4389
        %4391 = vmatmul.bf16.gmra.mxu0 %v4326
        %v4392 = vpop.f32.mrf.mxu0
        %v4393 = vadd.f32 0.0, %v4392
        %v4394 = vpop.f32.mrf.mxu0
        %v4395 = vadd.f32 0.0, %v4394
        %4396 = vmatmul.bf16.gmra.mxu0 %v4329
        %v4397 = vpop.f32.mrf.mxu0
        %v4398 = vadd.f32 0.0, %v4397
        %v4399 = vpop.f32.mrf.mxu0
        %v4400 = vadd.f32 0.0, %v4399
        %4401 = vmatmul.bf16.gmra.mxu0 %v4332
        %v4402 = vpop.f32.mrf.mxu0
        %v4403 = vadd.f32 0.0, %v4402
        %v4404 = vpop.f32.mrf.mxu0
        %v4405 = vadd.f32 0.0, %v4404
        %4406 = vmatmul.bf16.gmra.mxu0 %v4335
        %v4407 = vpop.f32.mrf.mxu0
        %v4408 = vadd.f32 0.0, %v4407
        %v4409 = vpop.f32.mrf.mxu0
        %v4410 = vadd.f32 0.0, %v4409
        %4411 = vmatmul.bf16.gmra.mxu0 %v4338
        %v4412 = vpop.f32.mrf.mxu0
        %v4413 = vadd.f32 0.0, %v4412
        %v4414 = vpop.f32.mrf.mxu0
        %v4415 = vadd.f32 0.0, %v4414
        %4416 = vmatmul.bf16.gmra.mxu0 %v4341
        %v4417 = vpop.f32.mrf.mxu0
        %v4418 = vadd.f32 0.0, %v4417
        %v4419 = vpop.f32.mrf.mxu0
        %v4420 = vadd.f32 0.0, %v4419
        %4421 = vmatmul.bf16.gmra.mxu0 %v4344
        %v4422 = vpop.f32.mrf.mxu0
        %v4423 = vadd.f32 0.0, %v4422
        %v4424 = vpop.f32.mrf.mxu0
        %v4425 = vadd.f32 0.0, %v4424
        %4426 = vmatmul.bf16.gmra.mxu0 %v4347
        %v4427 = vpop.f32.mrf.mxu0
        %v4428 = vadd.f32 0.0, %v4427
        %v4429 = vpop.f32.mrf.mxu0
        %v4430 = vadd.f32 0.0, %v4429
        %4431 = vmatmul.bf16.gmra.mxu0 %v4350
        %v4432 = vpop.f32.mrf.mxu0
        %v4433 = vadd.f32 0.0, %v4432
        %v4434 = vpop.f32.mrf.mxu0
        %v4435 = vadd.f32 0.0, %v4434
        %4436 = vmatmul.bf16.gmra.mxu0 %v4353
        %v4437 = vpop.f32.mrf.mxu0
        %v4438 = vadd.f32 0.0, %v4437
        %v4439 = vpop.f32.mrf.mxu0
        %v4440 = vadd.f32 0.0, %v4439
        %4441 = vmatmul.bf16.gmra.mxu0 %v4356
        %v4442 = vpop.f32.mrf.mxu0
        %v4443 = vadd.f32 0.0, %v4442
        %v4444 = vpop.f32.mrf.mxu0
        %v4445 = vadd.f32 0.0, %v4444
        %4446 = vmatmul.bf16.gmra.mxu0 %v4359
        %v4447 = vpop.f32.mrf.mxu0
        %v4448 = vadd.f32 0.0, %v4447
        %v4449 = vpop.f32.mrf.mxu0
        %v4450 = vadd.f32 0.0, %v4449
        %4451 = vmatmul.bf16.gmra.mxu0 %v4362
        %v4452 = vpop.f32.mrf.mxu0
        %v4453 = vadd.f32 0.0, %v4452
        %v4454 = vpop.f32.mrf.mxu0
        %v4455 = vadd.f32 0.0, %v4454
        %4456 = vdwg.mxu0
        %v4458 = vsel %vm4128, %v4249, 0
        %v4461 = vsel %vm4128, %v4250, 0
        %v4464 = vsel %vm4128, %v4251, 0
        %v4467 = vsel %vm4128, %v4252, 0
        %v4470 = vsel %vm4128, %v4253, 0
        %v4473 = vsel %vm4128, %v4254, 0
        %v4476 = vsel %vm4128, %v4255, 0
        %v4479 = vsel %vm4128, %v4256, 0
        %v4482 = vsel %vm4128, %v4257, 0
        %v4485 = vsel %vm4128, %v4258, 0
        %v4488 = vsel %vm4128, %v4259, 0
        %v4491 = vsel %vm4128, %v4260, 0
        %v4494 = vsel %vm4128, %v4261, 0
        %v4497 = vsel %vm4128, %v4262, 0
        %v4500 = vsel %vm4128, %v4263, 0
        %v4503 = vsel %vm4128, %v4264, 0
        %v4506 = vsel %vm4364, %v4265, 0
        %4508 = vmatpush.bf16.msra.mxu0 0
        %4509 = vmatpush.bf16.msra.mxu0 0
        %4510 = vmatpush.bf16.msra.mxu0 0
        %4511 = vmatpush.bf16.msra.mxu0 0
        %4512 = vmatpush.bf16.msra.mxu0 0
        %4513 = vmatpush.bf16.msra.mxu0 0
        %4514 = vmatpush.bf16.msra.mxu0 0
        %4515 = vmatpush.bf16.msra.mxu0 %v4506
        %4516 = vmatmul.bf16.gmra.mxu0 %v4458
        %v4517 = vpop.f32.mrf.mxu0
        %v4518 = vadd.f32 %v4378, %v4517
        %v4519 = vpop.f32.mrf.mxu0
        %v4520 = vadd.f32 %v4380, %v4519
        %4521 = vmatmul.bf16.gmra.mxu0 %v4461
        %v4522 = vpop.f32.mrf.mxu0
        %v4523 = vadd.f32 %v4383, %v4522
        %v4524 = vpop.f32.mrf.mxu0
        %v4525 = vadd.f32 %v4385, %v4524
        %4526 = vmatmul.bf16.gmra.mxu0 %v4464
        %v4527 = vpop.f32.mrf.mxu0
        %v4528 = vadd.f32 %v4388, %v4527
        %v4529 = vpop.f32.mrf.mxu0
        %v4530 = vadd.f32 %v4390, %v4529
        %4531 = vmatmul.bf16.gmra.mxu0 %v4467
        %v4532 = vpop.f32.mrf.mxu0
        %v4533 = vadd.f32 %v4393, %v4532
        %v4534 = vpop.f32.mrf.mxu0
        %v4535 = vadd.f32 %v4395, %v4534
        %4536 = vmatmul.bf16.gmra.mxu0 %v4470
        %v4537 = vpop.f32.mrf.mxu0
        %v4538 = vadd.f32 %v4398, %v4537
        %v4539 = vpop.f32.mrf.mxu0
        %v4540 = vadd.f32 %v4400, %v4539
        %4541 = vmatmul.bf16.gmra.mxu0 %v4473
        %v4542 = vpop.f32.mrf.mxu0
        %v4543 = vadd.f32 %v4403, %v4542
        %v4544 = vpop.f32.mrf.mxu0
        %v4545 = vadd.f32 %v4405, %v4544
        %4546 = vmatmul.bf16.gmra.mxu0 %v4476
        %v4547 = vpop.f32.mrf.mxu0
        %v4548 = vadd.f32 %v4408, %v4547
        %v4549 = vpop.f32.mrf.mxu0
        %v4550 = vadd.f32 %v4410, %v4549
        %4551 = vmatmul.bf16.gmra.mxu0 %v4479
        %v4552 = vpop.f32.mrf.mxu0
        %v4553 = vadd.f32 %v4413, %v4552
        %v4554 = vpop.f32.mrf.mxu0
        %v4555 = vadd.f32 %v4415, %v4554
        %4556 = vmatmul.bf16.gmra.mxu0 %v4482
        %v4557 = vpop.f32.mrf.mxu0
        %v4558 = vadd.f32 %v4418, %v4557
        %v4559 = vpop.f32.mrf.mxu0
        %v4560 = vadd.f32 %v4420, %v4559
        %4561 = vmatmul.bf16.gmra.mxu0 %v4485
        %v4562 = vpop.f32.mrf.mxu0
        %v4563 = vadd.f32 %v4423, %v4562
        %v4564 = vpop.f32.mrf.mxu0
        %v4565 = vadd.f32 %v4425, %v4564
        %4566 = vmatmul.bf16.gmra.mxu0 %v4488
        %v4567 = vpop.f32.mrf.mxu0
        %v4568 = vadd.f32 %v4428, %v4567
        %v4569 = vpop.f32.mrf.mxu0
        %v4570 = vadd.f32 %v4430, %v4569
        %4571 = vmatmul.bf16.gmra.mxu0 %v4491
        %v4572 = vpop.f32.mrf.mxu0
        %v4573 = vadd.f32 %v4433, %v4572
        %v4574 = vpop.f32.mrf.mxu0
        %v4575 = vadd.f32 %v4435, %v4574
        %4576 = vmatmul.bf16.gmra.mxu0 %v4494
        %v4577 = vpop.f32.mrf.mxu0
        %v4578 = vadd.f32 %v4438, %v4577
        %v4579 = vpop.f32.mrf.mxu0
        %v4580 = vadd.f32 %v4440, %v4579
        %4581 = vmatmul.bf16.gmra.mxu0 %v4497
        %v4582 = vpop.f32.mrf.mxu0
        %v4583 = vadd.f32 %v4443, %v4582
        %v4584 = vpop.f32.mrf.mxu0
        %v4585 = vadd.f32 %v4445, %v4584
        %4586 = vmatmul.bf16.gmra.mxu0 %v4500
        %v4587 = vpop.f32.mrf.mxu0
        %v4588 = vadd.f32 %v4448, %v4587
        %v4589 = vpop.f32.mrf.mxu0
        %v4590 = vadd.f32 %v4450, %v4589
        %4591 = vmatmul.bf16.gmra.mxu0 %v4503
        %v4592 = vpop.f32.mrf.mxu0
        %v4593 = vadd.f32 %v4453, %v4592
        %v4594 = vpop.f32.mrf.mxu0
        %v4595 = vadd.f32 %v4455, %v4594
        %4596 = vdwg.mxu0
        %v4597 = vld [vmem:[#allocation4 + $0x2] sm:$0xff]
        %v4598 = vld [vmem:[#allocation4 + $0xa] sm:$0xff]
        %v4599 = vld [vmem:[#allocation4 + $0x1a] sm:$0xff]
        %v4600 = vld [vmem:[#allocation4 + $0x22] sm:$0xff]
        %v4601 = vld [vmem:[#allocation4 + $0x32] sm:$0xff]
        %v4602 = vld [vmem:[#allocation4 + $0x3a] sm:$0xff]
        %v4603 = vld [vmem:[#allocation4 + $0x4a] sm:$0xff]
        %v4604 = vld [vmem:[#allocation4 + $0x52] sm:$0xff]
        %v4605 = vld [vmem:[#allocation4 + $0x62] sm:$0xff]
        %v4606 = vld [vmem:[#allocation4 + $0x6a] sm:$0xff]
        %v4607 = vld [vmem:[#allocation4 + $0x7a] sm:$0xff]
        %v4608 = vld [vmem:[#allocation4 + $0x82] sm:$0xff]
        %v4609 = vld [vmem:[#allocation4 + $0x92] sm:$0xff]
        %v4610 = vld [vmem:[#allocation4 + $0x9a] sm:$0xff]
        %v4611 = vld [vmem:[#allocation4 + $0xaa] sm:$0xff]
        %v4612 = vld [vmem:[#allocation4 + $0xb2] sm:$0xff]
        %v4613 = vld [vmem:[#allocation4 + $0xc2] sm:$0xff]
        %v4614 = vld [vmem:[#allocation4 + $0xca] sm:$0xff]
        %v4615 = vld [vmem:[#allocation4 + $0xda] sm:$0xff]
        %v4616 = vld [vmem:[#allocation4 + $0xe2] sm:$0xff]
        %v4617 = vld [vmem:[#allocation4 + $0xf2] sm:$0xff]
        %v4618 = vld [vmem:[#allocation4 + $0xfa] sm:$0xff]
        %v4619 = vld [vmem:[#allocation4 + $0x10a] sm:$0xff]
        %v4620 = vld [vmem:[#allocation4 + $0x112] sm:$0xff]
        %v4621 = vld [vmem:[#allocation4 + $0x122] sm:$0xff]
        %v4622 = vld [vmem:[#allocation4 + $0x12a] sm:$0xff]
        %v4623 = vld [vmem:[#allocation4 + $0x13a] sm:$0xff]
        %v4624 = vld [vmem:[#allocation4 + $0x142] sm:$0xff]
        %v4625 = vld [vmem:[#allocation4 + $0x152] sm:$0xff]
        %v4626 = vld [vmem:[#allocation4 + $0x15a] sm:$0xff]
        %v4627 = vld [vmem:[#allocation4 + $0x16a] sm:$0xff]
        %v4628 = vld [vmem:[#allocation4 + $0x172] sm:$0xff]
        %v4629 = vpack.c.bf16 %v4598, %v4597
        %v4630 = vpack.c.bf16 %v4600, %v4599
        %v4631 = vpack.c.bf16 %v4602, %v4601
        %v4632 = vpack.c.bf16 %v4604, %v4603
        %v4633 = vpack.c.bf16 %v4606, %v4605
        %v4634 = vpack.c.bf16 %v4608, %v4607
        %v4635 = vpack.c.bf16 %v4610, %v4609
        %v4636 = vpack.c.bf16 %v4612, %v4611
        %v4637 = vpack.c.bf16 %v4614, %v4613
        %v4638 = vpack.c.bf16 %v4616, %v4615
        %v4639 = vpack.c.bf16 %v4618, %v4617
        %v4640 = vpack.c.bf16 %v4620, %v4619
        %v4641 = vpack.c.bf16 %v4622, %v4621
        %v4642 = vpack.c.bf16 %v4624, %v4623
        %v4643 = vpack.c.bf16 %v4626, %v4625
        %v4644 = vpack.c.bf16 %v4628, %v4627
        %s4645 = scalar_lea.vmem %s7, 8
        %v4646 = vld [vmem:[%s4645] sm:$0xf]
        %v4648 = vsel %vm4128, %v4629, 0
        %v4651 = vsel %vm4128, %v4630, 0
        %v4654 = vsel %vm4128, %v4631, 0
        %v4657 = vsel %vm4128, %v4632, 0
        %v4660 = vsel %vm4128, %v4633, 0
        %v4663 = vsel %vm4128, %v4634, 0
        %v4666 = vsel %vm4128, %v4635, 0
        %v4669 = vsel %vm4128, %v4636, 0
        %v4672 = vsel %vm4128, %v4637, 0
        %v4675 = vsel %vm4128, %v4638, 0
        %v4678 = vsel %vm4128, %v4639, 0
        %v4681 = vsel %vm4128, %v4640, 0
        %v4684 = vsel %vm4128, %v4641, 0
        %v4687 = vsel %vm4128, %v4642, 0
        %v4690 = vsel %vm4128, %v4643, 0
        %v4693 = vsel %vm4128, %v4644, 0
        %v4696 = vsel %vm4364, %v4646, 0
        %4698 = vmatpush.bf16.msra.mxu0 0
        %4699 = vmatpush.bf16.msra.mxu0 0
        %4700 = vmatpush.bf16.msra.mxu0 0
        %4701 = vmatpush.bf16.msra.mxu0 0
        %4702 = vmatpush.bf16.msra.mxu0 0
        %4703 = vmatpush.bf16.msra.mxu0 0
        %4704 = vmatpush.bf16.msra.mxu0 0
        %4705 = vmatpush.bf16.msra.mxu0 %v4696
        %4706 = vmatmul.bf16.gmra.mxu0 %v4648
        %v4707 = vpop.f32.mrf.mxu0
        %v4708 = vadd.f32 0.0, %v4707
        %v4709 = vpop.f32.mrf.mxu0
        %v4710 = vadd.f32 0.0, %v4709
        %4711 = vmatmul.bf16.gmra.mxu0 %v4651
        %v4712 = vpop.f32.mrf.mxu0
        %v4713 = vadd.f32 0.0, %v4712
        %v4714 = vpop.f32.mrf.mxu0
        %v4715 = vadd.f32 0.0, %v4714
        %4716 = vmatmul.bf16.gmra.mxu0 %v4654
        %v4717 = vpop.f32.mrf.mxu0
        %v4718 = vadd.f32 0.0, %v4717
        %v4719 = vpop.f32.mrf.mxu0
        %v4720 = vadd.f32 0.0, %v4719
        %4721 = vmatmul.bf16.gmra.mxu0 %v4657
        %v4722 = vpop.f32.mrf.mxu0
        %v4723 = vadd.f32 0.0, %v4722
        %v4724 = vpop.f32.mrf.mxu0
        %v4725 = vadd.f32 0.0, %v4724
        %4726 = vmatmul.bf16.gmra.mxu0 %v4660
        %v4727 = vpop.f32.mrf.mxu0
        %v4728 = vadd.f32 0.0, %v4727
        %v4729 = vpop.f32.mrf.mxu0
        %v4730 = vadd.f32 0.0, %v4729
        %4731 = vmatmul.bf16.gmra.mxu0 %v4663
        %v4732 = vpop.f32.mrf.mxu0
        %v4733 = vadd.f32 0.0, %v4732
        %v4734 = vpop.f32.mrf.mxu0
        %v4735 = vadd.f32 0.0, %v4734
        %4736 = vmatmul.bf16.gmra.mxu0 %v4666
        %v4737 = vpop.f32.mrf.mxu0
        %v4738 = vadd.f32 0.0, %v4737
        %v4739 = vpop.f32.mrf.mxu0
        %v4740 = vadd.f32 0.0, %v4739
        %4741 = vmatmul.bf16.gmra.mxu0 %v4669
        %v4742 = vpop.f32.mrf.mxu0
        %v4743 = vadd.f32 0.0, %v4742
        %v4744 = vpop.f32.mrf.mxu0
        %v4745 = vadd.f32 0.0, %v4744
        %4746 = vmatmul.bf16.gmra.mxu0 %v4672
        %v4747 = vpop.f32.mrf.mxu0
        %v4748 = vadd.f32 0.0, %v4747
        %v4749 = vpop.f32.mrf.mxu0
        %v4750 = vadd.f32 0.0, %v4749
        %4751 = vmatmul.bf16.gmra.mxu0 %v4675
        %v4752 = vpop.f32.mrf.mxu0
        %v4753 = vadd.f32 0.0, %v4752
        %v4754 = vpop.f32.mrf.mxu0
        %v4755 = vadd.f32 0.0, %v4754
        %4756 = vmatmul.bf16.gmra.mxu0 %v4678
        %v4757 = vpop.f32.mrf.mxu0
        %v4758 = vadd.f32 0.0, %v4757
        %v4759 = vpop.f32.mrf.mxu0
        %v4760 = vadd.f32 0.0, %v4759
        %4761 = vmatmul.bf16.gmra.mxu0 %v4681
        %v4762 = vpop.f32.mrf.mxu0
        %v4763 = vadd.f32 0.0, %v4762
        %v4764 = vpop.f32.mrf.mxu0
        %v4765 = vadd.f32 0.0, %v4764
        %4766 = vmatmul.bf16.gmra.mxu0 %v4684
        %v4767 = vpop.f32.mrf.mxu0
        %v4768 = vadd.f32 0.0, %v4767
        %v4769 = vpop.f32.mrf.mxu0
        %v4770 = vadd.f32 0.0, %v4769
        %4771 = vmatmul.bf16.gmra.mxu0 %v4687
        %v4772 = vpop.f32.mrf.mxu0
        %v4773 = vadd.f32 0.0, %v4772
        %v4774 = vpop.f32.mrf.mxu0
        %v4775 = vadd.f32 0.0, %v4774
        %4776 = vmatmul.bf16.gmra.mxu0 %v4690
        %v4777 = vpop.f32.mrf.mxu0
        %v4778 = vadd.f32 0.0, %v4777
        %v4779 = vpop.f32.mrf.mxu0
        %v4780 = vadd.f32 0.0, %v4779
        %4781 = vmatmul.bf16.gmra.mxu0 %v4693
        %v4782 = vpop.f32.mrf.mxu0
        %v4783 = vadd.f32 0.0, %v4782
        %v4784 = vpop.f32.mrf.mxu0
        %v4785 = vadd.f32 0.0, %v4784
        %4786 = vdwg.mxu0
        %v4787 = vadd.f32 %v4518, %v4708
        %v4788 = vadd.f32 %v4520, %v4710
        %v4789 = vadd.f32 %v4523, %v4713
        %v4790 = vadd.f32 %v4525, %v4715
        %v4791 = vadd.f32 %v4528, %v4718
        %v4792 = vadd.f32 %v4530, %v4720
        %v4793 = vadd.f32 %v4533, %v4723
        %v4794 = vadd.f32 %v4535, %v4725
        %v4795 = vadd.f32 %v4538, %v4728
        %v4796 = vadd.f32 %v4540, %v4730
        %v4797 = vadd.f32 %v4543, %v4733
        %v4798 = vadd.f32 %v4545, %v4735
        %v4799 = vadd.f32 %v4548, %v4738
        %v4800 = vadd.f32 %v4550, %v4740
        %v4801 = vadd.f32 %v4553, %v4743
        %v4802 = vadd.f32 %v4555, %v4745
        %v4803 = vadd.f32 %v4558, %v4748
        %v4804 = vadd.f32 %v4560, %v4750
        %v4805 = vadd.f32 %v4563, %v4753
        %v4806 = vadd.f32 %v4565, %v4755
        %v4807 = vadd.f32 %v4568, %v4758
        %v4808 = vadd.f32 %v4570, %v4760
        %v4809 = vadd.f32 %v4573, %v4763
        %v4810 = vadd.f32 %v4575, %v4765
        %v4811 = vadd.f32 %v4578, %v4768
        %v4812 = vadd.f32 %v4580, %v4770
        %v4813 = vadd.f32 %v4583, %v4773
        %v4814 = vadd.f32 %v4585, %v4775
        %v4815 = vadd.f32 %v4588, %v4778
        %v4816 = vadd.f32 %v4590, %v4780
        %v4817 = vadd.f32 %v4593, %v4783
        %v4818 = vadd.f32 %v4595, %v4785
        %v4819 = vld [vmem:[%s4184] sm:$0xff]
        %v4820 = vld [vmem:[%s4184 + $0x8] sm:$0xff]
        %v4821 = vld [vmem:[%s4184 + $0x18] sm:$0xff]
        %v4822 = vld [vmem:[%s4184 + $0x20] sm:$0xff]
        %v4823 = vld [vmem:[%s4184 + $0x30] sm:$0xff]
        %v4824 = vld [vmem:[%s4184 + $0x38] sm:$0xff]
        %v4825 = vld [vmem:[%s4184 + $0x48] sm:$0xff]
        %v4826 = vld [vmem:[%s4184 + $0x50] sm:$0xff]
        %v4827 = vld [vmem:[%s4184 + $0x60] sm:$0xff]
        %v4828 = vld [vmem:[%s4184 + $0x68] sm:$0xff]
        %v4829 = vld [vmem:[%s4184 + $0x78] sm:$0xff]
        %v4830 = vld [vmem:[%s4184 + $0x80] sm:$0xff]
        %v4831 = vld [vmem:[%s4184 + $0x90] sm:$0xff]
        %v4832 = vld [vmem:[%s4184 + $0x98] sm:$0xff]
        %v4833 = vld [vmem:[%s4184 + $0xa8] sm:$0xff]
        %v4834 = vld [vmem:[%s4184 + $0xb0] sm:$0xff]
        %v4835 = vld [vmem:[%s4184 + $0xc0] sm:$0xff]
        %v4836 = vld [vmem:[%s4184 + $0xc8] sm:$0xff]
        %v4837 = vld [vmem:[%s4184 + $0xd8] sm:$0xff]
        %v4838 = vld [vmem:[%s4184 + $0xe0] sm:$0xff]
        %v4839 = vld [vmem:[%s4184 + $0xf0] sm:$0xff]
        %v4840 = vld [vmem:[%s4184 + $0xf8] sm:$0xff]
        %v4841 = vld [vmem:[%s4184 + $0x108] sm:$0xff]
        %v4842 = vld [vmem:[%s4184 + $0x110] sm:$0xff]
        %v4843 = vld [vmem:[%s4184 + $0x120] sm:$0xff]
        %v4844 = vld [vmem:[%s4184 + $0x128] sm:$0xff]
        %v4845 = vld [vmem:[%s4184 + $0x138] sm:$0xff]
        %v4846 = vld [vmem:[%s4184 + $0x140] sm:$0xff]
        %v4847 = vld [vmem:[%s4184 + $0x150] sm:$0xff]
        %v4848 = vld [vmem:[%s4184 + $0x158] sm:$0xff]
        %v4849 = vld [vmem:[%s4184 + $0x168] sm:$0xff]
        %v4850 = vld [vmem:[%s4184 + $0x170] sm:$0xff]
        %v4851 = vpack.c.bf16 %v4820, %v4819
        %v4852 = vpack.c.bf16 %v4822, %v4821
        %v4853 = vpack.c.bf16 %v4824, %v4823
        %v4854 = vpack.c.bf16 %v4826, %v4825
        %v4855 = vpack.c.bf16 %v4828, %v4827
        %v4856 = vpack.c.bf16 %v4830, %v4829
        %v4857 = vpack.c.bf16 %v4832, %v4831
        %v4858 = vpack.c.bf16 %v4834, %v4833
        %v4859 = vpack.c.bf16 %v4836, %v4835
        %v4860 = vpack.c.bf16 %v4838, %v4837
        %v4861 = vpack.c.bf16 %v4840, %v4839
        %v4862 = vpack.c.bf16 %v4842, %v4841
        %v4863 = vpack.c.bf16 %v4844, %v4843
        %v4864 = vpack.c.bf16 %v4846, %v4845
        %v4865 = vpack.c.bf16 %v4848, %v4847
        %v4866 = vpack.c.bf16 %v4850, %v4849
        %s4867 = scalar_lea.vmem %s7, 12
        %v4868 = vld [vmem:[%s4867] sm:$0xf]
        %v4870 = vsel %vm4128, %v4851, 0
        %v4873 = vsel %vm4128, %v4852, 0
        %v4876 = vsel %vm4128, %v4853, 0
        %v4879 = vsel %vm4128, %v4854, 0
        %v4882 = vsel %vm4128, %v4855, 0
        %v4885 = vsel %vm4128, %v4856, 0
        %v4888 = vsel %vm4128, %v4857, 0
        %v4891 = vsel %vm4128, %v4858, 0
        %v4894 = vsel %vm4128, %v4859, 0
        %v4897 = vsel %vm4128, %v4860, 0
        %v4900 = vsel %vm4128, %v4861, 0
        %v4903 = vsel %vm4128, %v4862, 0
        %v4906 = vsel %vm4128, %v4863, 0
        %v4909 = vsel %vm4128, %v4864, 0
        %v4912 = vsel %vm4128, %v4865, 0
        %v4915 = vsel %vm4128, %v4866, 0
        %v4918 = vsel %vm4364, %v4868, 0
        %4920 = vmatpush.bf16.msra.mxu0 0
        %4921 = vmatpush.bf16.msra.mxu0 0
        %4922 = vmatpush.bf16.msra.mxu0 0
        %4923 = vmatpush.bf16.msra.mxu0 0
        %4924 = vmatpush.bf16.msra.mxu0 0
        %4925 = vmatpush.bf16.msra.mxu0 0
        %4926 = vmatpush.bf16.msra.mxu0 0
        %4927 = vmatpush.bf16.msra.mxu0 %v4918
        %4928 = vmatmul.bf16.gmra.mxu0 %v4870
        %v4929 = vpop.f32.mrf.mxu0
        %v4930 = vadd.f32 0.0, %v4929
        %v4931 = vpop.f32.mrf.mxu0
        %v4932 = vadd.f32 0.0, %v4931
        %4933 = vmatmul.bf16.gmra.mxu0 %v4873
        %v4934 = vpop.f32.mrf.mxu0
        %v4935 = vadd.f32 0.0, %v4934
        %v4936 = vpop.f32.mrf.mxu0
        %v4937 = vadd.f32 0.0, %v4936
        %4938 = vmatmul.bf16.gmra.mxu0 %v4876
        %v4939 = vpop.f32.mrf.mxu0
        %v4940 = vadd.f32 0.0, %v4939
        %v4941 = vpop.f32.mrf.mxu0
        %v4942 = vadd.f32 0.0, %v4941
        %4943 = vmatmul.bf16.gmra.mxu0 %v4879
        %v4944 = vpop.f32.mrf.mxu0
        %v4945 = vadd.f32 0.0, %v4944
        %v4946 = vpop.f32.mrf.mxu0
        %v4947 = vadd.f32 0.0, %v4946
        %4948 = vmatmul.bf16.gmra.mxu0 %v4882
        %v4949 = vpop.f32.mrf.mxu0
        %v4950 = vadd.f32 0.0, %v4949
        %v4951 = vpop.f32.mrf.mxu0
        %v4952 = vadd.f32 0.0, %v4951
        %4953 = vmatmul.bf16.gmra.mxu0 %v4885
        %v4954 = vpop.f32.mrf.mxu0
        %v4955 = vadd.f32 0.0, %v4954
        %v4956 = vpop.f32.mrf.mxu0
        %v4957 = vadd.f32 0.0, %v4956
        %4958 = vmatmul.bf16.gmra.mxu0 %v4888
        %v4959 = vpop.f32.mrf.mxu0
        %v4960 = vadd.f32 0.0, %v4959
        %v4961 = vpop.f32.mrf.mxu0
        %v4962 = vadd.f32 0.0, %v4961
        %4963 = vmatmul.bf16.gmra.mxu0 %v4891
        %v4964 = vpop.f32.mrf.mxu0
        %v4965 = vadd.f32 0.0, %v4964
        %v4966 = vpop.f32.mrf.mxu0
        %v4967 = vadd.f32 0.0, %v4966
        %4968 = vmatmul.bf16.gmra.mxu0 %v4894
        %v4969 = vpop.f32.mrf.mxu0
        %v4970 = vadd.f32 0.0, %v4969
        %v4971 = vpop.f32.mrf.mxu0
        %v4972 = vadd.f32 0.0, %v4971
        %4973 = vmatmul.bf16.gmra.mxu0 %v4897
        %v4974 = vpop.f32.mrf.mxu0
        %v4975 = vadd.f32 0.0, %v4974
        %v4976 = vpop.f32.mrf.mxu0
        %v4977 = vadd.f32 0.0, %v4976
        %4978 = vmatmul.bf16.gmra.mxu0 %v4900
        %v4979 = vpop.f32.mrf.mxu0
        %v4980 = vadd.f32 0.0, %v4979
        %v4981 = vpop.f32.mrf.mxu0
        %v4982 = vadd.f32 0.0, %v4981
        %4983 = vmatmul.bf16.gmra.mxu0 %v4903
        %v4984 = vpop.f32.mrf.mxu0
        %v4985 = vadd.f32 0.0, %v4984
        %v4986 = vpop.f32.mrf.mxu0
        %v4987 = vadd.f32 0.0, %v4986
        %4988 = vmatmul.bf16.gmra.mxu0 %v4906
        %v4989 = vpop.f32.mrf.mxu0
        %v4990 = vadd.f32 0.0, %v4989
        %v4991 = vpop.f32.mrf.mxu0
        %v4992 = vadd.f32 0.0, %v4991
        %4993 = vmatmul.bf16.gmra.mxu0 %v4909
        %v4994 = vpop.f32.mrf.mxu0
        %v4995 = vadd.f32 0.0, %v4994
        %v4996 = vpop.f32.mrf.mxu0
        %v4997 = vadd.f32 0.0, %v4996
        %4998 = vmatmul.bf16.gmra.mxu0 %v4912
        %v4999 = vpop.f32.mrf.mxu0
        %v5000 = vadd.f32 0.0, %v4999
        %v5001 = vpop.f32.mrf.mxu0
        %v5002 = vadd.f32 0.0, %v5001
        %5003 = vmatmul.bf16.gmra.mxu0 %v4915
        %v5004 = vpop.f32.mrf.mxu0
        %v5005 = vadd.f32 0.0, %v5004
        %v5006 = vpop.f32.mrf.mxu0
        %v5007 = vadd.f32 0.0, %v5006
        %5008 = vdwg.mxu0
        %v5009 = vadd.f32 %v4787, %v4930
        %v5010 = vadd.f32 %v4788, %v4932
        %v5011 = vadd.f32 %v4789, %v4935
        %v5012 = vadd.f32 %v4790, %v4937
        %v5013 = vadd.f32 %v4791, %v4940
        %v5014 = vadd.f32 %v4792, %v4942
        %v5015 = vadd.f32 %v4793, %v4945
        %v5016 = vadd.f32 %v4794, %v4947
        %v5017 = vadd.f32 %v4795, %v4950
        %v5018 = vadd.f32 %v4796, %v4952
        %v5019 = vadd.f32 %v4797, %v4955
        %v5020 = vadd.f32 %v4798, %v4957
        %v5021 = vadd.f32 %v4799, %v4960
        %v5022 = vadd.f32 %v4800, %v4962
        %v5023 = vadd.f32 %v4801, %v4965
        %v5024 = vadd.f32 %v4802, %v4967
        %v5025 = vadd.f32 %v4803, %v4970
        %v5026 = vadd.f32 %v4804, %v4972
        %v5027 = vadd.f32 %v4805, %v4975
        %v5028 = vadd.f32 %v4806, %v4977
        %v5029 = vadd.f32 %v4807, %v4980
        %v5030 = vadd.f32 %v4808, %v4982
        %v5031 = vadd.f32 %v4809, %v4985
        %v5032 = vadd.f32 %v4810, %v4987
        %v5033 = vadd.f32 %v4811, %v4990
        %v5034 = vadd.f32 %v4812, %v4992
        %v5035 = vadd.f32 %v4813, %v4995
        %v5036 = vadd.f32 %v4814, %v4997
        %v5037 = vadd.f32 %v4815, %v5000
        %v5038 = vadd.f32 %v4816, %v5002
        %v5039 = vadd.f32 %v4817, %v5005
        %v5040 = vadd.f32 %v4818, %v5007
        %v5041 = vld [vmem:[%s4184 + $0x1] sm:$0xff]
        %v5042 = vld [vmem:[%s4184 + $0x9] sm:$0xff]
        %v5043 = vld [vmem:[%s4184 + $0x19] sm:$0xff]
        %v5044 = vld [vmem:[%s4184 + $0x21] sm:$0xff]
        %v5045 = vld [vmem:[%s4184 + $0x31] sm:$0xff]
        %v5046 = vld [vmem:[%s4184 + $0x39] sm:$0xff]
        %v5047 = vld [vmem:[%s4184 + $0x49] sm:$0xff]
        %v5048 = vld [vmem:[%s4184 + $0x51] sm:$0xff]
        %v5049 = vld [vmem:[%s4184 + $0x61] sm:$0xff]
        %v5050 = vld [vmem:[%s4184 + $0x69] sm:$0xff]
        %v5051 = vld [vmem:[%s4184 + $0x79] sm:$0xff]
        %v5052 = vld [vmem:[%s4184 + $0x81] sm:$0xff]
        %v5053 = vld [vmem:[%s4184 + $0x91] sm:$0xff]
        %v5054 = vld [vmem:[%s4184 + $0x99] sm:$0xff]
        %v5055 = vld [vmem:[%s4184 + $0xa9] sm:$0xff]
        %v5056 = vld [vmem:[%s4184 + $0xb1] sm:$0xff]
        %v5057 = vld [vmem:[%s4184 + $0xc1] sm:$0xff]
        %v5058 = vld [vmem:[%s4184 + $0xc9] sm:$0xff]
        %v5059 = vld [vmem:[%s4184 + $0xd9] sm:$0xff]
        %v5060 = vld [vmem:[%s4184 + $0xe1] sm:$0xff]
        %v5061 = vld [vmem:[%s4184 + $0xf1] sm:$0xff]
        %v5062 = vld [vmem:[%s4184 + $0xf9] sm:$0xff]
        %v5063 = vld [vmem:[%s4184 + $0x109] sm:$0xff]
        %v5064 = vld [vmem:[%s4184 + $0x111] sm:$0xff]
        %v5065 = vld [vmem:[%s4184 + $0x121] sm:$0xff]
        %v5066 = vld [vmem:[%s4184 + $0x129] sm:$0xff]
        %v5067 = vld [vmem:[%s4184 + $0x139] sm:$0xff]
        %v5068 = vld [vmem:[%s4184 + $0x141] sm:$0xff]
        %v5069 = vld [vmem:[%s4184 + $0x151] sm:$0xff]
        %v5070 = vld [vmem:[%s4184 + $0x159] sm:$0xff]
        %v5071 = vld [vmem:[%s4184 + $0x169] sm:$0xff]
        %v5072 = vld [vmem:[%s4184 + $0x171] sm:$0xff]
        %v5073 = vpack.c.bf16 %v5042, %v5041
        %v5074 = vpack.c.bf16 %v5044, %v5043
        %v5075 = vpack.c.bf16 %v5046, %v5045
        %v5076 = vpack.c.bf16 %v5048, %v5047
        %v5077 = vpack.c.bf16 %v5050, %v5049
        %v5078 = vpack.c.bf16 %v5052, %v5051
        %v5079 = vpack.c.bf16 %v5054, %v5053
        %v5080 = vpack.c.bf16 %v5056, %v5055
        %v5081 = vpack.c.bf16 %v5058, %v5057
        %v5082 = vpack.c.bf16 %v5060, %v5059
        %v5083 = vpack.c.bf16 %v5062, %v5061
        %v5084 = vpack.c.bf16 %v5064, %v5063
        %v5085 = vpack.c.bf16 %v5066, %v5065
        %v5086 = vpack.c.bf16 %v5068, %v5067
        %v5087 = vpack.c.bf16 %v5070, %v5069
        %v5088 = vpack.c.bf16 %v5072, %v5071
        %s5089 = scalar_lea.vmem %s7, 16
        %v5090 = vld [vmem:[%s5089] sm:$0xf]
        %v5092 = vsel %vm4128, %v5073, 0
        %v5095 = vsel %vm4128, %v5074, 0
        %v5098 = vsel %vm4128, %v5075, 0
        %v5101 = vsel %vm4128, %v5076, 0
        %v5104 = vsel %vm4128, %v5077, 0
        %v5107 = vsel %vm4128, %v5078, 0
        %v5110 = vsel %vm4128, %v5079, 0
        %v5113 = vsel %vm4128, %v5080, 0
        %v5116 = vsel %vm4128, %v5081, 0
        %v5119 = vsel %vm4128, %v5082, 0
        %v5122 = vsel %vm4128, %v5083, 0
        %v5125 = vsel %vm4128, %v5084, 0
        %v5128 = vsel %vm4128, %v5085, 0
        %v5131 = vsel %vm4128, %v5086, 0
        %v5134 = vsel %vm4128, %v5087, 0
        %v5137 = vsel %vm4128, %v5088, 0
        %v5140 = vsel %vm4364, %v5090, 0
        %5142 = vmatpush.bf16.msra.mxu0 0
        %5143 = vmatpush.bf16.msra.mxu0 0
        %5144 = vmatpush.bf16.msra.mxu0 0
        %5145 = vmatpush.bf16.msra.mxu0 0
        %5146 = vmatpush.bf16.msra.mxu0 0
        %5147 = vmatpush.bf16.msra.mxu0 0
        %5148 = vmatpush.bf16.msra.mxu0 0
        %5149 = vmatpush.bf16.msra.mxu0 %v5140
        %5150 = vmatmul.bf16.gmra.mxu0 %v5092
        %v5151 = vpop.f32.mrf.mxu0
        %v5152 = vadd.f32 0.0, %v5151
        %v5153 = vpop.f32.mrf.mxu0
        %v5154 = vadd.f32 0.0, %v5153
        %5155 = vmatmul.bf16.gmra.mxu0 %v5095
        %v5156 = vpop.f32.mrf.mxu0
        %v5157 = vadd.f32 0.0, %v5156
        %v5158 = vpop.f32.mrf.mxu0
        %v5159 = vadd.f32 0.0, %v5158
        %5160 = vmatmul.bf16.gmra.mxu0 %v5098
        %v5161 = vpop.f32.mrf.mxu0
        %v5162 = vadd.f32 0.0, %v5161
        %v5163 = vpop.f32.mrf.mxu0
        %v5164 = vadd.f32 0.0, %v5163
        %5165 = vmatmul.bf16.gmra.mxu0 %v5101
        %v5166 = vpop.f32.mrf.mxu0
        %v5167 = vadd.f32 0.0, %v5166
        %v5168 = vpop.f32.mrf.mxu0
        %v5169 = vadd.f32 0.0, %v5168
        %5170 = vmatmul.bf16.gmra.mxu0 %v5104
        %v5171 = vpop.f32.mrf.mxu0
        %v5172 = vadd.f32 0.0, %v5171
        %v5173 = vpop.f32.mrf.mxu0
        %v5174 = vadd.f32 0.0, %v5173
        %5175 = vmatmul.bf16.gmra.mxu0 %v5107
        %v5176 = vpop.f32.mrf.mxu0
        %v5177 = vadd.f32 0.0, %v5176
        %v5178 = vpop.f32.mrf.mxu0
        %v5179 = vadd.f32 0.0, %v5178
        %5180 = vmatmul.bf16.gmra.mxu0 %v5110
        %v5181 = vpop.f32.mrf.mxu0
        %v5182 = vadd.f32 0.0, %v5181
        %v5183 = vpop.f32.mrf.mxu0
        %v5184 = vadd.f32 0.0, %v5183
        %5185 = vmatmul.bf16.gmra.mxu0 %v5113
        %v5186 = vpop.f32.mrf.mxu0
        %v5187 = vadd.f32 0.0, %v5186
        %v5188 = vpop.f32.mrf.mxu0
        %v5189 = vadd.f32 0.0, %v5188
        %5190 = vmatmul.bf16.gmra.mxu0 %v5116
        %v5191 = vpop.f32.mrf.mxu0
        %v5192 = vadd.f32 0.0, %v5191
        %v5193 = vpop.f32.mrf.mxu0
        %v5194 = vadd.f32 0.0, %v5193
        %5195 = vmatmul.bf16.gmra.mxu0 %v5119
        %v5196 = vpop.f32.mrf.mxu0
        %v5197 = vadd.f32 0.0, %v5196
        %v5198 = vpop.f32.mrf.mxu0
        %v5199 = vadd.f32 0.0, %v5198
        %5200 = vmatmul.bf16.gmra.mxu0 %v5122
        %v5201 = vpop.f32.mrf.mxu0
        %v5202 = vadd.f32 0.0, %v5201
        %v5203 = vpop.f32.mrf.mxu0
        %v5204 = vadd.f32 0.0, %v5203
        %5205 = vmatmul.bf16.gmra.mxu0 %v5125
        %v5206 = vpop.f32.mrf.mxu0
        %v5207 = vadd.f32 0.0, %v5206
        %v5208 = vpop.f32.mrf.mxu0
        %v5209 = vadd.f32 0.0, %v5208
        %5210 = vmatmul.bf16.gmra.mxu0 %v5128
        %v5211 = vpop.f32.mrf.mxu0
        %v5212 = vadd.f32 0.0, %v5211
        %v5213 = vpop.f32.mrf.mxu0
        %v5214 = vadd.f32 0.0, %v5213
        %5215 = vmatmul.bf16.gmra.mxu0 %v5131
        %v5216 = vpop.f32.mrf.mxu0
        %v5217 = vadd.f32 0.0, %v5216
        %v5218 = vpop.f32.mrf.mxu0
        %v5219 = vadd.f32 0.0, %v5218
        %5220 = vmatmul.bf16.gmra.mxu0 %v5134
        %v5221 = vpop.f32.mrf.mxu0
        %v5222 = vadd.f32 0.0, %v5221
        %v5223 = vpop.f32.mrf.mxu0
        %v5224 = vadd.f32 0.0, %v5223
        %5225 = vmatmul.bf16.gmra.mxu0 %v5137
        %v5226 = vpop.f32.mrf.mxu0
        %v5227 = vadd.f32 0.0, %v5226
        %v5228 = vpop.f32.mrf.mxu0
        %v5229 = vadd.f32 0.0, %v5228
        %5230 = vdwg.mxu0
        %v5231 = vadd.f32 %v5009, %v5152
        %v5232 = vadd.f32 %v5010, %v5154
        %v5233 = vadd.f32 %v5011, %v5157
        %v5234 = vadd.f32 %v5012, %v5159
        %v5235 = vadd.f32 %v5013, %v5162
        %v5236 = vadd.f32 %v5014, %v5164
        %v5237 = vadd.f32 %v5015, %v5167
        %v5238 = vadd.f32 %v5016, %v5169
        %v5239 = vadd.f32 %v5017, %v5172
        %v5240 = vadd.f32 %v5018, %v5174
        %v5241 = vadd.f32 %v5019, %v5177
        %v5242 = vadd.f32 %v5020, %v5179
        %v5243 = vadd.f32 %v5021, %v5182
        %v5244 = vadd.f32 %v5022, %v5184
        %v5245 = vadd.f32 %v5023, %v5187
        %v5246 = vadd.f32 %v5024, %v5189
        %v5247 = vadd.f32 %v5025, %v5192
        %v5248 = vadd.f32 %v5026, %v5194
        %v5249 = vadd.f32 %v5027, %v5197
        %v5250 = vadd.f32 %v5028, %v5199
        %v5251 = vadd.f32 %v5029, %v5202
        %v5252 = vadd.f32 %v5030, %v5204
        %v5253 = vadd.f32 %v5031, %v5207
        %v5254 = vadd.f32 %v5032, %v5209
        %v5255 = vadd.f32 %v5033, %v5212
        %v5256 = vadd.f32 %v5034, %v5214
        %v5257 = vadd.f32 %v5035, %v5217
        %v5258 = vadd.f32 %v5036, %v5219
        %v5259 = vadd.f32 %v5037, %v5222
        %v5260 = vadd.f32 %v5038, %v5224
        %v5261 = vadd.f32 %v5039, %v5227
        %v5262 = vadd.f32 %v5040, %v5229
        %v5263 = vld [vmem:[%s4184 + $0x2] sm:$0xff]
        %v5264 = vld [vmem:[%s4184 + $0xa] sm:$0xff]
        %v5265 = vld [vmem:[%s4184 + $0x1a] sm:$0xff]
        %v5266 = vld [vmem:[%s4184 + $0x22] sm:$0xff]
        %v5267 = vld [vmem:[%s4184 + $0x32] sm:$0xff]
        %v5268 = vld [vmem:[%s4184 + $0x3a] sm:$0xff]
        %v5269 = vld [vmem:[%s4184 + $0x4a] sm:$0xff]
        %v5270 = vld [vmem:[%s4184 + $0x52] sm:$0xff]
        %v5271 = vld [vmem:[%s4184 + $0x62] sm:$0xff]
        %v5272 = vld [vmem:[%s4184 + $0x6a] sm:$0xff]
        %v5273 = vld [vmem:[%s4184 + $0x7a] sm:$0xff]
        %v5274 = vld [vmem:[%s4184 + $0x82] sm:$0xff]
        %v5275 = vld [vmem:[%s4184 + $0x92] sm:$0xff]
        %v5276 = vld [vmem:[%s4184 + $0x9a] sm:$0xff]
        %v5277 = vld [vmem:[%s4184 + $0xaa] sm:$0xff]
        %v5278 = vld [vmem:[%s4184 + $0xb2] sm:$0xff]
        %v5279 = vld [vmem:[%s4184 + $0xc2] sm:$0xff]
        %v5280 = vld [vmem:[%s4184 + $0xca] sm:$0xff]
        %v5281 = vld [vmem:[%s4184 + $0xda] sm:$0xff]
        %v5282 = vld [vmem:[%s4184 + $0xe2] sm:$0xff]
        %v5283 = vld [vmem:[%s4184 + $0xf2] sm:$0xff]
        %v5284 = vld [vmem:[%s4184 + $0xfa] sm:$0xff]
        %v5285 = vld [vmem:[%s4184 + $0x10a] sm:$0xff]
        %v5286 = vld [vmem:[%s4184 + $0x112] sm:$0xff]
        %v5287 = vld [vmem:[%s4184 + $0x122] sm:$0xff]
        %v5288 = vld [vmem:[%s4184 + $0x12a] sm:$0xff]
        %v5289 = vld [vmem:[%s4184 + $0x13a] sm:$0xff]
        %v5290 = vld [vmem:[%s4184 + $0x142] sm:$0xff]
        %v5291 = vld [vmem:[%s4184 + $0x152] sm:$0xff]
        %v5292 = vld [vmem:[%s4184 + $0x15a] sm:$0xff]
        %v5293 = vld [vmem:[%s4184 + $0x16a] sm:$0xff]
        %v5294 = vld [vmem:[%s4184 + $0x172] sm:$0xff]
        %v5295 = vpack.c.bf16 %v5264, %v5263
        %v5296 = vpack.c.bf16 %v5266, %v5265
        %v5297 = vpack.c.bf16 %v5268, %v5267
        %v5298 = vpack.c.bf16 %v5270, %v5269
        %v5299 = vpack.c.bf16 %v5272, %v5271
        %v5300 = vpack.c.bf16 %v5274, %v5273
        %v5301 = vpack.c.bf16 %v5276, %v5275
        %v5302 = vpack.c.bf16 %v5278, %v5277
        %v5303 = vpack.c.bf16 %v5280, %v5279
        %v5304 = vpack.c.bf16 %v5282, %v5281
        %v5305 = vpack.c.bf16 %v5284, %v5283
        %v5306 = vpack.c.bf16 %v5286, %v5285
        %v5307 = vpack.c.bf16 %v5288, %v5287
        %v5308 = vpack.c.bf16 %v5290, %v5289
        %v5309 = vpack.c.bf16 %v5292, %v5291
        %v5310 = vpack.c.bf16 %v5294, %v5293
        %s5311 = scalar_lea.vmem %s7, 20
        %v5312 = vld [vmem:[%s5311] sm:$0xf]
        %v5314 = vsel %vm4128, %v5295, 0
        %v5317 = vsel %vm4128, %v5296, 0
        %v5320 = vsel %vm4128, %v5297, 0
        %v5323 = vsel %vm4128, %v5298, 0
        %v5326 = vsel %vm4128, %v5299, 0
        %v5329 = vsel %vm4128, %v5300, 0
        %v5332 = vsel %vm4128, %v5301, 0
        %v5335 = vsel %vm4128, %v5302, 0
        %v5338 = vsel %vm4128, %v5303, 0
        %v5341 = vsel %vm4128, %v5304, 0
        %v5344 = vsel %vm4128, %v5305, 0
        %v5347 = vsel %vm4128, %v5306, 0
        %v5350 = vsel %vm4128, %v5307, 0
        %v5353 = vsel %vm4128, %v5308, 0
        %v5356 = vsel %vm4128, %v5309, 0
        %v5359 = vsel %vm4128, %v5310, 0
        %v5362 = vsel %vm4364, %v5312, 0
        %5364 = vmatpush.bf16.msra.mxu0 0
        %5365 = vmatpush.bf16.msra.mxu0 0
        %5366 = vmatpush.bf16.msra.mxu0 0
        %5367 = vmatpush.bf16.msra.mxu0 0
        %5368 = vmatpush.bf16.msra.mxu0 0
        %5369 = vmatpush.bf16.msra.mxu0 0
        %5370 = vmatpush.bf16.msra.mxu0 0
        %5371 = vmatpush.bf16.msra.mxu0 %v5362
        %5372 = vmatmul.bf16.gmra.mxu0 %v5314
        %v5373 = vpop.f32.mrf.mxu0
        %v5374 = vadd.f32 0.0, %v5373
        %v5375 = vpop.f32.mrf.mxu0
        %v5376 = vadd.f32 0.0, %v5375
        %5377 = vmatmul.bf16.gmra.mxu0 %v5317
        %v5378 = vpop.f32.mrf.mxu0
        %v5379 = vadd.f32 0.0, %v5378
        %v5380 = vpop.f32.mrf.mxu0
        %v5381 = vadd.f32 0.0, %v5380
        %5382 = vmatmul.bf16.gmra.mxu0 %v5320
        %v5383 = vpop.f32.mrf.mxu0
        %v5384 = vadd.f32 0.0, %v5383
        %v5385 = vpop.f32.mrf.mxu0
        %v5386 = vadd.f32 0.0, %v5385
        %5387 = vmatmul.bf16.gmra.mxu0 %v5323
        %v5388 = vpop.f32.mrf.mxu0
        %v5389 = vadd.f32 0.0, %v5388
        %v5390 = vpop.f32.mrf.mxu0
        %v5391 = vadd.f32 0.0, %v5390
        %5392 = vmatmul.bf16.gmra.mxu0 %v5326
        %v5393 = vpop.f32.mrf.mxu0
        %v5394 = vadd.f32 0.0, %v5393
        %v5395 = vpop.f32.mrf.mxu0
        %v5396 = vadd.f32 0.0, %v5395
        %5397 = vmatmul.bf16.gmra.mxu0 %v5329
        %v5398 = vpop.f32.mrf.mxu0
        %v5399 = vadd.f32 0.0, %v5398
        %v5400 = vpop.f32.mrf.mxu0
        %v5401 = vadd.f32 0.0, %v5400
        %5402 = vmatmul.bf16.gmra.mxu0 %v5332
        %v5403 = vpop.f32.mrf.mxu0
        %v5404 = vadd.f32 0.0, %v5403
        %v5405 = vpop.f32.mrf.mxu0
        %v5406 = vadd.f32 0.0, %v5405
        %5407 = vmatmul.bf16.gmra.mxu0 %v5335
        %v5408 = vpop.f32.mrf.mxu0
        %v5409 = vadd.f32 0.0, %v5408
        %v5410 = vpop.f32.mrf.mxu0
        %v5411 = vadd.f32 0.0, %v5410
        %5412 = vmatmul.bf16.gmra.mxu0 %v5338
        %v5413 = vpop.f32.mrf.mxu0
        %v5414 = vadd.f32 0.0, %v5413
        %v5415 = vpop.f32.mrf.mxu0
        %v5416 = vadd.f32 0.0, %v5415
        %5417 = vmatmul.bf16.gmra.mxu0 %v5341
        %v5418 = vpop.f32.mrf.mxu0
        %v5419 = vadd.f32 0.0, %v5418
        %v5420 = vpop.f32.mrf.mxu0
        %v5421 = vadd.f32 0.0, %v5420
        %5422 = vmatmul.bf16.gmra.mxu0 %v5344
        %v5423 = vpop.f32.mrf.mxu0
        %v5424 = vadd.f32 0.0, %v5423
        %v5425 = vpop.f32.mrf.mxu0
        %v5426 = vadd.f32 0.0, %v5425
        %5427 = vmatmul.bf16.gmra.mxu0 %v5347
        %v5428 = vpop.f32.mrf.mxu0
        %v5429 = vadd.f32 0.0, %v5428
        %v5430 = vpop.f32.mrf.mxu0
        %v5431 = vadd.f32 0.0, %v5430
        %5432 = vmatmul.bf16.gmra.mxu0 %v5350
        %v5433 = vpop.f32.mrf.mxu0
        %v5434 = vadd.f32 0.0, %v5433
        %v5435 = vpop.f32.mrf.mxu0
        %v5436 = vadd.f32 0.0, %v5435
        %5437 = vmatmul.bf16.gmra.mxu0 %v5353
        %v5438 = vpop.f32.mrf.mxu0
        %v5439 = vadd.f32 0.0, %v5438
        %v5440 = vpop.f32.mrf.mxu0
        %v5441 = vadd.f32 0.0, %v5440
        %5442 = vmatmul.bf16.gmra.mxu0 %v5356
        %v5443 = vpop.f32.mrf.mxu0
        %v5444 = vadd.f32 0.0, %v5443
        %v5445 = vpop.f32.mrf.mxu0
        %v5446 = vadd.f32 0.0, %v5445
        %5447 = vmatmul.bf16.gmra.mxu0 %v5359
        %v5448 = vpop.f32.mrf.mxu0
        %v5449 = vadd.f32 0.0, %v5448
        %v5450 = vpop.f32.mrf.mxu0
        %v5451 = vadd.f32 0.0, %v5450
        %5452 = vdwg.mxu0
        %v5453 = vadd.f32 %v5231, %v5374
        %v5454 = vadd.f32 %v5232, %v5376
        %v5455 = vadd.f32 %v5233, %v5379
        %v5456 = vadd.f32 %v5234, %v5381
        %v5457 = vadd.f32 %v5235, %v5384
        %v5458 = vadd.f32 %v5236, %v5386
        %v5459 = vadd.f32 %v5237, %v5389
        %v5460 = vadd.f32 %v5238, %v5391
        %v5461 = vadd.f32 %v5239, %v5394
        %v5462 = vadd.f32 %v5240, %v5396
        %v5463 = vadd.f32 %v5241, %v5399
        %v5464 = vadd.f32 %v5242, %v5401
        %v5465 = vadd.f32 %v5243, %v5404
        %v5466 = vadd.f32 %v5244, %v5406
        %v5467 = vadd.f32 %v5245, %v5409
        %v5468 = vadd.f32 %v5246, %v5411
        %v5469 = vadd.f32 %v5247, %v5414
        %v5470 = vadd.f32 %v5248, %v5416
        %v5471 = vadd.f32 %v5249, %v5419
        %v5472 = vadd.f32 %v5250, %v5421
        %v5473 = vadd.f32 %v5251, %v5424
        %v5474 = vadd.f32 %v5252, %v5426
        %v5475 = vadd.f32 %v5253, %v5429
        %v5476 = vadd.f32 %v5254, %v5431
        %v5477 = vadd.f32 %v5255, %v5434
        %v5478 = vadd.f32 %v5256, %v5436
        %v5479 = vadd.f32 %v5257, %v5439
        %v5480 = vadd.f32 %v5258, %v5441
        %v5481 = vadd.f32 %v5259, %v5444
        %v5482 = vadd.f32 %v5260, %v5446
        %v5483 = vadd.f32 %v5261, %v5449
        %v5484 = vadd.f32 %v5262, %v5451
        %s5485 = scalar_lea.vmem [#allocation4], 48
        %v5486 = vld [vmem:[%s5485] sm:$0xff]
        %v5487 = vld [vmem:[%s5485 + $0x8] sm:$0xff]
        %v5488 = vld [vmem:[%s5485 + $0x18] sm:$0xff]
        %v5489 = vld [vmem:[%s5485 + $0x20] sm:$0xff]
        %v5490 = vld [vmem:[%s5485 + $0x30] sm:$0xff]
        %v5491 = vld [vmem:[%s5485 + $0x38] sm:$0xff]
        %v5492 = vld [vmem:[%s5485 + $0x48] sm:$0xff]
        %v5493 = vld [vmem:[%s5485 + $0x50] sm:$0xff]
        %v5494 = vld [vmem:[%s5485 + $0x60] sm:$0xff]
        %v5495 = vld [vmem:[%s5485 + $0x68] sm:$0xff]
        %v5496 = vld [vmem:[%s5485 + $0x78] sm:$0xff]
        %v5497 = vld [vmem:[%s5485 + $0x80] sm:$0xff]
        %v5498 = vld [vmem:[%s5485 + $0x90] sm:$0xff]
        %v5499 = vld [vmem:[%s5485 + $0x98] sm:$0xff]
        %v5500 = vld [vmem:[%s5485 + $0xa8] sm:$0xff]
        %v5501 = vld [vmem:[%s5485 + $0xb0] sm:$0xff]
        %v5502 = vld [vmem:[%s5485 + $0xc0] sm:$0xff]
        %v5503 = vld [vmem:[%s5485 + $0xc8] sm:$0xff]
        %v5504 = vld [vmem:[%s5485 + $0xd8] sm:$0xff]
        %v5505 = vld [vmem:[%s5485 + $0xe0] sm:$0xff]
        %v5506 = vld [vmem:[%s5485 + $0xf0] sm:$0xff]
        %v5507 = vld [vmem:[%s5485 + $0xf8] sm:$0xff]
        %v5508 = vld [vmem:[%s5485 + $0x108] sm:$0xff]
        %v5509 = vld [vmem:[%s5485 + $0x110] sm:$0xff]
        %v5510 = vld [vmem:[%s5485 + $0x120] sm:$0xff]
        %v5511 = vld [vmem:[%s5485 + $0x128] sm:$0xff]
        %v5512 = vld [vmem:[%s5485 + $0x138] sm:$0xff]
        %v5513 = vld [vmem:[%s5485 + $0x140] sm:$0xff]
        %v5514 = vld [vmem:[%s5485 + $0x150] sm:$0xff]
        %v5515 = vld [vmem:[%s5485 + $0x158] sm:$0xff]
        %v5516 = vld [vmem:[%s5485 + $0x168] sm:$0xff]
        %v5517 = vld [vmem:[%s5485 + $0x170] sm:$0xff]
        %v5518 = vpack.c.bf16 %v5487, %v5486
        %v5519 = vpack.c.bf16 %v5489, %v5488
        %v5520 = vpack.c.bf16 %v5491, %v5490
        %v5521 = vpack.c.bf16 %v5493, %v5492
        %v5522 = vpack.c.bf16 %v5495, %v5494
        %v5523 = vpack.c.bf16 %v5497, %v5496
        %v5524 = vpack.c.bf16 %v5499, %v5498
        %v5525 = vpack.c.bf16 %v5501, %v5500
        %v5526 = vpack.c.bf16 %v5503, %v5502
        %v5527 = vpack.c.bf16 %v5505, %v5504
        %v5528 = vpack.c.bf16 %v5507, %v5506
        %v5529 = vpack.c.bf16 %v5509, %v5508
        %v5530 = vpack.c.bf16 %v5511, %v5510
        %v5531 = vpack.c.bf16 %v5513, %v5512
        %v5532 = vpack.c.bf16 %v5515, %v5514
        %v5533 = vpack.c.bf16 %v5517, %v5516
        %s5534 = scalar_lea.vmem %s7, 24
        %v5535 = vld [vmem:[%s5534] sm:$0xf]
        %v5537 = vsel %vm4128, %v5518, 0
        %v5540 = vsel %vm4128, %v5519, 0
        %v5543 = vsel %vm4128, %v5520, 0
        %v5546 = vsel %vm4128, %v5521, 0
        %v5549 = vsel %vm4128, %v5522, 0
        %v5552 = vsel %vm4128, %v5523, 0
        %v5555 = vsel %vm4128, %v5524, 0
        %v5558 = vsel %vm4128, %v5525, 0
        %v5561 = vsel %vm4128, %v5526, 0
        %v5564 = vsel %vm4128, %v5527, 0
        %v5567 = vsel %vm4128, %v5528, 0
        %v5570 = vsel %vm4128, %v5529, 0
        %v5573 = vsel %vm4128, %v5530, 0
        %v5576 = vsel %vm4128, %v5531, 0
        %v5579 = vsel %vm4128, %v5532, 0
        %v5582 = vsel %vm4128, %v5533, 0
        %v5585 = vsel %vm4364, %v5535, 0
        %5587 = vmatpush.bf16.msra.mxu0 0
        %5588 = vmatpush.bf16.msra.mxu0 0
        %5589 = vmatpush.bf16.msra.mxu0 0
        %5590 = vmatpush.bf16.msra.mxu0 0
        %5591 = vmatpush.bf16.msra.mxu0 0
        %5592 = vmatpush.bf16.msra.mxu0 0
        %5593 = vmatpush.bf16.msra.mxu0 0
        %5594 = vmatpush.bf16.msra.mxu0 %v5585
        %5595 = vmatmul.bf16.gmra.mxu0 %v5537
        %v5596 = vpop.f32.mrf.mxu0
        %v5597 = vadd.f32 0.0, %v5596
        %v5598 = vpop.f32.mrf.mxu0
        %v5599 = vadd.f32 0.0, %v5598
        %5600 = vmatmul.bf16.gmra.mxu0 %v5540
        %v5601 = vpop.f32.mrf.mxu0
        %v5602 = vadd.f32 0.0, %v5601
        %v5603 = vpop.f32.mrf.mxu0
        %v5604 = vadd.f32 0.0, %v5603
        %5605 = vmatmul.bf16.gmra.mxu0 %v5543
        %v5606 = vpop.f32.mrf.mxu0
        %v5607 = vadd.f32 0.0, %v5606
        %v5608 = vpop.f32.mrf.mxu0
        %v5609 = vadd.f32 0.0, %v5608
        %5610 = vmatmul.bf16.gmra.mxu0 %v5546
        %v5611 = vpop.f32.mrf.mxu0
        %v5612 = vadd.f32 0.0, %v5611
        %v5613 = vpop.f32.mrf.mxu0
        %v5614 = vadd.f32 0.0, %v5613
        %5615 = vmatmul.bf16.gmra.mxu0 %v5549
        %v5616 = vpop.f32.mrf.mxu0
        %v5617 = vadd.f32 0.0, %v5616
        %v5618 = vpop.f32.mrf.mxu0
        %v5619 = vadd.f32 0.0, %v5618
        %5620 = vmatmul.bf16.gmra.mxu0 %v5552
        %v5621 = vpop.f32.mrf.mxu0
        %v5622 = vadd.f32 0.0, %v5621
        %v5623 = vpop.f32.mrf.mxu0
        %v5624 = vadd.f32 0.0, %v5623
        %5625 = vmatmul.bf16.gmra.mxu0 %v5555
        %v5626 = vpop.f32.mrf.mxu0
        %v5627 = vadd.f32 0.0, %v5626
        %v5628 = vpop.f32.mrf.mxu0
        %v5629 = vadd.f32 0.0, %v5628
        %5630 = vmatmul.bf16.gmra.mxu0 %v5558
        %v5631 = vpop.f32.mrf.mxu0
        %v5632 = vadd.f32 0.0, %v5631
        %v5633 = vpop.f32.mrf.mxu0
        %v5634 = vadd.f32 0.0, %v5633
        %5635 = vmatmul.bf16.gmra.mxu0 %v5561
        %v5636 = vpop.f32.mrf.mxu0
        %v5637 = vadd.f32 0.0, %v5636
        %v5638 = vpop.f32.mrf.mxu0
        %v5639 = vadd.f32 0.0, %v5638
        %5640 = vmatmul.bf16.gmra.mxu0 %v5564
        %v5641 = vpop.f32.mrf.mxu0
        %v5642 = vadd.f32 0.0, %v5641
        %v5643 = vpop.f32.mrf.mxu0
        %v5644 = vadd.f32 0.0, %v5643
        %5645 = vmatmul.bf16.gmra.mxu0 %v5567
        %v5646 = vpop.f32.mrf.mxu0
        %v5647 = vadd.f32 0.0, %v5646
        %v5648 = vpop.f32.mrf.mxu0
        %v5649 = vadd.f32 0.0, %v5648
        %5650 = vmatmul.bf16.gmra.mxu0 %v5570
        %v5651 = vpop.f32.mrf.mxu0
        %v5652 = vadd.f32 0.0, %v5651
        %v5653 = vpop.f32.mrf.mxu0
        %v5654 = vadd.f32 0.0, %v5653
        %5655 = vmatmul.bf16.gmra.mxu0 %v5573
        %v5656 = vpop.f32.mrf.mxu0
        %v5657 = vadd.f32 0.0, %v5656
        %v5658 = vpop.f32.mrf.mxu0
        %v5659 = vadd.f32 0.0, %v5658
        %5660 = vmatmul.bf16.gmra.mxu0 %v5576
        %v5661 = vpop.f32.mrf.mxu0
        %v5662 = vadd.f32 0.0, %v5661
        %v5663 = vpop.f32.mrf.mxu0
        %v5664 = vadd.f32 0.0, %v5663
        %5665 = vmatmul.bf16.gmra.mxu0 %v5579
        %v5666 = vpop.f32.mrf.mxu0
        %v5667 = vadd.f32 0.0, %v5666
        %v5668 = vpop.f32.mrf.mxu0
        %v5669 = vadd.f32 0.0, %v5668
        %5670 = vmatmul.bf16.gmra.mxu0 %v5582
        %v5671 = vpop.f32.mrf.mxu0
        %v5672 = vadd.f32 0.0, %v5671
        %v5673 = vpop.f32.mrf.mxu0
        %v5674 = vadd.f32 0.0, %v5673
        %5675 = vdwg.mxu0
        %v5676 = vadd.f32 %v5453, %v5597
        %v5677 = vadd.f32 %v5454, %v5599
        %v5678 = vadd.f32 %v5455, %v5602
        %v5679 = vadd.f32 %v5456, %v5604
        %v5680 = vadd.f32 %v5457, %v5607
        %v5681 = vadd.f32 %v5458, %v5609
        %v5682 = vadd.f32 %v5459, %v5612
        %v5683 = vadd.f32 %v5460, %v5614
        %v5684 = vadd.f32 %v5461, %v5617
        %v5685 = vadd.f32 %v5462, %v5619
        %v5686 = vadd.f32 %v5463, %v5622
        %v5687 = vadd.f32 %v5464, %v5624
        %v5688 = vadd.f32 %v5465, %v5627
        %v5689 = vadd.f32 %v5466, %v5629
        %v5690 = vadd.f32 %v5467, %v5632
        %v5691 = vadd.f32 %v5468, %v5634
        %v5692 = vadd.f32 %v5469, %v5637
        %v5693 = vadd.f32 %v5470, %v5639
        %v5694 = vadd.f32 %v5471, %v5642
        %v5695 = vadd.f32 %v5472, %v5644
        %v5696 = vadd.f32 %v5473, %v5647
        %v5697 = vadd.f32 %v5474, %v5649
        %v5698 = vadd.f32 %v5475, %v5652
        %v5699 = vadd.f32 %v5476, %v5654
        %v5700 = vadd.f32 %v5477, %v5657
        %v5701 = vadd.f32 %v5478, %v5659
        %v5702 = vadd.f32 %v5479, %v5662
        %v5703 = vadd.f32 %v5480, %v5664
        %v5704 = vadd.f32 %v5481, %v5667
        %v5705 = vadd.f32 %v5482, %v5669
        %v5706 = vadd.f32 %v5483, %v5672
        %v5707 = vadd.f32 %v5484, %v5674
        %v5708 = vld [vmem:[%s5485 + $0x1] sm:$0xff]
        %v5709 = vld [vmem:[%s5485 + $0x9] sm:$0xff]
        %v5710 = vld [vmem:[%s5485 + $0x19] sm:$0xff]
        %v5711 = vld [vmem:[%s5485 + $0x21] sm:$0xff]
        %v5712 = vld [vmem:[%s5485 + $0x31] sm:$0xff]
        %v5713 = vld [vmem:[%s5485 + $0x39] sm:$0xff]
        %v5714 = vld [vmem:[%s5485 + $0x49] sm:$0xff]
        %v5715 = vld [vmem:[%s5485 + $0x51] sm:$0xff]
        %v5716 = vld [vmem:[%s5485 + $0x61] sm:$0xff]
        %v5717 = vld [vmem:[%s5485 + $0x69] sm:$0xff]
        %v5718 = vld [vmem:[%s5485 + $0x79] sm:$0xff]
        %v5719 = vld [vmem:[%s5485 + $0x81] sm:$0xff]
        %v5720 = vld [vmem:[%s5485 + $0x91] sm:$0xff]
        %v5721 = vld [vmem:[%s5485 + $0x99] sm:$0xff]
        %v5722 = vld [vmem:[%s5485 + $0xa9] sm:$0xff]
        %v5723 = vld [vmem:[%s5485 + $0xb1] sm:$0xff]
        %v5724 = vld [vmem:[%s5485 + $0xc1] sm:$0xff]
        %v5725 = vld [vmem:[%s5485 + $0xc9] sm:$0xff]
        %v5726 = vld [vmem:[%s5485 + $0xd9] sm:$0xff]
        %v5727 = vld [vmem:[%s5485 + $0xe1] sm:$0xff]
        %v5728 = vld [vmem:[%s5485 + $0xf1] sm:$0xff]
        %v5729 = vld [vmem:[%s5485 + $0xf9] sm:$0xff]
        %v5730 = vld [vmem:[%s5485 + $0x109] sm:$0xff]
        %v5731 = vld [vmem:[%s5485 + $0x111] sm:$0xff]
        %v5732 = vld [vmem:[%s5485 + $0x121] sm:$0xff]
        %v5733 = vld [vmem:[%s5485 + $0x129] sm:$0xff]
        %v5734 = vld [vmem:[%s5485 + $0x139] sm:$0xff]
        %v5735 = vld [vmem:[%s5485 + $0x141] sm:$0xff]
        %v5736 = vld [vmem:[%s5485 + $0x151] sm:$0xff]
        %v5737 = vld [vmem:[%s5485 + $0x159] sm:$0xff]
        %v5738 = vld [vmem:[%s5485 + $0x169] sm:$0xff]
        %v5739 = vld [vmem:[%s5485 + $0x171] sm:$0xff]
        %v5740 = vpack.c.bf16 %v5709, %v5708
        %v5741 = vpack.c.bf16 %v5711, %v5710
        %v5742 = vpack.c.bf16 %v5713, %v5712
        %v5743 = vpack.c.bf16 %v5715, %v5714
        %v5744 = vpack.c.bf16 %v5717, %v5716
        %v5745 = vpack.c.bf16 %v5719, %v5718
        %v5746 = vpack.c.bf16 %v5721, %v5720
        %v5747 = vpack.c.bf16 %v5723, %v5722
        %v5748 = vpack.c.bf16 %v5725, %v5724
        %v5749 = vpack.c.bf16 %v5727, %v5726
        %v5750 = vpack.c.bf16 %v5729, %v5728
        %v5751 = vpack.c.bf16 %v5731, %v5730
        %v5752 = vpack.c.bf16 %v5733, %v5732
        %v5753 = vpack.c.bf16 %v5735, %v5734
        %v5754 = vpack.c.bf16 %v5737, %v5736
        %v5755 = vpack.c.bf16 %v5739, %v5738
        %s5756 = scalar_lea.vmem %s7, 28
        %v5757 = vld [vmem:[%s5756] sm:$0xf]
        %v5759 = vsel %vm4128, %v5740, 0
        %v5762 = vsel %vm4128, %v5741, 0
        %v5765 = vsel %vm4128, %v5742, 0
        %v5768 = vsel %vm4128, %v5743, 0
        %v5771 = vsel %vm4128, %v5744, 0
        %v5774 = vsel %vm4128, %v5745, 0
        %v5777 = vsel %vm4128, %v5746, 0
        %v5780 = vsel %vm4128, %v5747, 0
        %v5783 = vsel %vm4128, %v5748, 0
        %v5786 = vsel %vm4128, %v5749, 0
        %v5789 = vsel %vm4128, %v5750, 0
        %v5792 = vsel %vm4128, %v5751, 0
        %v5795 = vsel %vm4128, %v5752, 0
        %v5798 = vsel %vm4128, %v5753, 0
        %v5801 = vsel %vm4128, %v5754, 0
        %v5804 = vsel %vm4128, %v5755, 0
        %v5807 = vsel %vm4364, %v5757, 0
        %5809 = vmatpush.bf16.msra.mxu0 0
        %5810 = vmatpush.bf16.msra.mxu0 0
        %5811 = vmatpush.bf16.msra.mxu0 0
        %5812 = vmatpush.bf16.msra.mxu0 0
        %5813 = vmatpush.bf16.msra.mxu0 0
        %5814 = vmatpush.bf16.msra.mxu0 0
        %5815 = vmatpush.bf16.msra.mxu0 0
        %5816 = vmatpush.bf16.msra.mxu0 %v5807
        %5817 = vmatmul.bf16.gmra.mxu0 %v5759
        %v5818 = vpop.f32.mrf.mxu0
        %v5819 = vadd.f32 0.0, %v5818
        %v5820 = vpop.f32.mrf.mxu0
        %v5821 = vadd.f32 0.0, %v5820
        %5822 = vmatmul.bf16.gmra.mxu0 %v5762
        %v5823 = vpop.f32.mrf.mxu0
        %v5824 = vadd.f32 0.0, %v5823
        %v5825 = vpop.f32.mrf.mxu0
        %v5826 = vadd.f32 0.0, %v5825
        %5827 = vmatmul.bf16.gmra.mxu0 %v5765
        %v5828 = vpop.f32.mrf.mxu0
        %v5829 = vadd.f32 0.0, %v5828
        %v5830 = vpop.f32.mrf.mxu0
        %v5831 = vadd.f32 0.0, %v5830
        %5832 = vmatmul.bf16.gmra.mxu0 %v5768
        %v5833 = vpop.f32.mrf.mxu0
        %v5834 = vadd.f32 0.0, %v5833
        %v5835 = vpop.f32.mrf.mxu0
        %v5836 = vadd.f32 0.0, %v5835
        %5837 = vmatmul.bf16.gmra.mxu0 %v5771
        %v5838 = vpop.f32.mrf.mxu0
        %v5839 = vadd.f32 0.0, %v5838
        %v5840 = vpop.f32.mrf.mxu0
        %v5841 = vadd.f32 0.0, %v5840
        %5842 = vmatmul.bf16.gmra.mxu0 %v5774
        %v5843 = vpop.f32.mrf.mxu0
        %v5844 = vadd.f32 0.0, %v5843
        %v5845 = vpop.f32.mrf.mxu0
        %v5846 = vadd.f32 0.0, %v5845
        %5847 = vmatmul.bf16.gmra.mxu0 %v5777
        %v5848 = vpop.f32.mrf.mxu0
        %v5849 = vadd.f32 0.0, %v5848
        %v5850 = vpop.f32.mrf.mxu0
        %v5851 = vadd.f32 0.0, %v5850
        %5852 = vmatmul.bf16.gmra.mxu0 %v5780
        %v5853 = vpop.f32.mrf.mxu0
        %v5854 = vadd.f32 0.0, %v5853
        %v5855 = vpop.f32.mrf.mxu0
        %v5856 = vadd.f32 0.0, %v5855
        %5857 = vmatmul.bf16.gmra.mxu0 %v5783
        %v5858 = vpop.f32.mrf.mxu0
        %v5859 = vadd.f32 0.0, %v5858
        %v5860 = vpop.f32.mrf.mxu0
        %v5861 = vadd.f32 0.0, %v5860
        %5862 = vmatmul.bf16.gmra.mxu0 %v5786
        %v5863 = vpop.f32.mrf.mxu0
        %v5864 = vadd.f32 0.0, %v5863
        %v5865 = vpop.f32.mrf.mxu0
        %v5866 = vadd.f32 0.0, %v5865
        %5867 = vmatmul.bf16.gmra.mxu0 %v5789
        %v5868 = vpop.f32.mrf.mxu0
        %v5869 = vadd.f32 0.0, %v5868
        %v5870 = vpop.f32.mrf.mxu0
        %v5871 = vadd.f32 0.0, %v5870
        %5872 = vmatmul.bf16.gmra.mxu0 %v5792
        %v5873 = vpop.f32.mrf.mxu0
        %v5874 = vadd.f32 0.0, %v5873
        %v5875 = vpop.f32.mrf.mxu0
        %v5876 = vadd.f32 0.0, %v5875
        %5877 = vmatmul.bf16.gmra.mxu0 %v5795
        %v5878 = vpop.f32.mrf.mxu0
        %v5879 = vadd.f32 0.0, %v5878
        %v5880 = vpop.f32.mrf.mxu0
        %v5881 = vadd.f32 0.0, %v5880
        %5882 = vmatmul.bf16.gmra.mxu0 %v5798
        %v5883 = vpop.f32.mrf.mxu0
        %v5884 = vadd.f32 0.0, %v5883
        %v5885 = vpop.f32.mrf.mxu0
        %v5886 = vadd.f32 0.0, %v5885
        %5887 = vmatmul.bf16.gmra.mxu0 %v5801
        %v5888 = vpop.f32.mrf.mxu0
        %v5889 = vadd.f32 0.0, %v5888
        %v5890 = vpop.f32.mrf.mxu0
        %v5891 = vadd.f32 0.0, %v5890
        %5892 = vmatmul.bf16.gmra.mxu0 %v5804
        %v5893 = vpop.f32.mrf.mxu0
        %v5894 = vadd.f32 0.0, %v5893
        %v5895 = vpop.f32.mrf.mxu0
        %v5896 = vadd.f32 0.0, %v5895
        %5897 = vdwg.mxu0
        %v5898 = vadd.f32 %v5676, %v5819
        %v5899 = vadd.f32 %v5677, %v5821
        %v5900 = vadd.f32 %v5678, %v5824
        %v5901 = vadd.f32 %v5679, %v5826
        %v5902 = vadd.f32 %v5680, %v5829
        %v5903 = vadd.f32 %v5681, %v5831
        %v5904 = vadd.f32 %v5682, %v5834
        %v5905 = vadd.f32 %v5683, %v5836
        %v5906 = vadd.f32 %v5684, %v5839
        %v5907 = vadd.f32 %v5685, %v5841
        %v5908 = vadd.f32 %v5686, %v5844
        %v5909 = vadd.f32 %v5687, %v5846
        %v5910 = vadd.f32 %v5688, %v5849
        %v5911 = vadd.f32 %v5689, %v5851
        %v5912 = vadd.f32 %v5690, %v5854
        %v5913 = vadd.f32 %v5691, %v5856
        %v5914 = vadd.f32 %v5692, %v5859
        %v5915 = vadd.f32 %v5693, %v5861
        %v5916 = vadd.f32 %v5694, %v5864
        %v5917 = vadd.f32 %v5695, %v5866
        %v5918 = vadd.f32 %v5696, %v5869
        %v5919 = vadd.f32 %v5697, %v5871
        %v5920 = vadd.f32 %v5698, %v5874
        %v5921 = vadd.f32 %v5699, %v5876
        %v5922 = vadd.f32 %v5700, %v5879
        %v5923 = vadd.f32 %v5701, %v5881
        %v5924 = vadd.f32 %v5702, %v5884
        %v5925 = vadd.f32 %v5703, %v5886
        %v5926 = vadd.f32 %v5704, %v5889
        %v5927 = vadd.f32 %v5705, %v5891
        %v5928 = vadd.f32 %v5706, %v5894
        %v5929 = vadd.f32 %v5707, %v5896
        %v5930 = vld [vmem:[%s5485 + $0x2] sm:$0xff]
        %v5931 = vld [vmem:[%s5485 + $0xa] sm:$0xff]
        %v5932 = vld [vmem:[%s5485 + $0x1a] sm:$0xff]
        %v5933 = vld [vmem:[%s5485 + $0x22] sm:$0xff]
        %v5934 = vld [vmem:[%s5485 + $0x32] sm:$0xff]
        %v5935 = vld [vmem:[%s5485 + $0x3a] sm:$0xff]
        %v5936 = vld [vmem:[%s5485 + $0x4a] sm:$0xff]
        %v5937 = vld [vmem:[%s5485 + $0x52] sm:$0xff]
        %v5938 = vld [vmem:[%s5485 + $0x62] sm:$0xff]
        %v5939 = vld [vmem:[%s5485 + $0x6a] sm:$0xff]
        %v5940 = vld [vmem:[%s5485 + $0x7a] sm:$0xff]
        %v5941 = vld [vmem:[%s5485 + $0x82] sm:$0xff]
        %v5942 = vld [vmem:[%s5485 + $0x92] sm:$0xff]
        %v5943 = vld [vmem:[%s5485 + $0x9a] sm:$0xff]
        %v5944 = vld [vmem:[%s5485 + $0xaa] sm:$0xff]
        %v5945 = vld [vmem:[%s5485 + $0xb2] sm:$0xff]
        %v5946 = vld [vmem:[%s5485 + $0xc2] sm:$0xff]
        %v5947 = vld [vmem:[%s5485 + $0xca] sm:$0xff]
        %v5948 = vld [vmem:[%s5485 + $0xda] sm:$0xff]
        %v5949 = vld [vmem:[%s5485 + $0xe2] sm:$0xff]
        %v5950 = vld [vmem:[%s5485 + $0xf2] sm:$0xff]
        %v5951 = vld [vmem:[%s5485 + $0xfa] sm:$0xff]
        %v5952 = vld [vmem:[%s5485 + $0x10a] sm:$0xff]
        %v5953 = vld [vmem:[%s5485 + $0x112] sm:$0xff]
        %v5954 = vld [vmem:[%s5485 + $0x122] sm:$0xff]
        %v5955 = vld [vmem:[%s5485 + $0x12a] sm:$0xff]
        %v5956 = vld [vmem:[%s5485 + $0x13a] sm:$0xff]
        %v5957 = vld [vmem:[%s5485 + $0x142] sm:$0xff]
        %v5958 = vld [vmem:[%s5485 + $0x152] sm:$0xff]
        %v5959 = vld [vmem:[%s5485 + $0x15a] sm:$0xff]
        %v5960 = vld [vmem:[%s5485 + $0x16a] sm:$0xff]
        %v5961 = vld [vmem:[%s5485 + $0x172] sm:$0xff]
        %v5962 = vpack.c.bf16 %v5931, %v5930
        %v5963 = vpack.c.bf16 %v5933, %v5932
        %v5964 = vpack.c.bf16 %v5935, %v5934
        %v5965 = vpack.c.bf16 %v5937, %v5936
        %v5966 = vpack.c.bf16 %v5939, %v5938
        %v5967 = vpack.c.bf16 %v5941, %v5940
        %v5968 = vpack.c.bf16 %v5943, %v5942
        %v5969 = vpack.c.bf16 %v5945, %v5944
        %v5970 = vpack.c.bf16 %v5947, %v5946
        %v5971 = vpack.c.bf16 %v5949, %v5948
        %v5972 = vpack.c.bf16 %v5951, %v5950
        %v5973 = vpack.c.bf16 %v5953, %v5952
        %v5974 = vpack.c.bf16 %v5955, %v5954
        %v5975 = vpack.c.bf16 %v5957, %v5956
        %v5976 = vpack.c.bf16 %v5959, %v5958
        %v5977 = vpack.c.bf16 %v5961, %v5960
        %s5978 = scalar_lea.vmem %s7, 32
        %v5979 = vld [vmem:[%s5978] sm:$0xf]
        %v5981 = vsel %vm4128, %v5962, 0
        %v5984 = vsel %vm4128, %v5963, 0
        %v5987 = vsel %vm4128, %v5964, 0
        %v5990 = vsel %vm4128, %v5965, 0
        %v5993 = vsel %vm4128, %v5966, 0
        %v5996 = vsel %vm4128, %v5967, 0
        %v5999 = vsel %vm4128, %v5968, 0
        %v6002 = vsel %vm4128, %v5969, 0
        %v6005 = vsel %vm4128, %v5970, 0
        %v6008 = vsel %vm4128, %v5971, 0
        %v6011 = vsel %vm4128, %v5972, 0
        %v6014 = vsel %vm4128, %v5973, 0
        %v6017 = vsel %vm4128, %v5974, 0
        %v6020 = vsel %vm4128, %v5975, 0
        %v6023 = vsel %vm4128, %v5976, 0
        %v6026 = vsel %vm4128, %v5977, 0
        %v6029 = vsel %vm4364, %v5979, 0
        %6031 = vmatpush.bf16.msra.mxu0 0
        %6032 = vmatpush.bf16.msra.mxu0 0
        %6033 = vmatpush.bf16.msra.mxu0 0
        %6034 = vmatpush.bf16.msra.mxu0 0
        %6035 = vmatpush.bf16.msra.mxu0 0
        %6036 = vmatpush.bf16.msra.mxu0 0
        %6037 = vmatpush.bf16.msra.mxu0 0
        %6038 = vmatpush.bf16.msra.mxu0 %v6029
        %6039 = vmatmul.bf16.gmra.mxu0 %v5981
        %v6040 = vpop.f32.mrf.mxu0
        %v6041 = vadd.f32 0.0, %v6040
        %v6042 = vpop.f32.mrf.mxu0
        %v6043 = vadd.f32 0.0, %v6042
        %6044 = vmatmul.bf16.gmra.mxu0 %v5984
        %v6045 = vpop.f32.mrf.mxu0
        %v6046 = vadd.f32 0.0, %v6045
        %v6047 = vpop.f32.mrf.mxu0
        %v6048 = vadd.f32 0.0, %v6047
        %6049 = vmatmul.bf16.gmra.mxu0 %v5987
        %v6050 = vpop.f32.mrf.mxu0
        %v6051 = vadd.f32 0.0, %v6050
        %v6052 = vpop.f32.mrf.mxu0
        %v6053 = vadd.f32 0.0, %v6052
        %6054 = vmatmul.bf16.gmra.mxu0 %v5990
        %v6055 = vpop.f32.mrf.mxu0
        %v6056 = vadd.f32 0.0, %v6055
        %v6057 = vpop.f32.mrf.mxu0
        %v6058 = vadd.f32 0.0, %v6057
        %6059 = vmatmul.bf16.gmra.mxu0 %v5993
        %v6060 = vpop.f32.mrf.mxu0
        %v6061 = vadd.f32 0.0, %v6060
        %v6062 = vpop.f32.mrf.mxu0
        %v6063 = vadd.f32 0.0, %v6062
        %6064 = vmatmul.bf16.gmra.mxu0 %v5996
        %v6065 = vpop.f32.mrf.mxu0
        %v6066 = vadd.f32 0.0, %v6065
        %v6067 = vpop.f32.mrf.mxu0
        %v6068 = vadd.f32 0.0, %v6067
        %6069 = vmatmul.bf16.gmra.mxu0 %v5999
        %v6070 = vpop.f32.mrf.mxu0
        %v6071 = vadd.f32 0.0, %v6070
        %v6072 = vpop.f32.mrf.mxu0
        %v6073 = vadd.f32 0.0, %v6072
        %6074 = vmatmul.bf16.gmra.mxu0 %v6002
        %v6075 = vpop.f32.mrf.mxu0
        %v6076 = vadd.f32 0.0, %v6075
        %v6077 = vpop.f32.mrf.mxu0
        %v6078 = vadd.f32 0.0, %v6077
        %6079 = vmatmul.bf16.gmra.mxu0 %v6005
        %v6080 = vpop.f32.mrf.mxu0
        %v6081 = vadd.f32 0.0, %v6080
        %v6082 = vpop.f32.mrf.mxu0
        %v6083 = vadd.f32 0.0, %v6082
        %6084 = vmatmul.bf16.gmra.mxu0 %v6008
        %v6085 = vpop.f32.mrf.mxu0
        %v6086 = vadd.f32 0.0, %v6085
        %v6087 = vpop.f32.mrf.mxu0
        %v6088 = vadd.f32 0.0, %v6087
        %6089 = vmatmul.bf16.gmra.mxu0 %v6011
        %v6090 = vpop.f32.mrf.mxu0
        %v6091 = vadd.f32 0.0, %v6090
        %v6092 = vpop.f32.mrf.mxu0
        %v6093 = vadd.f32 0.0, %v6092
        %6094 = vmatmul.bf16.gmra.mxu0 %v6014
        %v6095 = vpop.f32.mrf.mxu0
        %v6096 = vadd.f32 0.0, %v6095
        %v6097 = vpop.f32.mrf.mxu0
        %v6098 = vadd.f32 0.0, %v6097
        %6099 = vmatmul.bf16.gmra.mxu0 %v6017
        %v6100 = vpop.f32.mrf.mxu0
        %v6101 = vadd.f32 0.0, %v6100
        %v6102 = vpop.f32.mrf.mxu0
        %v6103 = vadd.f32 0.0, %v6102
        %6104 = vmatmul.bf16.gmra.mxu0 %v6020
        %v6105 = vpop.f32.mrf.mxu0
        %v6106 = vadd.f32 0.0, %v6105
        %v6107 = vpop.f32.mrf.mxu0
        %v6108 = vadd.f32 0.0, %v6107
        %6109 = vmatmul.bf16.gmra.mxu0 %v6023
        %v6110 = vpop.f32.mrf.mxu0
        %v6111 = vadd.f32 0.0, %v6110
        %v6112 = vpop.f32.mrf.mxu0
        %v6113 = vadd.f32 0.0, %v6112
        %6114 = vmatmul.bf16.gmra.mxu0 %v6026
        %v6115 = vpop.f32.mrf.mxu0
        %v6116 = vadd.f32 0.0, %v6115
        %v6117 = vpop.f32.mrf.mxu0
        %v6118 = vadd.f32 0.0, %v6117
        %6119 = vdwg.mxu0
        %v6120 = vadd.f32 %v5898, %v6041
        %v6121 = vadd.f32 %v5899, %v6043
        %v6122 = vadd.f32 %v5900, %v6046
        %v6123 = vadd.f32 %v5901, %v6048
        %v6124 = vadd.f32 %v5902, %v6051
        %v6125 = vadd.f32 %v5903, %v6053
        %v6126 = vadd.f32 %v5904, %v6056
        %v6127 = vadd.f32 %v5905, %v6058
        %v6128 = vadd.f32 %v5906, %v6061
        %v6129 = vadd.f32 %v5907, %v6063
        %v6130 = vadd.f32 %v5908, %v6066
        %v6131 = vadd.f32 %v5909, %v6068
        %v6132 = vadd.f32 %v5910, %v6071
        %v6133 = vadd.f32 %v5911, %v6073
        %v6134 = vadd.f32 %v5912, %v6076
        %v6135 = vadd.f32 %v5913, %v6078
        %v6136 = vadd.f32 %v5914, %v6081
        %v6137 = vadd.f32 %v5915, %v6083
        %v6138 = vadd.f32 %v5916, %v6086
        %v6139 = vadd.f32 %v5917, %v6088
        %v6140 = vadd.f32 %v5918, %v6091
        %v6141 = vadd.f32 %v5919, %v6093
        %v6142 = vadd.f32 %v5920, %v6096
        %v6143 = vadd.f32 %v5921, %v6098
        %v6144 = vadd.f32 %v5922, %v6101
        %v6145 = vadd.f32 %v5923, %v6103
        %v6146 = vadd.f32 %v5924, %v6106
        %v6147 = vadd.f32 %v5925, %v6108
        %v6148 = vadd.f32 %v5926, %v6111
        %v6149 = vadd.f32 %v5927, %v6113
        %v6150 = vadd.f32 %v5928, %v6116
        %v6151 = vadd.f32 %v5929, %v6118
        %v6152 = vld [vmem:[%s8] sm:$0x1]
        %v6154 = vperm.slane %v6152, 0
        %v6156 = vadd.f32 %v6120, %v6154
        %v6157 = vadd.f32 %v6121, %v6154
        %v6158 = vadd.f32 %v6122, %v6154
        %v6159 = vadd.f32 %v6123, %v6154
        %v6160 = vadd.f32 %v6124, %v6154
        %v6161 = vadd.f32 %v6125, %v6154
        %v6162 = vadd.f32 %v6126, %v6154
        %v6163 = vadd.f32 %v6127, %v6154
        %v6164 = vadd.f32 %v6128, %v6154
        %v6165 = vadd.f32 %v6129, %v6154
        %v6166 = vadd.f32 %v6130, %v6154
        %v6167 = vadd.f32 %v6131, %v6154
        %v6168 = vadd.f32 %v6132, %v6154
        %v6169 = vadd.f32 %v6133, %v6154
        %v6170 = vadd.f32 %v6134, %v6154
        %v6171 = vadd.f32 %v6135, %v6154
        %v6172 = vadd.f32 %v6136, %v6154
        %v6173 = vadd.f32 %v6137, %v6154
        %v6174 = vadd.f32 %v6138, %v6154
        %v6175 = vadd.f32 %v6139, %v6154
        %v6176 = vadd.f32 %v6140, %v6154
        %v6177 = vadd.f32 %v6141, %v6154
        %v6178 = vadd.f32 %v6142, %v6154
        %v6179 = vadd.f32 %v6143, %v6154
        %v6180 = vadd.f32 %v6144, %v6154
        %v6181 = vadd.f32 %v6145, %v6154
        %v6182 = vadd.f32 %v6146, %v6154
        %v6183 = vadd.f32 %v6147, %v6154
        %v6184 = vadd.f32 %v6148, %v6154
        %v6185 = vadd.f32 %v6149, %v6154
        %v6186 = vadd.f32 %v6150, %v6154
        %v6187 = vadd.f32 %v6151, %v6154
        %v6188 = vmax.f32 %v6156, 0.0
        %v6189 = vmax.f32 %v6157, 0.0
        %v6190 = vmax.f32 %v6158, 0.0
        %v6191 = vmax.f32 %v6159, 0.0
        %v6192 = vmax.f32 %v6160, 0.0
        %v6193 = vmax.f32 %v6161, 0.0
        %v6194 = vmax.f32 %v6162, 0.0
        %v6195 = vmax.f32 %v6163, 0.0
        %v6196 = vmax.f32 %v6164, 0.0
        %v6197 = vmax.f32 %v6165, 0.0
        %v6198 = vmax.f32 %v6166, 0.0
        %v6199 = vmax.f32 %v6167, 0.0
        %v6200 = vmax.f32 %v6168, 0.0
        %v6201 = vmax.f32 %v6169, 0.0
        %v6202 = vmax.f32 %v6170, 0.0
        %v6203 = vmax.f32 %v6171, 0.0
        %v6204 = vmax.f32 %v6172, 0.0
        %v6205 = vmax.f32 %v6173, 0.0
        %v6206 = vmax.f32 %v6174, 0.0
        %v6207 = vmax.f32 %v6175, 0.0
        %v6208 = vmax.f32 %v6176, 0.0
        %v6209 = vmax.f32 %v6177, 0.0
        %v6210 = vmax.f32 %v6178, 0.0
        %v6211 = vmax.f32 %v6179, 0.0
        %v6212 = vmax.f32 %v6180, 0.0
        %v6213 = vmax.f32 %v6181, 0.0
        %v6214 = vmax.f32 %v6182, 0.0
        %v6215 = vmax.f32 %v6183, 0.0
        %v6216 = vmax.f32 %v6184, 0.0
        %v6217 = vmax.f32 %v6185, 0.0
        %v6218 = vmax.f32 %v6186, 0.0
        %v6219 = vmax.f32 %v6187, 0.0
        %v6220 = vld [vmem:[#allocation2] sm:$0xff]
        %v6221 = vld [vmem:[#allocation2 + $0x8] sm:$0xff]
        %v6222 = vld [vmem:[#allocation2 + $0x18] sm:$0xff]
        %v6223 = vld [vmem:[#allocation2 + $0x20] sm:$0xff]
        %v6224 = vld [vmem:[#allocation2 + $0x30] sm:$0xff]
        %v6225 = vld [vmem:[#allocation2 + $0x38] sm:$0xff]
        %v6226 = vld [vmem:[#allocation2 + $0x48] sm:$0xff]
        %v6227 = vld [vmem:[#allocation2 + $0x50] sm:$0xff]
        %v6228 = vld [vmem:[#allocation2 + $0x60] sm:$0xff]
        %v6229 = vld [vmem:[#allocation2 + $0x68] sm:$0xff]
        %v6230 = vld [vmem:[#allocation2 + $0x78] sm:$0xff]
        %v6231 = vld [vmem:[#allocation2 + $0x80] sm:$0xff]
        %v6232 = vld [vmem:[#allocation2 + $0x90] sm:$0xff]
        %v6233 = vld [vmem:[#allocation2 + $0x98] sm:$0xff]
        %v6234 = vld [vmem:[#allocation2 + $0xa8] sm:$0xff]
        %v6235 = vld [vmem:[#allocation2 + $0xb0] sm:$0xff]
        %v6236 = vld [vmem:[#allocation2 + $0xc0] sm:$0xff]
        %v6237 = vld [vmem:[#allocation2 + $0xc8] sm:$0xff]
        %v6238 = vld [vmem:[#allocation2 + $0xd8] sm:$0xff]
        %v6239 = vld [vmem:[#allocation2 + $0xe0] sm:$0xff]
        %v6240 = vld [vmem:[#allocation2 + $0xf0] sm:$0xff]
        %v6241 = vld [vmem:[#allocation2 + $0xf8] sm:$0xff]
        %v6242 = vld [vmem:[#allocation2 + $0x108] sm:$0xff]
        %v6243 = vld [vmem:[#allocation2 + $0x110] sm:$0xff]
        %v6244 = vld [vmem:[#allocation2 + $0x120] sm:$0xff]
        %v6245 = vld [vmem:[#allocation2 + $0x128] sm:$0xff]
        %v6246 = vld [vmem:[#allocation2 + $0x138] sm:$0xff]
        %v6247 = vld [vmem:[#allocation2 + $0x140] sm:$0xff]
        %v6248 = vld [vmem:[#allocation2 + $0x150] sm:$0xff]
        %v6249 = vld [vmem:[#allocation2 + $0x158] sm:$0xff]
        %v6250 = vld [vmem:[#allocation2 + $0x168] sm:$0xff]
        %v6251 = vld [vmem:[#allocation2 + $0x170] sm:$0xff]
        %v6252 = vadd.f32 %v6220, 0.0
        %v6253 = vadd.f32 %v6221, 0.0
        %v6254 = vadd.f32 %v6222, 0.0
        %v6255 = vadd.f32 %v6223, 0.0
        %v6256 = vadd.f32 %v6224, 0.0
        %v6257 = vadd.f32 %v6225, 0.0
        %v6258 = vadd.f32 %v6226, 0.0
        %v6259 = vadd.f32 %v6227, 0.0
        %v6260 = vadd.f32 %v6228, 0.0
        %v6261 = vadd.f32 %v6229, 0.0
        %v6262 = vadd.f32 %v6230, 0.0
        %v6263 = vadd.f32 %v6231, 0.0
        %v6264 = vadd.f32 %v6232, 0.0
        %v6265 = vadd.f32 %v6233, 0.0
        %v6266 = vadd.f32 %v6234, 0.0
        %v6267 = vadd.f32 %v6235, 0.0
        %v6268 = vadd.f32 %v6236, 0.0
        %v6269 = vadd.f32 %v6237, 0.0
        %v6270 = vadd.f32 %v6238, 0.0
        %v6271 = vadd.f32 %v6239, 0.0
        %v6272 = vadd.f32 %v6240, 0.0
        %v6273 = vadd.f32 %v6241, 0.0
        %v6274 = vadd.f32 %v6242, 0.0
        %v6275 = vadd.f32 %v6243, 0.0
        %v6276 = vadd.f32 %v6244, 0.0
        %v6277 = vadd.f32 %v6245, 0.0
        %v6278 = vadd.f32 %v6246, 0.0
        %v6279 = vadd.f32 %v6247, 0.0
        %v6280 = vadd.f32 %v6248, 0.0
        %v6281 = vadd.f32 %v6249, 0.0
        %v6282 = vadd.f32 %v6250, 0.0
        %v6283 = vadd.f32 %v6251, 0.0
        %v6284 = vld [vmem:[#allocation2 + $0x1] sm:$0xff]
        %v6285 = vld [vmem:[#allocation2 + $0x9] sm:$0xff]
        %v6286 = vld [vmem:[#allocation2 + $0x19] sm:$0xff]
        %v6287 = vld [vmem:[#allocation2 + $0x21] sm:$0xff]
        %v6288 = vld [vmem:[#allocation2 + $0x31] sm:$0xff]
        %v6289 = vld [vmem:[#allocation2 + $0x39] sm:$0xff]
        %v6290 = vld [vmem:[#allocation2 + $0x49] sm:$0xff]
        %v6291 = vld [vmem:[#allocation2 + $0x51] sm:$0xff]
        %v6292 = vld [vmem:[#allocation2 + $0x61] sm:$0xff]
        %v6293 = vld [vmem:[#allocation2 + $0x69] sm:$0xff]
        %v6294 = vld [vmem:[#allocation2 + $0x79] sm:$0xff]
        %v6295 = vld [vmem:[#allocation2 + $0x81] sm:$0xff]
        %v6296 = vld [vmem:[#allocation2 + $0x91] sm:$0xff]
        %v6297 = vld [vmem:[#allocation2 + $0x99] sm:$0xff]
        %v6298 = vld [vmem:[#allocation2 + $0xa9] sm:$0xff]
        %v6299 = vld [vmem:[#allocation2 + $0xb1] sm:$0xff]
        %v6300 = vld [vmem:[#allocation2 + $0xc1] sm:$0xff]
        %v6301 = vld [vmem:[#allocation2 + $0xc9] sm:$0xff]
        %v6302 = vld [vmem:[#allocation2 + $0xd9] sm:$0xff]
        %v6303 = vld [vmem:[#allocation2 + $0xe1] sm:$0xff]
        %v6304 = vld [vmem:[#allocation2 + $0xf1] sm:$0xff]
        %v6305 = vld [vmem:[#allocation2 + $0xf9] sm:$0xff]
        %v6306 = vld [vmem:[#allocation2 + $0x109] sm:$0xff]
        %v6307 = vld [vmem:[#allocation2 + $0x111] sm:$0xff]
        %v6308 = vld [vmem:[#allocation2 + $0x121] sm:$0xff]
        %v6309 = vld [vmem:[#allocation2 + $0x129] sm:$0xff]
        %v6310 = vld [vmem:[#allocation2 + $0x139] sm:$0xff]
        %v6311 = vld [vmem:[#allocation2 + $0x141] sm:$0xff]
        %v6312 = vld [vmem:[#allocation2 + $0x151] sm:$0xff]
        %v6313 = vld [vmem:[#allocation2 + $0x159] sm:$0xff]
        %v6314 = vld [vmem:[#allocation2 + $0x169] sm:$0xff]
        %v6315 = vld [vmem:[#allocation2 + $0x171] sm:$0xff]
        %v6316 = vadd.f32 %v6252, %v6284
        %v6317 = vadd.f32 %v6253, %v6285
        %v6318 = vadd.f32 %v6254, %v6286
        %v6319 = vadd.f32 %v6255, %v6287
        %v6320 = vadd.f32 %v6256, %v6288
        %v6321 = vadd.f32 %v6257, %v6289
        %v6322 = vadd.f32 %v6258, %v6290
        %v6323 = vadd.f32 %v6259, %v6291
        %v6324 = vadd.f32 %v6260, %v6292
        %v6325 = vadd.f32 %v6261, %v6293
        %v6326 = vadd.f32 %v6262, %v6294
        %v6327 = vadd.f32 %v6263, %v6295
        %v6328 = vadd.f32 %v6264, %v6296
        %v6329 = vadd.f32 %v6265, %v6297
        %v6330 = vadd.f32 %v6266, %v6298
        %v6331 = vadd.f32 %v6267, %v6299
        %v6332 = vadd.f32 %v6268, %v6300
        %v6333 = vadd.f32 %v6269, %v6301
        %v6334 = vadd.f32 %v6270, %v6302
        %v6335 = vadd.f32 %v6271, %v6303
        %v6336 = vadd.f32 %v6272, %v6304
        %v6337 = vadd.f32 %v6273, %v6305
        %v6338 = vadd.f32 %v6274, %v6306
        %v6339 = vadd.f32 %v6275, %v6307
        %v6340 = vadd.f32 %v6276, %v6308
        %v6341 = vadd.f32 %v6277, %v6309
        %v6342 = vadd.f32 %v6278, %v6310
        %v6343 = vadd.f32 %v6279, %v6311
        %v6344 = vadd.f32 %v6280, %v6312
        %v6345 = vadd.f32 %v6281, %v6313
        %v6346 = vadd.f32 %v6282, %v6314
        %v6347 = vadd.f32 %v6283, %v6315
        %v6348 = vld [vmem:[#allocation2 + $0x2] sm:$0xff]
        %v6349 = vld [vmem:[#allocation2 + $0xa] sm:$0xff]
        %v6350 = vld [vmem:[#allocation2 + $0x1a] sm:$0xff]
        %v6351 = vld [vmem:[#allocation2 + $0x22] sm:$0xff]
        %v6352 = vld [vmem:[#allocation2 + $0x32] sm:$0xff]
        %v6353 = vld [vmem:[#allocation2 + $0x3a] sm:$0xff]
        %v6354 = vld [vmem:[#allocation2 + $0x4a] sm:$0xff]
        %v6355 = vld [vmem:[#allocation2 + $0x52] sm:$0xff]
        %v6356 = vld [vmem:[#allocation2 + $0x62] sm:$0xff]
        %v6357 = vld [vmem:[#allocation2 + $0x6a] sm:$0xff]
        %v6358 = vld [vmem:[#allocation2 + $0x7a] sm:$0xff]
        %v6359 = vld [vmem:[#allocation2 + $0x82] sm:$0xff]
        %v6360 = vld [vmem:[#allocation2 + $0x92] sm:$0xff]
        %v6361 = vld [vmem:[#allocation2 + $0x9a] sm:$0xff]
        %v6362 = vld [vmem:[#allocation2 + $0xaa] sm:$0xff]
        %v6363 = vld [vmem:[#allocation2 + $0xb2] sm:$0xff]
        %v6364 = vld [vmem:[#allocation2 + $0xc2] sm:$0xff]
        %v6365 = vld [vmem:[#allocation2 + $0xca] sm:$0xff]
        %v6366 = vld [vmem:[#allocation2 + $0xda] sm:$0xff]
        %v6367 = vld [vmem:[#allocation2 + $0xe2] sm:$0xff]
        %v6368 = vld [vmem:[#allocation2 + $0xf2] sm:$0xff]
        %v6369 = vld [vmem:[#allocation2 + $0xfa] sm:$0xff]
        %v6370 = vld [vmem:[#allocation2 + $0x10a] sm:$0xff]
        %v6371 = vld [vmem:[#allocation2 + $0x112] sm:$0xff]
        %v6372 = vld [vmem:[#allocation2 + $0x122] sm:$0xff]
        %v6373 = vld [vmem:[#allocation2 + $0x12a] sm:$0xff]
        %v6374 = vld [vmem:[#allocation2 + $0x13a] sm:$0xff]
        %v6375 = vld [vmem:[#allocation2 + $0x142] sm:$0xff]
        %v6376 = vld [vmem:[#allocation2 + $0x152] sm:$0xff]
        %v6377 = vld [vmem:[#allocation2 + $0x15a] sm:$0xff]
        %v6378 = vld [vmem:[#allocation2 + $0x16a] sm:$0xff]
        %v6379 = vld [vmem:[#allocation2 + $0x172] sm:$0xff]
        %v6380 = vadd.f32 %v6316, %v6348
        %v6381 = vadd.f32 %v6317, %v6349
        %v6382 = vadd.f32 %v6318, %v6350
        %v6383 = vadd.f32 %v6319, %v6351
        %v6384 = vadd.f32 %v6320, %v6352
        %v6385 = vadd.f32 %v6321, %v6353
        %v6386 = vadd.f32 %v6322, %v6354
        %v6387 = vadd.f32 %v6323, %v6355
        %v6388 = vadd.f32 %v6324, %v6356
        %v6389 = vadd.f32 %v6325, %v6357
        %v6390 = vadd.f32 %v6326, %v6358
        %v6391 = vadd.f32 %v6327, %v6359
        %v6392 = vadd.f32 %v6328, %v6360
        %v6393 = vadd.f32 %v6329, %v6361
        %v6394 = vadd.f32 %v6330, %v6362
        %v6395 = vadd.f32 %v6331, %v6363
        %v6396 = vadd.f32 %v6332, %v6364
        %v6397 = vadd.f32 %v6333, %v6365
        %v6398 = vadd.f32 %v6334, %v6366
        %v6399 = vadd.f32 %v6335, %v6367
        %v6400 = vadd.f32 %v6336, %v6368
        %v6401 = vadd.f32 %v6337, %v6369
        %v6402 = vadd.f32 %v6338, %v6370
        %v6403 = vadd.f32 %v6339, %v6371
        %v6404 = vadd.f32 %v6340, %v6372
        %v6405 = vadd.f32 %v6341, %v6373
        %v6406 = vadd.f32 %v6342, %v6374
        %v6407 = vadd.f32 %v6343, %v6375
        %v6408 = vadd.f32 %v6344, %v6376
        %v6409 = vadd.f32 %v6345, %v6377
        %v6410 = vadd.f32 %v6346, %v6378
        %v6411 = vadd.f32 %v6347, %v6379
        %v6412 = vld [vmem:[%s474] sm:$0xff]
        %v6413 = vld [vmem:[%s474 + $0x8] sm:$0xff]
        %v6414 = vld [vmem:[%s474 + $0x18] sm:$0xff]
        %v6415 = vld [vmem:[%s474 + $0x20] sm:$0xff]
        %v6416 = vld [vmem:[%s474 + $0x30] sm:$0xff]
        %v6417 = vld [vmem:[%s474 + $0x38] sm:$0xff]
        %v6418 = vld [vmem:[%s474 + $0x48] sm:$0xff]
        %v6419 = vld [vmem:[%s474 + $0x50] sm:$0xff]
        %v6420 = vld [vmem:[%s474 + $0x60] sm:$0xff]
        %v6421 = vld [vmem:[%s474 + $0x68] sm:$0xff]
        %v6422 = vld [vmem:[%s474 + $0x78] sm:$0xff]
        %v6423 = vld [vmem:[%s474 + $0x80] sm:$0xff]
        %v6424 = vld [vmem:[%s474 + $0x90] sm:$0xff]
        %v6425 = vld [vmem:[%s474 + $0x98] sm:$0xff]
        %v6426 = vld [vmem:[%s474 + $0xa8] sm:$0xff]
        %v6427 = vld [vmem:[%s474 + $0xb0] sm:$0xff]
        %v6428 = vld [vmem:[%s474 + $0xc0] sm:$0xff]
        %v6429 = vld [vmem:[%s474 + $0xc8] sm:$0xff]
        %v6430 = vld [vmem:[%s474 + $0xd8] sm:$0xff]
        %v6431 = vld [vmem:[%s474 + $0xe0] sm:$0xff]
        %v6432 = vld [vmem:[%s474 + $0xf0] sm:$0xff]
        %v6433 = vld [vmem:[%s474 + $0xf8] sm:$0xff]
        %v6434 = vld [vmem:[%s474 + $0x108] sm:$0xff]
        %v6435 = vld [vmem:[%s474 + $0x110] sm:$0xff]
        %v6436 = vld [vmem:[%s474 + $0x120] sm:$0xff]
        %v6437 = vld [vmem:[%s474 + $0x128] sm:$0xff]
        %v6438 = vld [vmem:[%s474 + $0x138] sm:$0xff]
        %v6439 = vld [vmem:[%s474 + $0x140] sm:$0xff]
        %v6440 = vld [vmem:[%s474 + $0x150] sm:$0xff]
        %v6441 = vld [vmem:[%s474 + $0x158] sm:$0xff]
        %v6442 = vld [vmem:[%s474 + $0x168] sm:$0xff]
        %v6443 = vld [vmem:[%s474 + $0x170] sm:$0xff]
        %v6444 = vadd.f32 %v6380, %v6412
        %v6445 = vadd.f32 %v6381, %v6413
        %v6446 = vadd.f32 %v6382, %v6414
        %v6447 = vadd.f32 %v6383, %v6415
        %v6448 = vadd.f32 %v6384, %v6416
        %v6449 = vadd.f32 %v6385, %v6417
        %v6450 = vadd.f32 %v6386, %v6418
        %v6451 = vadd.f32 %v6387, %v6419
        %v6452 = vadd.f32 %v6388, %v6420
        %v6453 = vadd.f32 %v6389, %v6421
        %v6454 = vadd.f32 %v6390, %v6422
        %v6455 = vadd.f32 %v6391, %v6423
        %v6456 = vadd.f32 %v6392, %v6424
        %v6457 = vadd.f32 %v6393, %v6425
        %v6458 = vadd.f32 %v6394, %v6426
        %v6459 = vadd.f32 %v6395, %v6427
        %v6460 = vadd.f32 %v6396, %v6428
        %v6461 = vadd.f32 %v6397, %v6429
        %v6462 = vadd.f32 %v6398, %v6430
        %v6463 = vadd.f32 %v6399, %v6431
        %v6464 = vadd.f32 %v6400, %v6432
        %v6465 = vadd.f32 %v6401, %v6433
        %v6466 = vadd.f32 %v6402, %v6434
        %v6467 = vadd.f32 %v6403, %v6435
        %v6468 = vadd.f32 %v6404, %v6436
        %v6469 = vadd.f32 %v6405, %v6437
        %v6470 = vadd.f32 %v6406, %v6438
        %v6471 = vadd.f32 %v6407, %v6439
        %v6472 = vadd.f32 %v6408, %v6440
        %v6473 = vadd.f32 %v6409, %v6441
        %v6474 = vadd.f32 %v6410, %v6442
        %v6475 = vadd.f32 %v6411, %v6443
        %v6476 = vld [vmem:[%s474 + $0x1] sm:$0xff]
        %v6477 = vld [vmem:[%s474 + $0x9] sm:$0xff]
        %v6478 = vld [vmem:[%s474 + $0x19] sm:$0xff]
        %v6479 = vld [vmem:[%s474 + $0x21] sm:$0xff]
        %v6480 = vld [vmem:[%s474 + $0x31] sm:$0xff]
        %v6481 = vld [vmem:[%s474 + $0x39] sm:$0xff]
        %v6482 = vld [vmem:[%s474 + $0x49] sm:$0xff]
        %v6483 = vld [vmem:[%s474 + $0x51] sm:$0xff]
        %v6484 = vld [vmem:[%s474 + $0x61] sm:$0xff]
        %v6485 = vld [vmem:[%s474 + $0x69] sm:$0xff]
        %v6486 = vld [vmem:[%s474 + $0x79] sm:$0xff]
        %v6487 = vld [vmem:[%s474 + $0x81] sm:$0xff]
        %v6488 = vld [vmem:[%s474 + $0x91] sm:$0xff]
        %v6489 = vld [vmem:[%s474 + $0x99] sm:$0xff]
        %v6490 = vld [vmem:[%s474 + $0xa9] sm:$0xff]
        %v6491 = vld [vmem:[%s474 + $0xb1] sm:$0xff]
        %v6492 = vld [vmem:[%s474 + $0xc1] sm:$0xff]
        %v6493 = vld [vmem:[%s474 + $0xc9] sm:$0xff]
        %v6494 = vld [vmem:[%s474 + $0xd9] sm:$0xff]
        %v6495 = vld [vmem:[%s474 + $0xe1] sm:$0xff]
        %v6496 = vld [vmem:[%s474 + $0xf1] sm:$0xff]
        %v6497 = vld [vmem:[%s474 + $0xf9] sm:$0xff]
        %v6498 = vld [vmem:[%s474 + $0x109] sm:$0xff]
        %v6499 = vld [vmem:[%s474 + $0x111] sm:$0xff]
        %v6500 = vld [vmem:[%s474 + $0x121] sm:$0xff]
        %v6501 = vld [vmem:[%s474 + $0x129] sm:$0xff]
        %v6502 = vld [vmem:[%s474 + $0x139] sm:$0xff]
        %v6503 = vld [vmem:[%s474 + $0x141] sm:$0xff]
        %v6504 = vld [vmem:[%s474 + $0x151] sm:$0xff]
        %v6505 = vld [vmem:[%s474 + $0x159] sm:$0xff]
        %v6506 = vld [vmem:[%s474 + $0x169] sm:$0xff]
        %v6507 = vld [vmem:[%s474 + $0x171] sm:$0xff]
        %v6508 = vadd.f32 %v6444, %v6476
        %v6509 = vadd.f32 %v6445, %v6477
        %v6510 = vadd.f32 %v6446, %v6478
        %v6511 = vadd.f32 %v6447, %v6479
        %v6512 = vadd.f32 %v6448, %v6480
        %v6513 = vadd.f32 %v6449, %v6481
        %v6514 = vadd.f32 %v6450, %v6482
        %v6515 = vadd.f32 %v6451, %v6483
        %v6516 = vadd.f32 %v6452, %v6484
        %v6517 = vadd.f32 %v6453, %v6485
        %v6518 = vadd.f32 %v6454, %v6486
        %v6519 = vadd.f32 %v6455, %v6487
        %v6520 = vadd.f32 %v6456, %v6488
        %v6521 = vadd.f32 %v6457, %v6489
        %v6522 = vadd.f32 %v6458, %v6490
        %v6523 = vadd.f32 %v6459, %v6491
        %v6524 = vadd.f32 %v6460, %v6492
        %v6525 = vadd.f32 %v6461, %v6493
        %v6526 = vadd.f32 %v6462, %v6494
        %v6527 = vadd.f32 %v6463, %v6495
        %v6528 = vadd.f32 %v6464, %v6496
        %v6529 = vadd.f32 %v6465, %v6497
        %v6530 = vadd.f32 %v6466, %v6498
        %v6531 = vadd.f32 %v6467, %v6499
        %v6532 = vadd.f32 %v6468, %v6500
        %v6533 = vadd.f32 %v6469, %v6501
        %v6534 = vadd.f32 %v6470, %v6502
        %v6535 = vadd.f32 %v6471, %v6503
        %v6536 = vadd.f32 %v6472, %v6504
        %v6537 = vadd.f32 %v6473, %v6505
        %v6538 = vadd.f32 %v6474, %v6506
        %v6539 = vadd.f32 %v6475, %v6507
        %v6540 = vld [vmem:[%s474 + $0x2] sm:$0xff]
        %v6541 = vld [vmem:[%s474 + $0xa] sm:$0xff]
        %v6542 = vld [vmem:[%s474 + $0x1a] sm:$0xff]
        %v6543 = vld [vmem:[%s474 + $0x22] sm:$0xff]
        %v6544 = vld [vmem:[%s474 + $0x32] sm:$0xff]
        %v6545 = vld [vmem:[%s474 + $0x3a] sm:$0xff]
        %v6546 = vld [vmem:[%s474 + $0x4a] sm:$0xff]
        %v6547 = vld [vmem:[%s474 + $0x52] sm:$0xff]
        %v6548 = vld [vmem:[%s474 + $0x62] sm:$0xff]
        %v6549 = vld [vmem:[%s474 + $0x6a] sm:$0xff]
        %v6550 = vld [vmem:[%s474 + $0x7a] sm:$0xff]
        %v6551 = vld [vmem:[%s474 + $0x82] sm:$0xff]
        %v6552 = vld [vmem:[%s474 + $0x92] sm:$0xff]
        %v6553 = vld [vmem:[%s474 + $0x9a] sm:$0xff]
        %v6554 = vld [vmem:[%s474 + $0xaa] sm:$0xff]
        %v6555 = vld [vmem:[%s474 + $0xb2] sm:$0xff]
        %v6556 = vld [vmem:[%s474 + $0xc2] sm:$0xff]
        %v6557 = vld [vmem:[%s474 + $0xca] sm:$0xff]
        %v6558 = vld [vmem:[%s474 + $0xda] sm:$0xff]
        %v6559 = vld [vmem:[%s474 + $0xe2] sm:$0xff]
        %v6560 = vld [vmem:[%s474 + $0xf2] sm:$0xff]
        %v6561 = vld [vmem:[%s474 + $0xfa] sm:$0xff]
        %v6562 = vld [vmem:[%s474 + $0x10a] sm:$0xff]
        %v6563 = vld [vmem:[%s474 + $0x112] sm:$0xff]
        %v6564 = vld [vmem:[%s474 + $0x122] sm:$0xff]
        %v6565 = vld [vmem:[%s474 + $0x12a] sm:$0xff]
        %v6566 = vld [vmem:[%s474 + $0x13a] sm:$0xff]
        %v6567 = vld [vmem:[%s474 + $0x142] sm:$0xff]
        %v6568 = vld [vmem:[%s474 + $0x152] sm:$0xff]
        %v6569 = vld [vmem:[%s474 + $0x15a] sm:$0xff]
        %v6570 = vld [vmem:[%s474 + $0x16a] sm:$0xff]
        %v6571 = vld [vmem:[%s474 + $0x172] sm:$0xff]
        %v6572 = vadd.f32 %v6508, %v6540
        %v6573 = vadd.f32 %v6509, %v6541
        %v6574 = vadd.f32 %v6510, %v6542
        %v6575 = vadd.f32 %v6511, %v6543
        %v6576 = vadd.f32 %v6512, %v6544
        %v6577 = vadd.f32 %v6513, %v6545
        %v6578 = vadd.f32 %v6514, %v6546
        %v6579 = vadd.f32 %v6515, %v6547
        %v6580 = vadd.f32 %v6516, %v6548
        %v6581 = vadd.f32 %v6517, %v6549
        %v6582 = vadd.f32 %v6518, %v6550
        %v6583 = vadd.f32 %v6519, %v6551
        %v6584 = vadd.f32 %v6520, %v6552
        %v6585 = vadd.f32 %v6521, %v6553
        %v6586 = vadd.f32 %v6522, %v6554
        %v6587 = vadd.f32 %v6523, %v6555
        %v6588 = vadd.f32 %v6524, %v6556
        %v6589 = vadd.f32 %v6525, %v6557
        %v6590 = vadd.f32 %v6526, %v6558
        %v6591 = vadd.f32 %v6527, %v6559
        %v6592 = vadd.f32 %v6528, %v6560
        %v6593 = vadd.f32 %v6529, %v6561
        %v6594 = vadd.f32 %v6530, %v6562
        %v6595 = vadd.f32 %v6531, %v6563
        %v6596 = vadd.f32 %v6532, %v6564
        %v6597 = vadd.f32 %v6533, %v6565
        %v6598 = vadd.f32 %v6534, %v6566
        %v6599 = vadd.f32 %v6535, %v6567
        %v6600 = vadd.f32 %v6536, %v6568
        %v6601 = vadd.f32 %v6537, %v6569
        %v6602 = vadd.f32 %v6538, %v6570
        %v6603 = vadd.f32 %v6539, %v6571
        %s6604 = scalar_lea.vmem [#allocation2], 48
        %v6605 = vld [vmem:[%s6604] sm:$0xff]
        %v6606 = vld [vmem:[%s6604 + $0x8] sm:$0xff]
        %v6607 = vld [vmem:[%s6604 + $0x18] sm:$0xff]
        %v6608 = vld [vmem:[%s6604 + $0x20] sm:$0xff]
        %v6609 = vld [vmem:[%s6604 + $0x30] sm:$0xff]
        %v6610 = vld [vmem:[%s6604 + $0x38] sm:$0xff]
        %v6611 = vld [vmem:[%s6604 + $0x48] sm:$0xff]
        %v6612 = vld [vmem:[%s6604 + $0x50] sm:$0xff]
        %v6613 = vld [vmem:[%s6604 + $0x60] sm:$0xff]
        %v6614 = vld [vmem:[%s6604 + $0x68] sm:$0xff]
        %v6615 = vld [vmem:[%s6604 + $0x78] sm:$0xff]
        %v6616 = vld [vmem:[%s6604 + $0x80] sm:$0xff]
        %v6617 = vld [vmem:[%s6604 + $0x90] sm:$0xff]
        %v6618 = vld [vmem:[%s6604 + $0x98] sm:$0xff]
        %v6619 = vld [vmem:[%s6604 + $0xa8] sm:$0xff]
        %v6620 = vld [vmem:[%s6604 + $0xb0] sm:$0xff]
        %v6621 = vld [vmem:[%s6604 + $0xc0] sm:$0xff]
        %v6622 = vld [vmem:[%s6604 + $0xc8] sm:$0xff]
        %v6623 = vld [vmem:[%s6604 + $0xd8] sm:$0xff]
        %v6624 = vld [vmem:[%s6604 + $0xe0] sm:$0xff]
        %v6625 = vld [vmem:[%s6604 + $0xf0] sm:$0xff]
        %v6626 = vld [vmem:[%s6604 + $0xf8] sm:$0xff]
        %v6627 = vld [vmem:[%s6604 + $0x108] sm:$0xff]
        %v6628 = vld [vmem:[%s6604 + $0x110] sm:$0xff]
        %v6629 = vld [vmem:[%s6604 + $0x120] sm:$0xff]
        %v6630 = vld [vmem:[%s6604 + $0x128] sm:$0xff]
        %v6631 = vld [vmem:[%s6604 + $0x138] sm:$0xff]
        %v6632 = vld [vmem:[%s6604 + $0x140] sm:$0xff]
        %v6633 = vld [vmem:[%s6604 + $0x150] sm:$0xff]
        %v6634 = vld [vmem:[%s6604 + $0x158] sm:$0xff]
        %v6635 = vld [vmem:[%s6604 + $0x168] sm:$0xff]
        %v6636 = vld [vmem:[%s6604 + $0x170] sm:$0xff]
        %v6637 = vadd.f32 %v6572, %v6605
        %v6638 = vadd.f32 %v6573, %v6606
        %v6639 = vadd.f32 %v6574, %v6607
        %v6640 = vadd.f32 %v6575, %v6608
        %v6641 = vadd.f32 %v6576, %v6609
        %v6642 = vadd.f32 %v6577, %v6610
        %v6643 = vadd.f32 %v6578, %v6611
        %v6644 = vadd.f32 %v6579, %v6612
        %v6645 = vadd.f32 %v6580, %v6613
        %v6646 = vadd.f32 %v6581, %v6614
        %v6647 = vadd.f32 %v6582, %v6615
        %v6648 = vadd.f32 %v6583, %v6616
        %v6649 = vadd.f32 %v6584, %v6617
        %v6650 = vadd.f32 %v6585, %v6618
        %v6651 = vadd.f32 %v6586, %v6619
        %v6652 = vadd.f32 %v6587, %v6620
        %v6653 = vadd.f32 %v6588, %v6621
        %v6654 = vadd.f32 %v6589, %v6622
        %v6655 = vadd.f32 %v6590, %v6623
        %v6656 = vadd.f32 %v6591, %v6624
        %v6657 = vadd.f32 %v6592, %v6625
        %v6658 = vadd.f32 %v6593, %v6626
        %v6659 = vadd.f32 %v6594, %v6627
        %v6660 = vadd.f32 %v6595, %v6628
        %v6661 = vadd.f32 %v6596, %v6629
        %v6662 = vadd.f32 %v6597, %v6630
        %v6663 = vadd.f32 %v6598, %v6631
        %v6664 = vadd.f32 %v6599, %v6632
        %v6665 = vadd.f32 %v6600, %v6633
        %v6666 = vadd.f32 %v6601, %v6634
        %v6667 = vadd.f32 %v6602, %v6635
        %v6668 = vadd.f32 %v6603, %v6636
        %v6669 = vld [vmem:[%s6604 + $0x1] sm:$0xff]
        %v6670 = vld [vmem:[%s6604 + $0x9] sm:$0xff]
        %v6671 = vld [vmem:[%s6604 + $0x19] sm:$0xff]
        %v6672 = vld [vmem:[%s6604 + $0x21] sm:$0xff]
        %v6673 = vld [vmem:[%s6604 + $0x31] sm:$0xff]
        %v6674 = vld [vmem:[%s6604 + $0x39] sm:$0xff]
        %v6675 = vld [vmem:[%s6604 + $0x49] sm:$0xff]
        %v6676 = vld [vmem:[%s6604 + $0x51] sm:$0xff]
        %v6677 = vld [vmem:[%s6604 + $0x61] sm:$0xff]
        %v6678 = vld [vmem:[%s6604 + $0x69] sm:$0xff]
        %v6679 = vld [vmem:[%s6604 + $0x79] sm:$0xff]
        %v6680 = vld [vmem:[%s6604 + $0x81] sm:$0xff]
        %v6681 = vld [vmem:[%s6604 + $0x91] sm:$0xff]
        %v6682 = vld [vmem:[%s6604 + $0x99] sm:$0xff]
        %v6683 = vld [vmem:[%s6604 + $0xa9] sm:$0xff]
        %v6684 = vld [vmem:[%s6604 + $0xb1] sm:$0xff]
        %v6685 = vld [vmem:[%s6604 + $0xc1] sm:$0xff]
        %v6686 = vld [vmem:[%s6604 + $0xc9] sm:$0xff]
        %v6687 = vld [vmem:[%s6604 + $0xd9] sm:$0xff]
        %v6688 = vld [vmem:[%s6604 + $0xe1] sm:$0xff]
        %v6689 = vld [vmem:[%s6604 + $0xf1] sm:$0xff]
        %v6690 = vld [vmem:[%s6604 + $0xf9] sm:$0xff]
        %v6691 = vld [vmem:[%s6604 + $0x109] sm:$0xff]
        %v6692 = vld [vmem:[%s6604 + $0x111] sm:$0xff]
        %v6693 = vld [vmem:[%s6604 + $0x121] sm:$0xff]
        %v6694 = vld [vmem:[%s6604 + $0x129] sm:$0xff]
        %v6695 = vld [vmem:[%s6604 + $0x139] sm:$0xff]
        %v6696 = vld [vmem:[%s6604 + $0x141] sm:$0xff]
        %v6697 = vld [vmem:[%s6604 + $0x151] sm:$0xff]
        %v6698 = vld [vmem:[%s6604 + $0x159] sm:$0xff]
        %v6699 = vld [vmem:[%s6604 + $0x169] sm:$0xff]
        %v6700 = vld [vmem:[%s6604 + $0x171] sm:$0xff]
        %v6701 = vadd.f32 %v6637, %v6669
        %v6702 = vadd.f32 %v6638, %v6670
        %v6703 = vadd.f32 %v6639, %v6671
        %v6704 = vadd.f32 %v6640, %v6672
        %v6705 = vadd.f32 %v6641, %v6673
        %v6706 = vadd.f32 %v6642, %v6674
        %v6707 = vadd.f32 %v6643, %v6675
        %v6708 = vadd.f32 %v6644, %v6676
        %v6709 = vadd.f32 %v6645, %v6677
        %v6710 = vadd.f32 %v6646, %v6678
        %v6711 = vadd.f32 %v6647, %v6679
        %v6712 = vadd.f32 %v6648, %v6680
        %v6713 = vadd.f32 %v6649, %v6681
        %v6714 = vadd.f32 %v6650, %v6682
        %v6715 = vadd.f32 %v6651, %v6683
        %v6716 = vadd.f32 %v6652, %v6684
        %v6717 = vadd.f32 %v6653, %v6685
        %v6718 = vadd.f32 %v6654, %v6686
        %v6719 = vadd.f32 %v6655, %v6687
        %v6720 = vadd.f32 %v6656, %v6688
        %v6721 = vadd.f32 %v6657, %v6689
        %v6722 = vadd.f32 %v6658, %v6690
        %v6723 = vadd.f32 %v6659, %v6691
        %v6724 = vadd.f32 %v6660, %v6692
        %v6725 = vadd.f32 %v6661, %v6693
        %v6726 = vadd.f32 %v6662, %v6694
        %v6727 = vadd.f32 %v6663, %v6695
        %v6728 = vadd.f32 %v6664, %v6696
        %v6729 = vadd.f32 %v6665, %v6697
        %v6730 = vadd.f32 %v6666, %v6698
        %v6731 = vadd.f32 %v6667, %v6699
        %v6732 = vadd.f32 %v6668, %v6700
        %v6733 = vld [vmem:[%s6604 + $0x2] sm:$0xff]
        %v6734 = vld [vmem:[%s6604 + $0xa] sm:$0xff]
        %v6735 = vld [vmem:[%s6604 + $0x1a] sm:$0xff]
        %v6736 = vld [vmem:[%s6604 + $0x22] sm:$0xff]
        %v6737 = vld [vmem:[%s6604 + $0x32] sm:$0xff]
        %v6738 = vld [vmem:[%s6604 + $0x3a] sm:$0xff]
        %v6739 = vld [vmem:[%s6604 + $0x4a] sm:$0xff]
        %v6740 = vld [vmem:[%s6604 + $0x52] sm:$0xff]
        %v6741 = vld [vmem:[%s6604 + $0x62] sm:$0xff]
        %v6742 = vld [vmem:[%s6604 + $0x6a] sm:$0xff]
        %v6743 = vld [vmem:[%s6604 + $0x7a] sm:$0xff]
        %v6744 = vld [vmem:[%s6604 + $0x82] sm:$0xff]
        %v6745 = vld [vmem:[%s6604 + $0x92] sm:$0xff]
        %v6746 = vld [vmem:[%s6604 + $0x9a] sm:$0xff]
        %v6747 = vld [vmem:[%s6604 + $0xaa] sm:$0xff]
        %v6748 = vld [vmem:[%s6604 + $0xb2] sm:$0xff]
        %v6749 = vld [vmem:[%s6604 + $0xc2] sm:$0xff]
        %v6750 = vld [vmem:[%s6604 + $0xca] sm:$0xff]
        %v6751 = vld [vmem:[%s6604 + $0xda] sm:$0xff]
        %v6752 = vld [vmem:[%s6604 + $0xe2] sm:$0xff]
        %v6753 = vld [vmem:[%s6604 + $0xf2] sm:$0xff]
        %v6754 = vld [vmem:[%s6604 + $0xfa] sm:$0xff]
        %v6755 = vld [vmem:[%s6604 + $0x10a] sm:$0xff]
        %v6756 = vld [vmem:[%s6604 + $0x112] sm:$0xff]
        %v6757 = vld [vmem:[%s6604 + $0x122] sm:$0xff]
        %v6758 = vld [vmem:[%s6604 + $0x12a] sm:$0xff]
        %v6759 = vld [vmem:[%s6604 + $0x13a] sm:$0xff]
        %v6760 = vld [vmem:[%s6604 + $0x142] sm:$0xff]
        %v6761 = vld [vmem:[%s6604 + $0x152] sm:$0xff]
        %v6762 = vld [vmem:[%s6604 + $0x15a] sm:$0xff]
        %v6763 = vld [vmem:[%s6604 + $0x16a] sm:$0xff]
        %v6764 = vld [vmem:[%s6604 + $0x172] sm:$0xff]
        %v6765 = vadd.f32 %v6701, %v6733
        %v6766 = vadd.f32 %v6702, %v6734
        %v6767 = vadd.f32 %v6703, %v6735
        %v6768 = vadd.f32 %v6704, %v6736
        %v6769 = vadd.f32 %v6705, %v6737
        %v6770 = vadd.f32 %v6706, %v6738
        %v6771 = vadd.f32 %v6707, %v6739
        %v6772 = vadd.f32 %v6708, %v6740
        %v6773 = vadd.f32 %v6709, %v6741
        %v6774 = vadd.f32 %v6710, %v6742
        %v6775 = vadd.f32 %v6711, %v6743
        %v6776 = vadd.f32 %v6712, %v6744
        %v6777 = vadd.f32 %v6713, %v6745
        %v6778 = vadd.f32 %v6714, %v6746
        %v6779 = vadd.f32 %v6715, %v6747
        %v6780 = vadd.f32 %v6716, %v6748
        %v6781 = vadd.f32 %v6717, %v6749
        %v6782 = vadd.f32 %v6718, %v6750
        %v6783 = vadd.f32 %v6719, %v6751
        %v6784 = vadd.f32 %v6720, %v6752
        %v6785 = vadd.f32 %v6721, %v6753
        %v6786 = vadd.f32 %v6722, %v6754
        %v6787 = vadd.f32 %v6723, %v6755
        %v6788 = vadd.f32 %v6724, %v6756
        %v6789 = vadd.f32 %v6725, %v6757
        %v6790 = vadd.f32 %v6726, %v6758
        %v6791 = vadd.f32 %v6727, %v6759
        %v6792 = vadd.f32 %v6728, %v6760
        %v6793 = vadd.f32 %v6729, %v6761
        %v6794 = vadd.f32 %v6730, %v6762
        %v6795 = vadd.f32 %v6731, %v6763
        %v6796 = vadd.f32 %v6732, %v6764
        %6797 = vst.msk [vmem:[#allocation5] sm:$0xff] %vm418, 0.0
        %6798 = vst.msk [vmem:[#allocation5 + $0x8] sm:$0xff] %vm418, 0.0
        %6799 = vst.msk [vmem:[#allocation5 + $0x10] sm:$0x3] %vm421, 0.0
        %6800 = vst.msk [vmem:[#allocation5 + $0x18] sm:$0xff] %vm418, 0.0
        %6801 = vst.msk [vmem:[#allocation5 + $0x20] sm:$0xff] %vm418, 0.0
        %6802 = vst.msk [vmem:[#allocation5 + $0x28] sm:$0x3] %vm421, 0.0
        %6803 = vst.msk [vmem:[#allocation5 + $0x30] sm:$0xff] %vm418, 0.0
        %6804 = vst.msk [vmem:[#allocation5 + $0x38] sm:$0xff] %vm418, 0.0
        %6805 = vst.msk [vmem:[#allocation5 + $0x40] sm:$0x3] %vm421, 0.0
        %6806 = vst.msk [vmem:[#allocation5 + $0x48] sm:$0xff] %vm418, 0.0
        %6807 = vst.msk [vmem:[#allocation5 + $0x50] sm:$0xff] %vm418, 0.0
        %6808 = vst.msk [vmem:[#allocation5 + $0x58] sm:$0x3] %vm421, 0.0
        %6809 = vst.msk [vmem:[#allocation5 + $0x60] sm:$0xff] %vm418, 0.0
        %6810 = vst.msk [vmem:[#allocation5 + $0x68] sm:$0xff] %vm418, 0.0
        %6811 = vst.msk [vmem:[#allocation5 + $0x70] sm:$0x3] %vm421, 0.0
        %6812 = vst.msk [vmem:[#allocation5 + $0x78] sm:$0xff] %vm418, 0.0
        %6813 = vst.msk [vmem:[#allocation5 + $0x80] sm:$0xff] %vm418, 0.0
        %6814 = vst.msk [vmem:[#allocation5 + $0x88] sm:$0x3] %vm421, 0.0
        %6815 = vst.msk [vmem:[#allocation5 + $0x90] sm:$0xff] %vm418, 0.0
        %6816 = vst.msk [vmem:[#allocation5 + $0x98] sm:$0xff] %vm418, 0.0
        %6817 = vst.msk [vmem:[#allocation5 + $0xa0] sm:$0x3] %vm421, 0.0
        %6818 = vst.msk [vmem:[#allocation5 + $0xa8] sm:$0xff] %vm418, 0.0
        %6819 = vst.msk [vmem:[#allocation5 + $0xb0] sm:$0xff] %vm418, 0.0
        %6820 = vst.msk [vmem:[#allocation5 + $0xb8] sm:$0x3] %vm421, 0.0
        %6821 = vst.msk [vmem:[#allocation5 + $0xc0] sm:$0xff] %vm418, 0.0
        %6822 = vst.msk [vmem:[#allocation5 + $0xc8] sm:$0xff] %vm418, 0.0
        %6823 = vst.msk [vmem:[#allocation5 + $0xd0] sm:$0x3] %vm421, 0.0
        %6824 = vst.msk [vmem:[#allocation5 + $0xd8] sm:$0xff] %vm418, 0.0
        %6825 = vst.msk [vmem:[#allocation5 + $0xe0] sm:$0xff] %vm418, 0.0
        %6826 = vst.msk [vmem:[#allocation5 + $0xe8] sm:$0x3] %vm421, 0.0
        %6827 = vst.msk [vmem:[#allocation5 + $0xf0] sm:$0xff] %vm418, 0.0
        %6828 = vst.msk [vmem:[#allocation5 + $0xf8] sm:$0xff] %vm418, 0.0
        %6829 = vst.msk [vmem:[#allocation5 + $0x100] sm:$0x3] %vm421, 0.0
        %6830 = vst.msk [vmem:[#allocation5 + $0x108] sm:$0xff] %vm418, 0.0
        %6831 = vst.msk [vmem:[#allocation5 + $0x110] sm:$0xff] %vm418, 0.0
        %6832 = vst.msk [vmem:[#allocation5 + $0x118] sm:$0x3] %vm421, 0.0
        %6833 = vst.msk [vmem:[#allocation5 + $0x120] sm:$0xff] %vm418, 0.0
        %6834 = vst.msk [vmem:[#allocation5 + $0x128] sm:$0xff] %vm418, 0.0
        %6835 = vst.msk [vmem:[#allocation5 + $0x130] sm:$0x3] %vm421, 0.0
        %6836 = vst.msk [vmem:[#allocation5 + $0x138] sm:$0xff] %vm418, 0.0
        %6837 = vst.msk [vmem:[#allocation5 + $0x140] sm:$0xff] %vm418, 0.0
        %6838 = vst.msk [vmem:[#allocation5 + $0x148] sm:$0x3] %vm421, 0.0
        %6839 = vst.msk [vmem:[#allocation5 + $0x150] sm:$0xff] %vm418, 0.0
        %6840 = vst.msk [vmem:[#allocation5 + $0x158] sm:$0xff] %vm418, 0.0
        %6841 = vst.msk [vmem:[#allocation5 + $0x160] sm:$0x3] %vm421, 0.0
        %6842 = vst.msk [vmem:[#allocation5 + $0x168] sm:$0xff] %vm418, 0.0
        %6843 = vst.msk [vmem:[#allocation5 + $0x170] sm:$0xff] %vm418, 0.0
        %6844 = vst.msk [vmem:[#allocation5 + $0x178] sm:$0x3] %vm421, 0.0
        %6845 = vst.msk [vmem:[#allocation5 + $0x180] sm:$0xff] %vm418, 0.0
        %6846 = vst.msk [vmem:[#allocation5 + $0x188] sm:$0xff] %vm418, 0.0
        %6847 = vst.msk [vmem:[#allocation5 + $0x190] sm:$0x3] %vm421, 0.0
        %6848 = vst.msk [vmem:[#allocation5 + $0x198] sm:$0xff] %vm418, 0.0
        %6849 = vst.msk [vmem:[#allocation5 + $0x1a0] sm:$0xff] %vm418, 0.0
        %6850 = vst.msk [vmem:[#allocation5 + $0x1a8] sm:$0x3] %vm421, 0.0
        %v6851 = vmul.f32 %v6765, 0.11111111
        %v6852 = vmul.f32 %v6766, 0.11111111
        %v6853 = vmul.f32 %v6767, 0.11111111
        %v6854 = vmul.f32 %v6768, 0.11111111
        %v6855 = vmul.f32 %v6769, 0.11111111
        %v6856 = vmul.f32 %v6770, 0.11111111
        %v6857 = vmul.f32 %v6771, 0.11111111
        %v6858 = vmul.f32 %v6772, 0.11111111
        %v6859 = vmul.f32 %v6773, 0.11111111
        %v6860 = vmul.f32 %v6774, 0.11111111
        %v6861 = vmul.f32 %v6775, 0.11111111
        %v6862 = vmul.f32 %v6776, 0.11111111
        %v6863 = vmul.f32 %v6777, 0.11111111
        %v6864 = vmul.f32 %v6778, 0.11111111
        %v6865 = vmul.f32 %v6779, 0.11111111
        %v6866 = vmul.f32 %v6780, 0.11111111
        %v6867 = vmul.f32 %v6781, 0.11111111
        %v6868 = vmul.f32 %v6782, 0.11111111
        %v6869 = vmul.f32 %v6783, 0.11111111
        %v6870 = vmul.f32 %v6784, 0.11111111
        %v6871 = vmul.f32 %v6785, 0.11111111
        %v6872 = vmul.f32 %v6786, 0.11111111
        %v6873 = vmul.f32 %v6787, 0.11111111
        %v6874 = vmul.f32 %v6788, 0.11111111
        %v6875 = vmul.f32 %v6789, 0.11111111
        %v6876 = vmul.f32 %v6790, 0.11111111
        %v6877 = vmul.f32 %v6791, 0.11111111
        %v6878 = vmul.f32 %v6792, 0.11111111
        %v6879 = vmul.f32 %v6793, 0.11111111
        %v6880 = vmul.f32 %v6794, 0.11111111
        %v6881 = vmul.f32 %v6795, 0.11111111
        %v6882 = vmul.f32 %v6796, 0.11111111
        %s6883 = scalar_lea.vmem [#allocation5], 24
        %6884 = vst.msk [vmem:[%s6883 + $0x1] sm:$0xff] %vm418, %v6851
        %6885 = vst.msk [vmem:[%s6883 + $0x9] sm:$0xff] %vm418, %v6852
        %6886 = vst.msk [vmem:[%s6883 + $0x19] sm:$0xff] %vm418, %v6853
        %6887 = vst.msk [vmem:[%s6883 + $0x21] sm:$0xff] %vm418, %v6854
        %6888 = vst.msk [vmem:[%s6883 + $0x31] sm:$0xff] %vm418, %v6855
        %6889 = vst.msk [vmem:[%s6883 + $0x39] sm:$0xff] %vm418, %v6856
        %6890 = vst.msk [vmem:[%s6883 + $0x49] sm:$0xff] %vm418, %v6857
        %6891 = vst.msk [vmem:[%s6883 + $0x51] sm:$0xff] %vm418, %v6858
        %6892 = vst.msk [vmem:[%s6883 + $0x61] sm:$0xff] %vm418, %v6859
        %6893 = vst.msk [vmem:[%s6883 + $0x69] sm:$0xff] %vm418, %v6860
        %6894 = vst.msk [vmem:[%s6883 + $0x79] sm:$0xff] %vm418, %v6861
        %6895 = vst.msk [vmem:[%s6883 + $0x81] sm:$0xff] %vm418, %v6862
        %6896 = vst.msk [vmem:[%s6883 + $0x91] sm:$0xff] %vm418, %v6863
        %6897 = vst.msk [vmem:[%s6883 + $0x99] sm:$0xff] %vm418, %v6864
        %6898 = vst.msk [vmem:[%s6883 + $0xa9] sm:$0xff] %vm418, %v6865
        %6899 = vst.msk [vmem:[%s6883 + $0xb1] sm:$0xff] %vm418, %v6866
        %6900 = vst.msk [vmem:[%s6883 + $0xc1] sm:$0xff] %vm418, %v6867
        %6901 = vst.msk [vmem:[%s6883 + $0xc9] sm:$0xff] %vm418, %v6868
        %6902 = vst.msk [vmem:[%s6883 + $0xd9] sm:$0xff] %vm418, %v6869
        %6903 = vst.msk [vmem:[%s6883 + $0xe1] sm:$0xff] %vm418, %v6870
        %6904 = vst.msk [vmem:[%s6883 + $0xf1] sm:$0xff] %vm418, %v6871
        %6905 = vst.msk [vmem:[%s6883 + $0xf9] sm:$0xff] %vm418, %v6872
        %6906 = vst.msk [vmem:[%s6883 + $0x109] sm:$0xff] %vm418, %v6873
        %6907 = vst.msk [vmem:[%s6883 + $0x111] sm:$0xff] %vm418, %v6874
        %6908 = vst.msk [vmem:[%s6883 + $0x121] sm:$0xff] %vm418, %v6875
        %6909 = vst.msk [vmem:[%s6883 + $0x129] sm:$0xff] %vm418, %v6876
        %6910 = vst.msk [vmem:[%s6883 + $0x139] sm:$0xff] %vm418, %v6877
        %6911 = vst.msk [vmem:[%s6883 + $0x141] sm:$0xff] %vm418, %v6878
        %6912 = vst.msk [vmem:[%s6883 + $0x151] sm:$0xff] %vm418, %v6879
        %6913 = vst.msk [vmem:[%s6883 + $0x159] sm:$0xff] %vm418, %v6880
        %6914 = vst.msk [vmem:[%s6883 + $0x169] sm:$0xff] %vm418, %v6881
        %6915 = vst.msk [vmem:[%s6883 + $0x171] sm:$0xff] %vm418, %v6882
        %v6916 = vld [vmem:[#allocation5] sm:$0xff]
        %v6917 = vld [vmem:[#allocation5 + $0x8] sm:$0xff]
        %v6918 = vld [vmem:[#allocation5 + $0x18] sm:$0xff]
        %v6919 = vld [vmem:[#allocation5 + $0x20] sm:$0xff]
        %v6920 = vld [vmem:[#allocation5 + $0x30] sm:$0xff]
        %v6921 = vld [vmem:[#allocation5 + $0x38] sm:$0xff]
        %v6922 = vld [vmem:[#allocation5 + $0x48] sm:$0xff]
        %v6923 = vld [vmem:[#allocation5 + $0x50] sm:$0xff]
        %v6924 = vld [vmem:[#allocation5 + $0x60] sm:$0xff]
        %v6925 = vld [vmem:[#allocation5 + $0x68] sm:$0xff]
        %v6926 = vld [vmem:[#allocation5 + $0x78] sm:$0xff]
        %v6927 = vld [vmem:[#allocation5 + $0x80] sm:$0xff]
        %v6928 = vld [vmem:[#allocation5 + $0x90] sm:$0xff]
        %v6929 = vld [vmem:[#allocation5 + $0x98] sm:$0xff]
        %v6930 = vld [vmem:[#allocation5 + $0xa8] sm:$0xff]
        %v6931 = vld [vmem:[#allocation5 + $0xb0] sm:$0xff]
        %v6932 = vld [vmem:[#allocation5 + $0xc0] sm:$0xff]
        %v6933 = vld [vmem:[#allocation5 + $0xc8] sm:$0xff]
        %v6934 = vld [vmem:[#allocation5 + $0xd8] sm:$0xff]
        %v6935 = vld [vmem:[#allocation5 + $0xe0] sm:$0xff]
        %v6936 = vld [vmem:[#allocation5 + $0xf0] sm:$0xff]
        %v6937 = vld [vmem:[#allocation5 + $0xf8] sm:$0xff]
        %v6938 = vld [vmem:[#allocation5 + $0x108] sm:$0xff]
        %v6939 = vld [vmem:[#allocation5 + $0x110] sm:$0xff]
        %v6940 = vld [vmem:[#allocation5 + $0x120] sm:$0xff]
        %v6941 = vld [vmem:[#allocation5 + $0x128] sm:$0xff]
        %v6942 = vld [vmem:[#allocation5 + $0x138] sm:$0xff]
        %v6943 = vld [vmem:[#allocation5 + $0x140] sm:$0xff]
        %v6944 = vld [vmem:[#allocation5 + $0x150] sm:$0xff]
        %v6945 = vld [vmem:[#allocation5 + $0x158] sm:$0xff]
        %v6946 = vld [vmem:[#allocation5 + $0x168] sm:$0xff]
        %v6947 = vld [vmem:[#allocation5 + $0x170] sm:$0xff]
        %v6948 = vpack.c.bf16 %v6917, %v6916
        %v6949 = vpack.c.bf16 %v6919, %v6918
        %v6950 = vpack.c.bf16 %v6921, %v6920
        %v6951 = vpack.c.bf16 %v6923, %v6922
        %v6952 = vpack.c.bf16 %v6925, %v6924
        %v6953 = vpack.c.bf16 %v6927, %v6926
        %v6954 = vpack.c.bf16 %v6929, %v6928
        %v6955 = vpack.c.bf16 %v6931, %v6930
        %v6956 = vpack.c.bf16 %v6933, %v6932
        %v6957 = vpack.c.bf16 %v6935, %v6934
        %v6958 = vpack.c.bf16 %v6937, %v6936
        %v6959 = vpack.c.bf16 %v6939, %v6938
        %v6960 = vpack.c.bf16 %v6941, %v6940
        %v6961 = vpack.c.bf16 %v6943, %v6942
        %v6962 = vpack.c.bf16 %v6945, %v6944
        %v6963 = vpack.c.bf16 %v6947, %v6946
        %v6964 = vld [vmem:[%s9] sm:$0x3]
        %v6965 = vld [vmem:[#allocation5 + $0x1] sm:$0xff]
        %v6966 = vld [vmem:[#allocation5 + $0x9] sm:$0xff]
        %v6967 = vld [vmem:[#allocation5 + $0x19] sm:$0xff]
        %v6968 = vld [vmem:[#allocation5 + $0x21] sm:$0xff]
        %v6969 = vld [vmem:[#allocation5 + $0x31] sm:$0xff]
        %v6970 = vld [vmem:[#allocation5 + $0x39] sm:$0xff]
        %v6971 = vld [vmem:[#allocation5 + $0x49] sm:$0xff]
        %v6972 = vld [vmem:[#allocation5 + $0x51] sm:$0xff]
        %v6973 = vld [vmem:[#allocation5 + $0x61] sm:$0xff]
        %v6974 = vld [vmem:[#allocation5 + $0x69] sm:$0xff]
        %v6975 = vld [vmem:[#allocation5 + $0x79] sm:$0xff]
        %v6976 = vld [vmem:[#allocation5 + $0x81] sm:$0xff]
        %v6977 = vld [vmem:[#allocation5 + $0x91] sm:$0xff]
        %v6978 = vld [vmem:[#allocation5 + $0x99] sm:$0xff]
        %v6979 = vld [vmem:[#allocation5 + $0xa9] sm:$0xff]
        %v6980 = vld [vmem:[#allocation5 + $0xb1] sm:$0xff]
        %v6981 = vld [vmem:[#allocation5 + $0xc1] sm:$0xff]
        %v6982 = vld [vmem:[#allocation5 + $0xc9] sm:$0xff]
        %v6983 = vld [vmem:[#allocation5 + $0xd9] sm:$0xff]
        %v6984 = vld [vmem:[#allocation5 + $0xe1] sm:$0xff]
        %v6985 = vld [vmem:[#allocation5 + $0xf1] sm:$0xff]
        %v6986 = vld [vmem:[#allocation5 + $0xf9] sm:$0xff]
        %v6987 = vld [vmem:[#allocation5 + $0x109] sm:$0xff]
        %v6988 = vld [vmem:[#allocation5 + $0x111] sm:$0xff]
        %v6989 = vld [vmem:[#allocation5 + $0x121] sm:$0xff]
        %v6990 = vld [vmem:[#allocation5 + $0x129] sm:$0xff]
        %v6991 = vld [vmem:[#allocation5 + $0x139] sm:$0xff]
        %v6992 = vld [vmem:[#allocation5 + $0x141] sm:$0xff]
        %v6993 = vld [vmem:[#allocation5 + $0x151] sm:$0xff]
        %v6994 = vld [vmem:[#allocation5 + $0x159] sm:$0xff]
        %v6995 = vld [vmem:[#allocation5 + $0x169] sm:$0xff]
        %v6996 = vld [vmem:[#allocation5 + $0x171] sm:$0xff]
        %v6997 = vpack.c.bf16 %v6966, %v6965
        %v6998 = vpack.c.bf16 %v6968, %v6967
        %v6999 = vpack.c.bf16 %v6970, %v6969
        %v7000 = vpack.c.bf16 %v6972, %v6971
        %v7001 = vpack.c.bf16 %v6974, %v6973
        %v7002 = vpack.c.bf16 %v6976, %v6975
        %v7003 = vpack.c.bf16 %v6978, %v6977
        %v7004 = vpack.c.bf16 %v6980, %v6979
        %v7005 = vpack.c.bf16 %v6982, %v6981
        %v7006 = vpack.c.bf16 %v6984, %v6983
        %v7007 = vpack.c.bf16 %v6986, %v6985
        %v7008 = vpack.c.bf16 %v6988, %v6987
        %v7009 = vpack.c.bf16 %v6990, %v6989
        %v7010 = vpack.c.bf16 %v6992, %v6991
        %v7011 = vpack.c.bf16 %v6994, %v6993
        %v7012 = vpack.c.bf16 %v6996, %v6995
        %s7013 = scalar_lea.vmem %s9, 2
        %v7014 = vld [vmem:[%s7013] sm:$0x3]
        %v7016 = vsel %vm418, %v6997, 0
        %v7019 = vsel %vm418, %v6998, 0
        %v7022 = vsel %vm418, %v6999, 0
        %v7025 = vsel %vm418, %v7000, 0
        %v7028 = vsel %vm418, %v7001, 0
        %v7031 = vsel %vm418, %v7002, 0
        %v7034 = vsel %vm418, %v7003, 0
        %v7037 = vsel %vm418, %v7004, 0
        %v7040 = vsel %vm418, %v7005, 0
        %v7043 = vsel %vm418, %v7006, 0
        %v7046 = vsel %vm418, %v7007, 0
        %v7049 = vsel %vm418, %v7008, 0
        %v7052 = vsel %vm418, %v7009, 0
        %v7055 = vsel %vm418, %v7010, 0
        %v7058 = vsel %vm418, %v7011, 0
        %v7061 = vsel %vm418, %v7012, 0
        %v7064 = vsel %vm576, %v7014, 0
        %7066 = vmatpush.bf16.msra.mxu0 0
        %7067 = vmatpush.bf16.msra.mxu0 0
        %7068 = vmatpush.bf16.msra.mxu0 0
        %7069 = vmatpush.bf16.msra.mxu0 0
        %7070 = vmatpush.bf16.msra.mxu0 0
        %7071 = vmatpush.bf16.msra.mxu0 0
        %7072 = vmatpush.bf16.msra.mxu0 0
        %7073 = vmatpush.bf16.msra.mxu0 %v7064
        %7074 = vmatmul.bf16.gmra.mxu0 %v7016
        %v7075 = vpop.f32.mrf.mxu0
        %v7076 = vadd.f32 0.0, %v7075
        %v7077 = vpop.f32.mrf.mxu0
        %v7078 = vadd.f32 0.0, %v7077
        %7079 = vmatmul.bf16.gmra.mxu0 %v7019
        %v7080 = vpop.f32.mrf.mxu0
        %v7081 = vadd.f32 0.0, %v7080
        %v7082 = vpop.f32.mrf.mxu0
        %v7083 = vadd.f32 0.0, %v7082
        %7084 = vmatmul.bf16.gmra.mxu0 %v7022
        %v7085 = vpop.f32.mrf.mxu0
        %v7086 = vadd.f32 0.0, %v7085
        %v7087 = vpop.f32.mrf.mxu0
        %v7088 = vadd.f32 0.0, %v7087
        %7089 = vmatmul.bf16.gmra.mxu0 %v7025
        %v7090 = vpop.f32.mrf.mxu0
        %v7091 = vadd.f32 0.0, %v7090
        %v7092 = vpop.f32.mrf.mxu0
        %v7093 = vadd.f32 0.0, %v7092
        %7094 = vmatmul.bf16.gmra.mxu0 %v7028
        %v7095 = vpop.f32.mrf.mxu0
        %v7096 = vadd.f32 0.0, %v7095
        %v7097 = vpop.f32.mrf.mxu0
        %v7098 = vadd.f32 0.0, %v7097
        %7099 = vmatmul.bf16.gmra.mxu0 %v7031
        %v7100 = vpop.f32.mrf.mxu0
        %v7101 = vadd.f32 0.0, %v7100
        %v7102 = vpop.f32.mrf.mxu0
        %v7103 = vadd.f32 0.0, %v7102
        %7104 = vmatmul.bf16.gmra.mxu0 %v7034
        %v7105 = vpop.f32.mrf.mxu0
        %v7106 = vadd.f32 0.0, %v7105
        %v7107 = vpop.f32.mrf.mxu0
        %v7108 = vadd.f32 0.0, %v7107
        %7109 = vmatmul.bf16.gmra.mxu0 %v7037
        %v7110 = vpop.f32.mrf.mxu0
        %v7111 = vadd.f32 0.0, %v7110
        %v7112 = vpop.f32.mrf.mxu0
        %v7113 = vadd.f32 0.0, %v7112
        %7114 = vmatmul.bf16.gmra.mxu0 %v7040
        %v7115 = vpop.f32.mrf.mxu0
        %v7116 = vadd.f32 0.0, %v7115
        %v7117 = vpop.f32.mrf.mxu0
        %v7118 = vadd.f32 0.0, %v7117
        %7119 = vmatmul.bf16.gmra.mxu0 %v7043
        %v7120 = vpop.f32.mrf.mxu0
        %v7121 = vadd.f32 0.0, %v7120
        %v7122 = vpop.f32.mrf.mxu0
        %v7123 = vadd.f32 0.0, %v7122
        %7124 = vmatmul.bf16.gmra.mxu0 %v7046
        %v7125 = vpop.f32.mrf.mxu0
        %v7126 = vadd.f32 0.0, %v7125
        %v7127 = vpop.f32.mrf.mxu0
        %v7128 = vadd.f32 0.0, %v7127
        %7129 = vmatmul.bf16.gmra.mxu0 %v7049
        %v7130 = vpop.f32.mrf.mxu0
        %v7131 = vadd.f32 0.0, %v7130
        %v7132 = vpop.f32.mrf.mxu0
        %v7133 = vadd.f32 0.0, %v7132
        %7134 = vmatmul.bf16.gmra.mxu0 %v7052
        %v7135 = vpop.f32.mrf.mxu0
        %v7136 = vadd.f32 0.0, %v7135
        %v7137 = vpop.f32.mrf.mxu0
        %v7138 = vadd.f32 0.0, %v7137
        %7139 = vmatmul.bf16.gmra.mxu0 %v7055
        %v7140 = vpop.f32.mrf.mxu0
        %v7141 = vadd.f32 0.0, %v7140
        %v7142 = vpop.f32.mrf.mxu0
        %v7143 = vadd.f32 0.0, %v7142
        %7144 = vmatmul.bf16.gmra.mxu0 %v7058
        %v7145 = vpop.f32.mrf.mxu0
        %v7146 = vadd.f32 0.0, %v7145
        %v7147 = vpop.f32.mrf.mxu0
        %v7148 = vadd.f32 0.0, %v7147
        %7149 = vmatmul.bf16.gmra.mxu0 %v7061
        %v7150 = vpop.f32.mrf.mxu0
        %v7151 = vadd.f32 0.0, %v7150
        %v7152 = vpop.f32.mrf.mxu0
        %v7153 = vadd.f32 0.0, %v7152
        %7154 = vdwg.mxu0
        %v7156 = vsel %vm418, %v6948, 0
        %v7159 = vsel %vm418, %v6949, 0
        %v7162 = vsel %vm418, %v6950, 0
        %v7165 = vsel %vm418, %v6951, 0
        %v7168 = vsel %vm418, %v6952, 0
        %v7171 = vsel %vm418, %v6953, 0
        %v7174 = vsel %vm418, %v6954, 0
        %v7177 = vsel %vm418, %v6955, 0
        %v7180 = vsel %vm418, %v6956, 0
        %v7183 = vsel %vm418, %v6957, 0
        %v7186 = vsel %vm418, %v6958, 0
        %v7189 = vsel %vm418, %v6959, 0
        %v7192 = vsel %vm418, %v6960, 0
        %v7195 = vsel %vm418, %v6961, 0
        %v7198 = vsel %vm418, %v6962, 0
        %v7201 = vsel %vm418, %v6963, 0
        %v7204 = vsel %vm576, %v6964, 0
        %7206 = vmatpush.bf16.msra.mxu0 0
        %7207 = vmatpush.bf16.msra.mxu0 0
        %7208 = vmatpush.bf16.msra.mxu0 0
        %7209 = vmatpush.bf16.msra.mxu0 0
        %7210 = vmatpush.bf16.msra.mxu0 0
        %7211 = vmatpush.bf16.msra.mxu0 0
        %7212 = vmatpush.bf16.msra.mxu0 0
        %7213 = vmatpush.bf16.msra.mxu0 %v7204
        %7214 = vmatmul.bf16.gmra.mxu0 %v7156
        %v7215 = vpop.f32.mrf.mxu0
        %v7216 = vadd.f32 %v7076, %v7215
        %v7217 = vpop.f32.mrf.mxu0
        %v7218 = vadd.f32 %v7078, %v7217
        %7219 = vmatmul.bf16.gmra.mxu0 %v7159
        %v7220 = vpop.f32.mrf.mxu0
        %v7221 = vadd.f32 %v7081, %v7220
        %v7222 = vpop.f32.mrf.mxu0
        %v7223 = vadd.f32 %v7083, %v7222
        %7224 = vmatmul.bf16.gmra.mxu0 %v7162
        %v7225 = vpop.f32.mrf.mxu0
        %v7226 = vadd.f32 %v7086, %v7225
        %v7227 = vpop.f32.mrf.mxu0
        %v7228 = vadd.f32 %v7088, %v7227
        %7229 = vmatmul.bf16.gmra.mxu0 %v7165
        %v7230 = vpop.f32.mrf.mxu0
        %v7231 = vadd.f32 %v7091, %v7230
        %v7232 = vpop.f32.mrf.mxu0
        %v7233 = vadd.f32 %v7093, %v7232
        %7234 = vmatmul.bf16.gmra.mxu0 %v7168
        %v7235 = vpop.f32.mrf.mxu0
        %v7236 = vadd.f32 %v7096, %v7235
        %v7237 = vpop.f32.mrf.mxu0
        %v7238 = vadd.f32 %v7098, %v7237
        %7239 = vmatmul.bf16.gmra.mxu0 %v7171
        %v7240 = vpop.f32.mrf.mxu0
        %v7241 = vadd.f32 %v7101, %v7240
        %v7242 = vpop.f32.mrf.mxu0
        %v7243 = vadd.f32 %v7103, %v7242
        %7244 = vmatmul.bf16.gmra.mxu0 %v7174
        %v7245 = vpop.f32.mrf.mxu0
        %v7246 = vadd.f32 %v7106, %v7245
        %v7247 = vpop.f32.mrf.mxu0
        %v7248 = vadd.f32 %v7108, %v7247
        %7249 = vmatmul.bf16.gmra.mxu0 %v7177
        %v7250 = vpop.f32.mrf.mxu0
        %v7251 = vadd.f32 %v7111, %v7250
        %v7252 = vpop.f32.mrf.mxu0
        %v7253 = vadd.f32 %v7113, %v7252
        %7254 = vmatmul.bf16.gmra.mxu0 %v7180
        %v7255 = vpop.f32.mrf.mxu0
        %v7256 = vadd.f32 %v7116, %v7255
        %v7257 = vpop.f32.mrf.mxu0
        %v7258 = vadd.f32 %v7118, %v7257
        %7259 = vmatmul.bf16.gmra.mxu0 %v7183
        %v7260 = vpop.f32.mrf.mxu0
        %v7261 = vadd.f32 %v7121, %v7260
        %v7262 = vpop.f32.mrf.mxu0
        %v7263 = vadd.f32 %v7123, %v7262
        %7264 = vmatmul.bf16.gmra.mxu0 %v7186
        %v7265 = vpop.f32.mrf.mxu0
        %v7266 = vadd.f32 %v7126, %v7265
        %v7267 = vpop.f32.mrf.mxu0
        %v7268 = vadd.f32 %v7128, %v7267
        %7269 = vmatmul.bf16.gmra.mxu0 %v7189
        %v7270 = vpop.f32.mrf.mxu0
        %v7271 = vadd.f32 %v7131, %v7270
        %v7272 = vpop.f32.mrf.mxu0
        %v7273 = vadd.f32 %v7133, %v7272
        %7274 = vmatmul.bf16.gmra.mxu0 %v7192
        %v7275 = vpop.f32.mrf.mxu0
        %v7276 = vadd.f32 %v7136, %v7275
        %v7277 = vpop.f32.mrf.mxu0
        %v7278 = vadd.f32 %v7138, %v7277
        %7279 = vmatmul.bf16.gmra.mxu0 %v7195
        %v7280 = vpop.f32.mrf.mxu0
        %v7281 = vadd.f32 %v7141, %v7280
        %v7282 = vpop.f32.mrf.mxu0
        %v7283 = vadd.f32 %v7143, %v7282
        %7284 = vmatmul.bf16.gmra.mxu0 %v7198
        %v7285 = vpop.f32.mrf.mxu0
        %v7286 = vadd.f32 %v7146, %v7285
        %v7287 = vpop.f32.mrf.mxu0
        %v7288 = vadd.f32 %v7148, %v7287
        %7289 = vmatmul.bf16.gmra.mxu0 %v7201
        %v7290 = vpop.f32.mrf.mxu0
        %v7291 = vadd.f32 %v7151, %v7290
        %v7292 = vpop.f32.mrf.mxu0
        %v7293 = vadd.f32 %v7153, %v7292
        %7294 = vdwg.mxu0
        %v7295 = vld [vmem:[#allocation5 + $0x2] sm:$0xff]
        %v7296 = vld [vmem:[#allocation5 + $0xa] sm:$0xff]
        %v7297 = vld [vmem:[#allocation5 + $0x1a] sm:$0xff]
        %v7298 = vld [vmem:[#allocation5 + $0x22] sm:$0xff]
        %v7299 = vld [vmem:[#allocation5 + $0x32] sm:$0xff]
        %v7300 = vld [vmem:[#allocation5 + $0x3a] sm:$0xff]
        %v7301 = vld [vmem:[#allocation5 + $0x4a] sm:$0xff]
        %v7302 = vld [vmem:[#allocation5 + $0x52] sm:$0xff]
        %v7303 = vld [vmem:[#allocation5 + $0x62] sm:$0xff]
        %v7304 = vld [vmem:[#allocation5 + $0x6a] sm:$0xff]
        %v7305 = vld [vmem:[#allocation5 + $0x7a] sm:$0xff]
        %v7306 = vld [vmem:[#allocation5 + $0x82] sm:$0xff]
        %v7307 = vld [vmem:[#allocation5 + $0x92] sm:$0xff]
        %v7308 = vld [vmem:[#allocation5 + $0x9a] sm:$0xff]
        %v7309 = vld [vmem:[#allocation5 + $0xaa] sm:$0xff]
        %v7310 = vld [vmem:[#allocation5 + $0xb2] sm:$0xff]
        %v7311 = vld [vmem:[#allocation5 + $0xc2] sm:$0xff]
        %v7312 = vld [vmem:[#allocation5 + $0xca] sm:$0xff]
        %v7313 = vld [vmem:[#allocation5 + $0xda] sm:$0xff]
        %v7314 = vld [vmem:[#allocation5 + $0xe2] sm:$0xff]
        %v7315 = vld [vmem:[#allocation5 + $0xf2] sm:$0xff]
        %v7316 = vld [vmem:[#allocation5 + $0xfa] sm:$0xff]
        %v7317 = vld [vmem:[#allocation5 + $0x10a] sm:$0xff]
        %v7318 = vld [vmem:[#allocation5 + $0x112] sm:$0xff]
        %v7319 = vld [vmem:[#allocation5 + $0x122] sm:$0xff]
        %v7320 = vld [vmem:[#allocation5 + $0x12a] sm:$0xff]
        %v7321 = vld [vmem:[#allocation5 + $0x13a] sm:$0xff]
        %v7322 = vld [vmem:[#allocation5 + $0x142] sm:$0xff]
        %v7323 = vld [vmem:[#allocation5 + $0x152] sm:$0xff]
        %v7324 = vld [vmem:[#allocation5 + $0x15a] sm:$0xff]
        %v7325 = vld [vmem:[#allocation5 + $0x16a] sm:$0xff]
        %v7326 = vld [vmem:[#allocation5 + $0x172] sm:$0xff]
        %v7327 = vpack.c.bf16 %v7296, %v7295
        %v7328 = vpack.c.bf16 %v7298, %v7297
        %v7329 = vpack.c.bf16 %v7300, %v7299
        %v7330 = vpack.c.bf16 %v7302, %v7301
        %v7331 = vpack.c.bf16 %v7304, %v7303
        %v7332 = vpack.c.bf16 %v7306, %v7305
        %v7333 = vpack.c.bf16 %v7308, %v7307
        %v7334 = vpack.c.bf16 %v7310, %v7309
        %v7335 = vpack.c.bf16 %v7312, %v7311
        %v7336 = vpack.c.bf16 %v7314, %v7313
        %v7337 = vpack.c.bf16 %v7316, %v7315
        %v7338 = vpack.c.bf16 %v7318, %v7317
        %v7339 = vpack.c.bf16 %v7320, %v7319
        %v7340 = vpack.c.bf16 %v7322, %v7321
        %v7341 = vpack.c.bf16 %v7324, %v7323
        %v7342 = vpack.c.bf16 %v7326, %v7325
        %s7343 = scalar_lea.vmem %s9, 4
        %v7344 = vld [vmem:[%s7343] sm:$0x3]
        %v7346 = vsel %vm418, %v7327, 0
        %v7349 = vsel %vm418, %v7328, 0
        %v7352 = vsel %vm418, %v7329, 0
        %v7355 = vsel %vm418, %v7330, 0
        %v7358 = vsel %vm418, %v7331, 0
        %v7361 = vsel %vm418, %v7332, 0
        %v7364 = vsel %vm418, %v7333, 0
        %v7367 = vsel %vm418, %v7334, 0
        %v7370 = vsel %vm418, %v7335, 0
        %v7373 = vsel %vm418, %v7336, 0
        %v7376 = vsel %vm418, %v7337, 0
        %v7379 = vsel %vm418, %v7338, 0
        %v7382 = vsel %vm418, %v7339, 0
        %v7385 = vsel %vm418, %v7340, 0
        %v7388 = vsel %vm418, %v7341, 0
        %v7391 = vsel %vm418, %v7342, 0
        %v7394 = vsel %vm576, %v7344, 0
        %7396 = vmatpush.bf16.msra.mxu0 0
        %7397 = vmatpush.bf16.msra.mxu0 0
        %7398 = vmatpush.bf16.msra.mxu0 0
        %7399 = vmatpush.bf16.msra.mxu0 0
        %7400 = vmatpush.bf16.msra.mxu0 0
        %7401 = vmatpush.bf16.msra.mxu0 0
        %7402 = vmatpush.bf16.msra.mxu0 0
        %7403 = vmatpush.bf16.msra.mxu0 %v7394
        %7404 = vmatmul.bf16.gmra.mxu0 %v7346
        %v7405 = vpop.f32.mrf.mxu0
        %v7406 = vadd.f32 0.0, %v7405
        %v7407 = vpop.f32.mrf.mxu0
        %v7408 = vadd.f32 0.0, %v7407
        %7409 = vmatmul.bf16.gmra.mxu0 %v7349
        %v7410 = vpop.f32.mrf.mxu0
        %v7411 = vadd.f32 0.0, %v7410
        %v7412 = vpop.f32.mrf.mxu0
        %v7413 = vadd.f32 0.0, %v7412
        %7414 = vmatmul.bf16.gmra.mxu0 %v7352
        %v7415 = vpop.f32.mrf.mxu0
        %v7416 = vadd.f32 0.0, %v7415
        %v7417 = vpop.f32.mrf.mxu0
        %v7418 = vadd.f32 0.0, %v7417
        %7419 = vmatmul.bf16.gmra.mxu0 %v7355
        %v7420 = vpop.f32.mrf.mxu0
        %v7421 = vadd.f32 0.0, %v7420
        %v7422 = vpop.f32.mrf.mxu0
        %v7423 = vadd.f32 0.0, %v7422
        %7424 = vmatmul.bf16.gmra.mxu0 %v7358
        %v7425 = vpop.f32.mrf.mxu0
        %v7426 = vadd.f32 0.0, %v7425
        %v7427 = vpop.f32.mrf.mxu0
        %v7428 = vadd.f32 0.0, %v7427
        %7429 = vmatmul.bf16.gmra.mxu0 %v7361
        %v7430 = vpop.f32.mrf.mxu0
        %v7431 = vadd.f32 0.0, %v7430
        %v7432 = vpop.f32.mrf.mxu0
        %v7433 = vadd.f32 0.0, %v7432
        %7434 = vmatmul.bf16.gmra.mxu0 %v7364
        %v7435 = vpop.f32.mrf.mxu0
        %v7436 = vadd.f32 0.0, %v7435
        %v7437 = vpop.f32.mrf.mxu0
        %v7438 = vadd.f32 0.0, %v7437
        %7439 = vmatmul.bf16.gmra.mxu0 %v7367
        %v7440 = vpop.f32.mrf.mxu0
        %v7441 = vadd.f32 0.0, %v7440
        %v7442 = vpop.f32.mrf.mxu0
        %v7443 = vadd.f32 0.0, %v7442
        %7444 = vmatmul.bf16.gmra.mxu0 %v7370
        %v7445 = vpop.f32.mrf.mxu0
        %v7446 = vadd.f32 0.0, %v7445
        %v7447 = vpop.f32.mrf.mxu0
        %v7448 = vadd.f32 0.0, %v7447
        %7449 = vmatmul.bf16.gmra.mxu0 %v7373
        %v7450 = vpop.f32.mrf.mxu0
        %v7451 = vadd.f32 0.0, %v7450
        %v7452 = vpop.f32.mrf.mxu0
        %v7453 = vadd.f32 0.0, %v7452
        %7454 = vmatmul.bf16.gmra.mxu0 %v7376
        %v7455 = vpop.f32.mrf.mxu0
        %v7456 = vadd.f32 0.0, %v7455
        %v7457 = vpop.f32.mrf.mxu0
        %v7458 = vadd.f32 0.0, %v7457
        %7459 = vmatmul.bf16.gmra.mxu0 %v7379
        %v7460 = vpop.f32.mrf.mxu0
        %v7461 = vadd.f32 0.0, %v7460
        %v7462 = vpop.f32.mrf.mxu0
        %v7463 = vadd.f32 0.0, %v7462
        %7464 = vmatmul.bf16.gmra.mxu0 %v7382
        %v7465 = vpop.f32.mrf.mxu0
        %v7466 = vadd.f32 0.0, %v7465
        %v7467 = vpop.f32.mrf.mxu0
        %v7468 = vadd.f32 0.0, %v7467
        %7469 = vmatmul.bf16.gmra.mxu0 %v7385
        %v7470 = vpop.f32.mrf.mxu0
        %v7471 = vadd.f32 0.0, %v7470
        %v7472 = vpop.f32.mrf.mxu0
        %v7473 = vadd.f32 0.0, %v7472
        %7474 = vmatmul.bf16.gmra.mxu0 %v7388
        %v7475 = vpop.f32.mrf.mxu0
        %v7476 = vadd.f32 0.0, %v7475
        %v7477 = vpop.f32.mrf.mxu0
        %v7478 = vadd.f32 0.0, %v7477
        %7479 = vmatmul.bf16.gmra.mxu0 %v7391
        %v7480 = vpop.f32.mrf.mxu0
        %v7481 = vadd.f32 0.0, %v7480
        %v7482 = vpop.f32.mrf.mxu0
        %v7483 = vadd.f32 0.0, %v7482
        %7484 = vdwg.mxu0
        %v7485 = vadd.f32 %v7216, %v7406
        %v7486 = vadd.f32 %v7218, %v7408
        %v7487 = vadd.f32 %v7221, %v7411
        %v7488 = vadd.f32 %v7223, %v7413
        %v7489 = vadd.f32 %v7226, %v7416
        %v7490 = vadd.f32 %v7228, %v7418
        %v7491 = vadd.f32 %v7231, %v7421
        %v7492 = vadd.f32 %v7233, %v7423
        %v7493 = vadd.f32 %v7236, %v7426
        %v7494 = vadd.f32 %v7238, %v7428
        %v7495 = vadd.f32 %v7241, %v7431
        %v7496 = vadd.f32 %v7243, %v7433
        %v7497 = vadd.f32 %v7246, %v7436
        %v7498 = vadd.f32 %v7248, %v7438
        %v7499 = vadd.f32 %v7251, %v7441
        %v7500 = vadd.f32 %v7253, %v7443
        %v7501 = vadd.f32 %v7256, %v7446
        %v7502 = vadd.f32 %v7258, %v7448
        %v7503 = vadd.f32 %v7261, %v7451
        %v7504 = vadd.f32 %v7263, %v7453
        %v7505 = vadd.f32 %v7266, %v7456
        %v7506 = vadd.f32 %v7268, %v7458
        %v7507 = vadd.f32 %v7271, %v7461
        %v7508 = vadd.f32 %v7273, %v7463
        %v7509 = vadd.f32 %v7276, %v7466
        %v7510 = vadd.f32 %v7278, %v7468
        %v7511 = vadd.f32 %v7281, %v7471
        %v7512 = vadd.f32 %v7283, %v7473
        %v7513 = vadd.f32 %v7286, %v7476
        %v7514 = vadd.f32 %v7288, %v7478
        %v7515 = vadd.f32 %v7291, %v7481
        %v7516 = vadd.f32 %v7293, %v7483
        %v7517 = vld [vmem:[%s6883] sm:$0xff]
        %v7518 = vld [vmem:[%s6883 + $0x8] sm:$0xff]
        %v7519 = vld [vmem:[%s6883 + $0x18] sm:$0xff]
        %v7520 = vld [vmem:[%s6883 + $0x20] sm:$0xff]
        %v7521 = vld [vmem:[%s6883 + $0x30] sm:$0xff]
        %v7522 = vld [vmem:[%s6883 + $0x38] sm:$0xff]
        %v7523 = vld [vmem:[%s6883 + $0x48] sm:$0xff]
        %v7524 = vld [vmem:[%s6883 + $0x50] sm:$0xff]
        %v7525 = vld [vmem:[%s6883 + $0x60] sm:$0xff]
        %v7526 = vld [vmem:[%s6883 + $0x68] sm:$0xff]
        %v7527 = vld [vmem:[%s6883 + $0x78] sm:$0xff]
        %v7528 = vld [vmem:[%s6883 + $0x80] sm:$0xff]
        %v7529 = vld [vmem:[%s6883 + $0x90] sm:$0xff]
        %v7530 = vld [vmem:[%s6883 + $0x98] sm:$0xff]
        %v7531 = vld [vmem:[%s6883 + $0xa8] sm:$0xff]
        %v7532 = vld [vmem:[%s6883 + $0xb0] sm:$0xff]
        %v7533 = vld [vmem:[%s6883 + $0xc0] sm:$0xff]
        %v7534 = vld [vmem:[%s6883 + $0xc8] sm:$0xff]
        %v7535 = vld [vmem:[%s6883 + $0xd8] sm:$0xff]
        %v7536 = vld [vmem:[%s6883 + $0xe0] sm:$0xff]
        %v7537 = vld [vmem:[%s6883 + $0xf0] sm:$0xff]
        %v7538 = vld [vmem:[%s6883 + $0xf8] sm:$0xff]
        %v7539 = vld [vmem:[%s6883 + $0x108] sm:$0xff]
        %v7540 = vld [vmem:[%s6883 + $0x110] sm:$0xff]
        %v7541 = vld [vmem:[%s6883 + $0x120] sm:$0xff]
        %v7542 = vld [vmem:[%s6883 + $0x128] sm:$0xff]
        %v7543 = vld [vmem:[%s6883 + $0x138] sm:$0xff]
        %v7544 = vld [vmem:[%s6883 + $0x140] sm:$0xff]
        %v7545 = vld [vmem:[%s6883 + $0x150] sm:$0xff]
        %v7546 = vld [vmem:[%s6883 + $0x158] sm:$0xff]
        %v7547 = vld [vmem:[%s6883 + $0x168] sm:$0xff]
        %v7548 = vld [vmem:[%s6883 + $0x170] sm:$0xff]
        %v7549 = vpack.c.bf16 %v7518, %v7517
        %v7550 = vpack.c.bf16 %v7520, %v7519
        %v7551 = vpack.c.bf16 %v7522, %v7521
        %v7552 = vpack.c.bf16 %v7524, %v7523
        %v7553 = vpack.c.bf16 %v7526, %v7525
        %v7554 = vpack.c.bf16 %v7528, %v7527
        %v7555 = vpack.c.bf16 %v7530, %v7529
        %v7556 = vpack.c.bf16 %v7532, %v7531
        %v7557 = vpack.c.bf16 %v7534, %v7533
        %v7558 = vpack.c.bf16 %v7536, %v7535
        %v7559 = vpack.c.bf16 %v7538, %v7537
        %v7560 = vpack.c.bf16 %v7540, %v7539
        %v7561 = vpack.c.bf16 %v7542, %v7541
        %v7562 = vpack.c.bf16 %v7544, %v7543
        %v7563 = vpack.c.bf16 %v7546, %v7545
        %v7564 = vpack.c.bf16 %v7548, %v7547
        %s7565 = scalar_lea.vmem %s9, 6
        %v7566 = vld [vmem:[%s7565] sm:$0x3]
        %v7568 = vsel %vm418, %v7549, 0
        %v7571 = vsel %vm418, %v7550, 0
        %v7574 = vsel %vm418, %v7551, 0
        %v7577 = vsel %vm418, %v7552, 0
        %v7580 = vsel %vm418, %v7553, 0
        %v7583 = vsel %vm418, %v7554, 0
        %v7586 = vsel %vm418, %v7555, 0
        %v7589 = vsel %vm418, %v7556, 0
        %v7592 = vsel %vm418, %v7557, 0
        %v7595 = vsel %vm418, %v7558, 0
        %v7598 = vsel %vm418, %v7559, 0
        %v7601 = vsel %vm418, %v7560, 0
        %v7604 = vsel %vm418, %v7561, 0
        %v7607 = vsel %vm418, %v7562, 0
        %v7610 = vsel %vm418, %v7563, 0
        %v7613 = vsel %vm418, %v7564, 0
        %v7616 = vsel %vm576, %v7566, 0
        %7618 = vmatpush.bf16.msra.mxu0 0
        %7619 = vmatpush.bf16.msra.mxu0 0
        %7620 = vmatpush.bf16.msra.mxu0 0
        %7621 = vmatpush.bf16.msra.mxu0 0
        %7622 = vmatpush.bf16.msra.mxu0 0
        %7623 = vmatpush.bf16.msra.mxu0 0
        %7624 = vmatpush.bf16.msra.mxu0 0
        %7625 = vmatpush.bf16.msra.mxu0 %v7616
        %7626 = vmatmul.bf16.gmra.mxu0 %v7568
        %v7627 = vpop.f32.mrf.mxu0
        %v7628 = vadd.f32 0.0, %v7627
        %v7629 = vpop.f32.mrf.mxu0
        %v7630 = vadd.f32 0.0, %v7629
        %7631 = vmatmul.bf16.gmra.mxu0 %v7571
        %v7632 = vpop.f32.mrf.mxu0
        %v7633 = vadd.f32 0.0, %v7632
        %v7634 = vpop.f32.mrf.mxu0
        %v7635 = vadd.f32 0.0, %v7634
        %7636 = vmatmul.bf16.gmra.mxu0 %v7574
        %v7637 = vpop.f32.mrf.mxu0
        %v7638 = vadd.f32 0.0, %v7637
        %v7639 = vpop.f32.mrf.mxu0
        %v7640 = vadd.f32 0.0, %v7639
        %7641 = vmatmul.bf16.gmra.mxu0 %v7577
        %v7642 = vpop.f32.mrf.mxu0
        %v7643 = vadd.f32 0.0, %v7642
        %v7644 = vpop.f32.mrf.mxu0
        %v7645 = vadd.f32 0.0, %v7644
        %7646 = vmatmul.bf16.gmra.mxu0 %v7580
        %v7647 = vpop.f32.mrf.mxu0
        %v7648 = vadd.f32 0.0, %v7647
        %v7649 = vpop.f32.mrf.mxu0
        %v7650 = vadd.f32 0.0, %v7649
        %7651 = vmatmul.bf16.gmra.mxu0 %v7583
        %v7652 = vpop.f32.mrf.mxu0
        %v7653 = vadd.f32 0.0, %v7652
        %v7654 = vpop.f32.mrf.mxu0
        %v7655 = vadd.f32 0.0, %v7654
        %7656 = vmatmul.bf16.gmra.mxu0 %v7586
        %v7657 = vpop.f32.mrf.mxu0
        %v7658 = vadd.f32 0.0, %v7657
        %v7659 = vpop.f32.mrf.mxu0
        %v7660 = vadd.f32 0.0, %v7659
        %7661 = vmatmul.bf16.gmra.mxu0 %v7589
        %v7662 = vpop.f32.mrf.mxu0
        %v7663 = vadd.f32 0.0, %v7662
        %v7664 = vpop.f32.mrf.mxu0
        %v7665 = vadd.f32 0.0, %v7664
        %7666 = vmatmul.bf16.gmra.mxu0 %v7592
        %v7667 = vpop.f32.mrf.mxu0
        %v7668 = vadd.f32 0.0, %v7667
        %v7669 = vpop.f32.mrf.mxu0
        %v7670 = vadd.f32 0.0, %v7669
        %7671 = vmatmul.bf16.gmra.mxu0 %v7595
        %v7672 = vpop.f32.mrf.mxu0
        %v7673 = vadd.f32 0.0, %v7672
        %v7674 = vpop.f32.mrf.mxu0
        %v7675 = vadd.f32 0.0, %v7674
        %7676 = vmatmul.bf16.gmra.mxu0 %v7598
        %v7677 = vpop.f32.mrf.mxu0
        %v7678 = vadd.f32 0.0, %v7677
        %v7679 = vpop.f32.mrf.mxu0
        %v7680 = vadd.f32 0.0, %v7679
        %7681 = vmatmul.bf16.gmra.mxu0 %v7601
        %v7682 = vpop.f32.mrf.mxu0
        %v7683 = vadd.f32 0.0, %v7682
        %v7684 = vpop.f32.mrf.mxu0
        %v7685 = vadd.f32 0.0, %v7684
        %7686 = vmatmul.bf16.gmra.mxu0 %v7604
        %v7687 = vpop.f32.mrf.mxu0
        %v7688 = vadd.f32 0.0, %v7687
        %v7689 = vpop.f32.mrf.mxu0
        %v7690 = vadd.f32 0.0, %v7689
        %7691 = vmatmul.bf16.gmra.mxu0 %v7607
        %v7692 = vpop.f32.mrf.mxu0
        %v7693 = vadd.f32 0.0, %v7692
        %v7694 = vpop.f32.mrf.mxu0
        %v7695 = vadd.f32 0.0, %v7694
        %7696 = vmatmul.bf16.gmra.mxu0 %v7610
        %v7697 = vpop.f32.mrf.mxu0
        %v7698 = vadd.f32 0.0, %v7697
        %v7699 = vpop.f32.mrf.mxu0
        %v7700 = vadd.f32 0.0, %v7699
        %7701 = vmatmul.bf16.gmra.mxu0 %v7613
        %v7702 = vpop.f32.mrf.mxu0
        %v7703 = vadd.f32 0.0, %v7702
        %v7704 = vpop.f32.mrf.mxu0
        %v7705 = vadd.f32 0.0, %v7704
        %7706 = vdwg.mxu0
        %v7707 = vadd.f32 %v7485, %v7628
        %v7708 = vadd.f32 %v7486, %v7630
        %v7709 = vadd.f32 %v7487, %v7633
        %v7710 = vadd.f32 %v7488, %v7635
        %v7711 = vadd.f32 %v7489, %v7638
        %v7712 = vadd.f32 %v7490, %v7640
        %v7713 = vadd.f32 %v7491, %v7643
        %v7714 = vadd.f32 %v7492, %v7645
        %v7715 = vadd.f32 %v7493, %v7648
        %v7716 = vadd.f32 %v7494, %v7650
        %v7717 = vadd.f32 %v7495, %v7653
        %v7718 = vadd.f32 %v7496, %v7655
        %v7719 = vadd.f32 %v7497, %v7658
        %v7720 = vadd.f32 %v7498, %v7660
        %v7721 = vadd.f32 %v7499, %v7663
        %v7722 = vadd.f32 %v7500, %v7665
        %v7723 = vadd.f32 %v7501, %v7668
        %v7724 = vadd.f32 %v7502, %v7670
        %v7725 = vadd.f32 %v7503, %v7673
        %v7726 = vadd.f32 %v7504, %v7675
        %v7727 = vadd.f32 %v7505, %v7678
        %v7728 = vadd.f32 %v7506, %v7680
        %v7729 = vadd.f32 %v7507, %v7683
        %v7730 = vadd.f32 %v7508, %v7685
        %v7731 = vadd.f32 %v7509, %v7688
        %v7732 = vadd.f32 %v7510, %v7690
        %v7733 = vadd.f32 %v7511, %v7693
        %v7734 = vadd.f32 %v7512, %v7695
        %v7735 = vadd.f32 %v7513, %v7698
        %v7736 = vadd.f32 %v7514, %v7700
        %v7737 = vadd.f32 %v7515, %v7703
        %v7738 = vadd.f32 %v7516, %v7705
        %v7739 = vld [vmem:[%s6883 + $0x1] sm:$0xff]
        %v7740 = vld [vmem:[%s6883 + $0x9] sm:$0xff]
        %v7741 = vld [vmem:[%s6883 + $0x19] sm:$0xff]
        %v7742 = vld [vmem:[%s6883 + $0x21] sm:$0xff]
        %v7743 = vld [vmem:[%s6883 + $0x31] sm:$0xff]
        %v7744 = vld [vmem:[%s6883 + $0x39] sm:$0xff]
        %v7745 = vld [vmem:[%s6883 + $0x49] sm:$0xff]
        %v7746 = vld [vmem:[%s6883 + $0x51] sm:$0xff]
        %v7747 = vld [vmem:[%s6883 + $0x61] sm:$0xff]
        %v7748 = vld [vmem:[%s6883 + $0x69] sm:$0xff]
        %v7749 = vld [vmem:[%s6883 + $0x79] sm:$0xff]
        %v7750 = vld [vmem:[%s6883 + $0x81] sm:$0xff]
        %v7751 = vld [vmem:[%s6883 + $0x91] sm:$0xff]
        %v7752 = vld [vmem:[%s6883 + $0x99] sm:$0xff]
        %v7753 = vld [vmem:[%s6883 + $0xa9] sm:$0xff]
        %v7754 = vld [vmem:[%s6883 + $0xb1] sm:$0xff]
        %v7755 = vld [vmem:[%s6883 + $0xc1] sm:$0xff]
        %v7756 = vld [vmem:[%s6883 + $0xc9] sm:$0xff]
        %v7757 = vld [vmem:[%s6883 + $0xd9] sm:$0xff]
        %v7758 = vld [vmem:[%s6883 + $0xe1] sm:$0xff]
        %v7759 = vld [vmem:[%s6883 + $0xf1] sm:$0xff]
        %v7760 = vld [vmem:[%s6883 + $0xf9] sm:$0xff]
        %v7761 = vld [vmem:[%s6883 + $0x109] sm:$0xff]
        %v7762 = vld [vmem:[%s6883 + $0x111] sm:$0xff]
        %v7763 = vld [vmem:[%s6883 + $0x121] sm:$0xff]
        %v7764 = vld [vmem:[%s6883 + $0x129] sm:$0xff]
        %v7765 = vld [vmem:[%s6883 + $0x139] sm:$0xff]
        %v7766 = vld [vmem:[%s6883 + $0x141] sm:$0xff]
        %v7767 = vld [vmem:[%s6883 + $0x151] sm:$0xff]
        %v7768 = vld [vmem:[%s6883 + $0x159] sm:$0xff]
        %v7769 = vld [vmem:[%s6883 + $0x169] sm:$0xff]
        %v7770 = vld [vmem:[%s6883 + $0x171] sm:$0xff]
        %v7771 = vpack.c.bf16 %v7740, %v7739
        %v7772 = vpack.c.bf16 %v7742, %v7741
        %v7773 = vpack.c.bf16 %v7744, %v7743
        %v7774 = vpack.c.bf16 %v7746, %v7745
        %v7775 = vpack.c.bf16 %v7748, %v7747
        %v7776 = vpack.c.bf16 %v7750, %v7749
        %v7777 = vpack.c.bf16 %v7752, %v7751
        %v7778 = vpack.c.bf16 %v7754, %v7753
        %v7779 = vpack.c.bf16 %v7756, %v7755
        %v7780 = vpack.c.bf16 %v7758, %v7757
        %v7781 = vpack.c.bf16 %v7760, %v7759
        %v7782 = vpack.c.bf16 %v7762, %v7761
        %v7783 = vpack.c.bf16 %v7764, %v7763
        %v7784 = vpack.c.bf16 %v7766, %v7765
        %v7785 = vpack.c.bf16 %v7768, %v7767
        %v7786 = vpack.c.bf16 %v7770, %v7769
        %s7787 = scalar_lea.vmem %s9, 8
        %v7788 = vld [vmem:[%s7787] sm:$0x3]
        %v7790 = vsel %vm418, %v7771, 0
        %v7793 = vsel %vm418, %v7772, 0
        %v7796 = vsel %vm418, %v7773, 0
        %v7799 = vsel %vm418, %v7774, 0
        %v7802 = vsel %vm418, %v7775, 0
        %v7805 = vsel %vm418, %v7776, 0
        %v7808 = vsel %vm418, %v7777, 0
        %v7811 = vsel %vm418, %v7778, 0
        %v7814 = vsel %vm418, %v7779, 0
        %v7817 = vsel %vm418, %v7780, 0
        %v7820 = vsel %vm418, %v7781, 0
        %v7823 = vsel %vm418, %v7782, 0
        %v7826 = vsel %vm418, %v7783, 0
        %v7829 = vsel %vm418, %v7784, 0
        %v7832 = vsel %vm418, %v7785, 0
        %v7835 = vsel %vm418, %v7786, 0
        %v7838 = vsel %vm576, %v7788, 0
        %7840 = vmatpush.bf16.msra.mxu0 0
        %7841 = vmatpush.bf16.msra.mxu0 0
        %7842 = vmatpush.bf16.msra.mxu0 0
        %7843 = vmatpush.bf16.msra.mxu0 0
        %7844 = vmatpush.bf16.msra.mxu0 0
        %7845 = vmatpush.bf16.msra.mxu0 0
        %7846 = vmatpush.bf16.msra.mxu0 0
        %7847 = vmatpush.bf16.msra.mxu0 %v7838
        %7848 = vmatmul.bf16.gmra.mxu0 %v7790
        %v7849 = vpop.f32.mrf.mxu0
        %v7850 = vadd.f32 0.0, %v7849
        %v7851 = vpop.f32.mrf.mxu0
        %v7852 = vadd.f32 0.0, %v7851
        %7853 = vmatmul.bf16.gmra.mxu0 %v7793
        %v7854 = vpop.f32.mrf.mxu0
        %v7855 = vadd.f32 0.0, %v7854
        %v7856 = vpop.f32.mrf.mxu0
        %v7857 = vadd.f32 0.0, %v7856
        %7858 = vmatmul.bf16.gmra.mxu0 %v7796
        %v7859 = vpop.f32.mrf.mxu0
        %v7860 = vadd.f32 0.0, %v7859
        %v7861 = vpop.f32.mrf.mxu0
        %v7862 = vadd.f32 0.0, %v7861
        %7863 = vmatmul.bf16.gmra.mxu0 %v7799
        %v7864 = vpop.f32.mrf.mxu0
        %v7865 = vadd.f32 0.0, %v7864
        %v7866 = vpop.f32.mrf.mxu0
        %v7867 = vadd.f32 0.0, %v7866
        %7868 = vmatmul.bf16.gmra.mxu0 %v7802
        %v7869 = vpop.f32.mrf.mxu0
        %v7870 = vadd.f32 0.0, %v7869
        %v7871 = vpop.f32.mrf.mxu0
        %v7872 = vadd.f32 0.0, %v7871
        %7873 = vmatmul.bf16.gmra.mxu0 %v7805
        %v7874 = vpop.f32.mrf.mxu0
        %v7875 = vadd.f32 0.0, %v7874
        %v7876 = vpop.f32.mrf.mxu0
        %v7877 = vadd.f32 0.0, %v7876
        %7878 = vmatmul.bf16.gmra.mxu0 %v7808
        %v7879 = vpop.f32.mrf.mxu0
        %v7880 = vadd.f32 0.0, %v7879
        %v7881 = vpop.f32.mrf.mxu0
        %v7882 = vadd.f32 0.0, %v7881
        %7883 = vmatmul.bf16.gmra.mxu0 %v7811
        %v7884 = vpop.f32.mrf.mxu0
        %v7885 = vadd.f32 0.0, %v7884
        %v7886 = vpop.f32.mrf.mxu0
        %v7887 = vadd.f32 0.0, %v7886
        %7888 = vmatmul.bf16.gmra.mxu0 %v7814
        %v7889 = vpop.f32.mrf.mxu0
        %v7890 = vadd.f32 0.0, %v7889
        %v7891 = vpop.f32.mrf.mxu0
        %v7892 = vadd.f32 0.0, %v7891
        %7893 = vmatmul.bf16.gmra.mxu0 %v7817
        %v7894 = vpop.f32.mrf.mxu0
        %v7895 = vadd.f32 0.0, %v7894
        %v7896 = vpop.f32.mrf.mxu0
        %v7897 = vadd.f32 0.0, %v7896
        %7898 = vmatmul.bf16.gmra.mxu0 %v7820
        %v7899 = vpop.f32.mrf.mxu0
        %v7900 = vadd.f32 0.0, %v7899
        %v7901 = vpop.f32.mrf.mxu0
        %v7902 = vadd.f32 0.0, %v7901
        %7903 = vmatmul.bf16.gmra.mxu0 %v7823
        %v7904 = vpop.f32.mrf.mxu0
        %v7905 = vadd.f32 0.0, %v7904
        %v7906 = vpop.f32.mrf.mxu0
        %v7907 = vadd.f32 0.0, %v7906
        %7908 = vmatmul.bf16.gmra.mxu0 %v7826
        %v7909 = vpop.f32.mrf.mxu0
        %v7910 = vadd.f32 0.0, %v7909
        %v7911 = vpop.f32.mrf.mxu0
        %v7912 = vadd.f32 0.0, %v7911
        %7913 = vmatmul.bf16.gmra.mxu0 %v7829
        %v7914 = vpop.f32.mrf.mxu0
        %v7915 = vadd.f32 0.0, %v7914
        %v7916 = vpop.f32.mrf.mxu0
        %v7917 = vadd.f32 0.0, %v7916
        %7918 = vmatmul.bf16.gmra.mxu0 %v7832
        %v7919 = vpop.f32.mrf.mxu0
        %v7920 = vadd.f32 0.0, %v7919
        %v7921 = vpop.f32.mrf.mxu0
        %v7922 = vadd.f32 0.0, %v7921
        %7923 = vmatmul.bf16.gmra.mxu0 %v7835
        %v7924 = vpop.f32.mrf.mxu0
        %v7925 = vadd.f32 0.0, %v7924
        %v7926 = vpop.f32.mrf.mxu0
        %v7927 = vadd.f32 0.0, %v7926
        %7928 = vdwg.mxu0
        %v7929 = vadd.f32 %v7707, %v7850
        %v7930 = vadd.f32 %v7708, %v7852
        %v7931 = vadd.f32 %v7709, %v7855
        %v7932 = vadd.f32 %v7710, %v7857
        %v7933 = vadd.f32 %v7711, %v7860
        %v7934 = vadd.f32 %v7712, %v7862
        %v7935 = vadd.f32 %v7713, %v7865
        %v7936 = vadd.f32 %v7714, %v7867
        %v7937 = vadd.f32 %v7715, %v7870
        %v7938 = vadd.f32 %v7716, %v7872
        %v7939 = vadd.f32 %v7717, %v7875
        %v7940 = vadd.f32 %v7718, %v7877
        %v7941 = vadd.f32 %v7719, %v7880
        %v7942 = vadd.f32 %v7720, %v7882
        %v7943 = vadd.f32 %v7721, %v7885
        %v7944 = vadd.f32 %v7722, %v7887
        %v7945 = vadd.f32 %v7723, %v7890
        %v7946 = vadd.f32 %v7724, %v7892
        %v7947 = vadd.f32 %v7725, %v7895
        %v7948 = vadd.f32 %v7726, %v7897
        %v7949 = vadd.f32 %v7727, %v7900
        %v7950 = vadd.f32 %v7728, %v7902
        %v7951 = vadd.f32 %v7729, %v7905
        %v7952 = vadd.f32 %v7730, %v7907
        %v7953 = vadd.f32 %v7731, %v7910
        %v7954 = vadd.f32 %v7732, %v7912
        %v7955 = vadd.f32 %v7733, %v7915
        %v7956 = vadd.f32 %v7734, %v7917
        %v7957 = vadd.f32 %v7735, %v7920
        %v7958 = vadd.f32 %v7736, %v7922
        %v7959 = vadd.f32 %v7737, %v7925
        %v7960 = vadd.f32 %v7738, %v7927
        %v7961 = vld [vmem:[%s6883 + $0x2] sm:$0xff]
        %v7962 = vld [vmem:[%s6883 + $0xa] sm:$0xff]
        %v7963 = vld [vmem:[%s6883 + $0x1a] sm:$0xff]
        %v7964 = vld [vmem:[%s6883 + $0x22] sm:$0xff]
        %v7965 = vld [vmem:[%s6883 + $0x32] sm:$0xff]
        %v7966 = vld [vmem:[%s6883 + $0x3a] sm:$0xff]
        %v7967 = vld [vmem:[%s6883 + $0x4a] sm:$0xff]
        %v7968 = vld [vmem:[%s6883 + $0x52] sm:$0xff]
        %v7969 = vld [vmem:[%s6883 + $0x62] sm:$0xff]
        %v7970 = vld [vmem:[%s6883 + $0x6a] sm:$0xff]
        %v7971 = vld [vmem:[%s6883 + $0x7a] sm:$0xff]
        %v7972 = vld [vmem:[%s6883 + $0x82] sm:$0xff]
        %v7973 = vld [vmem:[%s6883 + $0x92] sm:$0xff]
        %v7974 = vld [vmem:[%s6883 + $0x9a] sm:$0xff]
        %v7975 = vld [vmem:[%s6883 + $0xaa] sm:$0xff]
        %v7976 = vld [vmem:[%s6883 + $0xb2] sm:$0xff]
        %v7977 = vld [vmem:[%s6883 + $0xc2] sm:$0xff]
        %v7978 = vld [vmem:[%s6883 + $0xca] sm:$0xff]
        %v7979 = vld [vmem:[%s6883 + $0xda] sm:$0xff]
        %v7980 = vld [vmem:[%s6883 + $0xe2] sm:$0xff]
        %v7981 = vld [vmem:[%s6883 + $0xf2] sm:$0xff]
        %v7982 = vld [vmem:[%s6883 + $0xfa] sm:$0xff]
        %v7983 = vld [vmem:[%s6883 + $0x10a] sm:$0xff]
        %v7984 = vld [vmem:[%s6883 + $0x112] sm:$0xff]
        %v7985 = vld [vmem:[%s6883 + $0x122] sm:$0xff]
        %v7986 = vld [vmem:[%s6883 + $0x12a] sm:$0xff]
        %v7987 = vld [vmem:[%s6883 + $0x13a] sm:$0xff]
        %v7988 = vld [vmem:[%s6883 + $0x142] sm:$0xff]
        %v7989 = vld [vmem:[%s6883 + $0x152] sm:$0xff]
        %v7990 = vld [vmem:[%s6883 + $0x15a] sm:$0xff]
        %v7991 = vld [vmem:[%s6883 + $0x16a] sm:$0xff]
        %v7992 = vld [vmem:[%s6883 + $0x172] sm:$0xff]
        %v7993 = vpack.c.bf16 %v7962, %v7961
        %v7994 = vpack.c.bf16 %v7964, %v7963
        %v7995 = vpack.c.bf16 %v7966, %v7965
        %v7996 = vpack.c.bf16 %v7968, %v7967
        %v7997 = vpack.c.bf16 %v7970, %v7969
        %v7998 = vpack.c.bf16 %v7972, %v7971
        %v7999 = vpack.c.bf16 %v7974, %v7973
        %v8000 = vpack.c.bf16 %v7976, %v7975
        %v8001 = vpack.c.bf16 %v7978, %v7977
        %v8002 = vpack.c.bf16 %v7980, %v7979
        %v8003 = vpack.c.bf16 %v7982, %v7981
        %v8004 = vpack.c.bf16 %v7984, %v7983
        %v8005 = vpack.c.bf16 %v7986, %v7985
        %v8006 = vpack.c.bf16 %v7988, %v7987
        %v8007 = vpack.c.bf16 %v7990, %v7989
        %v8008 = vpack.c.bf16 %v7992, %v7991
        %s8009 = scalar_lea.vmem %s9, 10
        %v8010 = vld [vmem:[%s8009] sm:$0x3]
        %v8012 = vsel %vm418, %v7993, 0
        %v8015 = vsel %vm418, %v7994, 0
        %v8018 = vsel %vm418, %v7995, 0
        %v8021 = vsel %vm418, %v7996, 0
        %v8024 = vsel %vm418, %v7997, 0
        %v8027 = vsel %vm418, %v7998, 0
        %v8030 = vsel %vm418, %v7999, 0
        %v8033 = vsel %vm418, %v8000, 0
        %v8036 = vsel %vm418, %v8001, 0
        %v8039 = vsel %vm418, %v8002, 0
        %v8042 = vsel %vm418, %v8003, 0
        %v8045 = vsel %vm418, %v8004, 0
        %v8048 = vsel %vm418, %v8005, 0
        %v8051 = vsel %vm418, %v8006, 0
        %v8054 = vsel %vm418, %v8007, 0
        %v8057 = vsel %vm418, %v8008, 0
        %v8060 = vsel %vm576, %v8010, 0
        %8062 = vmatpush.bf16.msra.mxu0 0
        %8063 = vmatpush.bf16.msra.mxu0 0
        %8064 = vmatpush.bf16.msra.mxu0 0
        %8065 = vmatpush.bf16.msra.mxu0 0
        %8066 = vmatpush.bf16.msra.mxu0 0
        %8067 = vmatpush.bf16.msra.mxu0 0
        %8068 = vmatpush.bf16.msra.mxu0 0
        %8069 = vmatpush.bf16.msra.mxu0 %v8060
        %8070 = vmatmul.bf16.gmra.mxu0 %v8012
        %v8071 = vpop.f32.mrf.mxu0
        %v8072 = vadd.f32 0.0, %v8071
        %v8073 = vpop.f32.mrf.mxu0
        %v8074 = vadd.f32 0.0, %v8073
        %8075 = vmatmul.bf16.gmra.mxu0 %v8015
        %v8076 = vpop.f32.mrf.mxu0
        %v8077 = vadd.f32 0.0, %v8076
        %v8078 = vpop.f32.mrf.mxu0
        %v8079 = vadd.f32 0.0, %v8078
        %8080 = vmatmul.bf16.gmra.mxu0 %v8018
        %v8081 = vpop.f32.mrf.mxu0
        %v8082 = vadd.f32 0.0, %v8081
        %v8083 = vpop.f32.mrf.mxu0
        %v8084 = vadd.f32 0.0, %v8083
        %8085 = vmatmul.bf16.gmra.mxu0 %v8021
        %v8086 = vpop.f32.mrf.mxu0
        %v8087 = vadd.f32 0.0, %v8086
        %v8088 = vpop.f32.mrf.mxu0
        %v8089 = vadd.f32 0.0, %v8088
        %8090 = vmatmul.bf16.gmra.mxu0 %v8024
        %v8091 = vpop.f32.mrf.mxu0
        %v8092 = vadd.f32 0.0, %v8091
        %v8093 = vpop.f32.mrf.mxu0
        %v8094 = vadd.f32 0.0, %v8093
        %8095 = vmatmul.bf16.gmra.mxu0 %v8027
        %v8096 = vpop.f32.mrf.mxu0
        %v8097 = vadd.f32 0.0, %v8096
        %v8098 = vpop.f32.mrf.mxu0
        %v8099 = vadd.f32 0.0, %v8098
        %8100 = vmatmul.bf16.gmra.mxu0 %v8030
        %v8101 = vpop.f32.mrf.mxu0
        %v8102 = vadd.f32 0.0, %v8101
        %v8103 = vpop.f32.mrf.mxu0
        %v8104 = vadd.f32 0.0, %v8103
        %8105 = vmatmul.bf16.gmra.mxu0 %v8033
        %v8106 = vpop.f32.mrf.mxu0
        %v8107 = vadd.f32 0.0, %v8106
        %v8108 = vpop.f32.mrf.mxu0
        %v8109 = vadd.f32 0.0, %v8108
        %8110 = vmatmul.bf16.gmra.mxu0 %v8036
        %v8111 = vpop.f32.mrf.mxu0
        %v8112 = vadd.f32 0.0, %v8111
        %v8113 = vpop.f32.mrf.mxu0
        %v8114 = vadd.f32 0.0, %v8113
        %8115 = vmatmul.bf16.gmra.mxu0 %v8039
        %v8116 = vpop.f32.mrf.mxu0
        %v8117 = vadd.f32 0.0, %v8116
        %v8118 = vpop.f32.mrf.mxu0
        %v8119 = vadd.f32 0.0, %v8118
        %8120 = vmatmul.bf16.gmra.mxu0 %v8042
        %v8121 = vpop.f32.mrf.mxu0
        %v8122 = vadd.f32 0.0, %v8121
        %v8123 = vpop.f32.mrf.mxu0
        %v8124 = vadd.f32 0.0, %v8123
        %8125 = vmatmul.bf16.gmra.mxu0 %v8045
        %v8126 = vpop.f32.mrf.mxu0
        %v8127 = vadd.f32 0.0, %v8126
        %v8128 = vpop.f32.mrf.mxu0
        %v8129 = vadd.f32 0.0, %v8128
        %8130 = vmatmul.bf16.gmra.mxu0 %v8048
        %v8131 = vpop.f32.mrf.mxu0
        %v8132 = vadd.f32 0.0, %v8131
        %v8133 = vpop.f32.mrf.mxu0
        %v8134 = vadd.f32 0.0, %v8133
        %8135 = vmatmul.bf16.gmra.mxu0 %v8051
        %v8136 = vpop.f32.mrf.mxu0
        %v8137 = vadd.f32 0.0, %v8136
        %v8138 = vpop.f32.mrf.mxu0
        %v8139 = vadd.f32 0.0, %v8138
        %8140 = vmatmul.bf16.gmra.mxu0 %v8054
        %v8141 = vpop.f32.mrf.mxu0
        %v8142 = vadd.f32 0.0, %v8141
        %v8143 = vpop.f32.mrf.mxu0
        %v8144 = vadd.f32 0.0, %v8143
        %8145 = vmatmul.bf16.gmra.mxu0 %v8057
        %v8146 = vpop.f32.mrf.mxu0
        %v8147 = vadd.f32 0.0, %v8146
        %v8148 = vpop.f32.mrf.mxu0
        %v8149 = vadd.f32 0.0, %v8148
        %8150 = vdwg.mxu0
        %v8151 = vadd.f32 %v7929, %v8072
        %v8152 = vadd.f32 %v7930, %v8074
        %v8153 = vadd.f32 %v7931, %v8077
        %v8154 = vadd.f32 %v7932, %v8079
        %v8155 = vadd.f32 %v7933, %v8082
        %v8156 = vadd.f32 %v7934, %v8084
        %v8157 = vadd.f32 %v7935, %v8087
        %v8158 = vadd.f32 %v7936, %v8089
        %v8159 = vadd.f32 %v7937, %v8092
        %v8160 = vadd.f32 %v7938, %v8094
        %v8161 = vadd.f32 %v7939, %v8097
        %v8162 = vadd.f32 %v7940, %v8099
        %v8163 = vadd.f32 %v7941, %v8102
        %v8164 = vadd.f32 %v7942, %v8104
        %v8165 = vadd.f32 %v7943, %v8107
        %v8166 = vadd.f32 %v7944, %v8109
        %v8167 = vadd.f32 %v7945, %v8112
        %v8168 = vadd.f32 %v7946, %v8114
        %v8169 = vadd.f32 %v7947, %v8117
        %v8170 = vadd.f32 %v7948, %v8119
        %v8171 = vadd.f32 %v7949, %v8122
        %v8172 = vadd.f32 %v7950, %v8124
        %v8173 = vadd.f32 %v7951, %v8127
        %v8174 = vadd.f32 %v7952, %v8129
        %v8175 = vadd.f32 %v7953, %v8132
        %v8176 = vadd.f32 %v7954, %v8134
        %v8177 = vadd.f32 %v7955, %v8137
        %v8178 = vadd.f32 %v7956, %v8139
        %v8179 = vadd.f32 %v7957, %v8142
        %v8180 = vadd.f32 %v7958, %v8144
        %v8181 = vadd.f32 %v7959, %v8147
        %v8182 = vadd.f32 %v7960, %v8149
        %s8183 = scalar_lea.vmem [#allocation5], 48
        %v8184 = vld [vmem:[%s8183] sm:$0xff]
        %v8185 = vld [vmem:[%s8183 + $0x8] sm:$0xff]
        %v8186 = vld [vmem:[%s8183 + $0x18] sm:$0xff]
        %v8187 = vld [vmem:[%s8183 + $0x20] sm:$0xff]
        %v8188 = vld [vmem:[%s8183 + $0x30] sm:$0xff]
        %v8189 = vld [vmem:[%s8183 + $0x38] sm:$0xff]
        %v8190 = vld [vmem:[%s8183 + $0x48] sm:$0xff]
        %v8191 = vld [vmem:[%s8183 + $0x50] sm:$0xff]
        %v8192 = vld [vmem:[%s8183 + $0x60] sm:$0xff]
        %v8193 = vld [vmem:[%s8183 + $0x68] sm:$0xff]
        %v8194 = vld [vmem:[%s8183 + $0x78] sm:$0xff]
        %v8195 = vld [vmem:[%s8183 + $0x80] sm:$0xff]
        %v8196 = vld [vmem:[%s8183 + $0x90] sm:$0xff]
        %v8197 = vld [vmem:[%s8183 + $0x98] sm:$0xff]
        %v8198 = vld [vmem:[%s8183 + $0xa8] sm:$0xff]
        %v8199 = vld [vmem:[%s8183 + $0xb0] sm:$0xff]
        %v8200 = vld [vmem:[%s8183 + $0xc0] sm:$0xff]
        %v8201 = vld [vmem:[%s8183 + $0xc8] sm:$0xff]
        %v8202 = vld [vmem:[%s8183 + $0xd8] sm:$0xff]
        %v8203 = vld [vmem:[%s8183 + $0xe0] sm:$0xff]
        %v8204 = vld [vmem:[%s8183 + $0xf0] sm:$0xff]
        %v8205 = vld [vmem:[%s8183 + $0xf8] sm:$0xff]
        %v8206 = vld [vmem:[%s8183 + $0x108] sm:$0xff]
        %v8207 = vld [vmem:[%s8183 + $0x110] sm:$0xff]
        %v8208 = vld [vmem:[%s8183 + $0x120] sm:$0xff]
        %v8209 = vld [vmem:[%s8183 + $0x128] sm:$0xff]
        %v8210 = vld [vmem:[%s8183 + $0x138] sm:$0xff]
        %v8211 = vld [vmem:[%s8183 + $0x140] sm:$0xff]
        %v8212 = vld [vmem:[%s8183 + $0x150] sm:$0xff]
        %v8213 = vld [vmem:[%s8183 + $0x158] sm:$0xff]
        %v8214 = vld [vmem:[%s8183 + $0x168] sm:$0xff]
        %v8215 = vld [vmem:[%s8183 + $0x170] sm:$0xff]
        %v8216 = vpack.c.bf16 %v8185, %v8184
        %v8217 = vpack.c.bf16 %v8187, %v8186
        %v8218 = vpack.c.bf16 %v8189, %v8188
        %v8219 = vpack.c.bf16 %v8191, %v8190
        %v8220 = vpack.c.bf16 %v8193, %v8192
        %v8221 = vpack.c.bf16 %v8195, %v8194
        %v8222 = vpack.c.bf16 %v8197, %v8196
        %v8223 = vpack.c.bf16 %v8199, %v8198
        %v8224 = vpack.c.bf16 %v8201, %v8200
        %v8225 = vpack.c.bf16 %v8203, %v8202
        %v8226 = vpack.c.bf16 %v8205, %v8204
        %v8227 = vpack.c.bf16 %v8207, %v8206
        %v8228 = vpack.c.bf16 %v8209, %v8208
        %v8229 = vpack.c.bf16 %v8211, %v8210
        %v8230 = vpack.c.bf16 %v8213, %v8212
        %v8231 = vpack.c.bf16 %v8215, %v8214
        %s8232 = scalar_lea.vmem %s9, 12
        %v8233 = vld [vmem:[%s8232] sm:$0x3]
        %v8235 = vsel %vm418, %v8216, 0
        %v8238 = vsel %vm418, %v8217, 0
        %v8241 = vsel %vm418, %v8218, 0
        %v8244 = vsel %vm418, %v8219, 0
        %v8247 = vsel %vm418, %v8220, 0
        %v8250 = vsel %vm418, %v8221, 0
        %v8253 = vsel %vm418, %v8222, 0
        %v8256 = vsel %vm418, %v8223, 0
        %v8259 = vsel %vm418, %v8224, 0
        %v8262 = vsel %vm418, %v8225, 0
        %v8265 = vsel %vm418, %v8226, 0
        %v8268 = vsel %vm418, %v8227, 0
        %v8271 = vsel %vm418, %v8228, 0
        %v8274 = vsel %vm418, %v8229, 0
        %v8277 = vsel %vm418, %v8230, 0
        %v8280 = vsel %vm418, %v8231, 0
        %v8283 = vsel %vm576, %v8233, 0
        %8285 = vmatpush.bf16.msra.mxu0 0
        %8286 = vmatpush.bf16.msra.mxu0 0
        %8287 = vmatpush.bf16.msra.mxu0 0
        %8288 = vmatpush.bf16.msra.mxu0 0
        %8289 = vmatpush.bf16.msra.mxu0 0
        %8290 = vmatpush.bf16.msra.mxu0 0
        %8291 = vmatpush.bf16.msra.mxu0 0
        %8292 = vmatpush.bf16.msra.mxu0 %v8283
        %8293 = vmatmul.bf16.gmra.mxu0 %v8235
        %v8294 = vpop.f32.mrf.mxu0
        %v8295 = vadd.f32 0.0, %v8294
        %v8296 = vpop.f32.mrf.mxu0
        %v8297 = vadd.f32 0.0, %v8296
        %8298 = vmatmul.bf16.gmra.mxu0 %v8238
        %v8299 = vpop.f32.mrf.mxu0
        %v8300 = vadd.f32 0.0, %v8299
        %v8301 = vpop.f32.mrf.mxu0
        %v8302 = vadd.f32 0.0, %v8301
        %8303 = vmatmul.bf16.gmra.mxu0 %v8241
        %v8304 = vpop.f32.mrf.mxu0
        %v8305 = vadd.f32 0.0, %v8304
        %v8306 = vpop.f32.mrf.mxu0
        %v8307 = vadd.f32 0.0, %v8306
        %8308 = vmatmul.bf16.gmra.mxu0 %v8244
        %v8309 = vpop.f32.mrf.mxu0
        %v8310 = vadd.f32 0.0, %v8309
        %v8311 = vpop.f32.mrf.mxu0
        %v8312 = vadd.f32 0.0, %v8311
        %8313 = vmatmul.bf16.gmra.mxu0 %v8247
        %v8314 = vpop.f32.mrf.mxu0
        %v8315 = vadd.f32 0.0, %v8314
        %v8316 = vpop.f32.mrf.mxu0
        %v8317 = vadd.f32 0.0, %v8316
        %8318 = vmatmul.bf16.gmra.mxu0 %v8250
        %v8319 = vpop.f32.mrf.mxu0
        %v8320 = vadd.f32 0.0, %v8319
        %v8321 = vpop.f32.mrf.mxu0
        %v8322 = vadd.f32 0.0, %v8321
        %8323 = vmatmul.bf16.gmra.mxu0 %v8253
        %v8324 = vpop.f32.mrf.mxu0
        %v8325 = vadd.f32 0.0, %v8324
        %v8326 = vpop.f32.mrf.mxu0
        %v8327 = vadd.f32 0.0, %v8326
        %8328 = vmatmul.bf16.gmra.mxu0 %v8256
        %v8329 = vpop.f32.mrf.mxu0
        %v8330 = vadd.f32 0.0, %v8329
        %v8331 = vpop.f32.mrf.mxu0
        %v8332 = vadd.f32 0.0, %v8331
        %8333 = vmatmul.bf16.gmra.mxu0 %v8259
        %v8334 = vpop.f32.mrf.mxu0
        %v8335 = vadd.f32 0.0, %v8334
        %v8336 = vpop.f32.mrf.mxu0
        %v8337 = vadd.f32 0.0, %v8336
        %8338 = vmatmul.bf16.gmra.mxu0 %v8262
        %v8339 = vpop.f32.mrf.mxu0
        %v8340 = vadd.f32 0.0, %v8339
        %v8341 = vpop.f32.mrf.mxu0
        %v8342 = vadd.f32 0.0, %v8341
        %8343 = vmatmul.bf16.gmra.mxu0 %v8265
        %v8344 = vpop.f32.mrf.mxu0
        %v8345 = vadd.f32 0.0, %v8344
        %v8346 = vpop.f32.mrf.mxu0
        %v8347 = vadd.f32 0.0, %v8346
        %8348 = vmatmul.bf16.gmra.mxu0 %v8268
        %v8349 = vpop.f32.mrf.mxu0
        %v8350 = vadd.f32 0.0, %v8349
        %v8351 = vpop.f32.mrf.mxu0
        %v8352 = vadd.f32 0.0, %v8351
        %8353 = vmatmul.bf16.gmra.mxu0 %v8271
        %v8354 = vpop.f32.mrf.mxu0
        %v8355 = vadd.f32 0.0, %v8354
        %v8356 = vpop.f32.mrf.mxu0
        %v8357 = vadd.f32 0.0, %v8356
        %8358 = vmatmul.bf16.gmra.mxu0 %v8274
        %v8359 = vpop.f32.mrf.mxu0
        %v8360 = vadd.f32 0.0, %v8359
        %v8361 = vpop.f32.mrf.mxu0
        %v8362 = vadd.f32 0.0, %v8361
        %8363 = vmatmul.bf16.gmra.mxu0 %v8277
        %v8364 = vpop.f32.mrf.mxu0
        %v8365 = vadd.f32 0.0, %v8364
        %v8366 = vpop.f32.mrf.mxu0
        %v8367 = vadd.f32 0.0, %v8366
        %8368 = vmatmul.bf16.gmra.mxu0 %v8280
        %v8369 = vpop.f32.mrf.mxu0
        %v8370 = vadd.f32 0.0, %v8369
        %v8371 = vpop.f32.mrf.mxu0
        %v8372 = vadd.f32 0.0, %v8371
        %8373 = vdwg.mxu0
        %v8374 = vadd.f32 %v8151, %v8295
        %v8375 = vadd.f32 %v8152, %v8297
        %v8376 = vadd.f32 %v8153, %v8300
        %v8377 = vadd.f32 %v8154, %v8302
        %v8378 = vadd.f32 %v8155, %v8305
        %v8379 = vadd.f32 %v8156, %v8307
        %v8380 = vadd.f32 %v8157, %v8310
        %v8381 = vadd.f32 %v8158, %v8312
        %v8382 = vadd.f32 %v8159, %v8315
        %v8383 = vadd.f32 %v8160, %v8317
        %v8384 = vadd.f32 %v8161, %v8320
        %v8385 = vadd.f32 %v8162, %v8322
        %v8386 = vadd.f32 %v8163, %v8325
        %v8387 = vadd.f32 %v8164, %v8327
        %v8388 = vadd.f32 %v8165, %v8330
        %v8389 = vadd.f32 %v8166, %v8332
        %v8390 = vadd.f32 %v8167, %v8335
        %v8391 = vadd.f32 %v8168, %v8337
        %v8392 = vadd.f32 %v8169, %v8340
        %v8393 = vadd.f32 %v8170, %v8342
        %v8394 = vadd.f32 %v8171, %v8345
        %v8395 = vadd.f32 %v8172, %v8347
        %v8396 = vadd.f32 %v8173, %v8350
        %v8397 = vadd.f32 %v8174, %v8352
        %v8398 = vadd.f32 %v8175, %v8355
        %v8399 = vadd.f32 %v8176, %v8357
        %v8400 = vadd.f32 %v8177, %v8360
        %v8401 = vadd.f32 %v8178, %v8362
        %v8402 = vadd.f32 %v8179, %v8365
        %v8403 = vadd.f32 %v8180, %v8367
        %v8404 = vadd.f32 %v8181, %v8370
        %v8405 = vadd.f32 %v8182, %v8372
        %v8406 = vld [vmem:[%s8183 + $0x1] sm:$0xff]
        %v8407 = vld [vmem:[%s8183 + $0x9] sm:$0xff]
        %v8408 = vld [vmem:[%s8183 + $0x19] sm:$0xff]
        %v8409 = vld [vmem:[%s8183 + $0x21] sm:$0xff]
        %v8410 = vld [vmem:[%s8183 + $0x31] sm:$0xff]
        %v8411 = vld [vmem:[%s8183 + $0x39] sm:$0xff]
        %v8412 = vld [vmem:[%s8183 + $0x49] sm:$0xff]
        %v8413 = vld [vmem:[%s8183 + $0x51] sm:$0xff]
        %v8414 = vld [vmem:[%s8183 + $0x61] sm:$0xff]
        %v8415 = vld [vmem:[%s8183 + $0x69] sm:$0xff]
        %v8416 = vld [vmem:[%s8183 + $0x79] sm:$0xff]
        %v8417 = vld [vmem:[%s8183 + $0x81] sm:$0xff]
        %v8418 = vld [vmem:[%s8183 + $0x91] sm:$0xff]
        %v8419 = vld [vmem:[%s8183 + $0x99] sm:$0xff]
        %v8420 = vld [vmem:[%s8183 + $0xa9] sm:$0xff]
        %v8421 = vld [vmem:[%s8183 + $0xb1] sm:$0xff]
        %v8422 = vld [vmem:[%s8183 + $0xc1] sm:$0xff]
        %v8423 = vld [vmem:[%s8183 + $0xc9] sm:$0xff]
        %v8424 = vld [vmem:[%s8183 + $0xd9] sm:$0xff]
        %v8425 = vld [vmem:[%s8183 + $0xe1] sm:$0xff]
        %v8426 = vld [vmem:[%s8183 + $0xf1] sm:$0xff]
        %v8427 = vld [vmem:[%s8183 + $0xf9] sm:$0xff]
        %v8428 = vld [vmem:[%s8183 + $0x109] sm:$0xff]
        %v8429 = vld [vmem:[%s8183 + $0x111] sm:$0xff]
        %v8430 = vld [vmem:[%s8183 + $0x121] sm:$0xff]
        %v8431 = vld [vmem:[%s8183 + $0x129] sm:$0xff]
        %v8432 = vld [vmem:[%s8183 + $0x139] sm:$0xff]
        %v8433 = vld [vmem:[%s8183 + $0x141] sm:$0xff]
        %v8434 = vld [vmem:[%s8183 + $0x151] sm:$0xff]
        %v8435 = vld [vmem:[%s8183 + $0x159] sm:$0xff]
        %v8436 = vld [vmem:[%s8183 + $0x169] sm:$0xff]
        %v8437 = vld [vmem:[%s8183 + $0x171] sm:$0xff]
        %v8438 = vpack.c.bf16 %v8407, %v8406
        %v8439 = vpack.c.bf16 %v8409, %v8408
        %v8440 = vpack.c.bf16 %v8411, %v8410
        %v8441 = vpack.c.bf16 %v8413, %v8412
        %v8442 = vpack.c.bf16 %v8415, %v8414
        %v8443 = vpack.c.bf16 %v8417, %v8416
        %v8444 = vpack.c.bf16 %v8419, %v8418
        %v8445 = vpack.c.bf16 %v8421, %v8420
        %v8446 = vpack.c.bf16 %v8423, %v8422
        %v8447 = vpack.c.bf16 %v8425, %v8424
        %v8448 = vpack.c.bf16 %v8427, %v8426
        %v8449 = vpack.c.bf16 %v8429, %v8428
        %v8450 = vpack.c.bf16 %v8431, %v8430
        %v8451 = vpack.c.bf16 %v8433, %v8432
        %v8452 = vpack.c.bf16 %v8435, %v8434
        %v8453 = vpack.c.bf16 %v8437, %v8436
        %s8454 = scalar_lea.vmem %s9, 14
        %v8455 = vld [vmem:[%s8454] sm:$0x3]
        %v8457 = vsel %vm418, %v8438, 0
        %v8460 = vsel %vm418, %v8439, 0
        %v8463 = vsel %vm418, %v8440, 0
        %v8466 = vsel %vm418, %v8441, 0
        %v8469 = vsel %vm418, %v8442, 0
        %v8472 = vsel %vm418, %v8443, 0
        %v8475 = vsel %vm418, %v8444, 0
        %v8478 = vsel %vm418, %v8445, 0
        %v8481 = vsel %vm418, %v8446, 0
        %v8484 = vsel %vm418, %v8447, 0
        %v8487 = vsel %vm418, %v8448, 0
        %v8490 = vsel %vm418, %v8449, 0
        %v8493 = vsel %vm418, %v8450, 0
        %v8496 = vsel %vm418, %v8451, 0
        %v8499 = vsel %vm418, %v8452, 0
        %v8502 = vsel %vm418, %v8453, 0
        %v8505 = vsel %vm576, %v8455, 0
        %8507 = vmatpush.bf16.msra.mxu0 0
        %8508 = vmatpush.bf16.msra.mxu0 0
        %8509 = vmatpush.bf16.msra.mxu0 0
        %8510 = vmatpush.bf16.msra.mxu0 0
        %8511 = vmatpush.bf16.msra.mxu0 0
        %8512 = vmatpush.bf16.msra.mxu0 0
        %8513 = vmatpush.bf16.msra.mxu0 0
        %8514 = vmatpush.bf16.msra.mxu0 %v8505
        %8515 = vmatmul.bf16.gmra.mxu0 %v8457
        %v8516 = vpop.f32.mrf.mxu0
        %v8517 = vadd.f32 0.0, %v8516
        %v8518 = vpop.f32.mrf.mxu0
        %v8519 = vadd.f32 0.0, %v8518
        %8520 = vmatmul.bf16.gmra.mxu0 %v8460
        %v8521 = vpop.f32.mrf.mxu0
        %v8522 = vadd.f32 0.0, %v8521
        %v8523 = vpop.f32.mrf.mxu0
        %v8524 = vadd.f32 0.0, %v8523
        %8525 = vmatmul.bf16.gmra.mxu0 %v8463
        %v8526 = vpop.f32.mrf.mxu0
        %v8527 = vadd.f32 0.0, %v8526
        %v8528 = vpop.f32.mrf.mxu0
        %v8529 = vadd.f32 0.0, %v8528
        %8530 = vmatmul.bf16.gmra.mxu0 %v8466
        %v8531 = vpop.f32.mrf.mxu0
        %v8532 = vadd.f32 0.0, %v8531
        %v8533 = vpop.f32.mrf.mxu0
        %v8534 = vadd.f32 0.0, %v8533
        %8535 = vmatmul.bf16.gmra.mxu0 %v8469
        %v8536 = vpop.f32.mrf.mxu0
        %v8537 = vadd.f32 0.0, %v8536
        %v8538 = vpop.f32.mrf.mxu0
        %v8539 = vadd.f32 0.0, %v8538
        %8540 = vmatmul.bf16.gmra.mxu0 %v8472
        %v8541 = vpop.f32.mrf.mxu0
        %v8542 = vadd.f32 0.0, %v8541
        %v8543 = vpop.f32.mrf.mxu0
        %v8544 = vadd.f32 0.0, %v8543
        %8545 = vmatmul.bf16.gmra.mxu0 %v8475
        %v8546 = vpop.f32.mrf.mxu0
        %v8547 = vadd.f32 0.0, %v8546
        %v8548 = vpop.f32.mrf.mxu0
        %v8549 = vadd.f32 0.0, %v8548
        %8550 = vmatmul.bf16.gmra.mxu0 %v8478
        %v8551 = vpop.f32.mrf.mxu0
        %v8552 = vadd.f32 0.0, %v8551
        %v8553 = vpop.f32.mrf.mxu0
        %v8554 = vadd.f32 0.0, %v8553
        %8555 = vmatmul.bf16.gmra.mxu0 %v8481
        %v8556 = vpop.f32.mrf.mxu0
        %v8557 = vadd.f32 0.0, %v8556
        %v8558 = vpop.f32.mrf.mxu0
        %v8559 = vadd.f32 0.0, %v8558
        %8560 = vmatmul.bf16.gmra.mxu0 %v8484
        %v8561 = vpop.f32.mrf.mxu0
        %v8562 = vadd.f32 0.0, %v8561
        %v8563 = vpop.f32.mrf.mxu0
        %v8564 = vadd.f32 0.0, %v8563
        %8565 = vmatmul.bf16.gmra.mxu0 %v8487
        %v8566 = vpop.f32.mrf.mxu0
        %v8567 = vadd.f32 0.0, %v8566
        %v8568 = vpop.f32.mrf.mxu0
        %v8569 = vadd.f32 0.0, %v8568
        %8570 = vmatmul.bf16.gmra.mxu0 %v8490
        %v8571 = vpop.f32.mrf.mxu0
        %v8572 = vadd.f32 0.0, %v8571
        %v8573 = vpop.f32.mrf.mxu0
        %v8574 = vadd.f32 0.0, %v8573
        %8575 = vmatmul.bf16.gmra.mxu0 %v8493
        %v8576 = vpop.f32.mrf.mxu0
        %v8577 = vadd.f32 0.0, %v8576
        %v8578 = vpop.f32.mrf.mxu0
        %v8579 = vadd.f32 0.0, %v8578
        %8580 = vmatmul.bf16.gmra.mxu0 %v8496
        %v8581 = vpop.f32.mrf.mxu0
        %v8582 = vadd.f32 0.0, %v8581
        %v8583 = vpop.f32.mrf.mxu0
        %v8584 = vadd.f32 0.0, %v8583
        %8585 = vmatmul.bf16.gmra.mxu0 %v8499
        %v8586 = vpop.f32.mrf.mxu0
        %v8587 = vadd.f32 0.0, %v8586
        %v8588 = vpop.f32.mrf.mxu0
        %v8589 = vadd.f32 0.0, %v8588
        %8590 = vmatmul.bf16.gmra.mxu0 %v8502
        %v8591 = vpop.f32.mrf.mxu0
        %v8592 = vadd.f32 0.0, %v8591
        %v8593 = vpop.f32.mrf.mxu0
        %v8594 = vadd.f32 0.0, %v8593
        %8595 = vdwg.mxu0
        %v8596 = vadd.f32 %v8374, %v8517
        %v8597 = vadd.f32 %v8375, %v8519
        %v8598 = vadd.f32 %v8376, %v8522
        %v8599 = vadd.f32 %v8377, %v8524
        %v8600 = vadd.f32 %v8378, %v8527
        %v8601 = vadd.f32 %v8379, %v8529
        %v8602 = vadd.f32 %v8380, %v8532
        %v8603 = vadd.f32 %v8381, %v8534
        %v8604 = vadd.f32 %v8382, %v8537
        %v8605 = vadd.f32 %v8383, %v8539
        %v8606 = vadd.f32 %v8384, %v8542
        %v8607 = vadd.f32 %v8385, %v8544
        %v8608 = vadd.f32 %v8386, %v8547
        %v8609 = vadd.f32 %v8387, %v8549
        %v8610 = vadd.f32 %v8388, %v8552
        %v8611 = vadd.f32 %v8389, %v8554
        %v8612 = vadd.f32 %v8390, %v8557
        %v8613 = vadd.f32 %v8391, %v8559
        %v8614 = vadd.f32 %v8392, %v8562
        %v8615 = vadd.f32 %v8393, %v8564
        %v8616 = vadd.f32 %v8394, %v8567
        %v8617 = vadd.f32 %v8395, %v8569
        %v8618 = vadd.f32 %v8396, %v8572
        %v8619 = vadd.f32 %v8397, %v8574
        %v8620 = vadd.f32 %v8398, %v8577
        %v8621 = vadd.f32 %v8399, %v8579
        %v8622 = vadd.f32 %v8400, %v8582
        %v8623 = vadd.f32 %v8401, %v8584
        %v8624 = vadd.f32 %v8402, %v8587
        %v8625 = vadd.f32 %v8403, %v8589
        %v8626 = vadd.f32 %v8404, %v8592
        %v8627 = vadd.f32 %v8405, %v8594
        %v8628 = vld [vmem:[%s8183 + $0x2] sm:$0xff]
        %v8629 = vld [vmem:[%s8183 + $0xa] sm:$0xff]
        %v8630 = vld [vmem:[%s8183 + $0x1a] sm:$0xff]
        %v8631 = vld [vmem:[%s8183 + $0x22] sm:$0xff]
        %v8632 = vld [vmem:[%s8183 + $0x32] sm:$0xff]
        %v8633 = vld [vmem:[%s8183 + $0x3a] sm:$0xff]
        %v8634 = vld [vmem:[%s8183 + $0x4a] sm:$0xff]
        %v8635 = vld [vmem:[%s8183 + $0x52] sm:$0xff]
        %v8636 = vld [vmem:[%s8183 + $0x62] sm:$0xff]
        %v8637 = vld [vmem:[%s8183 + $0x6a] sm:$0xff]
        %v8638 = vld [vmem:[%s8183 + $0x7a] sm:$0xff]
        %v8639 = vld [vmem:[%s8183 + $0x82] sm:$0xff]
        %v8640 = vld [vmem:[%s8183 + $0x92] sm:$0xff]
        %v8641 = vld [vmem:[%s8183 + $0x9a] sm:$0xff]
        %v8642 = vld [vmem:[%s8183 + $0xaa] sm:$0xff]
        %v8643 = vld [vmem:[%s8183 + $0xb2] sm:$0xff]
        %v8644 = vld [vmem:[%s8183 + $0xc2] sm:$0xff]
        %v8645 = vld [vmem:[%s8183 + $0xca] sm:$0xff]
        %v8646 = vld [vmem:[%s8183 + $0xda] sm:$0xff]
        %v8647 = vld [vmem:[%s8183 + $0xe2] sm:$0xff]
        %v8648 = vld [vmem:[%s8183 + $0xf2] sm:$0xff]
        %v8649 = vld [vmem:[%s8183 + $0xfa] sm:$0xff]
        %v8650 = vld [vmem:[%s8183 + $0x10a] sm:$0xff]
        %v8651 = vld [vmem:[%s8183 + $0x112] sm:$0xff]
        %v8652 = vld [vmem:[%s8183 + $0x122] sm:$0xff]
        %v8653 = vld [vmem:[%s8183 + $0x12a] sm:$0xff]
        %v8654 = vld [vmem:[%s8183 + $0x13a] sm:$0xff]
        %v8655 = vld [vmem:[%s8183 + $0x142] sm:$0xff]
        %v8656 = vld [vmem:[%s8183 + $0x152] sm:$0xff]
        %v8657 = vld [vmem:[%s8183 + $0x15a] sm:$0xff]
        %v8658 = vld [vmem:[%s8183 + $0x16a] sm:$0xff]
        %v8659 = vld [vmem:[%s8183 + $0x172] sm:$0xff]
        %v8660 = vpack.c.bf16 %v8629, %v8628
        %v8661 = vpack.c.bf16 %v8631, %v8630
        %v8662 = vpack.c.bf16 %v8633, %v8632
        %v8663 = vpack.c.bf16 %v8635, %v8634
        %v8664 = vpack.c.bf16 %v8637, %v8636
        %v8665 = vpack.c.bf16 %v8639, %v8638
        %v8666 = vpack.c.bf16 %v8641, %v8640
        %v8667 = vpack.c.bf16 %v8643, %v8642
        %v8668 = vpack.c.bf16 %v8645, %v8644
        %v8669 = vpack.c.bf16 %v8647, %v8646
        %v8670 = vpack.c.bf16 %v8649, %v8648
        %v8671 = vpack.c.bf16 %v8651, %v8650
        %v8672 = vpack.c.bf16 %v8653, %v8652
        %v8673 = vpack.c.bf16 %v8655, %v8654
        %v8674 = vpack.c.bf16 %v8657, %v8656
        %v8675 = vpack.c.bf16 %v8659, %v8658
        %s8676 = scalar_lea.vmem %s9, 16
        %v8677 = vld [vmem:[%s8676] sm:$0x3]
        %v8679 = vsel %vm418, %v8660, 0
        %v8682 = vsel %vm418, %v8661, 0
        %v8685 = vsel %vm418, %v8662, 0
        %v8688 = vsel %vm418, %v8663, 0
        %v8691 = vsel %vm418, %v8664, 0
        %v8694 = vsel %vm418, %v8665, 0
        %v8697 = vsel %vm418, %v8666, 0
        %v8700 = vsel %vm418, %v8667, 0
        %v8703 = vsel %vm418, %v8668, 0
        %v8706 = vsel %vm418, %v8669, 0
        %v8709 = vsel %vm418, %v8670, 0
        %v8712 = vsel %vm418, %v8671, 0
        %v8715 = vsel %vm418, %v8672, 0
        %v8718 = vsel %vm418, %v8673, 0
        %v8721 = vsel %vm418, %v8674, 0
        %v8724 = vsel %vm418, %v8675, 0
        %v8727 = vsel %vm576, %v8677, 0
        %8729 = vmatpush.bf16.msra.mxu0 0
        %8730 = vmatpush.bf16.msra.mxu0 0
        %8731 = vmatpush.bf16.msra.mxu0 0
        %8732 = vmatpush.bf16.msra.mxu0 0
        %8733 = vmatpush.bf16.msra.mxu0 0
        %8734 = vmatpush.bf16.msra.mxu0 0
        %8735 = vmatpush.bf16.msra.mxu0 0
        %8736 = vmatpush.bf16.msra.mxu0 %v8727
        %8737 = vmatmul.bf16.gmra.mxu0 %v8679
        %v8738 = vpop.f32.mrf.mxu0
        %v8739 = vadd.f32 0.0, %v8738
        %v8740 = vpop.f32.mrf.mxu0
        %v8741 = vadd.f32 0.0, %v8740
        %8742 = vmatmul.bf16.gmra.mxu0 %v8682
        %v8743 = vpop.f32.mrf.mxu0
        %v8744 = vadd.f32 0.0, %v8743
        %v8745 = vpop.f32.mrf.mxu0
        %v8746 = vadd.f32 0.0, %v8745
        %8747 = vmatmul.bf16.gmra.mxu0 %v8685
        %v8748 = vpop.f32.mrf.mxu0
        %v8749 = vadd.f32 0.0, %v8748
        %v8750 = vpop.f32.mrf.mxu0
        %v8751 = vadd.f32 0.0, %v8750
        %8752 = vmatmul.bf16.gmra.mxu0 %v8688
        %v8753 = vpop.f32.mrf.mxu0
        %v8754 = vadd.f32 0.0, %v8753
        %v8755 = vpop.f32.mrf.mxu0
        %v8756 = vadd.f32 0.0, %v8755
        %8757 = vmatmul.bf16.gmra.mxu0 %v8691
        %v8758 = vpop.f32.mrf.mxu0
        %v8759 = vadd.f32 0.0, %v8758
        %v8760 = vpop.f32.mrf.mxu0
        %v8761 = vadd.f32 0.0, %v8760
        %8762 = vmatmul.bf16.gmra.mxu0 %v8694
        %v8763 = vpop.f32.mrf.mxu0
        %v8764 = vadd.f32 0.0, %v8763
        %v8765 = vpop.f32.mrf.mxu0
        %v8766 = vadd.f32 0.0, %v8765
        %8767 = vmatmul.bf16.gmra.mxu0 %v8697
        %v8768 = vpop.f32.mrf.mxu0
        %v8769 = vadd.f32 0.0, %v8768
        %v8770 = vpop.f32.mrf.mxu0
        %v8771 = vadd.f32 0.0, %v8770
        %8772 = vmatmul.bf16.gmra.mxu0 %v8700
        %v8773 = vpop.f32.mrf.mxu0
        %v8774 = vadd.f32 0.0, %v8773
        %v8775 = vpop.f32.mrf.mxu0
        %v8776 = vadd.f32 0.0, %v8775
        %8777 = vmatmul.bf16.gmra.mxu0 %v8703
        %v8778 = vpop.f32.mrf.mxu0
        %v8779 = vadd.f32 0.0, %v8778
        %v8780 = vpop.f32.mrf.mxu0
        %v8781 = vadd.f32 0.0, %v8780
        %8782 = vmatmul.bf16.gmra.mxu0 %v8706
        %v8783 = vpop.f32.mrf.mxu0
        %v8784 = vadd.f32 0.0, %v8783
        %v8785 = vpop.f32.mrf.mxu0
        %v8786 = vadd.f32 0.0, %v8785
        %8787 = vmatmul.bf16.gmra.mxu0 %v8709
        %v8788 = vpop.f32.mrf.mxu0
        %v8789 = vadd.f32 0.0, %v8788
        %v8790 = vpop.f32.mrf.mxu0
        %v8791 = vadd.f32 0.0, %v8790
        %8792 = vmatmul.bf16.gmra.mxu0 %v8712
        %v8793 = vpop.f32.mrf.mxu0
        %v8794 = vadd.f32 0.0, %v8793
        %v8795 = vpop.f32.mrf.mxu0
        %v8796 = vadd.f32 0.0, %v8795
        %8797 = vmatmul.bf16.gmra.mxu0 %v8715
        %v8798 = vpop.f32.mrf.mxu0
        %v8799 = vadd.f32 0.0, %v8798
        %v8800 = vpop.f32.mrf.mxu0
        %v8801 = vadd.f32 0.0, %v8800
        %8802 = vmatmul.bf16.gmra.mxu0 %v8718
        %v8803 = vpop.f32.mrf.mxu0
        %v8804 = vadd.f32 0.0, %v8803
        %v8805 = vpop.f32.mrf.mxu0
        %v8806 = vadd.f32 0.0, %v8805
        %8807 = vmatmul.bf16.gmra.mxu0 %v8721
        %v8808 = vpop.f32.mrf.mxu0
        %v8809 = vadd.f32 0.0, %v8808
        %v8810 = vpop.f32.mrf.mxu0
        %v8811 = vadd.f32 0.0, %v8810
        %8812 = vmatmul.bf16.gmra.mxu0 %v8724
        %v8813 = vpop.f32.mrf.mxu0
        %v8814 = vadd.f32 0.0, %v8813
        %v8815 = vpop.f32.mrf.mxu0
        %v8816 = vadd.f32 0.0, %v8815
        %8817 = vdwg.mxu0
        %v8818 = vadd.f32 %v8596, %v8739
        %v8819 = vadd.f32 %v8597, %v8741
        %v8820 = vadd.f32 %v8598, %v8744
        %v8821 = vadd.f32 %v8599, %v8746
        %v8822 = vadd.f32 %v8600, %v8749
        %v8823 = vadd.f32 %v8601, %v8751
        %v8824 = vadd.f32 %v8602, %v8754
        %v8825 = vadd.f32 %v8603, %v8756
        %v8826 = vadd.f32 %v8604, %v8759
        %v8827 = vadd.f32 %v8605, %v8761
        %v8828 = vadd.f32 %v8606, %v8764
        %v8829 = vadd.f32 %v8607, %v8766
        %v8830 = vadd.f32 %v8608, %v8769
        %v8831 = vadd.f32 %v8609, %v8771
        %v8832 = vadd.f32 %v8610, %v8774
        %v8833 = vadd.f32 %v8611, %v8776
        %v8834 = vadd.f32 %v8612, %v8779
        %v8835 = vadd.f32 %v8613, %v8781
        %v8836 = vadd.f32 %v8614, %v8784
        %v8837 = vadd.f32 %v8615, %v8786
        %v8838 = vadd.f32 %v8616, %v8789
        %v8839 = vadd.f32 %v8617, %v8791
        %v8840 = vadd.f32 %v8618, %v8794
        %v8841 = vadd.f32 %v8619, %v8796
        %v8842 = vadd.f32 %v8620, %v8799
        %v8843 = vadd.f32 %v8621, %v8801
        %v8844 = vadd.f32 %v8622, %v8804
        %v8845 = vadd.f32 %v8623, %v8806
        %v8846 = vadd.f32 %v8624, %v8809
        %v8847 = vadd.f32 %v8625, %v8811
        %v8848 = vadd.f32 %v8626, %v8814
        %v8849 = vadd.f32 %v8627, %v8816
        %v8850 = vld [vmem:[%s10] sm:$0x1]
        %v8852 = vperm.slane %v8850, 0
        %v8854 = vadd.f32 %v8818, %v8852
        %v8855 = vadd.f32 %v8819, %v8852
        %v8856 = vadd.f32 %v8820, %v8852
        %v8857 = vadd.f32 %v8821, %v8852
        %v8858 = vadd.f32 %v8822, %v8852
        %v8859 = vadd.f32 %v8823, %v8852
        %v8860 = vadd.f32 %v8824, %v8852
        %v8861 = vadd.f32 %v8825, %v8852
        %v8862 = vadd.f32 %v8826, %v8852
        %v8863 = vadd.f32 %v8827, %v8852
        %v8864 = vadd.f32 %v8828, %v8852
        %v8865 = vadd.f32 %v8829, %v8852
        %v8866 = vadd.f32 %v8830, %v8852
        %v8867 = vadd.f32 %v8831, %v8852
        %v8868 = vadd.f32 %v8832, %v8852
        %v8869 = vadd.f32 %v8833, %v8852
        %v8870 = vadd.f32 %v8834, %v8852
        %v8871 = vadd.f32 %v8835, %v8852
        %v8872 = vadd.f32 %v8836, %v8852
        %v8873 = vadd.f32 %v8837, %v8852
        %v8874 = vadd.f32 %v8838, %v8852
        %v8875 = vadd.f32 %v8839, %v8852
        %v8876 = vadd.f32 %v8840, %v8852
        %v8877 = vadd.f32 %v8841, %v8852
        %v8878 = vadd.f32 %v8842, %v8852
        %v8879 = vadd.f32 %v8843, %v8852
        %v8880 = vadd.f32 %v8844, %v8852
        %v8881 = vadd.f32 %v8845, %v8852
        %v8882 = vadd.f32 %v8846, %v8852
        %v8883 = vadd.f32 %v8847, %v8852
        %v8884 = vadd.f32 %v8848, %v8852
        %v8885 = vadd.f32 %v8849, %v8852
        %v8886 = vmax.f32 %v8854, 0.0
        %v8887 = vmax.f32 %v8855, 0.0
        %v8888 = vmax.f32 %v8856, 0.0
        %v8889 = vmax.f32 %v8857, 0.0
        %v8890 = vmax.f32 %v8858, 0.0
        %v8891 = vmax.f32 %v8859, 0.0
        %v8892 = vmax.f32 %v8860, 0.0
        %v8893 = vmax.f32 %v8861, 0.0
        %v8894 = vmax.f32 %v8862, 0.0
        %v8895 = vmax.f32 %v8863, 0.0
        %v8896 = vmax.f32 %v8864, 0.0
        %v8897 = vmax.f32 %v8865, 0.0
        %v8898 = vmax.f32 %v8866, 0.0
        %v8899 = vmax.f32 %v8867, 0.0
        %v8900 = vmax.f32 %v8868, 0.0
        %v8901 = vmax.f32 %v8869, 0.0
        %v8902 = vmax.f32 %v8870, 0.0
        %v8903 = vmax.f32 %v8871, 0.0
        %v8904 = vmax.f32 %v8872, 0.0
        %v8905 = vmax.f32 %v8873, 0.0
        %v8906 = vmax.f32 %v8874, 0.0
        %v8907 = vmax.f32 %v8875, 0.0
        %v8908 = vmax.f32 %v8876, 0.0
        %v8909 = vmax.f32 %v8877, 0.0
        %v8910 = vmax.f32 %v8878, 0.0
        %v8911 = vmax.f32 %v8879, 0.0
        %v8912 = vmax.f32 %v8880, 0.0
        %v8913 = vmax.f32 %v8881, 0.0
        %v8914 = vmax.f32 %v8882, 0.0
        %v8915 = vmax.f32 %v8883, 0.0
        %v8916 = vmax.f32 %v8884, 0.0
        %v8917 = vmax.f32 %v8885, 0.0
        %8950 = vrot.lane.b32.xlu0 %v2860, 8
        %v8951 = vpop.permute.xlu0 %8950
        %8952 = vrot.lane.b32.xlu0 %v2861, 8
        %v8953 = vpop.permute.xlu0 %8952
        %8954 = vrot.lane.b32.xlu0 %v2862, 8
        %v8955 = vpop.permute.xlu0 %8954
        %8956 = vrot.lane.b32.xlu0 %v2863, 8
        %v8957 = vpop.permute.xlu0 %8956
        %8958 = vrot.lane.b32.xlu0 %v2864, 8
        %v8959 = vpop.permute.xlu0 %8958
        %8960 = vrot.lane.b32.xlu0 %v2865, 8
        %v8961 = vpop.permute.xlu0 %8960
        %8962 = vrot.lane.b32.xlu0 %v2866, 8
        %v8963 = vpop.permute.xlu0 %8962
        %8964 = vrot.lane.b32.xlu0 %v2867, 8
        %v8965 = vpop.permute.xlu0 %8964
        %8966 = vrot.lane.b32.xlu0 %v2868, 8
        %v8967 = vpop.permute.xlu0 %8966
        %8968 = vrot.lane.b32.xlu0 %v2869, 8
        %v8969 = vpop.permute.xlu0 %8968
        %8970 = vrot.lane.b32.xlu0 %v2870, 8
        %v8971 = vpop.permute.xlu0 %8970
        %8972 = vrot.lane.b32.xlu0 %v2871, 8
        %v8973 = vpop.permute.xlu0 %8972
        %8974 = vrot.lane.b32.xlu0 %v2872, 8
        %v8975 = vpop.permute.xlu0 %8974
        %8976 = vrot.lane.b32.xlu0 %v2873, 8
        %v8977 = vpop.permute.xlu0 %8976
        %8978 = vrot.lane.b32.xlu0 %v2874, 8
        %v8979 = vpop.permute.xlu0 %8978
        %8980 = vrot.lane.b32.xlu0 %v2875, 8
        %v8981 = vpop.permute.xlu0 %8980
        %8982 = vrot.lane.b32.xlu0 %v2876, 8
        %v8983 = vpop.permute.xlu0 %8982
        %8984 = vrot.lane.b32.xlu0 %v2877, 8
        %v8985 = vpop.permute.xlu0 %8984
        %8986 = vrot.lane.b32.xlu0 %v2878, 8
        %v8987 = vpop.permute.xlu0 %8986
        %8988 = vrot.lane.b32.xlu0 %v2879, 8
        %v8989 = vpop.permute.xlu0 %8988
        %8990 = vrot.lane.b32.xlu0 %v2880, 8
        %v8991 = vpop.permute.xlu0 %8990
        %8992 = vrot.lane.b32.xlu0 %v2881, 8
        %v8993 = vpop.permute.xlu0 %8992
        %8994 = vrot.lane.b32.xlu0 %v2882, 8
        %v8995 = vpop.permute.xlu0 %8994
        %8996 = vrot.lane.b32.xlu0 %v2883, 8
        %v8997 = vpop.permute.xlu0 %8996
        %8998 = vrot.lane.b32.xlu0 %v2884, 8
        %v8999 = vpop.permute.xlu0 %8998
        %9000 = vrot.lane.b32.xlu0 %v2885, 8
        %v9001 = vpop.permute.xlu0 %9000
        %9002 = vrot.lane.b32.xlu0 %v2886, 8
        %v9003 = vpop.permute.xlu0 %9002
        %9004 = vrot.lane.b32.xlu0 %v2887, 8
        %v9005 = vpop.permute.xlu0 %9004
        %9006 = vrot.lane.b32.xlu0 %v2888, 8
        %v9007 = vpop.permute.xlu0 %9006
        %9008 = vrot.lane.b32.xlu0 %v2889, 8
        %v9009 = vpop.permute.xlu0 %9008
        %9010 = vrot.lane.b32.xlu0 %v2890, 8
        %v9011 = vpop.permute.xlu0 %9010
        %9012 = vrot.lane.b32.xlu0 %v2891, 8
        %v9013 = vpop.permute.xlu0 %9012
        %9078 = vrot.lane.b32.xlu0 %v6188, 16
        %v9079 = vpop.permute.xlu0 %9078
        %9080 = vrot.lane.b32.xlu0 %v6189, 16
        %v9081 = vpop.permute.xlu0 %9080
        %9082 = vrot.lane.b32.xlu0 %v6190, 16
        %v9083 = vpop.permute.xlu0 %9082
        %9084 = vrot.lane.b32.xlu0 %v6191, 16
        %v9085 = vpop.permute.xlu0 %9084
        %9086 = vrot.lane.b32.xlu0 %v6192, 16
        %v9087 = vpop.permute.xlu0 %9086
        %9088 = vrot.lane.b32.xlu0 %v6193, 16
        %v9089 = vpop.permute.xlu0 %9088
        %9090 = vrot.lane.b32.xlu0 %v6194, 16
        %v9091 = vpop.permute.xlu0 %9090
        %9092 = vrot.lane.b32.xlu0 %v6195, 16
        %v9093 = vpop.permute.xlu0 %9092
        %9094 = vrot.lane.b32.xlu0 %v6196, 16
        %v9095 = vpop.permute.xlu0 %9094
        %9096 = vrot.lane.b32.xlu0 %v6197, 16
        %v9097 = vpop.permute.xlu0 %9096
        %9098 = vrot.lane.b32.xlu0 %v6198, 16
        %v9099 = vpop.permute.xlu0 %9098
        %9100 = vrot.lane.b32.xlu0 %v6199, 16
        %v9101 = vpop.permute.xlu0 %9100
        %9102 = vrot.lane.b32.xlu0 %v6200, 16
        %v9103 = vpop.permute.xlu0 %9102
        %9104 = vrot.lane.b32.xlu0 %v6201, 16
        %v9105 = vpop.permute.xlu0 %9104
        %9106 = vrot.lane.b32.xlu0 %v6202, 16
        %v9107 = vpop.permute.xlu0 %9106
        %9108 = vrot.lane.b32.xlu0 %v6203, 16
        %v9109 = vpop.permute.xlu0 %9108
        %9110 = vrot.lane.b32.xlu0 %v6204, 16
        %v9111 = vpop.permute.xlu0 %9110
        %9112 = vrot.lane.b32.xlu0 %v6205, 16
        %v9113 = vpop.permute.xlu0 %9112
        %9114 = vrot.lane.b32.xlu0 %v6206, 16
        %v9115 = vpop.permute.xlu0 %9114
        %9116 = vrot.lane.b32.xlu0 %v6207, 16
        %v9117 = vpop.permute.xlu0 %9116
        %9118 = vrot.lane.b32.xlu0 %v6208, 16
        %v9119 = vpop.permute.xlu0 %9118
        %9120 = vrot.lane.b32.xlu0 %v6209, 16
        %v9121 = vpop.permute.xlu0 %9120
        %9122 = vrot.lane.b32.xlu0 %v6210, 16
        %v9123 = vpop.permute.xlu0 %9122
        %9124 = vrot.lane.b32.xlu0 %v6211, 16
        %v9125 = vpop.permute.xlu0 %9124
        %9126 = vrot.lane.b32.xlu0 %v6212, 16
        %v9127 = vpop.permute.xlu0 %9126
        %9128 = vrot.lane.b32.xlu0 %v6213, 16
        %v9129 = vpop.permute.xlu0 %9128
        %9130 = vrot.lane.b32.xlu0 %v6214, 16
        %v9131 = vpop.permute.xlu0 %9130
        %9132 = vrot.lane.b32.xlu0 %v6215, 16
        %v9133 = vpop.permute.xlu0 %9132
        %9134 = vrot.lane.b32.xlu0 %v6216, 16
        %v9135 = vpop.permute.xlu0 %9134
        %9136 = vrot.lane.b32.xlu0 %v6217, 16
        %v9137 = vpop.permute.xlu0 %9136
        %9138 = vrot.lane.b32.xlu0 %v6218, 16
        %v9139 = vpop.permute.xlu0 %9138
        %9140 = vrot.lane.b32.xlu0 %v6219, 16
        %v9141 = vpop.permute.xlu0 %9140
        %9206 = vrot.lane.b32.xlu0 %v8886, 24
        %v9207 = vpop.permute.xlu0 %9206
        %9208 = vrot.lane.b32.xlu0 %v8887, 24
        %v9209 = vpop.permute.xlu0 %9208
        %9210 = vrot.lane.b32.xlu0 %v8888, 24
        %v9211 = vpop.permute.xlu0 %9210
        %9212 = vrot.lane.b32.xlu0 %v8889, 24
        %v9213 = vpop.permute.xlu0 %9212
        %9214 = vrot.lane.b32.xlu0 %v8890, 24
        %v9215 = vpop.permute.xlu0 %9214
        %9216 = vrot.lane.b32.xlu0 %v8891, 24
        %v9217 = vpop.permute.xlu0 %9216
        %9218 = vrot.lane.b32.xlu0 %v8892, 24
        %v9219 = vpop.permute.xlu0 %9218
        %9220 = vrot.lane.b32.xlu0 %v8893, 24
        %v9221 = vpop.permute.xlu0 %9220
        %9222 = vrot.lane.b32.xlu0 %v8894, 24
        %v9223 = vpop.permute.xlu0 %9222
        %9224 = vrot.lane.b32.xlu0 %v8895, 24
        %v9225 = vpop.permute.xlu0 %9224
        %9226 = vrot.lane.b32.xlu0 %v8896, 24
        %v9227 = vpop.permute.xlu0 %9226
        %9228 = vrot.lane.b32.xlu0 %v8897, 24
        %v9229 = vpop.permute.xlu0 %9228
        %9230 = vrot.lane.b32.xlu0 %v8898, 24
        %v9231 = vpop.permute.xlu0 %9230
        %9232 = vrot.lane.b32.xlu0 %v8899, 24
        %v9233 = vpop.permute.xlu0 %9232
        %9234 = vrot.lane.b32.xlu0 %v8900, 24
        %v9235 = vpop.permute.xlu0 %9234
        %9236 = vrot.lane.b32.xlu0 %v8901, 24
        %v9237 = vpop.permute.xlu0 %9236
        %9238 = vrot.lane.b32.xlu0 %v8902, 24
        %v9239 = vpop.permute.xlu0 %9238
        %9240 = vrot.lane.b32.xlu0 %v8903, 24
        %v9241 = vpop.permute.xlu0 %9240
        %9242 = vrot.lane.b32.xlu0 %v8904, 24
        %v9243 = vpop.permute.xlu0 %9242
        %9244 = vrot.lane.b32.xlu0 %v8905, 24
        %v9245 = vpop.permute.xlu0 %9244
        %9246 = vrot.lane.b32.xlu0 %v8906, 24
        %v9247 = vpop.permute.xlu0 %9246
        %9248 = vrot.lane.b32.xlu0 %v8907, 24
        %v9249 = vpop.permute.xlu0 %9248
        %9250 = vrot.lane.b32.xlu0 %v8908, 24
        %v9251 = vpop.permute.xlu0 %9250
        %9252 = vrot.lane.b32.xlu0 %v8909, 24
        %v9253 = vpop.permute.xlu0 %9252
        %9254 = vrot.lane.b32.xlu0 %v8910, 24
        %v9255 = vpop.permute.xlu0 %9254
        %9256 = vrot.lane.b32.xlu0 %v8911, 24
        %v9257 = vpop.permute.xlu0 %9256
        %9258 = vrot.lane.b32.xlu0 %v8912, 24
        %v9259 = vpop.permute.xlu0 %9258
        %9260 = vrot.lane.b32.xlu0 %v8913, 24
        %v9261 = vpop.permute.xlu0 %9260
        %9262 = vrot.lane.b32.xlu0 %v8914, 24
        %v9263 = vpop.permute.xlu0 %9262
        %9264 = vrot.lane.b32.xlu0 %v8915, 24
        %v9265 = vpop.permute.xlu0 %9264
        %9266 = vrot.lane.b32.xlu0 %v8916, 24
        %v9267 = vpop.permute.xlu0 %9266
        %9268 = vrot.lane.b32.xlu0 %v8917, 24
        %v9269 = vpop.permute.xlu0 %9268
        %v9302 = vsel %vm4128, %v669, %v8951
        %v9303 = vsel %vm4128, %v670, %v8953
        %v9304 = vsel %vm4128, %v671, %v8955
        %v9305 = vsel %vm4128, %v672, %v8957
        %v9306 = vsel %vm4128, %v673, %v8959
        %v9307 = vsel %vm4128, %v674, %v8961
        %v9308 = vsel %vm4128, %v675, %v8963
        %v9309 = vsel %vm4128, %v676, %v8965
        %v9310 = vsel %vm4128, %v677, %v8967
        %v9311 = vsel %vm4128, %v678, %v8969
        %v9312 = vsel %vm4128, %v679, %v8971
        %v9313 = vsel %vm4128, %v680, %v8973
        %v9314 = vsel %vm4128, %v681, %v8975
        %v9315 = vsel %vm4128, %v682, %v8977
        %v9316 = vsel %vm4128, %v683, %v8979
        %v9317 = vsel %vm4128, %v684, %v8981
        %v9318 = vsel %vm4128, %v685, %v8983
        %v9319 = vsel %vm4128, %v686, %v8985
        %v9320 = vsel %vm4128, %v687, %v8987
        %v9321 = vsel %vm4128, %v688, %v8989
        %v9322 = vsel %vm4128, %v689, %v8991
        %v9323 = vsel %vm4128, %v690, %v8993
        %v9324 = vsel %vm4128, %v691, %v8995
        %v9325 = vsel %vm4128, %v692, %v8997
        %v9326 = vsel %vm4128, %v693, %v8999
        %v9327 = vsel %vm4128, %v694, %v9001
        %v9328 = vsel %vm4128, %v695, %v9003
        %v9329 = vsel %vm4128, %v696, %v9005
        %v9330 = vsel %vm4128, %v697, %v9007
        %v9331 = vsel %vm4128, %v698, %v9009
        %v9332 = vsel %vm4128, %v699, %v9011
        %v9333 = vsel %vm4128, %v700, %v9013
        %vm9334 = vcmask 130048
        %v9335 = vsel %vm9334, %v9302, %v9079
        %v9336 = vsel %vm9334, %v9303, %v9081
        %v9337 = vsel %vm9334, %v9304, %v9083
        %v9338 = vsel %vm9334, %v9305, %v9085
        %v9339 = vsel %vm9334, %v9306, %v9087
        %v9340 = vsel %vm9334, %v9307, %v9089
        %v9341 = vsel %vm9334, %v9308, %v9091
        %v9342 = vsel %vm9334, %v9309, %v9093
        %v9343 = vsel %vm9334, %v9310, %v9095
        %v9344 = vsel %vm9334, %v9311, %v9097
        %v9345 = vsel %vm9334, %v9312, %v9099
        %v9346 = vsel %vm9334, %v9313, %v9101
        %v9347 = vsel %vm9334, %v9314, %v9103
        %v9348 = vsel %vm9334, %v9315, %v9105
        %v9349 = vsel %vm9334, %v9316, %v9107
        %v9350 = vsel %vm9334, %v9317, %v9109
        %v9351 = vsel %vm9334, %v9318, %v9111
        %v9352 = vsel %vm9334, %v9319, %v9113
        %v9353 = vsel %vm9334, %v9320, %v9115
        %v9354 = vsel %vm9334, %v9321, %v9117
        %v9355 = vsel %vm9334, %v9322, %v9119
        %v9356 = vsel %vm9334, %v9323, %v9121
        %v9357 = vsel %vm9334, %v9324, %v9123
        %v9358 = vsel %vm9334, %v9325, %v9125
        %v9359 = vsel %vm9334, %v9326, %v9127
        %v9360 = vsel %vm9334, %v9327, %v9129
        %v9361 = vsel %vm9334, %v9328, %v9131
        %v9362 = vsel %vm9334, %v9329, %v9133
        %v9363 = vsel %vm9334, %v9330, %v9135
        %v9364 = vsel %vm9334, %v9331, %v9137
        %v9365 = vsel %vm9334, %v9332, %v9139
        %v9366 = vsel %vm9334, %v9333, %v9141
        %vm9367 = vcmask 195584
        %v9368 = vsel %vm9367, %v9335, %v9207
        %v9369 = vsel %vm9367, %v9336, %v9209
        %v9370 = vsel %vm9367, %v9337, %v9211
        %v9371 = vsel %vm9367, %v9338, %v9213
        %v9372 = vsel %vm9367, %v9339, %v9215
        %v9373 = vsel %vm9367, %v9340, %v9217
        %v9374 = vsel %vm9367, %v9341, %v9219
        %v9375 = vsel %vm9367, %v9342, %v9221
        %v9376 = vsel %vm9367, %v9343, %v9223
        %v9377 = vsel %vm9367, %v9344, %v9225
        %v9378 = vsel %vm9367, %v9345, %v9227
        %v9379 = vsel %vm9367, %v9346, %v9229
        %v9380 = vsel %vm9367, %v9347, %v9231
        %v9381 = vsel %vm9367, %v9348, %v9233
        %v9382 = vsel %vm9367, %v9349, %v9235
        %v9383 = vsel %vm9367, %v9350, %v9237
        %v9384 = vsel %vm9367, %v9351, %v9239
        %v9385 = vsel %vm9367, %v9352, %v9241
        %v9386 = vsel %vm9367, %v9353, %v9243
        %v9387 = vsel %vm9367, %v9354, %v9245
        %v9388 = vsel %vm9367, %v9355, %v9247
        %v9389 = vsel %vm9367, %v9356, %v9249
        %v9390 = vsel %vm9367, %v9357, %v9251
        %v9391 = vsel %vm9367, %v9358, %v9253
        %v9392 = vsel %vm9367, %v9359, %v9255
        %v9393 = vsel %vm9367, %v9360, %v9257
        %v9394 = vsel %vm9367, %v9361, %v9259
        %v9395 = vsel %vm9367, %v9362, %v9261
        %v9396 = vsel %vm9367, %v9363, %v9263
        %v9397 = vsel %vm9367, %v9364, %v9265
        %v9398 = vsel %vm9367, %v9365, %v9267
        %v9399 = vsel %vm9367, %v9366, %v9269
        %vm9400 = vcmask 261120
        %9401 = vst.msk [vmem:[%s379] sm:$0xff] %vm9400, %v9368
        %9402 = vst.msk [vmem:[%s379 + $0x8] sm:$0xff] %vm9400, %v9369
        %9403 = vst.msk [vmem:[%s379 + $0x10] sm:$0xff] %vm9400, %v9370
        %9404 = vst.msk [vmem:[%s379 + $0x18] sm:$0xff] %vm9400, %v9371
        %9405 = vst.msk [vmem:[%s379 + $0x20] sm:$0xff] %vm9400, %v9372
        %9406 = vst.msk [vmem:[%s379 + $0x28] sm:$0xff] %vm9400, %v9373
        %9407 = vst.msk [vmem:[%s379 + $0x30] sm:$0xff] %vm9400, %v9374
        %9408 = vst.msk [vmem:[%s379 + $0x38] sm:$0xff] %vm9400, %v9375
        %9409 = vst.msk [vmem:[%s379 + $0x40] sm:$0xff] %vm9400, %v9376
        %9410 = vst.msk [vmem:[%s379 + $0x48] sm:$0xff] %vm9400, %v9377
        %9411 = vst.msk [vmem:[%s379 + $0x50] sm:$0xff] %vm9400, %v9378
        %9412 = vst.msk [vmem:[%s379 + $0x58] sm:$0xff] %vm9400, %v9379
        %9413 = vst.msk [vmem:[%s379 + $0x60] sm:$0xff] %vm9400, %v9380
        %9414 = vst.msk [vmem:[%s379 + $0x68] sm:$0xff] %vm9400, %v9381
        %9415 = vst.msk [vmem:[%s379 + $0x70] sm:$0xff] %vm9400, %v9382
        %9416 = vst.msk [vmem:[%s379 + $0x78] sm:$0xff] %vm9400, %v9383
        %9417 = vst.msk [vmem:[%s379 + $0x80] sm:$0xff] %vm9400, %v9384
        %9418 = vst.msk [vmem:[%s379 + $0x88] sm:$0xff] %vm9400, %v9385
        %9419 = vst.msk [vmem:[%s379 + $0x90] sm:$0xff] %vm9400, %v9386
        %9420 = vst.msk [vmem:[%s379 + $0x98] sm:$0xff] %vm9400, %v9387
        %9421 = vst.msk [vmem:[%s379 + $0xa0] sm:$0xff] %vm9400, %v9388
        %9422 = vst.msk [vmem:[%s379 + $0xa8] sm:$0xff] %vm9400, %v9389
        %9423 = vst.msk [vmem:[%s379 + $0xb0] sm:$0xff] %vm9400, %v9390
        %9424 = vst.msk [vmem:[%s379 + $0xb8] sm:$0xff] %vm9400, %v9391
        %9425 = vst.msk [vmem:[%s379 + $0xc0] sm:$0xff] %vm9400, %v9392
        %9426 = vst.msk [vmem:[%s379 + $0xc8] sm:$0xff] %vm9400, %v9393
        %9427 = vst.msk [vmem:[%s379 + $0xd0] sm:$0xff] %vm9400, %v9394
        %9428 = vst.msk [vmem:[%s379 + $0xd8] sm:$0xff] %vm9400, %v9395
        %9429 = vst.msk [vmem:[%s379 + $0xe0] sm:$0xff] %vm9400, %v9396
        %9430 = vst.msk [vmem:[%s379 + $0xe8] sm:$0xff] %vm9400, %v9397
        %9431 = vst.msk [vmem:[%s379 + $0xf0] sm:$0xff] %vm9400, %v9398
        %9432 = vst.msk [vmem:[%s379 + $0xf8] sm:$0xff] %vm9400, %v9399
        %s9433 = sand.u32 %s269, 1
        %s9434 = scalar_lea.sflag [#allocation7], %s9433
        %s9435 = sand.u32 %s269, 1
        %s9436 = smul.addr %s9435, 256
        %s9437 = scalar_lea.vmem [#allocation6], %s9436
        // Predicated region
        $region65: #{tpu_custom_call.1} parent=63 // pred_check
          %p9438 = pneg %p279
        $region66: #{tpu_custom_call.1} parent=63 // pred_check_branch
          %9440 = sbr.rel (%p9438) target = $region68
        $region67: #{tpu_custom_call.1} parent=63 // pred_region
          %9442 = vsyncadd %s9434, 0
          %s9443 = smul.addr %s25, 32
          %s9444 = smul.addr %s9443, 8
          %s9445 = scalar_lea.hbm %s11, %s9444
          %s9446 = sshll.u32 %s9437, 4
          %s9447 = int_to_ptr.vmem [resolvable:$true] %s9446
          %s9448 = sshll.u32 %s9445, 4
          %s9449 = int_to_ptr.hbm [resolvable:$true] %s9448
          %9454 = dma.vmem_to_hbm [thread:$0]  %s9447, 4096, %s9449, %s9434, 128, 128, 8
        $region68: #{tpu_custom_call.1} parent=63 // pred_fallthru
          _
      $region64: #{tpu_custom_call.1} parent=5 // pred_fallthru
        _
      %p9455 = scmp.le.s32.totalorder 2, %s20
      // Predicated region
      $region69: #{tpu_custom_call.1} parent=5 // pred_check
        %p9456 = pneg %p9455
      $region70: #{tpu_custom_call.1} parent=5 // pred_check_branch
        %9458 = sbr.rel (%p9456) target = $region72
      $region71: #{tpu_custom_call.1} parent=5 // pred_region
        %s9459 = ssub.s32 %s20, 2
        // Predicated region
        $region73: #{tpu_custom_call.1} parent=71 // pred_check
          %p9460 = pneg %p285
        $region74: #{tpu_custom_call.1} parent=71 // pred_check_branch
          %9462 = sbr.rel (%p9460) target = $region76
        $region75: #{tpu_custom_call.1} parent=71 // pred_region
          %s9463 = sand.u32 %s270, 1
          %s9464 = scalar_lea.sflag [#allocation7], %s9463
          %s9465 = sand.u32 %s270, 1
          %s9466 = smul.addr %s9465, 256
          %s9467 = scalar_lea.vmem [#allocation6], %s9466
          %9469 = dma.done %s9464, 4096
        $region76: #{tpu_custom_call.1} parent=71 // pred_fallthru
          _
      $region72: #{tpu_custom_call.1} parent=5 // pred_fallthru
        _
    $region6: #{tpu_custom_call.1} parent=1 // loop_footer
      %s24 = sadd.s32 1, %s20
    $region7: #{tpu_custom_call.1} parent=1 // loop_footer_branch
      %19 = sbr.rel target = $region3
    $region8: #{tpu_custom_call.1} parent=1 // loop_exit
      _
    %9470 = vsyncpa [#allocation7], 1
    %s9471 = scalar_lea.sflag [#allocation7], 1
    %9472 = vsyncpa %s9471, 1

</llo_original>
